<compile_context>
chip_gen: v6e
topology: v6e:2x2x1
jax: 0.10.0
libtpu: 0.0.40
codegen_flags: <defaults>
</compile_context>

<pallas_src>
import functools

import jax
import jax.numpy as jnp
from jax import lax
from jax.experimental import pallas as pl
from jax.experimental.pallas import tpu as pltpu


def _round_up(x, m):
    return (x + m - 1) // m * m


# ----------------------------- Pallas kernel --------------------------------

def _embed(ids_ref, emb_ref):
    """One-hot MXU embedding lookup: (L, Bt) int32 ids -> (L, Bt, E) bf16."""
    L, Bt = ids_ref.shape
    Vp, E = emb_ref.shape
    ids = ids_ref[...]
    hot = ids[:, :, None] == lax.broadcasted_iota(jnp.int32, (L, Bt, Vp), 2)
    onehot = jnp.where(hot, 1.0, 0.0).astype(jnp.bfloat16)              # (L, Bt, Vp)
    x = jnp.dot(onehot.reshape(L * Bt, Vp), emb_ref[...],
                preferred_element_type=jnp.float32)                     # (L*Bt, E)
    return x.astype(jnp.bfloat16).reshape(L, Bt, E)


def _conv_pool(x, conv_w_ref, conv_b_ref, kernel_size):
    """Full-width conv (im2col) + global max-pool + bias + ReLU -> (Bt, Cp) f32."""
    L, Bt, E = x.shape
    lout = L - kernel_size + 1
    # K shifted views along the outermost (untiled) dim: free slices, no relayout.
    cols = [x[k:k + lout] for k in range(kernel_size)]
    patches = jnp.concatenate(cols, axis=-1)                            # (lout, Bt, K*E)
    p2d = patches.reshape(lout * Bt, kernel_size * E)                   # layout-preserving (Bt % 8 == 0)
    y = jnp.dot(p2d, conv_w_ref[...], preferred_element_type=jnp.float32)
    pooled = jnp.max(y.reshape(lout, Bt, -1), axis=0)                   # (Bt, Cp)
    # Bias + ReLU AFTER the pool: bias constant per window, ReLU monotone,
    # padded channels stay exactly zero.
    return jnp.maximum(pooled + conv_b_ref[...], 0.0)


def deepconn_kernel(uid_ref, sid_ref, emb_ref,
                    uconv_w_ref, uconv_b_ref, sconv_w_ref, sconv_b_ref,
                    lin_w_ref, lin_b_ref,
                    fm_rhs_ref, fm_b_ref, fm_v2_ref,
                    out_ref, *, user_kernel_size, section_kernel_size):
    # ---- embedding (fused gather) + towers
    ux = _embed(uid_ref, emb_ref)
    sx = _embed(sid_ref, emb_ref)
    pu = _conv_pool(ux, uconv_w_ref, uconv_b_ref, user_kernel_size)     # (Bt, Cpu)
    ps = _conv_pool(sx, sconv_w_ref, sconv_b_ref, section_kernel_size)  # (Bt, Cps)

    # ---- merged tower linears: one block-diag (Cpu+Cps, F) matmul + ReLU
    pc = jnp.concatenate([pu, ps], axis=-1).astype(jnp.bfloat16)        # (Bt, 128)
    z = jnp.maximum(jnp.dot(pc, lin_w_ref[...],
                            preferred_element_type=jnp.float32)
                    + lin_b_ref[...], 0.0)                              # (Bt, F) f32

    # ---- Factorization Machine, transposed (batch on lanes) + sigmoid
    zT = jnp.transpose(z)                                               # (F, Bt)
    fused = jnp.dot(fm_rhs_ref[...], zT,
                    preferred_element_type=jnp.float32)                 # (k+1, Bt) = [V^T z ; w^T z]
    k = fm_rhs_ref.shape[0] - 1
    zv = fused[:k, :]                                                   # (k, Bt)
    lin = fused[k:k + 1, :] + fm_b_ref[...]                             # (1, Bt)
    sq = jnp.sum(zv * zv, axis=0, keepdims=True)                        # sum_j (zV)_j^2
    z2v2 = jnp.sum((zT * zT) * fm_v2_ref[...], axis=0, keepdims=True)   # sum_f z_f^2 * sum_j V_fj^2
    out_ref[...] = jax.nn.sigmoid(lin + 0.5 * (sq - z2v2))              # lane-dense (1, Bt)


# ----------------------------- params / packing ------------------------------

def make_params(key, *, vocab_size, embedding_dim,
                user_num_kernels, section_num_kernels,
                user_kernel_size, section_kernel_size,
                user_latent, section_latent):
    ks = jax.random.split(key, 10)
    n_fm = user_latent + section_latent
    k_fm = n_fm
    scale = 0.1
    return dict(
        embedding=jax.random.normal(ks[0], (vocab_size, embedding_dim),
                                    jnp.float32) * scale,
        uconv_w=jax.random.normal(ks[1], (user_kernel_size, embedding_dim,
                                          user_num_kernels), jnp.float32) * scale,
        uconv_b=jax.random.normal(ks[2], (1, user_num_kernels), jnp.float32) * scale,
        sconv_w=jax.random.normal(ks[3], (section_kernel_size, embedding_dim,
                                          section_num_kernels), jnp.float32) * scale,
        sconv_b=jax.random.normal(ks[4], (1, section_num_kernels), jnp.float32) * scale,
        ulin_w=jax.random.normal(ks[5], (user_num_kernels, user_latent),
                                 jnp.float32) * scale,
        ulin_b=jnp.zeros((1, user_latent), jnp.float32),
        slin_w=jax.random.normal(ks[6], (section_num_kernels, section_latent),
                                 jnp.float32) * scale,
        slin_b=jnp.zeros((1, section_latent), jnp.float32),
        fm_w=jax.random.normal(ks[7], (n_fm, 1), jnp.float32) * scale,
        fm_b=jax.random.normal(ks[8], (1, 1), jnp.float32) * scale,
        fm_v=jax.random.normal(ks[9], (n_fm, k_fm), jnp.float32) * scale,
    )


def pack_params(params, *, channel_pad=64, vocab_pad=128):
    """Torch-style params -> kernel layout (im2col, lane-padded, fused, bf16 MXU feeds)."""
    emb = params["embedding"]
    V, E = emb.shape
    Vp = _round_up(V, vocab_pad)
    # NOTE: table is kept VMEM-resident; fine for small vocabularies.
    # TODO(synk): large-vocab tables should stay in HBM with an in-kernel DMA gather.
    emb_p = jnp.pad(emb, ((0, Vp - V), (0, 0))).astype(jnp.bfloat16)

    def pack_conv(w, b):
        K, E_, C = w.shape
        Cp = _round_up(C, channel_pad)
        w2 = jnp.pad(w.reshape(K * E_, C), ((0, 0), (0, Cp - C))).astype(jnp.bfloat16)
        b2 = jnp.pad(b, ((0, 0), (0, Cp - C))).astype(jnp.float32)
        return w2, b2, Cp

    uw, ub, Cpu = pack_conv(params["uconv_w"], params["uconv_b"])
    sw, sb, Cps = pack_conv(params["sconv_w"], params["sconv_b"])

    # Merged tower linear: block-diag(ulin_w, slin_w) with zero-padded channel rows.
    ulw, slw = params["ulin_w"], params["slin_w"]
    Cu, Fu = ulw.shape
    Cs, Fs = slw.shape
    blk = jnp.zeros((Cpu + Cps, Fu + Fs), jnp.float32)
    blk = blk.at[:Cu, :Fu].set(ulw)
    blk = blk.at[Cpu:Cpu + Cs, Fu:].set(slw)
    lin_b = jnp.concatenate([params["ulin_b"], params["slin_b"]],
                            axis=1).astype(jnp.float32)

    # FM: RHS^T = [V | w]^T -> (k+1, F); v2 = row-sums of V^2 -> (F, 1).
    fm_v = params["fm_v"].astype(jnp.float32)             # (F, k)
    fm_w = params["fm_w"].astype(jnp.float32)             # (F, 1)
    fm_rhs_t = jnp.concatenate([fm_v, fm_w], axis=1).T    # (k+1, F)
    fm_v2 = jnp.sum(fm_v * fm_v, axis=1, keepdims=True)   # (F, 1)

    return dict(
        emb=emb_p,
        uconv_w=uw, uconv_b=ub, sconv_w=sw, sconv_b=sb,
        lin_w=blk.astype(jnp.bfloat16), lin_b=lin_b,
        fm_rhs_t=fm_rhs_t, fm_b=params["fm_b"].astype(jnp.float32), fm_v2=fm_v2,
    )


# ----------------------------- wrapper / glue --------------------------------

def _vmem_limit_bytes():
    """Per-generation VMEM budget: ~75% of physical (48 MiB v7x, 96 MiB v5e/v6e)."""
    try:
        cap = pltpu.get_tpu_info().vmem_capacity_bytes
    except Exception:
        cap = 64 * 1024 * 1024
    return min(int(cap) * 3 // 4, 112 * 1024 * 1024)


def _choose_batch(B, batch_tile):
    """Pick (padded_batch, tile).  Tiles are lane-dense (multiple of 128) so the
    int32 id tiles and the (1, Bt) output row satisfy the (8, 128) constraint,
    and the grid has >=2 steps for large batches (both v7x TensorCores)."""
    if batch_tile is not None:
        bt = int(batch_tile)
        assert bt % 8 == 0, "batch_tile must be a multiple of 8"
        Bp = _round_up(B, bt)
        assert bt % 128 == 0 or bt == Bp, (
            "batch_tile must be a multiple of 128 (lane-dense tiles) or cover "
            "the whole (8-padded) batch")
        return Bp, bt
    Bp8 = _round_up(B, 8)
    if Bp8 <= 128:
        return Bp8, Bp8                       # single resident tile
    Bp = _round_up(B, 128)
    units = Bp // 128
    n_tiles = max(2, -(-Bp // 512))           # >=2 tiles, tile <= 512
    while units % n_tiles:
        n_tiles += 1
    return Bp, Bp // n_tiles


def deepconn_forward(user_content, section_content, packed, *,
                     user_kernel_size, section_kernel_size, batch_tile=None):
    B, Lu = user_content.shape
    Ls = section_content.shape[1]
    Bp, bt = _choose_batch(B, batch_tile)

    # Token ids go in seq-major (L, B) so the embedded activations are built in
    # (L, Bt, E) layout (conv shifts = free outer-dim slices).  Padded batch
    # columns use id 0; their outputs are sliced off below.
    uid = jnp.pad(user_content.T.astype(jnp.int32), ((0, 0), (0, Bp - B)))
    sid = jnp.pad(section_content.T.astype(jnp.int32), ((0, 0), (0, Bp - B)))

    kern = functools.partial(
        deepconn_kernel,
        user_kernel_size=user_kernel_size,
        section_kernel_size=section_kernel_size,
    )

    weights = (packed["emb"],
               packed["uconv_w"], packed["uconv_b"],
               packed["sconv_w"], packed["sconv_b"],
               packed["lin_w"], packed["lin_b"],
               packed["fm_rhs_t"], packed["fm_b"], packed["fm_v2"])

    def resident(a):
        # Whole array in VMEM; constant block index -> no re-DMA per grid step.
        return pl.BlockSpec(a.shape, lambda i, _nd=a.ndim: (0,) * _nd)

    grid = (Bp // bt,)
    in_specs = ([pl.BlockSpec((Lu, bt), lambda i: (0, i)),
                 pl.BlockSpec((Ls, bt), lambda i: (0, i))]
                + [resident(w) for w in weights])
    out_specs = pl.BlockSpec((1, bt), lambda i: (0, i))   # lane-dense output row

    out = pl.pallas_call(
        kern,
        grid=grid,
        in_specs=in_specs,
        out_specs=out_specs,
        out_shape=jax.ShapeDtypeStruct((1, Bp), jnp.float32),
        compiler_params=pltpu.CompilerParams(
            dimension_semantics=("parallel",),            # both TensorCores on v7x
            vmem_limit_bytes=_vmem_limit_bytes()),
    )(uid, sid, *weights)
    return out[0, :B]                                     # torch.squeeze(..., -1) -> (B,)


def deepconn_reference(user_content, section_content, params, *,
                       user_kernel_size, section_kernel_size):
    """Pure-JAX f32 reference of the PyTorch forward (sanity check)."""
    emb = params["embedding"]

    def tower(content, w, b, lw, lb, K):
        x = jnp.take(emb, content, axis=0).astype(jnp.float32)   # (B, L, E)
        B, L, E = x.shape
        lout = L - K + 1
        acc = jnp.zeros((B, lout, w.shape[-1]), jnp.float32)
        for k in range(K):
            acc = acc + jnp.einsum("ble,ec->blc", x[:, k:k + lout, :], w[k])
        acc = jnp.maximum(acc + b, 0.0)
        pooled = jnp.max(acc, axis=1)
        return jnp.maximum(pooled @ lw + lb, 0.0)

    u = tower(user_content, params["uconv_w"], params["uconv_b"],
              params["ulin_w"], params["ulin_b"], user_kernel_size)
    s = tower(section_content, params["sconv_w"], params["sconv_b"],
              params["slin_w"], params["slin_b"], section_kernel_size)
    z = jnp.concatenate([u, s], axis=1)
    lin = z @ params["fm_w"] + params["fm_b"]
    v = params["fm_v"]
    inter = 0.5 * jnp.sum((z @ v) ** 2 - (z * z) @ (v * v), axis=1, keepdims=True)
    return jax.nn.sigmoid(lin + inter)[:, 0]


# --------------------------------- main --------------------------------------

if __name__ == "__main__":
    B = 256                      # small, but exercises the tiled path (2 x 128 tiles)
    max_length_user_rep = 16
    max_length_comment_section = 12
    vocab_size = 100
    embedding_dim = 32
    user_num_kernels = 50
    section_num_kernels = 50
    user_kernel_size = 5
    section_kernel_size = 5
    user_latent = 16
    section_latent = 16

    key = jax.random.PRNGKey(0)
    k_param, k_u, k_s = jax.random.split(key, 3)
    params = make_params(
        k_param, vocab_size=vocab_size, embedding_dim=embedding_dim,
        user_num_kernels=user_num_kernels, section_num_kernels=section_num_kernels,
        user_kernel_size=user_kernel_size, section_kernel_size=section_kernel_size,
        user_latent=user_latent, section_latent=section_latent)
    packed = pack_params(params)

    user_content = jax.random.randint(
        k_u, (B, max_length_user_rep), 0, vocab_size, dtype=jnp.int32)
    section_content = jax.random.randint(
        k_s, (B, max_length_comment_section), 0, vocab_size, dtype=jnp.int32)

    pred = deepconn_forward(
        user_content, section_content, packed,
        user_kernel_size=user_kernel_size,
        section_kernel_size=section_kernel_size)           # auto tile: 128, grid = 2
    pred = jax.block_until_ready(pred)

    ref = deepconn_reference(
        user_content, section_content, params,
        user_kernel_size=user_kernel_size,
        section_kernel_size=section_kernel_size)
    ref = jax.block_until_ready(ref)

    assert pred.shape == (B,)
    # bf16 table / conv / linear weights with f32 MXU accumulation vs f32 reference.
    assert jnp.allclose(pred, ref, atol=2e-2, rtol=2e-2), (pred, ref)
    print("KERNEL_OK")
</pallas_src>

<mosaic_0001>
module attributes {stable_mosaic.version = 11 : i64} {
  func.func @deepconn_kernel(%arg0: i32, %arg1: memref<16x128xi32, #tpu.memory_space<vmem>>, %arg2: memref<12x128xi32, #tpu.memory_space<vmem>>, %arg3: memref<128x32xbf16, #tpu.memory_space<vmem>>, %arg4: memref<160x64xbf16, #tpu.memory_space<vmem>>, %arg5: memref<1x64xf32, #tpu.memory_space<vmem>>, %arg6: memref<160x64xbf16, #tpu.memory_space<vmem>>, %arg7: memref<1x64xf32, #tpu.memory_space<vmem>>, %arg8: memref<128x32xbf16, #tpu.memory_space<vmem>>, %arg9: memref<1x32xf32, #tpu.memory_space<vmem>>, %arg10: memref<33x32xf32, #tpu.memory_space<vmem>>, %arg11: memref<1x1xf32, #tpu.memory_space<vmem>>, %arg12: memref<32x1xf32, #tpu.memory_space<vmem>>, %arg13: memref<1x128xf32, #tpu.memory_space<vmem>>) attributes {dimension_semantics = [#tpu.dimension_semantics<parallel>], iteration_bounds = array<i64: 2>, scalar_prefetch = 0 : i64, scratch_operands = 0 : i64, tpu.core_type = #tpu.core_type<tc>, window_params = [{transform_indices = @transform_0, window_bounds = array<i64: 16, 128>}, {transform_indices = @transform_1, window_bounds = array<i64: 12, 128>}, {pipeline_mode = #tpu.pipeline_mode<synchronous>, transform_indices = @transform_2, window_bounds = array<i64: 128, 32>}, {pipeline_mode = #tpu.pipeline_mode<synchronous>, transform_indices = @transform_3, window_bounds = array<i64: 160, 64>}, {pipeline_mode = #tpu.pipeline_mode<synchronous>, transform_indices = @transform_4, window_bounds = array<i64: 1, 64>}, {pipeline_mode = #tpu.pipeline_mode<synchronous>, transform_indices = @transform_5, window_bounds = array<i64: 160, 64>}, {pipeline_mode = #tpu.pipeline_mode<synchronous>, transform_indices = @transform_6, window_bounds = array<i64: 1, 64>}, {pipeline_mode = #tpu.pipeline_mode<synchronous>, transform_indices = @transform_7, window_bounds = array<i64: 128, 32>}, {pipeline_mode = #tpu.pipeline_mode<synchronous>, transform_indices = @transform_8, window_bounds = array<i64: 1, 32>}, {pipeline_mode = #tpu.pipeline_mode<synchronous>, transform_indices = @transform_9, window_bounds = array<i64: 33, 32>}, {pipeline_mode = #tpu.pipeline_mode<synchronous>, transform_indices = @transform_10, window_bounds = array<i64: 1, 1>}, {pipeline_mode = #tpu.pipeline_mode<synchronous>, transform_indices = @transform_11, window_bounds = array<i64: 32, 1>}, {transform_indices = @transform_12, window_bounds = array<i64: 1, 128>}]} {
    %c0 = arith.constant 0 : index
    %c0_0 = arith.constant 0 : index
    %0 = vector.load %arg1[%c0, %c0_0] : memref<16x128xi32, #tpu.memory_space<vmem>>, vector<16x128xi32>
    %1 = vector.shape_cast %0 : vector<16x128xi32> to vector<16x128x1xi32>
    %2 = tpu.iota {dimensions = array<i32: 2>} : vector<16x128x128xi32>
    %3 = vector.broadcast %1 : vector<16x128x1xi32> to vector<16x128x128xi32>
    %4 = arith.cmpi eq, %3, %2 : vector<16x128x128xi32>
    %cst = arith.constant 1.000000e+00 : f32
    %cst_1 = arith.constant 0.000000e+00 : f32
    %5 = vector.broadcast %cst : f32 to vector<16x128x128xf32>
    %6 = vector.broadcast %cst_1 : f32 to vector<16x128x128xf32>
    %7 = arith.select %4, %5, %6 : vector<16x128x128xi1>, vector<16x128x128xf32>
    %8 = arith.truncf %7 : vector<16x128x128xf32> to vector<16x128x128xbf16>
    %9 = vector.shape_cast %8 : vector<16x128x128xbf16> to vector<2048x128xbf16>
    %c0_2 = arith.constant 0 : index
    %c0_3 = arith.constant 0 : index
    %10 = vector.load %arg3[%c0_2, %c0_3] : memref<128x32xbf16, #tpu.memory_space<vmem>>, vector<128x32xbf16>
    %cst_4 = arith.constant dense<0.000000e+00> : vector<2048x32xf32>
    %11 = tpu.matmul %9, %10, %cst_4 {dimension_numbers = #tpu.dot_dimension_numbers<[1], [0], [0], [1], [0, 0, 1, 1], [], []>} : vector<2048x128xbf16>, vector<128x32xbf16>, vector<2048x32xf32> -> vector<2048x32xf32>
    %12 = arith.truncf %11 : vector<2048x32xf32> to vector<2048x32xbf16>
    %13 = vector.shape_cast %12 : vector<2048x32xbf16> to vector<16x128x32xbf16>
    %c0_5 = arith.constant 0 : index
    %c0_6 = arith.constant 0 : index
    %14 = vector.load %arg2[%c0_5, %c0_6] : memref<12x128xi32, #tpu.memory_space<vmem>>, vector<12x128xi32>
    %15 = vector.shape_cast %14 : vector<12x128xi32> to vector<12x128x1xi32>
    %16 = tpu.iota {dimensions = array<i32: 2>} : vector<12x128x128xi32>
    %17 = vector.broadcast %15 : vector<12x128x1xi32> to vector<12x128x128xi32>
    %18 = arith.cmpi eq, %17, %16 : vector<12x128x128xi32>
    %cst_7 = arith.constant 1.000000e+00 : f32
    %cst_8 = arith.constant 0.000000e+00 : f32
    %19 = vector.broadcast %cst_7 : f32 to vector<12x128x128xf32>
    %20 = vector.broadcast %cst_8 : f32 to vector<12x128x128xf32>
    %21 = arith.select %18, %19, %20 : vector<12x128x128xi1>, vector<12x128x128xf32>
    %22 = arith.truncf %21 : vector<12x128x128xf32> to vector<12x128x128xbf16>
    %23 = vector.shape_cast %22 : vector<12x128x128xbf16> to vector<1536x128xbf16>
    %c0_9 = arith.constant 0 : index
    %c0_10 = arith.constant 0 : index
    %24 = vector.load %arg3[%c0_9, %c0_10] : memref<128x32xbf16, #tpu.memory_space<vmem>>, vector<128x32xbf16>
    %cst_11 = arith.constant dense<0.000000e+00> : vector<1536x32xf32>
    %25 = tpu.matmul %23, %24, %cst_11 {dimension_numbers = #tpu.dot_dimension_numbers<[1], [0], [0], [1], [0, 0, 1, 1], [], []>} : vector<1536x128xbf16>, vector<128x32xbf16>, vector<1536x32xf32> -> vector<1536x32xf32>
    %26 = arith.truncf %25 : vector<1536x32xf32> to vector<1536x32xbf16>
    %27 = vector.shape_cast %26 : vector<1536x32xbf16> to vector<12x128x32xbf16>
    %28 = vector.extract_strided_slice %13 {offsets = [0, 0, 0], sizes = [12, 128, 32], strides = [1, 1, 1]} : vector<16x128x32xbf16> to vector<12x128x32xbf16>
    %29 = vector.extract_strided_slice %13 {offsets = [1, 0, 0], sizes = [12, 128, 32], strides = [1, 1, 1]} : vector<16x128x32xbf16> to vector<12x128x32xbf16>
    %30 = vector.extract_strided_slice %13 {offsets = [2, 0, 0], sizes = [12, 128, 32], strides = [1, 1, 1]} : vector<16x128x32xbf16> to vector<12x128x32xbf16>
    %31 = vector.extract_strided_slice %13 {offsets = [3, 0, 0], sizes = [12, 128, 32], strides = [1, 1, 1]} : vector<16x128x32xbf16> to vector<12x128x32xbf16>
    %32 = vector.extract_strided_slice %13 {offsets = [4, 0, 0], sizes = [12, 128, 32], strides = [1, 1, 1]} : vector<16x128x32xbf16> to vector<12x128x32xbf16>
    %33 = tpu.concatenate %28, %29, %30, %31, %32 in 2 : vector<12x128x32xbf16>, vector<12x128x32xbf16>, vector<12x128x32xbf16>, vector<12x128x32xbf16>, vector<12x128x32xbf16> -> vector<12x128x160xbf16>
    %34 = vector.shape_cast %33 : vector<12x128x160xbf16> to vector<1536x160xbf16>
    %c0_12 = arith.constant 0 : index
    %c0_13 = arith.constant 0 : index
    %35 = vector.load %arg4[%c0_12, %c0_13] : memref<160x64xbf16, #tpu.memory_space<vmem>>, vector<160x64xbf16>
    %cst_14 = arith.constant dense<0.000000e+00> : vector<1536x64xf32>
    %36 = tpu.matmul %34, %35, %cst_14 {dimension_numbers = #tpu.dot_dimension_numbers<[1], [0], [0], [1], [0, 0, 1, 1], [], []>} : vector<1536x160xbf16>, vector<160x64xbf16>, vector<1536x64xf32> -> vector<1536x64xf32>
    %37 = vector.shape_cast %36 : vector<1536x64xf32> to vector<12x128x64xf32>
    %cst_15 = arith.constant dense<0xFF800000> : vector<128x64xf32>
    %38 = vector.multi_reduction <maximumf>, %37, %cst_15 [0] : vector<12x128x64xf32> to vector<128x64xf32>
    %c0_16 = arith.constant 0 : index
    %c0_17 = arith.constant 0 : index
    %39 = vector.load %arg5[%c0_16, %c0_17] : memref<1x64xf32, #tpu.memory_space<vmem>>, vector<1x64xf32>
    %40 = vector.broadcast %39 : vector<1x64xf32> to vector<128x64xf32>
    %41 = arith.addf %38, %40 : vector<128x64xf32>
    %cst_18 = arith.constant 0.000000e+00 : f32
    %42 = vector.broadcast %cst_18 : f32 to vector<128x64xf32>
    %43 = arith.maximumf %41, %42 : vector<128x64xf32>
    %44 = vector.extract_strided_slice %27 {offsets = [0, 0, 0], sizes = [8, 128, 32], strides = [1, 1, 1]} : vector<12x128x32xbf16> to vector<8x128x32xbf16>
    %45 = vector.extract_strided_slice %27 {offsets = [1, 0, 0], sizes = [8, 128, 32], strides = [1, 1, 1]} : vector<12x128x32xbf16> to vector<8x128x32xbf16>
    %46 = vector.extract_strided_slice %27 {offsets = [2, 0, 0], sizes = [8, 128, 32], strides = [1, 1, 1]} : vector<12x128x32xbf16> to vector<8x128x32xbf16>
    %47 = vector.extract_strided_slice %27 {offsets = [3, 0, 0], sizes = [8, 128, 32], strides = [1, 1, 1]} : vector<12x128x32xbf16> to vector<8x128x32xbf16>
    %48 = vector.extract_strided_slice %27 {offsets = [4, 0, 0], sizes = [8, 128, 32], strides = [1, 1, 1]} : vector<12x128x32xbf16> to vector<8x128x32xbf16>
    %49 = tpu.concatenate %44, %45, %46, %47, %48 in 2 : vector<8x128x32xbf16>, vector<8x128x32xbf16>, vector<8x128x32xbf16>, vector<8x128x32xbf16>, vector<8x128x32xbf16> -> vector<8x128x160xbf16>
    %50 = vector.shape_cast %49 : vector<8x128x160xbf16> to vector<1024x160xbf16>
    %c0_19 = arith.constant 0 : index
    %c0_20 = arith.constant 0 : index
    %51 = vector.load %arg6[%c0_19, %c0_20] : memref<160x64xbf16, #tpu.memory_space<vmem>>, vector<160x64xbf16>
    %cst_21 = arith.constant dense<0.000000e+00> : vector<1024x64xf32>
    %52 = tpu.matmul %50, %51, %cst_21 {dimension_numbers = #tpu.dot_dimension_numbers<[1], [0], [0], [1], [0, 0, 1, 1], [], []>} : vector<1024x160xbf16>, vector<160x64xbf16>, vector<1024x64xf32> -> vector<1024x64xf32>
    %53 = vector.shape_cast %52 : vector<1024x64xf32> to vector<8x128x64xf32>
    %cst_22 = arith.constant dense<0xFF800000> : vector<128x64xf32>
    %54 = vector.multi_reduction <maximumf>, %53, %cst_22 [0] : vector<8x128x64xf32> to vector<128x64xf32>
    %c0_23 = arith.constant 0 : index
    %c0_24 = arith.constant 0 : index
    %55 = vector.load %arg7[%c0_23, %c0_24] : memref<1x64xf32, #tpu.memory_space<vmem>>, vector<1x64xf32>
    %56 = vector.broadcast %55 : vector<1x64xf32> to vector<128x64xf32>
    %57 = arith.addf %54, %56 : vector<128x64xf32>
    %cst_25 = arith.constant 0.000000e+00 : f32
    %58 = vector.broadcast %cst_25 : f32 to vector<128x64xf32>
    %59 = arith.maximumf %57, %58 : vector<128x64xf32>
    %60 = tpu.concatenate %43, %59 in 1 : vector<128x64xf32>, vector<128x64xf32> -> vector<128x128xf32>
    %61 = arith.truncf %60 : vector<128x128xf32> to vector<128x128xbf16>
    %c0_26 = arith.constant 0 : index
    %c0_27 = arith.constant 0 : index
    %62 = vector.load %arg8[%c0_26, %c0_27] : memref<128x32xbf16, #tpu.memory_space<vmem>>, vector<128x32xbf16>
    %cst_28 = arith.constant dense<0.000000e+00> : vector<128x32xf32>
    %63 = tpu.matmul %61, %62, %cst_28 {dimension_numbers = #tpu.dot_dimension_numbers<[1], [0], [0], [1], [0, 0, 1, 1], [], []>} : vector<128x128xbf16>, vector<128x32xbf16>, vector<128x32xf32> -> vector<128x32xf32>
    %c0_29 = arith.constant 0 : index
    %c0_30 = arith.constant 0 : index
    %64 = vector.load %arg9[%c0_29, %c0_30] : memref<1x32xf32, #tpu.memory_space<vmem>>, vector<1x32xf32>
    %65 = vector.broadcast %64 : vector<1x32xf32> to vector<128x32xf32>
    %66 = arith.addf %63, %65 : vector<128x32xf32>
    %cst_31 = arith.constant 0.000000e+00 : f32
    %67 = vector.broadcast %cst_31 : f32 to vector<128x32xf32>
    %68 = arith.maximumf %66, %67 : vector<128x32xf32>
    %69 = tpu.transpose %68, [1, 0] : vector<128x32xf32> -> vector<32x128xf32>
    %c0_32 = arith.constant 0 : index
    %c0_33 = arith.constant 0 : index
    %70 = vector.load %arg10[%c0_32, %c0_33] : memref<33x32xf32, #tpu.memory_space<vmem>>, vector<33x32xf32>
    %cst_34 = arith.constant dense<0.000000e+00> : vector<33x128xf32>
    %71 = tpu.matmul %70, %69, %cst_34 {dimension_numbers = #tpu.dot_dimension_numbers<[1], [0], [0], [1], [0, 0, 1, 1], [], []>} : vector<33x32xf32>, vector<32x128xf32>, vector<33x128xf32> -> vector<33x128xf32>
    %72 = vector.extract_strided_slice %71 {offsets = [0, 0], sizes = [32, 128], strides = [1, 1]} : vector<33x128xf32> to vector<32x128xf32>
    %73 = vector.extract_strided_slice %71 {offsets = [32, 0], sizes = [1, 128], strides = [1, 1]} : vector<33x128xf32> to vector<1x128xf32>
    %c0_35 = arith.constant 0 : index
    %c0_36 = arith.constant 0 : index
    %74 = vector.load %arg11[%c0_35, %c0_36] : memref<1x1xf32, #tpu.memory_space<vmem>>, vector<1x1xf32>
    %75 = vector.broadcast %74 : vector<1x1xf32> to vector<1x128xf32>
    %76 = arith.addf %73, %75 : vector<1x128xf32>
    %77 = arith.mulf %72, %72 : vector<32x128xf32>
    %cst_37 = arith.constant dense<0.000000e+00> : vector<128xf32>
    %78 = vector.multi_reduction <add>, %77, %cst_37 [0] : vector<32x128xf32> to vector<128xf32>
    %79 = vector.shape_cast %78 : vector<128xf32> to vector<1x128xf32>
    %80 = arith.mulf %69, %69 : vector<32x128xf32>
    %c0_38 = arith.constant 0 : index
    %c0_39 = arith.constant 0 : index
    %81 = vector.load %arg12[%c0_38, %c0_39] : memref<32x1xf32, #tpu.memory_space<vmem>>, vector<32x1xf32>
    %82 = vector.broadcast %81 : vector<32x1xf32> to vector<32x128xf32>
    %83 = arith.mulf %80, %82 : vector<32x128xf32>
    %cst_40 = arith.constant dense<0.000000e+00> : vector<128xf32>
    %84 = vector.multi_reduction <add>, %83, %cst_40 [0] : vector<32x128xf32> to vector<128xf32>
    %85 = vector.shape_cast %84 : vector<128xf32> to vector<1x128xf32>
    %86 = arith.subf %79, %85 : vector<1x128xf32>
    %cst_41 = arith.constant 5.000000e-01 : f32
    %87 = vector.broadcast %cst_41 : f32 to vector<1x128xf32>
    %88 = arith.mulf %87, %86 : vector<1x128xf32>
    %89 = arith.addf %76, %88 : vector<1x128xf32>
    %90 = arith.negf %89 : vector<1x128xf32>
    %91 = math.exp %90 : vector<1x128xf32>
    %cst_42 = arith.constant 1.000000e+00 : f32
    %92 = vector.broadcast %cst_42 : f32 to vector<1x128xf32>
    %93 = arith.addf %92, %91 : vector<1x128xf32>
    %94 = arith.divf %92, %93 : vector<1x128xf32>
    %c0_43 = arith.constant 0 : index
    %c0_44 = arith.constant 0 : index
    %95 = vector.load %arg13[%c0_43, %c0_44] : memref<1x128xf32, #tpu.memory_space<vmem>>, vector<1x128xf32>
    tpu.vector_store %arg13[%c0_43, %c0_44], %94 {strides = array<i32>} : memref<1x128xf32, #tpu.memory_space<vmem>>, vector<1x128xf32>,
    return
  }
  func.func @transform_0(%arg0: i32) -> (i32, i32) {
    %c0_i32 = arith.constant 0 : i32
    %c0_i32_0 = arith.constant 0 : i32
    return %c0_i32, %arg0 : i32, i32
  }
  func.func @transform_1(%arg0: i32) -> (i32, i32) {
    %c0_i32 = arith.constant 0 : i32
    %c0_i32_0 = arith.constant 0 : i32
    return %c0_i32, %arg0 : i32, i32
  }
  func.func @transform_2(%arg0: i32) -> (i32, i32) {
    %c0_i32 = arith.constant 0 : i32
    %c0_i32_0 = arith.constant 0 : i32
    %c0_i32_1 = arith.constant 0 : i32
    return %c0_i32, %c0_i32_0 : i32, i32
  }
  func.func @transform_3(%arg0: i32) -> (i32, i32) {
    %c0_i32 = arith.constant 0 : i32
    %c0_i32_0 = arith.constant 0 : i32
    %c0_i32_1 = arith.constant 0 : i32
    return %c0_i32, %c0_i32_0 : i32, i32
  }
  func.func @transform_4(%arg0: i32) -> (i32, i32) {
    %c0_i32 = arith.constant 0 : i32
    %c0_i32_0 = arith.constant 0 : i32
    %c0_i32_1 = arith.constant 0 : i32
    return %c0_i32, %c0_i32_0 : i32, i32
  }
  func.func @transform_5(%arg0: i32) -> (i32, i32) {
    %c0_i32 = arith.constant 0 : i32
    %c0_i32_0 = arith.constant 0 : i32
    %c0_i32_1 = arith.constant 0 : i32
    return %c0_i32, %c0_i32_0 : i32, i32
  }
  func.func @transform_6(%arg0: i32) -> (i32, i32) {
    %c0_i32 = arith.constant 0 : i32
    %c0_i32_0 = arith.constant 0 : i32
    %c0_i32_1 = arith.constant 0 : i32
    return %c0_i32, %c0_i32_0 : i32, i32
  }
  func.func @transform_7(%arg0: i32) -> (i32, i32) {
    %c0_i32 = arith.constant 0 : i32
    %c0_i32_0 = arith.constant 0 : i32
    %c0_i32_1 = arith.constant 0 : i32
    return %c0_i32, %c0_i32_0 : i32, i32
  }
  func.func @transform_8(%arg0: i32) -> (i32, i32) {
    %c0_i32 = arith.constant 0 : i32
    %c0_i32_0 = arith.constant 0 : i32
    %c0_i32_1 = arith.constant 0 : i32
    return %c0_i32, %c0_i32_0 : i32, i32
  }
  func.func @transform_9(%arg0: i32) -> (i32, i32) {
    %c0_i32 = arith.constant 0 : i32
    %c0_i32_0 = arith.constant 0 : i32
    %c0_i32_1 = arith.constant 0 : i32
    return %c0_i32, %c0_i32_0 : i32, i32
  }
  func.func @transform_10(%arg0: i32) -> (i32, i32) {
    %c0_i32 = arith.constant 0 : i32
    %c0_i32_0 = arith.constant 0 : i32
    %c0_i32_1 = arith.constant 0 : i32
    return %c0_i32, %c0_i32_0 : i32, i32
  }
  func.func @transform_11(%arg0: i32) -> (i32, i32) {
    %c0_i32 = arith.constant 0 : i32
    %c0_i32_0 = arith.constant 0 : i32
    %c0_i32_1 = arith.constant 0 : i32
    return %c0_i32, %c0_i32_0 : i32, i32
  }
  func.func @transform_12(%arg0: i32) -> (i32, i32) {
    %c0_i32 = arith.constant 0 : i32
    %c0_i32_0 = arith.constant 0 : i32
    return %c0_i32, %arg0 : i32, i32
  }
}

</mosaic_0001>

<llo_original>
// kernel: tpu_custom_call.1
$region0: #{tpu_custom_call.1}
  #allocation0 [shape = 'u32[]', space=smem, size = 0x4, offset = 0x4, fixed_abs, tag = 'smem constant byte address 0x4 - core index']
  #allocation1 [shape = 'u32[144,128]{1,0:T(1,128)}', space=vmem, size = 0x12000, scoped, tag = 'internal scratch']
  #allocation2 [shape = 'f32[1,1]{1,0:T(1,128)S(1)}', space=vmem, size = 0x200, scoped, tag = 'scoped memory for tpu_custom_call.1']
  %s0 = inlined_call_operand.vmem [shape: s32[16,256], index: 0, kind: input, shape index: {}]
  %s1 = inlined_call_operand.vmem [shape: s32[12,256], index: 1, kind: input, shape index: {}]
  %s2 = inlined_call_operand.vmem [shape: bf16[128,32], index: 2, kind: input, shape index: {}]
  %s3 = inlined_call_operand.vmem [shape: bf16[160,64], index: 3, kind: input, shape index: {}]
  %s4 = inlined_call_operand.vmem [shape: f32[1,64], index: 4, kind: input, shape index: {}]
  %s5 = inlined_call_operand.vmem [shape: bf16[160,64], index: 5, kind: input, shape index: {}]
  %s6 = inlined_call_operand.vmem [shape: f32[1,64], index: 6, kind: input, shape index: {}]
  %s7 = inlined_call_operand.vmem [shape: bf16[128,32], index: 7, kind: input, shape index: {}]
  %s8 = inlined_call_operand.vmem [shape: f32[1,32], index: 8, kind: input, shape index: {}]
  %s9 = inlined_call_operand.vmem [shape: f32[33,32], index: 9, kind: input, shape index: {}]
  %s10 = inlined_call_operand.<no memory space> [shape: f32[1,1], index: 10, kind: input, shape index: {}]
  %s11 = inlined_call_operand.vmem [shape: f32[32,1], index: 11, kind: input, shape index: {}]
  %s12 = inlined_call_operand.hbm [shape: f32[1,256], index: 12, kind: output, shape index: {}]
  %s13 = sld [smem:[#allocation0]]
  $region157: #{tpu_custom_call.1} parent=0
    _
  %s15 = ssub.s32 1, %s13
  %s16 = scalar_select 0, %s15, %s13
  %v17 = vstv %s10
  %18 = vst [vmem:[#allocation2] sm:$0x1] %v17
  $region1: #{tpu_custom_call.1} parent=0
    #allocation3 [shape = 'u8[16384]{0}', space=vmem, size = 0x4000, scoped, tag = 'input window, operand 0']
    #allocation4 [shape = 'u8[16384]{0}', space=vmem, size = 0x4000, scoped, tag = 'input window, operand 1']
    #allocation5 [shape = 'u8[1024]{0}', space=vmem, size = 0x400, scoped, tag = 'output window, operand 0']
    #allocation6 [shape = 's32[2]{0}', space=sflag, size = 0x8, scoped, tag = 'scoped memory for tpu_custom_call.1']
    %19 = vsyncpa [#allocation6], 0
    %s20 = scalar_lea.sflag [#allocation6], 1
    %21 = vsyncpa %s20, 0
    loop: start=0, step=1, limit=4
    $region2: #{tpu_custom_call.1} parent=1 // loop_pre_header
      _
    $region3: #{tpu_custom_call.1} parent=1 // loop_header
      %s23 = sphi 0, %s27
      %p24 = scmp.ge.s32.totalorder %s23, 4
      %s33 = sphi 0, %s35
      %s36 = sphi 0, %s33
      %s37 = sphi 0, %s36
      %s53 = sphi 0, %s37
      %s59 = sphi 0, %s61
      %s62 = sphi 0, %s59
      %s63 = sphi 0, %s62
      %s79 = sphi 0, %s63
      %s83 = sphi 0, %s83
      %s85 = sphi 0, %s83
      %s86 = sphi 0, %s85
      %s100 = sphi 0, %s86
      %s104 = sphi 0, %s104
      %s106 = sphi 0, %s104
      %s107 = sphi 0, %s106
      %s121 = sphi 0, %s107
      %s125 = sphi 0, %s125
      %s127 = sphi 0, %s125
      %s128 = sphi 0, %s127
      %s142 = sphi 0, %s128
      %s146 = sphi 0, %s146
      %s148 = sphi 0, %s146
      %s149 = sphi 0, %s148
      %s163 = sphi 0, %s149
      %s167 = sphi 0, %s167
      %s169 = sphi 0, %s167
      %s170 = sphi 0, %s169
      %s184 = sphi 0, %s170
      %s188 = sphi 0, %s188
      %s190 = sphi 0, %s188
      %s191 = sphi 0, %s190
      %s205 = sphi 0, %s191
      %s209 = sphi 0, %s209
      %s211 = sphi 0, %s209
      %s212 = sphi 0, %s211
      %s226 = sphi 0, %s212
      %s230 = sphi 0, %s230
      %s232 = sphi 0, %s230
      %s233 = sphi 0, %s232
      %s247 = sphi 0, %s233
      %s251 = sphi 0, %s251
      %s253 = sphi 0, %s251
      %s254 = sphi 0, %s253
      %s268 = sphi 0, %s254
      %s272 = sphi 0, %s272
      %s274 = sphi 0, %s272
      %s275 = sphi 0, %s274
      %s289 = sphi 0, %s275
      %s295 = sphi 0, %s297
      %s298 = sphi 0, %s295
      %s299 = sphi 0, %s298
      %s315 = sphi 0, %s299
    $region4: #{tpu_custom_call.1} parent=1 // loop_header_branch
      %26 = sbr.rel (%p24) target = $region8
    $region5: #{tpu_custom_call.1} parent=1 // loop_body
      %s28 = ssub.s32 %s23, 1
      %s29 = ssub.s32 %s23, 2
      %s30 = sadd.s32 %s23, 1
      %s31 = ssub.s32 %s23, %s30
      %p32 = scmp.eq.s32.totalorder %s31, 0
      %s34 = sadd.s32 %s33, 1
      %s35 = scalar_select %p32, %s33, %s34
      %p38 = pneg %p32
      %p39 = scmp.eq.s32.totalorder %s23, 1
      %p40 = por %p38, %p39
      %p41 = scmp.ne.s32.totalorder %s33, %s36
      %p42 = scmp.eq.s32.totalorder %s23, 0
      %p43 = por %p41, %p42
      %p44 = scmp.ne.s32.totalorder %s33, %s36
      %p45 = scmp.eq.s32.totalorder %s28, 1
      %p46 = por %p44, %p45
      %p47 = scmp.ne.s32.totalorder %s36, %s37
      %p48 = scmp.eq.s32.totalorder %s28, 0
      %p49 = por %p47, %p48
      %p50 = scmp.ne.s32.totalorder %s36, %s37
      %p51 = scmp.eq.s32.totalorder %s29, 1
      %p52 = por %p50, %p51
      %p54 = scmp.ne.s32.totalorder %s37, %s53
      %p55 = scmp.eq.s32.totalorder %s29, 0
      %p56 = por %p54, %p55
      %s57 = ssub.s32 %s23, %s30
      %p58 = scmp.eq.s32.totalorder %s57, 0
      %s60 = sadd.s32 %s59, 1
      %s61 = scalar_select %p58, %s59, %s60
      %p64 = pneg %p58
      %p65 = scmp.eq.s32.totalorder %s23, 1
      %p66 = por %p64, %p65
      %p67 = scmp.ne.s32.totalorder %s59, %s62
      %p68 = scmp.eq.s32.totalorder %s23, 0
      %p69 = por %p67, %p68
      %p70 = scmp.ne.s32.totalorder %s59, %s62
      %p71 = scmp.eq.s32.totalorder %s28, 1
      %p72 = por %p70, %p71
      %p73 = scmp.ne.s32.totalorder %s62, %s63
      %p74 = scmp.eq.s32.totalorder %s28, 0
      %p75 = por %p73, %p74
      %p76 = scmp.ne.s32.totalorder %s62, %s63
      %p77 = scmp.eq.s32.totalorder %s29, 1
      %p78 = por %p76, %p77
      %p80 = scmp.ne.s32.totalorder %s63, %s79
      %p81 = scmp.eq.s32.totalorder %s29, 0
      %p82 = por %p80, %p81
      %s84 = sadd.s32 %s83, 1
      %p87 = scmp.eq.s32.totalorder %s23, 1
      %p88 = scmp.ne.s32.totalorder %s83, %s85
      %p89 = scmp.eq.s32.totalorder %s23, 0
      %p90 = por %p88, %p89
      %p91 = scmp.ne.s32.totalorder %s83, %s85
      %p92 = scmp.eq.s32.totalorder %s28, 1
      %p93 = por %p91, %p92
      %p94 = scmp.ne.s32.totalorder %s85, %s86
      %p95 = scmp.eq.s32.totalorder %s28, 0
      %p96 = por %p94, %p95
      %p97 = scmp.ne.s32.totalorder %s85, %s86
      %p98 = scmp.eq.s32.totalorder %s29, 1
      %p99 = por %p97, %p98
      %p101 = scmp.ne.s32.totalorder %s86, %s100
      %p102 = scmp.eq.s32.totalorder %s29, 0
      %p103 = por %p101, %p102
      %s105 = sadd.s32 %s104, 1
      %p108 = scmp.eq.s32.totalorder %s23, 1
      %p109 = scmp.ne.s32.totalorder %s104, %s106
      %p110 = scmp.eq.s32.totalorder %s23, 0
      %p111 = por %p109, %p110
      %p112 = scmp.ne.s32.totalorder %s104, %s106
      %p113 = scmp.eq.s32.totalorder %s28, 1
      %p114 = por %p112, %p113
      %p115 = scmp.ne.s32.totalorder %s106, %s107
      %p116 = scmp.eq.s32.totalorder %s28, 0
      %p117 = por %p115, %p116
      %p118 = scmp.ne.s32.totalorder %s106, %s107
      %p119 = scmp.eq.s32.totalorder %s29, 1
      %p120 = por %p118, %p119
      %p122 = scmp.ne.s32.totalorder %s107, %s121
      %p123 = scmp.eq.s32.totalorder %s29, 0
      %p124 = por %p122, %p123
      %s126 = sadd.s32 %s125, 1
      %p129 = scmp.eq.s32.totalorder %s23, 1
      %p130 = scmp.ne.s32.totalorder %s125, %s127
      %p131 = scmp.eq.s32.totalorder %s23, 0
      %p132 = por %p130, %p131
      %p133 = scmp.ne.s32.totalorder %s125, %s127
      %p134 = scmp.eq.s32.totalorder %s28, 1
      %p135 = por %p133, %p134
      %p136 = scmp.ne.s32.totalorder %s127, %s128
      %p137 = scmp.eq.s32.totalorder %s28, 0
      %p138 = por %p136, %p137
      %p139 = scmp.ne.s32.totalorder %s127, %s128
      %p140 = scmp.eq.s32.totalorder %s29, 1
      %p141 = por %p139, %p140
      %p143 = scmp.ne.s32.totalorder %s128, %s142
      %p144 = scmp.eq.s32.totalorder %s29, 0
      %p145 = por %p143, %p144
      %s147 = sadd.s32 %s146, 1
      %p150 = scmp.eq.s32.totalorder %s23, 1
      %p151 = scmp.ne.s32.totalorder %s146, %s148
      %p152 = scmp.eq.s32.totalorder %s23, 0
      %p153 = por %p151, %p152
      %p154 = scmp.ne.s32.totalorder %s146, %s148
      %p155 = scmp.eq.s32.totalorder %s28, 1
      %p156 = por %p154, %p155
      %p157 = scmp.ne.s32.totalorder %s148, %s149
      %p158 = scmp.eq.s32.totalorder %s28, 0
      %p159 = por %p157, %p158
      %p160 = scmp.ne.s32.totalorder %s148, %s149
      %p161 = scmp.eq.s32.totalorder %s29, 1
      %p162 = por %p160, %p161
      %p164 = scmp.ne.s32.totalorder %s149, %s163
      %p165 = scmp.eq.s32.totalorder %s29, 0
      %p166 = por %p164, %p165
      %s168 = sadd.s32 %s167, 1
      %p171 = scmp.eq.s32.totalorder %s23, 1
      %p172 = scmp.ne.s32.totalorder %s167, %s169
      %p173 = scmp.eq.s32.totalorder %s23, 0
      %p174 = por %p172, %p173
      %p175 = scmp.ne.s32.totalorder %s167, %s169
      %p176 = scmp.eq.s32.totalorder %s28, 1
      %p177 = por %p175, %p176
      %p178 = scmp.ne.s32.totalorder %s169, %s170
      %p179 = scmp.eq.s32.totalorder %s28, 0
      %p180 = por %p178, %p179
      %p181 = scmp.ne.s32.totalorder %s169, %s170
      %p182 = scmp.eq.s32.totalorder %s29, 1
      %p183 = por %p181, %p182
      %p185 = scmp.ne.s32.totalorder %s170, %s184
      %p186 = scmp.eq.s32.totalorder %s29, 0
      %p187 = por %p185, %p186
      %s189 = sadd.s32 %s188, 1
      %p192 = scmp.eq.s32.totalorder %s23, 1
      %p193 = scmp.ne.s32.totalorder %s188, %s190
      %p194 = scmp.eq.s32.totalorder %s23, 0
      %p195 = por %p193, %p194
      %p196 = scmp.ne.s32.totalorder %s188, %s190
      %p197 = scmp.eq.s32.totalorder %s28, 1
      %p198 = por %p196, %p197
      %p199 = scmp.ne.s32.totalorder %s190, %s191
      %p200 = scmp.eq.s32.totalorder %s28, 0
      %p201 = por %p199, %p200
      %p202 = scmp.ne.s32.totalorder %s190, %s191
      %p203 = scmp.eq.s32.totalorder %s29, 1
      %p204 = por %p202, %p203
      %p206 = scmp.ne.s32.totalorder %s191, %s205
      %p207 = scmp.eq.s32.totalorder %s29, 0
      %p208 = por %p206, %p207
      %s210 = sadd.s32 %s209, 1
      %p213 = scmp.eq.s32.totalorder %s23, 1
      %p214 = scmp.ne.s32.totalorder %s209, %s211
      %p215 = scmp.eq.s32.totalorder %s23, 0
      %p216 = por %p214, %p215
      %p217 = scmp.ne.s32.totalorder %s209, %s211
      %p218 = scmp.eq.s32.totalorder %s28, 1
      %p219 = por %p217, %p218
      %p220 = scmp.ne.s32.totalorder %s211, %s212
      %p221 = scmp.eq.s32.totalorder %s28, 0
      %p222 = por %p220, %p221
      %p223 = scmp.ne.s32.totalorder %s211, %s212
      %p224 = scmp.eq.s32.totalorder %s29, 1
      %p225 = por %p223, %p224
      %p227 = scmp.ne.s32.totalorder %s212, %s226
      %p228 = scmp.eq.s32.totalorder %s29, 0
      %p229 = por %p227, %p228
      %s231 = sadd.s32 %s230, 1
      %p234 = scmp.eq.s32.totalorder %s23, 1
      %p235 = scmp.ne.s32.totalorder %s230, %s232
      %p236 = scmp.eq.s32.totalorder %s23, 0
      %p237 = por %p235, %p236
      %p238 = scmp.ne.s32.totalorder %s230, %s232
      %p239 = scmp.eq.s32.totalorder %s28, 1
      %p240 = por %p238, %p239
      %p241 = scmp.ne.s32.totalorder %s232, %s233
      %p242 = scmp.eq.s32.totalorder %s28, 0
      %p243 = por %p241, %p242
      %p244 = scmp.ne.s32.totalorder %s232, %s233
      %p245 = scmp.eq.s32.totalorder %s29, 1
      %p246 = por %p244, %p245
      %p248 = scmp.ne.s32.totalorder %s233, %s247
      %p249 = scmp.eq.s32.totalorder %s29, 0
      %p250 = por %p248, %p249
      %s252 = sadd.s32 %s251, 1
      %p255 = scmp.eq.s32.totalorder %s23, 1
      %p256 = scmp.ne.s32.totalorder %s251, %s253
      %p257 = scmp.eq.s32.totalorder %s23, 0
      %p258 = por %p256, %p257
      %p259 = scmp.ne.s32.totalorder %s251, %s253
      %p260 = scmp.eq.s32.totalorder %s28, 1
      %p261 = por %p259, %p260
      %p262 = scmp.ne.s32.totalorder %s253, %s254
      %p263 = scmp.eq.s32.totalorder %s28, 0
      %p264 = por %p262, %p263
      %p265 = scmp.ne.s32.totalorder %s253, %s254
      %p266 = scmp.eq.s32.totalorder %s29, 1
      %p267 = por %p265, %p266
      %p269 = scmp.ne.s32.totalorder %s254, %s268
      %p270 = scmp.eq.s32.totalorder %s29, 0
      %p271 = por %p269, %p270
      %s273 = sadd.s32 %s272, 1
      %p276 = scmp.eq.s32.totalorder %s23, 1
      %p277 = scmp.ne.s32.totalorder %s272, %s274
      %p278 = scmp.eq.s32.totalorder %s23, 0
      %p279 = por %p277, %p278
      %p280 = scmp.ne.s32.totalorder %s272, %s274
      %p281 = scmp.eq.s32.totalorder %s28, 1
      %p282 = por %p280, %p281
      %p283 = scmp.ne.s32.totalorder %s274, %s275
      %p284 = scmp.eq.s32.totalorder %s28, 0
      %p285 = por %p283, %p284
      %p286 = scmp.ne.s32.totalorder %s274, %s275
      %p287 = scmp.eq.s32.totalorder %s29, 1
      %p288 = por %p286, %p287
      %p290 = scmp.ne.s32.totalorder %s275, %s289
      %p291 = scmp.eq.s32.totalorder %s29, 0
      %p292 = por %p290, %p291
      %s293 = ssub.s32 %s23, %s30
      %p294 = scmp.eq.s32.totalorder %s293, 0
      %s296 = sadd.s32 %s295, 1
      %s297 = scalar_select %p294, %s295, %s296
      %p300 = pneg %p294
      %p301 = scmp.eq.s32.totalorder %s23, 1
      %p302 = por %p300, %p301
      %p303 = scmp.ne.s32.totalorder %s295, %s298
      %p304 = scmp.eq.s32.totalorder %s23, 0
      %p305 = por %p303, %p304
      %p306 = scmp.ne.s32.totalorder %s295, %s298
      %p307 = scmp.eq.s32.totalorder %s28, 1
      %p308 = por %p306, %p307
      %p309 = scmp.ne.s32.totalorder %s298, %s299
      %p310 = scmp.eq.s32.totalorder %s28, 0
      %p311 = por %p309, %p310
      %p312 = scmp.ne.s32.totalorder %s298, %s299
      %p313 = scmp.eq.s32.totalorder %s29, 1
      %p314 = por %p312, %p313
      %p316 = scmp.ne.s32.totalorder %s299, %s315
      %p317 = scmp.eq.s32.totalorder %s29, 0
      %p318 = por %p316, %p317
      %p319 = scmp.le.s32.totalorder 1, %s23
      %p320 = scmp.lt.s32.totalorder %s23, 3
      %p321 = pnand %p319, %p320
      %p322 = pneg %p321
      // Predicated region
      $region9: #{tpu_custom_call.1} parent=5 // pred_check
        _
      $region10: #{tpu_custom_call.1} parent=5 // pred_check_branch
        %324 = sbr.rel (%p321) target = $region12
      $region11: #{tpu_custom_call.1} parent=5 // pred_region
        %s325 = ssub.s32 %s23, 1
        // Predicated region
        $region13: #{tpu_custom_call.1} parent=11 // pred_check
          %p326 = pneg %p96
        $region14: #{tpu_custom_call.1} parent=11 // pred_check_branch
          %328 = sbr.rel (%p326) target = $region16
        $region15: #{tpu_custom_call.1} parent=11 // pred_region
          _
        $region16: #{tpu_custom_call.1} parent=11 // pred_fallthru
          _
        // Predicated region
        $region17: #{tpu_custom_call.1} parent=11 // pred_check
          %p329 = pneg %p117
        $region18: #{tpu_custom_call.1} parent=11 // pred_check_branch
          %331 = sbr.rel (%p329) target = $region20
        $region19: #{tpu_custom_call.1} parent=11 // pred_region
          _
        $region20: #{tpu_custom_call.1} parent=11 // pred_fallthru
          _
        // Predicated region
        $region21: #{tpu_custom_call.1} parent=11 // pred_check
          %p332 = pneg %p138
        $region22: #{tpu_custom_call.1} parent=11 // pred_check_branch
          %334 = sbr.rel (%p332) target = $region24
        $region23: #{tpu_custom_call.1} parent=11 // pred_region
          _
        $region24: #{tpu_custom_call.1} parent=11 // pred_fallthru
          _
        // Predicated region
        $region25: #{tpu_custom_call.1} parent=11 // pred_check
          %p335 = pneg %p159
        $region26: #{tpu_custom_call.1} parent=11 // pred_check_branch
          %337 = sbr.rel (%p335) target = $region28
        $region27: #{tpu_custom_call.1} parent=11 // pred_region
          _
        $region28: #{tpu_custom_call.1} parent=11 // pred_fallthru
          _
        // Predicated region
        $region29: #{tpu_custom_call.1} parent=11 // pred_check
          %p338 = pneg %p180
        $region30: #{tpu_custom_call.1} parent=11 // pred_check_branch
          %340 = sbr.rel (%p338) target = $region32
        $region31: #{tpu_custom_call.1} parent=11 // pred_region
          _
        $region32: #{tpu_custom_call.1} parent=11 // pred_fallthru
          _
        // Predicated region
        $region33: #{tpu_custom_call.1} parent=11 // pred_check
          %p341 = pneg %p201
        $region34: #{tpu_custom_call.1} parent=11 // pred_check_branch
          %343 = sbr.rel (%p341) target = $region36
        $region35: #{tpu_custom_call.1} parent=11 // pred_region
          _
        $region36: #{tpu_custom_call.1} parent=11 // pred_fallthru
          _
        // Predicated region
        $region37: #{tpu_custom_call.1} parent=11 // pred_check
          %p344 = pneg %p222
        $region38: #{tpu_custom_call.1} parent=11 // pred_check_branch
          %346 = sbr.rel (%p344) target = $region40
        $region39: #{tpu_custom_call.1} parent=11 // pred_region
          _
        $region40: #{tpu_custom_call.1} parent=11 // pred_fallthru
          _
        // Predicated region
        $region41: #{tpu_custom_call.1} parent=11 // pred_check
          %p347 = pneg %p243
        $region42: #{tpu_custom_call.1} parent=11 // pred_check_branch
          %349 = sbr.rel (%p347) target = $region44
        $region43: #{tpu_custom_call.1} parent=11 // pred_region
          _
        $region44: #{tpu_custom_call.1} parent=11 // pred_fallthru
          _
        // Predicated region
        $region45: #{tpu_custom_call.1} parent=11 // pred_check
          %p350 = pneg %p264
        $region46: #{tpu_custom_call.1} parent=11 // pred_check_branch
          %352 = sbr.rel (%p350) target = $region48
        $region47: #{tpu_custom_call.1} parent=11 // pred_region
          _
        $region48: #{tpu_custom_call.1} parent=11 // pred_fallthru
          _
        // Predicated region
        $region49: #{tpu_custom_call.1} parent=11 // pred_check
          %p353 = pneg %p285
        $region50: #{tpu_custom_call.1} parent=11 // pred_check_branch
          %355 = sbr.rel (%p353) target = $region52
        $region51: #{tpu_custom_call.1} parent=11 // pred_region
          _
        $region52: #{tpu_custom_call.1} parent=11 // pred_fallthru
          _
      $region12: #{tpu_custom_call.1} parent=5 // pred_fallthru
        _
      %p356 = scmp.lt.s32.totalorder %s23, 2
      // Predicated region
      $region53: #{tpu_custom_call.1} parent=5 // pred_check
        %p357 = pneg %p356
      $region54: #{tpu_custom_call.1} parent=5 // pred_check_branch
        %359 = sbr.rel (%p357) target = $region56
      $region55: #{tpu_custom_call.1} parent=5 // pred_region
        // Predicated region
        $region57: #{tpu_custom_call.1} parent=55 // pred_check
          %p360 = pneg %p43
        $region58: #{tpu_custom_call.1} parent=55 // pred_check_branch
          %362 = sbr.rel (%p360) target = $region60
        $region59: #{tpu_custom_call.1} parent=55 // pred_region
          %s363 = sand.u32 %s33, 1
          %s364 = sand.u32 %s33, 1
          %s365 = smul.addr %s364, 16
          %s366 = scalar_lea.vmem [#allocation3], %s365
          %s367 = smul.addr %s23, 8
          %s368 = scalar_lea.vmem %s0, %s367
          // Predicated region
          $region61: #{tpu_custom_call.1} parent=59 // pred_check
            _
          $region62: #{tpu_custom_call.1} parent=59 // pred_check_branch
            %370 = sbr.rel (0) target = $region64
          $region63: #{tpu_custom_call.1} parent=59 // pred_region
            // Predicated region
            $region65: #{tpu_custom_call.1} parent=63 // pred_check
              _
            $region66: #{tpu_custom_call.1} parent=63 // pred_check_branch
              %372 = sbr.rel (0) target = $region68
            $region67: #{tpu_custom_call.1} parent=63 // pred_region
              // Predicated region
              $region80: #{tpu_custom_call.1} parent=67 // pred_check
                _
              $region81: #{tpu_custom_call.1} parent=67 // pred_check_branch
                %390 = sbr.rel (0) target = $region83
              $region82: #{tpu_custom_call.1} parent=67 // pred_region
                loop: start=0, step=1, limit=1
                $region84: #{tpu_custom_call.1} parent=82 // loop_pre_header
                  _
                $region85: #{tpu_custom_call.1} parent=82 // loop_header
                  %s392 = sphi 0, %s396
                  %p393 = scmp.ge.s32.totalorder %s392, 1
                  %s397 = sphi %s368, %s368
                  %s398 = sphi %s366, %s366
                $region86: #{tpu_custom_call.1} parent=82 // loop_header_branch
                  %395 = sbr.rel (%p393) target = $region90
                $region87: #{tpu_custom_call.1} parent=82 // loop_body
                  %v399 = vld [vmem:[%s397] sm:$0xff]
                  %400 = vst [vmem:[%s398] sm:$0xff] %v399
                  %v401 = vld [vmem:[%s397 + $0x10] sm:$0xff]
                  %402 = vst [vmem:[%s398 + $0x8] sm:$0xff] %v401
                $region88: #{tpu_custom_call.1} parent=82 // loop_footer
                  %s396 = sadd.s32 1, %s392
                $region89: #{tpu_custom_call.1} parent=82 // loop_footer_branch
                  %391 = sbr.rel target = $region85
                $region90: #{tpu_custom_call.1} parent=82 // loop_exit
                  _
              $region83: #{tpu_custom_call.1} parent=67 // pred_fallthru
                _
              // Predicated region
              $region91: #{tpu_custom_call.1} parent=67 // pred_check
                _
              $region92: #{tpu_custom_call.1} parent=67 // pred_check_branch
                %404 = sbr.rel target = $region94
              $region93: #{tpu_custom_call.1} parent=67 // pred_region
                _
              $region94: #{tpu_custom_call.1} parent=67 // pred_fallthru
                _
            $region68: #{tpu_custom_call.1} parent=63 // pred_fallthru
              _
            // Predicated region
            $region69: #{tpu_custom_call.1} parent=63 // pred_check
              _
            $region70: #{tpu_custom_call.1} parent=63 // pred_check_branch
              %374 = sbr.rel target = $region72
            $region71: #{tpu_custom_call.1} parent=63 // pred_region
              %s376 = ssub.s32 256, 1
              loop: start=0, step=1, limit=1
              $region73: #{tpu_custom_call.1} parent=71 // loop_pre_header
                _
              $region74: #{tpu_custom_call.1} parent=71 // loop_header
                %s378 = sphi 0, %s382
                %p379 = scmp.ge.s32.totalorder %s378, 1
                %s383 = sphi %s368, %s368
                %s384 = sphi %s366, %s366
              $region75: #{tpu_custom_call.1} parent=71 // loop_header_branch
                %381 = sbr.rel (%p379) target = $region79
              $region76: #{tpu_custom_call.1} parent=71 // loop_body
                %v385 = vld [vmem:[%s383] sm:%s376]
                %386 = vst [vmem:[%s384] sm:%s376] %v385
                %v387 = vld [vmem:[%s383 + $0x10] sm:%s376]
                %388 = vst [vmem:[%s384 + $0x8] sm:%s376] %v387
              $region77: #{tpu_custom_call.1} parent=71 // loop_footer
                %s382 = sadd.s32 1, %s378
              $region78: #{tpu_custom_call.1} parent=71 // loop_footer_branch
                %377 = sbr.rel target = $region74
              $region79: #{tpu_custom_call.1} parent=71 // loop_exit
                _
            $region72: #{tpu_custom_call.1} parent=63 // pred_fallthru
              _
          $region64: #{tpu_custom_call.1} parent=59 // pred_fallthru
            _
          %405 = vnop
        $region60: #{tpu_custom_call.1} parent=55 // pred_fallthru
          _
        // Predicated region
        $region95: #{tpu_custom_call.1} parent=55 // pred_check
          %p406 = pneg %p69
        $region96: #{tpu_custom_call.1} parent=55 // pred_check_branch
          %408 = sbr.rel (%p406) target = $region98
        $region97: #{tpu_custom_call.1} parent=55 // pred_region
          %s409 = sand.u32 %s59, 1
          %s410 = sand.u32 %s59, 1
          %s411 = smul.addr %s410, 16
          %s412 = scalar_lea.vmem [#allocation4], %s411
          %s413 = smul.addr %s23, 8
          %s414 = scalar_lea.vmem %s1, %s413
          // Predicated region
          $region99: #{tpu_custom_call.1} parent=97 // pred_check
            _
          $region100: #{tpu_custom_call.1} parent=97 // pred_check_branch
            %416 = sbr.rel (0) target = $region102
          $region101: #{tpu_custom_call.1} parent=97 // pred_region
            // Predicated region
            $region103: #{tpu_custom_call.1} parent=101 // pred_check
              _
            $region104: #{tpu_custom_call.1} parent=101 // pred_check_branch
              %418 = sbr.rel (0) target = $region106
            $region105: #{tpu_custom_call.1} parent=101 // pred_region
              // Predicated region
              $region118: #{tpu_custom_call.1} parent=105 // pred_check
                _
              $region119: #{tpu_custom_call.1} parent=105 // pred_check_branch
                %436 = sbr.rel (0) target = $region121
              $region120: #{tpu_custom_call.1} parent=105 // pred_region
                loop: start=0, step=1, limit=1
                $region122: #{tpu_custom_call.1} parent=120 // loop_pre_header
                  _
                $region123: #{tpu_custom_call.1} parent=120 // loop_header
                  %s438 = sphi 0, %s442
                  %p439 = scmp.ge.s32.totalorder %s438, 1
                  %s443 = sphi %s414, %s414
                  %s444 = sphi %s412, %s412
                $region124: #{tpu_custom_call.1} parent=120 // loop_header_branch
                  %441 = sbr.rel (%p439) target = $region128
                $region125: #{tpu_custom_call.1} parent=120 // loop_body
                  %v445 = vld [vmem:[%s443] sm:$0xff]
                  %446 = vst [vmem:[%s444] sm:$0xff] %v445
                  %v447 = vld [vmem:[%s443 + $0x10] sm:$0xff]
                  %448 = vst [vmem:[%s444 + $0x8] sm:$0xff] %v447
                $region126: #{tpu_custom_call.1} parent=120 // loop_footer
                  %s442 = sadd.s32 1, %s438
                $region127: #{tpu_custom_call.1} parent=120 // loop_footer_branch
                  %437 = sbr.rel target = $region123
                $region128: #{tpu_custom_call.1} parent=120 // loop_exit
                  _
              $region121: #{tpu_custom_call.1} parent=105 // pred_fallthru
                _
              // Predicated region
              $region129: #{tpu_custom_call.1} parent=105 // pred_check
                _
              $region130: #{tpu_custom_call.1} parent=105 // pred_check_branch
                %450 = sbr.rel target = $region132
              $region131: #{tpu_custom_call.1} parent=105 // pred_region
                _
              $region132: #{tpu_custom_call.1} parent=105 // pred_fallthru
                _
            $region106: #{tpu_custom_call.1} parent=101 // pred_fallthru
              _
            // Predicated region
            $region107: #{tpu_custom_call.1} parent=101 // pred_check
              _
            $region108: #{tpu_custom_call.1} parent=101 // pred_check_branch
              %420 = sbr.rel target = $region110
            $region109: #{tpu_custom_call.1} parent=101 // pred_region
              %s422 = ssub.s32 256, 1
              loop: start=0, step=1, limit=1
              $region111: #{tpu_custom_call.1} parent=109 // loop_pre_header
                _
              $region112: #{tpu_custom_call.1} parent=109 // loop_header
                %s424 = sphi 0, %s428
                %p425 = scmp.ge.s32.totalorder %s424, 1
                %s429 = sphi %s414, %s414
                %s430 = sphi %s412, %s412
              $region113: #{tpu_custom_call.1} parent=109 // loop_header_branch
                %427 = sbr.rel (%p425) target = $region117
              $region114: #{tpu_custom_call.1} parent=109 // loop_body
                %v431 = vld [vmem:[%s429] sm:%s422]
                %432 = vst [vmem:[%s430] sm:%s422] %v431
                %v433 = vld [vmem:[%s429 + $0x10] sm:%s422]
                %434 = vst [vmem:[%s430 + $0x8] sm:%s422] %v433
              $region115: #{tpu_custom_call.1} parent=109 // loop_footer
                %s428 = sadd.s32 1, %s424
              $region116: #{tpu_custom_call.1} parent=109 // loop_footer_branch
                %423 = sbr.rel target = $region112
              $region117: #{tpu_custom_call.1} parent=109 // loop_exit
                _
            $region110: #{tpu_custom_call.1} parent=101 // pred_fallthru
              _
          $region102: #{tpu_custom_call.1} parent=97 // pred_fallthru
            _
          %451 = vnop
        $region98: #{tpu_custom_call.1} parent=55 // pred_fallthru
          _
      $region56: #{tpu_custom_call.1} parent=5 // pred_fallthru
        _
      %p452 = scmp.le.s32.totalorder 1, %s23
      %p453 = scmp.lt.s32.totalorder %s23, 3
      %p454 = pnand %p452, %p453
      %p455 = pneg %p454
      // Predicated region
      $region133: #{tpu_custom_call.1} parent=5 // pred_check
        _
      $region134: #{tpu_custom_call.1} parent=5 // pred_check_branch
        %457 = sbr.rel (%p454) target = $region136
      $region135: #{tpu_custom_call.1} parent=5 // pred_region
        %s458 = ssub.s32 %s23, 1
        %s459 = sand.u32 %s36, 1
        %s460 = sand.u32 %s36, 1
        %s461 = smul.addr %s460, 16
        %s462 = scalar_lea.vmem [#allocation3], %s461
        // Predicated region
        $region137: #{tpu_custom_call.1} parent=135 // pred_check
          %p463 = pneg %p49
        $region138: #{tpu_custom_call.1} parent=135 // pred_check_branch
          %465 = sbr.rel (%p463) target = $region140
        $region139: #{tpu_custom_call.1} parent=135 // pred_region
          _
        $region140: #{tpu_custom_call.1} parent=135 // pred_fallthru
          _
        %s466 = sand.u32 %s62, 1
        %s467 = sand.u32 %s62, 1
        %s468 = smul.addr %s467, 16
        %s469 = scalar_lea.vmem [#allocation4], %s468
        // Predicated region
        $region141: #{tpu_custom_call.1} parent=135 // pred_check
          %p470 = pneg %p75
        $region142: #{tpu_custom_call.1} parent=135 // pred_check_branch
          %472 = sbr.rel (%p470) target = $region144
        $region143: #{tpu_custom_call.1} parent=135 // pred_region
          _
        $region144: #{tpu_custom_call.1} parent=135 // pred_fallthru
          _
        %s473 = sand.u32 %s36, 1
        %s474 = sand.u32 %s36, 1
        %s475 = smul.addr %s474, 16
        %s476 = scalar_lea.vmem [#allocation3], %s475
        %p477 = pneg %p49
        %p478 = pneg %p46
        %s479 = sand.u32 %s62, 1
        %s480 = sand.u32 %s62, 1
        %s481 = smul.addr %s480, 16
        %s482 = scalar_lea.vmem [#allocation4], %s481
        %p483 = pneg %p75
        %p484 = pneg %p72
        %p485 = pneg %p96
        %p486 = pneg %p93
        %p487 = pneg %p117
        %p488 = pneg %p114
        %p489 = pneg %p138
        %p490 = pneg %p135
        %p491 = pneg %p159
        %p492 = pneg %p156
        %p493 = pneg %p180
        %p494 = pneg %p177
        %p495 = pneg %p201
        %p496 = pneg %p198
        %p497 = pneg %p222
        %p498 = pneg %p219
        %p499 = pneg %p243
        %p500 = pneg %p240
        %p501 = pneg %p264
        %p502 = pneg %p261
        %p503 = pneg %p285
        %p504 = pneg %p282
        %p505 = pneg %p311
        %p506 = pneg %p308
        %s507 = sand.u32 %s298, 1
        %s508 = scalar_lea.sflag [#allocation6], %s507
        %s509 = sand.u32 %s298, 1
        %s510 = scalar_lea.vmem [#allocation5], %s509
        %v512 = vld [vmem:[%s462] sm:$0xff]
        %v513 = vld [vmem:[%s462 + $0x8] sm:$0xff]
        %v514 = vlaneseq
        %v515 = vshrl.u32 %v514, 7
        %v516 = vsub.s32 0, %v515
        %v517 = vrot.slane %v512, %v516
        %519 = vbcast.lane.b32.xlu0 %v517, 256
        %v520 = vpop.permute.xlu0 %519
        %s522 = sor.u32 256, 8
        %523 = vbcast.lane.b32.xlu0 %v517, %s522
        %v524 = vpop.permute.xlu0 %523
        %s526 = sor.u32 256, 16
        %527 = vbcast.lane.b32.xlu0 %v517, %s526
        %v528 = vpop.permute.xlu0 %527
        %s530 = sor.u32 256, 24
        %531 = vbcast.lane.b32.xlu0 %v517, %s530
        %v532 = vpop.permute.xlu0 %531
        %s534 = sor.u32 256, 32
        %535 = vbcast.lane.b32.xlu0 %v517, %s534
        %v536 = vpop.permute.xlu0 %535
        %s538 = sor.u32 256, 40
        %539 = vbcast.lane.b32.xlu0 %v517, %s538
        %v540 = vpop.permute.xlu0 %539
        %s542 = sor.u32 256, 48
        %543 = vbcast.lane.b32.xlu0 %v517, %s542
        %v544 = vpop.permute.xlu0 %543
        %s546 = sor.u32 256, 56
        %547 = vbcast.lane.b32.xlu0 %v517, %s546
        %v548 = vpop.permute.xlu0 %547
        %s550 = sor.u32 256, 64
        %551 = vbcast.lane.b32.xlu0 %v517, %s550
        %v552 = vpop.permute.xlu0 %551
        %s554 = sor.u32 256, 72
        %555 = vbcast.lane.b32.xlu0 %v517, %s554
        %v556 = vpop.permute.xlu0 %555
        %s558 = sor.u32 256, 80
        %559 = vbcast.lane.b32.xlu0 %v517, %s558
        %v560 = vpop.permute.xlu0 %559
        %s562 = sor.u32 256, 88
        %563 = vbcast.lane.b32.xlu0 %v517, %s562
        %v564 = vpop.permute.xlu0 %563
        %s566 = sor.u32 256, 96
        %567 = vbcast.lane.b32.xlu0 %v517, %s566
        %v568 = vpop.permute.xlu0 %567
        %s570 = sor.u32 256, 104
        %571 = vbcast.lane.b32.xlu0 %v517, %s570
        %v572 = vpop.permute.xlu0 %571
        %s574 = sor.u32 256, 112
        %575 = vbcast.lane.b32.xlu0 %v517, %s574
        %v576 = vpop.permute.xlu0 %575
        %s578 = sor.u32 256, 120
        %579 = vbcast.lane.b32.xlu0 %v517, %s578
        %v580 = vpop.permute.xlu0 %579
        %v581 = vlaneseq
        %v582 = vshrl.u32 %v581, 7
        %v583 = vsub.s32 1, %v582
        %v584 = vrot.slane %v512, %v583
        %586 = vbcast.lane.b32.xlu0 %v584, 256
        %v587 = vpop.permute.xlu0 %586
        %s589 = sor.u32 256, 8
        %590 = vbcast.lane.b32.xlu0 %v584, %s589
        %v591 = vpop.permute.xlu0 %590
        %s593 = sor.u32 256, 16
        %594 = vbcast.lane.b32.xlu0 %v584, %s593
        %v595 = vpop.permute.xlu0 %594
        %s597 = sor.u32 256, 24
        %598 = vbcast.lane.b32.xlu0 %v584, %s597
        %v599 = vpop.permute.xlu0 %598
        %s601 = sor.u32 256, 32
        %602 = vbcast.lane.b32.xlu0 %v584, %s601
        %v603 = vpop.permute.xlu0 %602
        %s605 = sor.u32 256, 40
        %606 = vbcast.lane.b32.xlu0 %v584, %s605
        %v607 = vpop.permute.xlu0 %606
        %s609 = sor.u32 256, 48
        %610 = vbcast.lane.b32.xlu0 %v584, %s609
        %v611 = vpop.permute.xlu0 %610
        %s613 = sor.u32 256, 56
        %614 = vbcast.lane.b32.xlu0 %v584, %s613
        %v615 = vpop.permute.xlu0 %614
        %s617 = sor.u32 256, 64
        %618 = vbcast.lane.b32.xlu0 %v584, %s617
        %v619 = vpop.permute.xlu0 %618
        %s621 = sor.u32 256, 72
        %622 = vbcast.lane.b32.xlu0 %v584, %s621
        %v623 = vpop.permute.xlu0 %622
        %s625 = sor.u32 256, 80
        %626 = vbcast.lane.b32.xlu0 %v584, %s625
        %v627 = vpop.permute.xlu0 %626
        %s629 = sor.u32 256, 88
        %630 = vbcast.lane.b32.xlu0 %v584, %s629
        %v631 = vpop.permute.xlu0 %630
        %s633 = sor.u32 256, 96
        %634 = vbcast.lane.b32.xlu0 %v584, %s633
        %v635 = vpop.permute.xlu0 %634
        %s637 = sor.u32 256, 104
        %638 = vbcast.lane.b32.xlu0 %v584, %s637
        %v639 = vpop.permute.xlu0 %638
        %s641 = sor.u32 256, 112
        %642 = vbcast.lane.b32.xlu0 %v584, %s641
        %v643 = vpop.permute.xlu0 %642
        %s645 = sor.u32 256, 120
        %646 = vbcast.lane.b32.xlu0 %v584, %s645
        %v647 = vpop.permute.xlu0 %646
        %v648 = vlaneseq
        %v649 = vshrl.u32 %v648, 7
        %v650 = vsub.s32 2, %v649
        %v651 = vrot.slane %v512, %v650
        %653 = vbcast.lane.b32.xlu0 %v651, 256
        %v654 = vpop.permute.xlu0 %653
        %s656 = sor.u32 256, 8
        %657 = vbcast.lane.b32.xlu0 %v651, %s656
        %v658 = vpop.permute.xlu0 %657
        %s660 = sor.u32 256, 16
        %661 = vbcast.lane.b32.xlu0 %v651, %s660
        %v662 = vpop.permute.xlu0 %661
        %s664 = sor.u32 256, 24
        %665 = vbcast.lane.b32.xlu0 %v651, %s664
        %v666 = vpop.permute.xlu0 %665
        %s668 = sor.u32 256, 32
        %669 = vbcast.lane.b32.xlu0 %v651, %s668
        %v670 = vpop.permute.xlu0 %669
        %s672 = sor.u32 256, 40
        %673 = vbcast.lane.b32.xlu0 %v651, %s672
        %v674 = vpop.permute.xlu0 %673
        %s676 = sor.u32 256, 48
        %677 = vbcast.lane.b32.xlu0 %v651, %s676
        %v678 = vpop.permute.xlu0 %677
        %s680 = sor.u32 256, 56
        %681 = vbcast.lane.b32.xlu0 %v651, %s680
        %v682 = vpop.permute.xlu0 %681
        %s684 = sor.u32 256, 64
        %685 = vbcast.lane.b32.xlu0 %v651, %s684
        %v686 = vpop.permute.xlu0 %685
        %s688 = sor.u32 256, 72
        %689 = vbcast.lane.b32.xlu0 %v651, %s688
        %v690 = vpop.permute.xlu0 %689
        %s692 = sor.u32 256, 80
        %693 = vbcast.lane.b32.xlu0 %v651, %s692
        %v694 = vpop.permute.xlu0 %693
        %s696 = sor.u32 256, 88
        %697 = vbcast.lane.b32.xlu0 %v651, %s696
        %v698 = vpop.permute.xlu0 %697
        %s700 = sor.u32 256, 96
        %701 = vbcast.lane.b32.xlu0 %v651, %s700
        %v702 = vpop.permute.xlu0 %701
        %s704 = sor.u32 256, 104
        %705 = vbcast.lane.b32.xlu0 %v651, %s704
        %v706 = vpop.permute.xlu0 %705
        %s708 = sor.u32 256, 112
        %709 = vbcast.lane.b32.xlu0 %v651, %s708
        %v710 = vpop.permute.xlu0 %709
        %s712 = sor.u32 256, 120
        %713 = vbcast.lane.b32.xlu0 %v651, %s712
        %v714 = vpop.permute.xlu0 %713
        %v715 = vlaneseq
        %v716 = vshrl.u32 %v715, 7
        %v717 = vsub.s32 3, %v716
        %v718 = vrot.slane %v512, %v717
        %720 = vbcast.lane.b32.xlu0 %v718, 256
        %v721 = vpop.permute.xlu0 %720
        %s723 = sor.u32 256, 8
        %724 = vbcast.lane.b32.xlu0 %v718, %s723
        %v725 = vpop.permute.xlu0 %724
        %s727 = sor.u32 256, 16
        %728 = vbcast.lane.b32.xlu0 %v718, %s727
        %v729 = vpop.permute.xlu0 %728
        %s731 = sor.u32 256, 24
        %732 = vbcast.lane.b32.xlu0 %v718, %s731
        %v733 = vpop.permute.xlu0 %732
        %s735 = sor.u32 256, 32
        %736 = vbcast.lane.b32.xlu0 %v718, %s735
        %v737 = vpop.permute.xlu0 %736
        %s739 = sor.u32 256, 40
        %740 = vbcast.lane.b32.xlu0 %v718, %s739
        %v741 = vpop.permute.xlu0 %740
        %s743 = sor.u32 256, 48
        %744 = vbcast.lane.b32.xlu0 %v718, %s743
        %v745 = vpop.permute.xlu0 %744
        %s747 = sor.u32 256, 56
        %748 = vbcast.lane.b32.xlu0 %v718, %s747
        %v749 = vpop.permute.xlu0 %748
        %s751 = sor.u32 256, 64
        %752 = vbcast.lane.b32.xlu0 %v718, %s751
        %v753 = vpop.permute.xlu0 %752
        %s755 = sor.u32 256, 72
        %756 = vbcast.lane.b32.xlu0 %v718, %s755
        %v757 = vpop.permute.xlu0 %756
        %s759 = sor.u32 256, 80
        %760 = vbcast.lane.b32.xlu0 %v718, %s759
        %v761 = vpop.permute.xlu0 %760
        %s763 = sor.u32 256, 88
        %764 = vbcast.lane.b32.xlu0 %v718, %s763
        %v765 = vpop.permute.xlu0 %764
        %s767 = sor.u32 256, 96
        %768 = vbcast.lane.b32.xlu0 %v718, %s767
        %v769 = vpop.permute.xlu0 %768
        %s771 = sor.u32 256, 104
        %772 = vbcast.lane.b32.xlu0 %v718, %s771
        %v773 = vpop.permute.xlu0 %772
        %s775 = sor.u32 256, 112
        %776 = vbcast.lane.b32.xlu0 %v718, %s775
        %v777 = vpop.permute.xlu0 %776
        %s779 = sor.u32 256, 120
        %780 = vbcast.lane.b32.xlu0 %v718, %s779
        %v781 = vpop.permute.xlu0 %780
        %v782 = vlaneseq
        %v783 = vshrl.u32 %v782, 7
        %v784 = vsub.s32 4, %v783
        %v785 = vrot.slane %v512, %v784
        %787 = vbcast.lane.b32.xlu0 %v785, 256
        %v788 = vpop.permute.xlu0 %787
        %s790 = sor.u32 256, 8
        %791 = vbcast.lane.b32.xlu0 %v785, %s790
        %v792 = vpop.permute.xlu0 %791
        %s794 = sor.u32 256, 16
        %795 = vbcast.lane.b32.xlu0 %v785, %s794
        %v796 = vpop.permute.xlu0 %795
        %s798 = sor.u32 256, 24
        %799 = vbcast.lane.b32.xlu0 %v785, %s798
        %v800 = vpop.permute.xlu0 %799
        %s802 = sor.u32 256, 32
        %803 = vbcast.lane.b32.xlu0 %v785, %s802
        %v804 = vpop.permute.xlu0 %803
        %s806 = sor.u32 256, 40
        %807 = vbcast.lane.b32.xlu0 %v785, %s806
        %v808 = vpop.permute.xlu0 %807
        %s810 = sor.u32 256, 48
        %811 = vbcast.lane.b32.xlu0 %v785, %s810
        %v812 = vpop.permute.xlu0 %811
        %s814 = sor.u32 256, 56
        %815 = vbcast.lane.b32.xlu0 %v785, %s814
        %v816 = vpop.permute.xlu0 %815
        %s818 = sor.u32 256, 64
        %819 = vbcast.lane.b32.xlu0 %v785, %s818
        %v820 = vpop.permute.xlu0 %819
        %s822 = sor.u32 256, 72
        %823 = vbcast.lane.b32.xlu0 %v785, %s822
        %v824 = vpop.permute.xlu0 %823
        %s826 = sor.u32 256, 80
        %827 = vbcast.lane.b32.xlu0 %v785, %s826
        %v828 = vpop.permute.xlu0 %827
        %s830 = sor.u32 256, 88
        %831 = vbcast.lane.b32.xlu0 %v785, %s830
        %v832 = vpop.permute.xlu0 %831
        %s834 = sor.u32 256, 96
        %835 = vbcast.lane.b32.xlu0 %v785, %s834
        %v836 = vpop.permute.xlu0 %835
        %s838 = sor.u32 256, 104
        %839 = vbcast.lane.b32.xlu0 %v785, %s838
        %v840 = vpop.permute.xlu0 %839
        %s842 = sor.u32 256, 112
        %843 = vbcast.lane.b32.xlu0 %v785, %s842
        %v844 = vpop.permute.xlu0 %843
        %s846 = sor.u32 256, 120
        %847 = vbcast.lane.b32.xlu0 %v785, %s846
        %v848 = vpop.permute.xlu0 %847
        %v849 = vlaneseq
        %v850 = vshrl.u32 %v849, 7
        %v851 = vsub.s32 5, %v850
        %v852 = vrot.slane %v512, %v851
        %854 = vbcast.lane.b32.xlu0 %v852, 256
        %v855 = vpop.permute.xlu0 %854
        %s857 = sor.u32 256, 8
        %858 = vbcast.lane.b32.xlu0 %v852, %s857
        %v859 = vpop.permute.xlu0 %858
        %s861 = sor.u32 256, 16
        %862 = vbcast.lane.b32.xlu0 %v852, %s861
        %v863 = vpop.permute.xlu0 %862
        %s865 = sor.u32 256, 24
        %866 = vbcast.lane.b32.xlu0 %v852, %s865
        %v867 = vpop.permute.xlu0 %866
        %s869 = sor.u32 256, 32
        %870 = vbcast.lane.b32.xlu0 %v852, %s869
        %v871 = vpop.permute.xlu0 %870
        %s873 = sor.u32 256, 40
        %874 = vbcast.lane.b32.xlu0 %v852, %s873
        %v875 = vpop.permute.xlu0 %874
        %s877 = sor.u32 256, 48
        %878 = vbcast.lane.b32.xlu0 %v852, %s877
        %v879 = vpop.permute.xlu0 %878
        %s881 = sor.u32 256, 56
        %882 = vbcast.lane.b32.xlu0 %v852, %s881
        %v883 = vpop.permute.xlu0 %882
        %s885 = sor.u32 256, 64
        %886 = vbcast.lane.b32.xlu0 %v852, %s885
        %v887 = vpop.permute.xlu0 %886
        %s889 = sor.u32 256, 72
        %890 = vbcast.lane.b32.xlu0 %v852, %s889
        %v891 = vpop.permute.xlu0 %890
        %s893 = sor.u32 256, 80
        %894 = vbcast.lane.b32.xlu0 %v852, %s893
        %v895 = vpop.permute.xlu0 %894
        %s897 = sor.u32 256, 88
        %898 = vbcast.lane.b32.xlu0 %v852, %s897
        %v899 = vpop.permute.xlu0 %898
        %s901 = sor.u32 256, 96
        %902 = vbcast.lane.b32.xlu0 %v852, %s901
        %v903 = vpop.permute.xlu0 %902
        %s905 = sor.u32 256, 104
        %906 = vbcast.lane.b32.xlu0 %v852, %s905
        %v907 = vpop.permute.xlu0 %906
        %s909 = sor.u32 256, 112
        %910 = vbcast.lane.b32.xlu0 %v852, %s909
        %v911 = vpop.permute.xlu0 %910
        %s913 = sor.u32 256, 120
        %914 = vbcast.lane.b32.xlu0 %v852, %s913
        %v915 = vpop.permute.xlu0 %914
        %v916 = vlaneseq
        %v917 = vshrl.u32 %v916, 7
        %v918 = vsub.s32 6, %v917
        %v919 = vrot.slane %v512, %v918
        %921 = vbcast.lane.b32.xlu0 %v919, 256
        %v922 = vpop.permute.xlu0 %921
        %s924 = sor.u32 256, 8
        %925 = vbcast.lane.b32.xlu0 %v919, %s924
        %v926 = vpop.permute.xlu0 %925
        %s928 = sor.u32 256, 16
        %929 = vbcast.lane.b32.xlu0 %v919, %s928
        %v930 = vpop.permute.xlu0 %929
        %s932 = sor.u32 256, 24
        %933 = vbcast.lane.b32.xlu0 %v919, %s932
        %v934 = vpop.permute.xlu0 %933
        %s936 = sor.u32 256, 32
        %937 = vbcast.lane.b32.xlu0 %v919, %s936
        %v938 = vpop.permute.xlu0 %937
        %s940 = sor.u32 256, 40
        %941 = vbcast.lane.b32.xlu0 %v919, %s940
        %v942 = vpop.permute.xlu0 %941
        %s944 = sor.u32 256, 48
        %945 = vbcast.lane.b32.xlu0 %v919, %s944
        %v946 = vpop.permute.xlu0 %945
        %s948 = sor.u32 256, 56
        %949 = vbcast.lane.b32.xlu0 %v919, %s948
        %v950 = vpop.permute.xlu0 %949
        %s952 = sor.u32 256, 64
        %953 = vbcast.lane.b32.xlu0 %v919, %s952
        %v954 = vpop.permute.xlu0 %953
        %s956 = sor.u32 256, 72
        %957 = vbcast.lane.b32.xlu0 %v919, %s956
        %v958 = vpop.permute.xlu0 %957
        %s960 = sor.u32 256, 80
        %961 = vbcast.lane.b32.xlu0 %v919, %s960
        %v962 = vpop.permute.xlu0 %961
        %s964 = sor.u32 256, 88
        %965 = vbcast.lane.b32.xlu0 %v919, %s964
        %v966 = vpop.permute.xlu0 %965
        %s968 = sor.u32 256, 96
        %969 = vbcast.lane.b32.xlu0 %v919, %s968
        %v970 = vpop.permute.xlu0 %969
        %s972 = sor.u32 256, 104
        %973 = vbcast.lane.b32.xlu0 %v919, %s972
        %v974 = vpop.permute.xlu0 %973
        %s976 = sor.u32 256, 112
        %977 = vbcast.lane.b32.xlu0 %v919, %s976
        %v978 = vpop.permute.xlu0 %977
        %s980 = sor.u32 256, 120
        %981 = vbcast.lane.b32.xlu0 %v919, %s980
        %v982 = vpop.permute.xlu0 %981
        %v983 = vlaneseq
        %v984 = vshrl.u32 %v983, 7
        %v985 = vsub.s32 7, %v984
        %v986 = vrot.slane %v512, %v985
        %988 = vbcast.lane.b32.xlu0 %v986, 256
        %v989 = vpop.permute.xlu0 %988
        %s991 = sor.u32 256, 8
        %992 = vbcast.lane.b32.xlu0 %v986, %s991
        %v993 = vpop.permute.xlu0 %992
        %s995 = sor.u32 256, 16
        %996 = vbcast.lane.b32.xlu0 %v986, %s995
        %v997 = vpop.permute.xlu0 %996
        %s999 = sor.u32 256, 24
        %1000 = vbcast.lane.b32.xlu0 %v986, %s999
        %v1001 = vpop.permute.xlu0 %1000
        %s1003 = sor.u32 256, 32
        %1004 = vbcast.lane.b32.xlu0 %v986, %s1003
        %v1005 = vpop.permute.xlu0 %1004
        %s1007 = sor.u32 256, 40
        %1008 = vbcast.lane.b32.xlu0 %v986, %s1007
        %v1009 = vpop.permute.xlu0 %1008
        %s1011 = sor.u32 256, 48
        %1012 = vbcast.lane.b32.xlu0 %v986, %s1011
        %v1013 = vpop.permute.xlu0 %1012
        %s1015 = sor.u32 256, 56
        %1016 = vbcast.lane.b32.xlu0 %v986, %s1015
        %v1017 = vpop.permute.xlu0 %1016
        %s1019 = sor.u32 256, 64
        %1020 = vbcast.lane.b32.xlu0 %v986, %s1019
        %v1021 = vpop.permute.xlu0 %1020
        %s1023 = sor.u32 256, 72
        %1024 = vbcast.lane.b32.xlu0 %v986, %s1023
        %v1025 = vpop.permute.xlu0 %1024
        %s1027 = sor.u32 256, 80
        %1028 = vbcast.lane.b32.xlu0 %v986, %s1027
        %v1029 = vpop.permute.xlu0 %1028
        %s1031 = sor.u32 256, 88
        %1032 = vbcast.lane.b32.xlu0 %v986, %s1031
        %v1033 = vpop.permute.xlu0 %1032
        %s1035 = sor.u32 256, 96
        %1036 = vbcast.lane.b32.xlu0 %v986, %s1035
        %v1037 = vpop.permute.xlu0 %1036
        %s1039 = sor.u32 256, 104
        %1040 = vbcast.lane.b32.xlu0 %v986, %s1039
        %v1041 = vpop.permute.xlu0 %1040
        %s1043 = sor.u32 256, 112
        %1044 = vbcast.lane.b32.xlu0 %v986, %s1043
        %v1045 = vpop.permute.xlu0 %1044
        %s1047 = sor.u32 256, 120
        %1048 = vbcast.lane.b32.xlu0 %v986, %s1047
        %v1049 = vpop.permute.xlu0 %1048
        %v1050 = vlaneseq
        %v1051 = vshrl.u32 %v1050, 7
        %v1052 = vsub.s32 0, %v1051
        %v1053 = vrot.slane %v513, %v1052
        %1055 = vbcast.lane.b32.xlu0 %v1053, 256
        %v1056 = vpop.permute.xlu0 %1055
        %s1058 = sor.u32 256, 8
        %1059 = vbcast.lane.b32.xlu0 %v1053, %s1058
        %v1060 = vpop.permute.xlu0 %1059
        %s1062 = sor.u32 256, 16
        %1063 = vbcast.lane.b32.xlu0 %v1053, %s1062
        %v1064 = vpop.permute.xlu0 %1063
        %s1066 = sor.u32 256, 24
        %1067 = vbcast.lane.b32.xlu0 %v1053, %s1066
        %v1068 = vpop.permute.xlu0 %1067
        %s1070 = sor.u32 256, 32
        %1071 = vbcast.lane.b32.xlu0 %v1053, %s1070
        %v1072 = vpop.permute.xlu0 %1071
        %s1074 = sor.u32 256, 40
        %1075 = vbcast.lane.b32.xlu0 %v1053, %s1074
        %v1076 = vpop.permute.xlu0 %1075
        %s1078 = sor.u32 256, 48
        %1079 = vbcast.lane.b32.xlu0 %v1053, %s1078
        %v1080 = vpop.permute.xlu0 %1079
        %s1082 = sor.u32 256, 56
        %1083 = vbcast.lane.b32.xlu0 %v1053, %s1082
        %v1084 = vpop.permute.xlu0 %1083
        %s1086 = sor.u32 256, 64
        %1087 = vbcast.lane.b32.xlu0 %v1053, %s1086
        %v1088 = vpop.permute.xlu0 %1087
        %s1090 = sor.u32 256, 72
        %1091 = vbcast.lane.b32.xlu0 %v1053, %s1090
        %v1092 = vpop.permute.xlu0 %1091
        %s1094 = sor.u32 256, 80
        %1095 = vbcast.lane.b32.xlu0 %v1053, %s1094
        %v1096 = vpop.permute.xlu0 %1095
        %s1098 = sor.u32 256, 88
        %1099 = vbcast.lane.b32.xlu0 %v1053, %s1098
        %v1100 = vpop.permute.xlu0 %1099
        %s1102 = sor.u32 256, 96
        %1103 = vbcast.lane.b32.xlu0 %v1053, %s1102
        %v1104 = vpop.permute.xlu0 %1103
        %s1106 = sor.u32 256, 104
        %1107 = vbcast.lane.b32.xlu0 %v1053, %s1106
        %v1108 = vpop.permute.xlu0 %1107
        %s1110 = sor.u32 256, 112
        %1111 = vbcast.lane.b32.xlu0 %v1053, %s1110
        %v1112 = vpop.permute.xlu0 %1111
        %s1114 = sor.u32 256, 120
        %1115 = vbcast.lane.b32.xlu0 %v1053, %s1114
        %v1116 = vpop.permute.xlu0 %1115
        %v1117 = vlaneseq
        %v1118 = vshrl.u32 %v1117, 7
        %v1119 = vsub.s32 1, %v1118
        %v1120 = vrot.slane %v513, %v1119
        %1122 = vbcast.lane.b32.xlu0 %v1120, 256
        %v1123 = vpop.permute.xlu0 %1122
        %s1125 = sor.u32 256, 8
        %1126 = vbcast.lane.b32.xlu0 %v1120, %s1125
        %v1127 = vpop.permute.xlu0 %1126
        %s1129 = sor.u32 256, 16
        %1130 = vbcast.lane.b32.xlu0 %v1120, %s1129
        %v1131 = vpop.permute.xlu0 %1130
        %s1133 = sor.u32 256, 24
        %1134 = vbcast.lane.b32.xlu0 %v1120, %s1133
        %v1135 = vpop.permute.xlu0 %1134
        %s1137 = sor.u32 256, 32
        %1138 = vbcast.lane.b32.xlu0 %v1120, %s1137
        %v1139 = vpop.permute.xlu0 %1138
        %s1141 = sor.u32 256, 40
        %1142 = vbcast.lane.b32.xlu0 %v1120, %s1141
        %v1143 = vpop.permute.xlu0 %1142
        %s1145 = sor.u32 256, 48
        %1146 = vbcast.lane.b32.xlu0 %v1120, %s1145
        %v1147 = vpop.permute.xlu0 %1146
        %s1149 = sor.u32 256, 56
        %1150 = vbcast.lane.b32.xlu0 %v1120, %s1149
        %v1151 = vpop.permute.xlu0 %1150
        %s1153 = sor.u32 256, 64
        %1154 = vbcast.lane.b32.xlu0 %v1120, %s1153
        %v1155 = vpop.permute.xlu0 %1154
        %s1157 = sor.u32 256, 72
        %1158 = vbcast.lane.b32.xlu0 %v1120, %s1157
        %v1159 = vpop.permute.xlu0 %1158
        %s1161 = sor.u32 256, 80
        %1162 = vbcast.lane.b32.xlu0 %v1120, %s1161
        %v1163 = vpop.permute.xlu0 %1162
        %s1165 = sor.u32 256, 88
        %1166 = vbcast.lane.b32.xlu0 %v1120, %s1165
        %v1167 = vpop.permute.xlu0 %1166
        %s1169 = sor.u32 256, 96
        %1170 = vbcast.lane.b32.xlu0 %v1120, %s1169
        %v1171 = vpop.permute.xlu0 %1170
        %s1173 = sor.u32 256, 104
        %1174 = vbcast.lane.b32.xlu0 %v1120, %s1173
        %v1175 = vpop.permute.xlu0 %1174
        %s1177 = sor.u32 256, 112
        %1178 = vbcast.lane.b32.xlu0 %v1120, %s1177
        %v1179 = vpop.permute.xlu0 %1178
        %s1181 = sor.u32 256, 120
        %1182 = vbcast.lane.b32.xlu0 %v1120, %s1181
        %v1183 = vpop.permute.xlu0 %1182
        %v1184 = vlaneseq
        %v1185 = vshrl.u32 %v1184, 7
        %v1186 = vsub.s32 2, %v1185
        %v1187 = vrot.slane %v513, %v1186
        %1189 = vbcast.lane.b32.xlu0 %v1187, 256
        %v1190 = vpop.permute.xlu0 %1189
        %s1192 = sor.u32 256, 8
        %1193 = vbcast.lane.b32.xlu0 %v1187, %s1192
        %v1194 = vpop.permute.xlu0 %1193
        %s1196 = sor.u32 256, 16
        %1197 = vbcast.lane.b32.xlu0 %v1187, %s1196
        %v1198 = vpop.permute.xlu0 %1197
        %s1200 = sor.u32 256, 24
        %1201 = vbcast.lane.b32.xlu0 %v1187, %s1200
        %v1202 = vpop.permute.xlu0 %1201
        %s1204 = sor.u32 256, 32
        %1205 = vbcast.lane.b32.xlu0 %v1187, %s1204
        %v1206 = vpop.permute.xlu0 %1205
        %s1208 = sor.u32 256, 40
        %1209 = vbcast.lane.b32.xlu0 %v1187, %s1208
        %v1210 = vpop.permute.xlu0 %1209
        %s1212 = sor.u32 256, 48
        %1213 = vbcast.lane.b32.xlu0 %v1187, %s1212
        %v1214 = vpop.permute.xlu0 %1213
        %s1216 = sor.u32 256, 56
        %1217 = vbcast.lane.b32.xlu0 %v1187, %s1216
        %v1218 = vpop.permute.xlu0 %1217
        %s1220 = sor.u32 256, 64
        %1221 = vbcast.lane.b32.xlu0 %v1187, %s1220
        %v1222 = vpop.permute.xlu0 %1221
        %s1224 = sor.u32 256, 72
        %1225 = vbcast.lane.b32.xlu0 %v1187, %s1224
        %v1226 = vpop.permute.xlu0 %1225
        %s1228 = sor.u32 256, 80
        %1229 = vbcast.lane.b32.xlu0 %v1187, %s1228
        %v1230 = vpop.permute.xlu0 %1229
        %s1232 = sor.u32 256, 88
        %1233 = vbcast.lane.b32.xlu0 %v1187, %s1232
        %v1234 = vpop.permute.xlu0 %1233
        %s1236 = sor.u32 256, 96
        %1237 = vbcast.lane.b32.xlu0 %v1187, %s1236
        %v1238 = vpop.permute.xlu0 %1237
        %s1240 = sor.u32 256, 104
        %1241 = vbcast.lane.b32.xlu0 %v1187, %s1240
        %v1242 = vpop.permute.xlu0 %1241
        %s1244 = sor.u32 256, 112
        %1245 = vbcast.lane.b32.xlu0 %v1187, %s1244
        %v1246 = vpop.permute.xlu0 %1245
        %s1248 = sor.u32 256, 120
        %1249 = vbcast.lane.b32.xlu0 %v1187, %s1248
        %v1250 = vpop.permute.xlu0 %1249
        %v1251 = vlaneseq
        %v1252 = vshrl.u32 %v1251, 7
        %v1253 = vsub.s32 3, %v1252
        %v1254 = vrot.slane %v513, %v1253
        %1256 = vbcast.lane.b32.xlu0 %v1254, 256
        %v1257 = vpop.permute.xlu0 %1256
        %s1259 = sor.u32 256, 8
        %1260 = vbcast.lane.b32.xlu0 %v1254, %s1259
        %v1261 = vpop.permute.xlu0 %1260
        %s1263 = sor.u32 256, 16
        %1264 = vbcast.lane.b32.xlu0 %v1254, %s1263
        %v1265 = vpop.permute.xlu0 %1264
        %s1267 = sor.u32 256, 24
        %1268 = vbcast.lane.b32.xlu0 %v1254, %s1267
        %v1269 = vpop.permute.xlu0 %1268
        %s1271 = sor.u32 256, 32
        %1272 = vbcast.lane.b32.xlu0 %v1254, %s1271
        %v1273 = vpop.permute.xlu0 %1272
        %s1275 = sor.u32 256, 40
        %1276 = vbcast.lane.b32.xlu0 %v1254, %s1275
        %v1277 = vpop.permute.xlu0 %1276
        %s1279 = sor.u32 256, 48
        %1280 = vbcast.lane.b32.xlu0 %v1254, %s1279
        %v1281 = vpop.permute.xlu0 %1280
        %s1283 = sor.u32 256, 56
        %1284 = vbcast.lane.b32.xlu0 %v1254, %s1283
        %v1285 = vpop.permute.xlu0 %1284
        %s1287 = sor.u32 256, 64
        %1288 = vbcast.lane.b32.xlu0 %v1254, %s1287
        %v1289 = vpop.permute.xlu0 %1288
        %s1291 = sor.u32 256, 72
        %1292 = vbcast.lane.b32.xlu0 %v1254, %s1291
        %v1293 = vpop.permute.xlu0 %1292
        %s1295 = sor.u32 256, 80
        %1296 = vbcast.lane.b32.xlu0 %v1254, %s1295
        %v1297 = vpop.permute.xlu0 %1296
        %s1299 = sor.u32 256, 88
        %1300 = vbcast.lane.b32.xlu0 %v1254, %s1299
        %v1301 = vpop.permute.xlu0 %1300
        %s1303 = sor.u32 256, 96
        %1304 = vbcast.lane.b32.xlu0 %v1254, %s1303
        %v1305 = vpop.permute.xlu0 %1304
        %s1307 = sor.u32 256, 104
        %1308 = vbcast.lane.b32.xlu0 %v1254, %s1307
        %v1309 = vpop.permute.xlu0 %1308
        %s1311 = sor.u32 256, 112
        %1312 = vbcast.lane.b32.xlu0 %v1254, %s1311
        %v1313 = vpop.permute.xlu0 %1312
        %s1315 = sor.u32 256, 120
        %1316 = vbcast.lane.b32.xlu0 %v1254, %s1315
        %v1317 = vpop.permute.xlu0 %1316
        %v1318 = vlaneseq
        %v1319 = vshrl.u32 %v1318, 7
        %v1320 = vsub.s32 4, %v1319
        %v1321 = vrot.slane %v513, %v1320
        %1323 = vbcast.lane.b32.xlu0 %v1321, 256
        %v1324 = vpop.permute.xlu0 %1323
        %s1326 = sor.u32 256, 8
        %1327 = vbcast.lane.b32.xlu0 %v1321, %s1326
        %v1328 = vpop.permute.xlu0 %1327
        %s1330 = sor.u32 256, 16
        %1331 = vbcast.lane.b32.xlu0 %v1321, %s1330
        %v1332 = vpop.permute.xlu0 %1331
        %s1334 = sor.u32 256, 24
        %1335 = vbcast.lane.b32.xlu0 %v1321, %s1334
        %v1336 = vpop.permute.xlu0 %1335
        %s1338 = sor.u32 256, 32
        %1339 = vbcast.lane.b32.xlu0 %v1321, %s1338
        %v1340 = vpop.permute.xlu0 %1339
        %s1342 = sor.u32 256, 40
        %1343 = vbcast.lane.b32.xlu0 %v1321, %s1342
        %v1344 = vpop.permute.xlu0 %1343
        %s1346 = sor.u32 256, 48
        %1347 = vbcast.lane.b32.xlu0 %v1321, %s1346
        %v1348 = vpop.permute.xlu0 %1347
        %s1350 = sor.u32 256, 56
        %1351 = vbcast.lane.b32.xlu0 %v1321, %s1350
        %v1352 = vpop.permute.xlu0 %1351
        %s1354 = sor.u32 256, 64
        %1355 = vbcast.lane.b32.xlu0 %v1321, %s1354
        %v1356 = vpop.permute.xlu0 %1355
        %s1358 = sor.u32 256, 72
        %1359 = vbcast.lane.b32.xlu0 %v1321, %s1358
        %v1360 = vpop.permute.xlu0 %1359
        %s1362 = sor.u32 256, 80
        %1363 = vbcast.lane.b32.xlu0 %v1321, %s1362
        %v1364 = vpop.permute.xlu0 %1363
        %s1366 = sor.u32 256, 88
        %1367 = vbcast.lane.b32.xlu0 %v1321, %s1366
        %v1368 = vpop.permute.xlu0 %1367
        %s1370 = sor.u32 256, 96
        %1371 = vbcast.lane.b32.xlu0 %v1321, %s1370
        %v1372 = vpop.permute.xlu0 %1371
        %s1374 = sor.u32 256, 104
        %1375 = vbcast.lane.b32.xlu0 %v1321, %s1374
        %v1376 = vpop.permute.xlu0 %1375
        %s1378 = sor.u32 256, 112
        %1379 = vbcast.lane.b32.xlu0 %v1321, %s1378
        %v1380 = vpop.permute.xlu0 %1379
        %s1382 = sor.u32 256, 120
        %1383 = vbcast.lane.b32.xlu0 %v1321, %s1382
        %v1384 = vpop.permute.xlu0 %1383
        %v1385 = vlaneseq
        %v1386 = vshrl.u32 %v1385, 7
        %v1387 = vsub.s32 5, %v1386
        %v1388 = vrot.slane %v513, %v1387
        %1390 = vbcast.lane.b32.xlu0 %v1388, 256
        %v1391 = vpop.permute.xlu0 %1390
        %s1393 = sor.u32 256, 8
        %1394 = vbcast.lane.b32.xlu0 %v1388, %s1393
        %v1395 = vpop.permute.xlu0 %1394
        %s1397 = sor.u32 256, 16
        %1398 = vbcast.lane.b32.xlu0 %v1388, %s1397
        %v1399 = vpop.permute.xlu0 %1398
        %s1401 = sor.u32 256, 24
        %1402 = vbcast.lane.b32.xlu0 %v1388, %s1401
        %v1403 = vpop.permute.xlu0 %1402
        %s1405 = sor.u32 256, 32
        %1406 = vbcast.lane.b32.xlu0 %v1388, %s1405
        %v1407 = vpop.permute.xlu0 %1406
        %s1409 = sor.u32 256, 40
        %1410 = vbcast.lane.b32.xlu0 %v1388, %s1409
        %v1411 = vpop.permute.xlu0 %1410
        %s1413 = sor.u32 256, 48
        %1414 = vbcast.lane.b32.xlu0 %v1388, %s1413
        %v1415 = vpop.permute.xlu0 %1414
        %s1417 = sor.u32 256, 56
        %1418 = vbcast.lane.b32.xlu0 %v1388, %s1417
        %v1419 = vpop.permute.xlu0 %1418
        %s1421 = sor.u32 256, 64
        %1422 = vbcast.lane.b32.xlu0 %v1388, %s1421
        %v1423 = vpop.permute.xlu0 %1422
        %s1425 = sor.u32 256, 72
        %1426 = vbcast.lane.b32.xlu0 %v1388, %s1425
        %v1427 = vpop.permute.xlu0 %1426
        %s1429 = sor.u32 256, 80
        %1430 = vbcast.lane.b32.xlu0 %v1388, %s1429
        %v1431 = vpop.permute.xlu0 %1430
        %s1433 = sor.u32 256, 88
        %1434 = vbcast.lane.b32.xlu0 %v1388, %s1433
        %v1435 = vpop.permute.xlu0 %1434
        %s1437 = sor.u32 256, 96
        %1438 = vbcast.lane.b32.xlu0 %v1388, %s1437
        %v1439 = vpop.permute.xlu0 %1438
        %s1441 = sor.u32 256, 104
        %1442 = vbcast.lane.b32.xlu0 %v1388, %s1441
        %v1443 = vpop.permute.xlu0 %1442
        %s1445 = sor.u32 256, 112
        %1446 = vbcast.lane.b32.xlu0 %v1388, %s1445
        %v1447 = vpop.permute.xlu0 %1446
        %s1449 = sor.u32 256, 120
        %1450 = vbcast.lane.b32.xlu0 %v1388, %s1449
        %v1451 = vpop.permute.xlu0 %1450
        %v1452 = vlaneseq
        %v1453 = vshrl.u32 %v1452, 7
        %v1454 = vsub.s32 6, %v1453
        %v1455 = vrot.slane %v513, %v1454
        %1457 = vbcast.lane.b32.xlu0 %v1455, 256
        %v1458 = vpop.permute.xlu0 %1457
        %s1460 = sor.u32 256, 8
        %1461 = vbcast.lane.b32.xlu0 %v1455, %s1460
        %v1462 = vpop.permute.xlu0 %1461
        %s1464 = sor.u32 256, 16
        %1465 = vbcast.lane.b32.xlu0 %v1455, %s1464
        %v1466 = vpop.permute.xlu0 %1465
        %s1468 = sor.u32 256, 24
        %1469 = vbcast.lane.b32.xlu0 %v1455, %s1468
        %v1470 = vpop.permute.xlu0 %1469
        %s1472 = sor.u32 256, 32
        %1473 = vbcast.lane.b32.xlu0 %v1455, %s1472
        %v1474 = vpop.permute.xlu0 %1473
        %s1476 = sor.u32 256, 40
        %1477 = vbcast.lane.b32.xlu0 %v1455, %s1476
        %v1478 = vpop.permute.xlu0 %1477
        %s1480 = sor.u32 256, 48
        %1481 = vbcast.lane.b32.xlu0 %v1455, %s1480
        %v1482 = vpop.permute.xlu0 %1481
        %s1484 = sor.u32 256, 56
        %1485 = vbcast.lane.b32.xlu0 %v1455, %s1484
        %v1486 = vpop.permute.xlu0 %1485
        %s1488 = sor.u32 256, 64
        %1489 = vbcast.lane.b32.xlu0 %v1455, %s1488
        %v1490 = vpop.permute.xlu0 %1489
        %s1492 = sor.u32 256, 72
        %1493 = vbcast.lane.b32.xlu0 %v1455, %s1492
        %v1494 = vpop.permute.xlu0 %1493
        %s1496 = sor.u32 256, 80
        %1497 = vbcast.lane.b32.xlu0 %v1455, %s1496
        %v1498 = vpop.permute.xlu0 %1497
        %s1500 = sor.u32 256, 88
        %1501 = vbcast.lane.b32.xlu0 %v1455, %s1500
        %v1502 = vpop.permute.xlu0 %1501
        %s1504 = sor.u32 256, 96
        %1505 = vbcast.lane.b32.xlu0 %v1455, %s1504
        %v1506 = vpop.permute.xlu0 %1505
        %s1508 = sor.u32 256, 104
        %1509 = vbcast.lane.b32.xlu0 %v1455, %s1508
        %v1510 = vpop.permute.xlu0 %1509
        %s1512 = sor.u32 256, 112
        %1513 = vbcast.lane.b32.xlu0 %v1455, %s1512
        %v1514 = vpop.permute.xlu0 %1513
        %s1516 = sor.u32 256, 120
        %1517 = vbcast.lane.b32.xlu0 %v1455, %s1516
        %v1518 = vpop.permute.xlu0 %1517
        %v1519 = vlaneseq
        %v1520 = vshrl.u32 %v1519, 7
        %v1521 = vsub.s32 7, %v1520
        %v1522 = vrot.slane %v513, %v1521
        %1524 = vbcast.lane.b32.xlu0 %v1522, 256
        %v1525 = vpop.permute.xlu0 %1524
        %s1527 = sor.u32 256, 8
        %1528 = vbcast.lane.b32.xlu0 %v1522, %s1527
        %v1529 = vpop.permute.xlu0 %1528
        %s1531 = sor.u32 256, 16
        %1532 = vbcast.lane.b32.xlu0 %v1522, %s1531
        %v1533 = vpop.permute.xlu0 %1532
        %s1535 = sor.u32 256, 24
        %1536 = vbcast.lane.b32.xlu0 %v1522, %s1535
        %v1537 = vpop.permute.xlu0 %1536
        %s1539 = sor.u32 256, 32
        %1540 = vbcast.lane.b32.xlu0 %v1522, %s1539
        %v1541 = vpop.permute.xlu0 %1540
        %s1543 = sor.u32 256, 40
        %1544 = vbcast.lane.b32.xlu0 %v1522, %s1543
        %v1545 = vpop.permute.xlu0 %1544
        %s1547 = sor.u32 256, 48
        %1548 = vbcast.lane.b32.xlu0 %v1522, %s1547
        %v1549 = vpop.permute.xlu0 %1548
        %s1551 = sor.u32 256, 56
        %1552 = vbcast.lane.b32.xlu0 %v1522, %s1551
        %v1553 = vpop.permute.xlu0 %1552
        %s1555 = sor.u32 256, 64
        %1556 = vbcast.lane.b32.xlu0 %v1522, %s1555
        %v1557 = vpop.permute.xlu0 %1556
        %s1559 = sor.u32 256, 72
        %1560 = vbcast.lane.b32.xlu0 %v1522, %s1559
        %v1561 = vpop.permute.xlu0 %1560
        %s1563 = sor.u32 256, 80
        %1564 = vbcast.lane.b32.xlu0 %v1522, %s1563
        %v1565 = vpop.permute.xlu0 %1564
        %s1567 = sor.u32 256, 88
        %1568 = vbcast.lane.b32.xlu0 %v1522, %s1567
        %v1569 = vpop.permute.xlu0 %1568
        %s1571 = sor.u32 256, 96
        %1572 = vbcast.lane.b32.xlu0 %v1522, %s1571
        %v1573 = vpop.permute.xlu0 %1572
        %s1575 = sor.u32 256, 104
        %1576 = vbcast.lane.b32.xlu0 %v1522, %s1575
        %v1577 = vpop.permute.xlu0 %1576
        %s1579 = sor.u32 256, 112
        %1580 = vbcast.lane.b32.xlu0 %v1522, %s1579
        %v1581 = vpop.permute.xlu0 %1580
        %s1583 = sor.u32 256, 120
        %1584 = vbcast.lane.b32.xlu0 %v1522, %s1583
        %v1585 = vpop.permute.xlu0 %1584
        %v1586 = vlaneseq
        %v1587 = vand.u32 %v1586, 127
        %vm1588 = vcmp.eq.s32.totalorder %v520, %v1587
        %vm1589 = vcmp.eq.s32.totalorder %v524, %v1587
        %vm1590 = vcmp.eq.s32.totalorder %v528, %v1587
        %vm1591 = vcmp.eq.s32.totalorder %v532, %v1587
        %vm1592 = vcmp.eq.s32.totalorder %v536, %v1587
        %vm1593 = vcmp.eq.s32.totalorder %v540, %v1587
        %vm1594 = vcmp.eq.s32.totalorder %v544, %v1587
        %vm1595 = vcmp.eq.s32.totalorder %v548, %v1587
        %vm1596 = vcmp.eq.s32.totalorder %v552, %v1587
        %vm1597 = vcmp.eq.s32.totalorder %v556, %v1587
        %vm1598 = vcmp.eq.s32.totalorder %v560, %v1587
        %vm1599 = vcmp.eq.s32.totalorder %v564, %v1587
        %vm1600 = vcmp.eq.s32.totalorder %v568, %v1587
        %vm1601 = vcmp.eq.s32.totalorder %v572, %v1587
        %vm1602 = vcmp.eq.s32.totalorder %v576, %v1587
        %vm1603 = vcmp.eq.s32.totalorder %v580, %v1587
        %vm1604 = vcmp.eq.s32.totalorder %v587, %v1587
        %vm1605 = vcmp.eq.s32.totalorder %v591, %v1587
        %vm1606 = vcmp.eq.s32.totalorder %v595, %v1587
        %vm1607 = vcmp.eq.s32.totalorder %v599, %v1587
        %vm1608 = vcmp.eq.s32.totalorder %v603, %v1587
        %vm1609 = vcmp.eq.s32.totalorder %v607, %v1587
        %vm1610 = vcmp.eq.s32.totalorder %v611, %v1587
        %vm1611 = vcmp.eq.s32.totalorder %v615, %v1587
        %vm1612 = vcmp.eq.s32.totalorder %v619, %v1587
        %vm1613 = vcmp.eq.s32.totalorder %v623, %v1587
        %vm1614 = vcmp.eq.s32.totalorder %v627, %v1587
        %vm1615 = vcmp.eq.s32.totalorder %v631, %v1587
        %vm1616 = vcmp.eq.s32.totalorder %v635, %v1587
        %vm1617 = vcmp.eq.s32.totalorder %v639, %v1587
        %vm1618 = vcmp.eq.s32.totalorder %v643, %v1587
        %vm1619 = vcmp.eq.s32.totalorder %v647, %v1587
        %vm1620 = vcmp.eq.s32.totalorder %v654, %v1587
        %vm1621 = vcmp.eq.s32.totalorder %v658, %v1587
        %vm1622 = vcmp.eq.s32.totalorder %v662, %v1587
        %vm1623 = vcmp.eq.s32.totalorder %v666, %v1587
        %vm1624 = vcmp.eq.s32.totalorder %v670, %v1587
        %vm1625 = vcmp.eq.s32.totalorder %v674, %v1587
        %vm1626 = vcmp.eq.s32.totalorder %v678, %v1587
        %vm1627 = vcmp.eq.s32.totalorder %v682, %v1587
        %vm1628 = vcmp.eq.s32.totalorder %v686, %v1587
        %vm1629 = vcmp.eq.s32.totalorder %v690, %v1587
        %vm1630 = vcmp.eq.s32.totalorder %v694, %v1587
        %vm1631 = vcmp.eq.s32.totalorder %v698, %v1587
        %vm1632 = vcmp.eq.s32.totalorder %v702, %v1587
        %vm1633 = vcmp.eq.s32.totalorder %v706, %v1587
        %vm1634 = vcmp.eq.s32.totalorder %v710, %v1587
        %vm1635 = vcmp.eq.s32.totalorder %v714, %v1587
        %vm1636 = vcmp.eq.s32.totalorder %v721, %v1587
        %vm1637 = vcmp.eq.s32.totalorder %v725, %v1587
        %vm1638 = vcmp.eq.s32.totalorder %v729, %v1587
        %vm1639 = vcmp.eq.s32.totalorder %v733, %v1587
        %vm1640 = vcmp.eq.s32.totalorder %v737, %v1587
        %vm1641 = vcmp.eq.s32.totalorder %v741, %v1587
        %vm1642 = vcmp.eq.s32.totalorder %v745, %v1587
        %vm1643 = vcmp.eq.s32.totalorder %v749, %v1587
        %vm1644 = vcmp.eq.s32.totalorder %v753, %v1587
        %vm1645 = vcmp.eq.s32.totalorder %v757, %v1587
        %vm1646 = vcmp.eq.s32.totalorder %v761, %v1587
        %vm1647 = vcmp.eq.s32.totalorder %v765, %v1587
        %vm1648 = vcmp.eq.s32.totalorder %v769, %v1587
        %vm1649 = vcmp.eq.s32.totalorder %v773, %v1587
        %vm1650 = vcmp.eq.s32.totalorder %v777, %v1587
        %vm1651 = vcmp.eq.s32.totalorder %v781, %v1587
        %vm1652 = vcmp.eq.s32.totalorder %v788, %v1587
        %vm1653 = vcmp.eq.s32.totalorder %v792, %v1587
        %vm1654 = vcmp.eq.s32.totalorder %v796, %v1587
        %vm1655 = vcmp.eq.s32.totalorder %v800, %v1587
        %vm1656 = vcmp.eq.s32.totalorder %v804, %v1587
        %vm1657 = vcmp.eq.s32.totalorder %v808, %v1587
        %vm1658 = vcmp.eq.s32.totalorder %v812, %v1587
        %vm1659 = vcmp.eq.s32.totalorder %v816, %v1587
        %vm1660 = vcmp.eq.s32.totalorder %v820, %v1587
        %vm1661 = vcmp.eq.s32.totalorder %v824, %v1587
        %vm1662 = vcmp.eq.s32.totalorder %v828, %v1587
        %vm1663 = vcmp.eq.s32.totalorder %v832, %v1587
        %vm1664 = vcmp.eq.s32.totalorder %v836, %v1587
        %vm1665 = vcmp.eq.s32.totalorder %v840, %v1587
        %vm1666 = vcmp.eq.s32.totalorder %v844, %v1587
        %vm1667 = vcmp.eq.s32.totalorder %v848, %v1587
        %vm1668 = vcmp.eq.s32.totalorder %v855, %v1587
        %vm1669 = vcmp.eq.s32.totalorder %v859, %v1587
        %vm1670 = vcmp.eq.s32.totalorder %v863, %v1587
        %vm1671 = vcmp.eq.s32.totalorder %v867, %v1587
        %vm1672 = vcmp.eq.s32.totalorder %v871, %v1587
        %vm1673 = vcmp.eq.s32.totalorder %v875, %v1587
        %vm1674 = vcmp.eq.s32.totalorder %v879, %v1587
        %vm1675 = vcmp.eq.s32.totalorder %v883, %v1587
        %vm1676 = vcmp.eq.s32.totalorder %v887, %v1587
        %vm1677 = vcmp.eq.s32.totalorder %v891, %v1587
        %vm1678 = vcmp.eq.s32.totalorder %v895, %v1587
        %vm1679 = vcmp.eq.s32.totalorder %v899, %v1587
        %vm1680 = vcmp.eq.s32.totalorder %v903, %v1587
        %vm1681 = vcmp.eq.s32.totalorder %v907, %v1587
        %vm1682 = vcmp.eq.s32.totalorder %v911, %v1587
        %vm1683 = vcmp.eq.s32.totalorder %v915, %v1587
        %vm1684 = vcmp.eq.s32.totalorder %v922, %v1587
        %vm1685 = vcmp.eq.s32.totalorder %v926, %v1587
        %vm1686 = vcmp.eq.s32.totalorder %v930, %v1587
        %vm1687 = vcmp.eq.s32.totalorder %v934, %v1587
        %vm1688 = vcmp.eq.s32.totalorder %v938, %v1587
        %vm1689 = vcmp.eq.s32.totalorder %v942, %v1587
        %vm1690 = vcmp.eq.s32.totalorder %v946, %v1587
        %vm1691 = vcmp.eq.s32.totalorder %v950, %v1587
        %vm1692 = vcmp.eq.s32.totalorder %v954, %v1587
        %vm1693 = vcmp.eq.s32.totalorder %v958, %v1587
        %vm1694 = vcmp.eq.s32.totalorder %v962, %v1587
        %vm1695 = vcmp.eq.s32.totalorder %v966, %v1587
        %vm1696 = vcmp.eq.s32.totalorder %v970, %v1587
        %vm1697 = vcmp.eq.s32.totalorder %v974, %v1587
        %vm1698 = vcmp.eq.s32.totalorder %v978, %v1587
        %vm1699 = vcmp.eq.s32.totalorder %v982, %v1587
        %vm1700 = vcmp.eq.s32.totalorder %v989, %v1587
        %vm1701 = vcmp.eq.s32.totalorder %v993, %v1587
        %vm1702 = vcmp.eq.s32.totalorder %v997, %v1587
        %vm1703 = vcmp.eq.s32.totalorder %v1001, %v1587
        %vm1704 = vcmp.eq.s32.totalorder %v1005, %v1587
        %vm1705 = vcmp.eq.s32.totalorder %v1009, %v1587
        %vm1706 = vcmp.eq.s32.totalorder %v1013, %v1587
        %vm1707 = vcmp.eq.s32.totalorder %v1017, %v1587
        %vm1708 = vcmp.eq.s32.totalorder %v1021, %v1587
        %vm1709 = vcmp.eq.s32.totalorder %v1025, %v1587
        %vm1710 = vcmp.eq.s32.totalorder %v1029, %v1587
        %vm1711 = vcmp.eq.s32.totalorder %v1033, %v1587
        %vm1712 = vcmp.eq.s32.totalorder %v1037, %v1587
        %vm1713 = vcmp.eq.s32.totalorder %v1041, %v1587
        %vm1714 = vcmp.eq.s32.totalorder %v1045, %v1587
        %vm1715 = vcmp.eq.s32.totalorder %v1049, %v1587
        %vm1716 = vcmp.eq.s32.totalorder %v1056, %v1587
        %vm1717 = vcmp.eq.s32.totalorder %v1060, %v1587
        %vm1718 = vcmp.eq.s32.totalorder %v1064, %v1587
        %vm1719 = vcmp.eq.s32.totalorder %v1068, %v1587
        %vm1720 = vcmp.eq.s32.totalorder %v1072, %v1587
        %vm1721 = vcmp.eq.s32.totalorder %v1076, %v1587
        %vm1722 = vcmp.eq.s32.totalorder %v1080, %v1587
        %vm1723 = vcmp.eq.s32.totalorder %v1084, %v1587
        %vm1724 = vcmp.eq.s32.totalorder %v1088, %v1587
        %vm1725 = vcmp.eq.s32.totalorder %v1092, %v1587
        %vm1726 = vcmp.eq.s32.totalorder %v1096, %v1587
        %vm1727 = vcmp.eq.s32.totalorder %v1100, %v1587
        %vm1728 = vcmp.eq.s32.totalorder %v1104, %v1587
        %vm1729 = vcmp.eq.s32.totalorder %v1108, %v1587
        %vm1730 = vcmp.eq.s32.totalorder %v1112, %v1587
        %vm1731 = vcmp.eq.s32.totalorder %v1116, %v1587
        %vm1732 = vcmp.eq.s32.totalorder %v1123, %v1587
        %vm1733 = vcmp.eq.s32.totalorder %v1127, %v1587
        %vm1734 = vcmp.eq.s32.totalorder %v1131, %v1587
        %vm1735 = vcmp.eq.s32.totalorder %v1135, %v1587
        %vm1736 = vcmp.eq.s32.totalorder %v1139, %v1587
        %vm1737 = vcmp.eq.s32.totalorder %v1143, %v1587
        %vm1738 = vcmp.eq.s32.totalorder %v1147, %v1587
        %vm1739 = vcmp.eq.s32.totalorder %v1151, %v1587
        %vm1740 = vcmp.eq.s32.totalorder %v1155, %v1587
        %vm1741 = vcmp.eq.s32.totalorder %v1159, %v1587
        %vm1742 = vcmp.eq.s32.totalorder %v1163, %v1587
        %vm1743 = vcmp.eq.s32.totalorder %v1167, %v1587
        %vm1744 = vcmp.eq.s32.totalorder %v1171, %v1587
        %vm1745 = vcmp.eq.s32.totalorder %v1175, %v1587
        %vm1746 = vcmp.eq.s32.totalorder %v1179, %v1587
        %vm1747 = vcmp.eq.s32.totalorder %v1183, %v1587
        %vm1748 = vcmp.eq.s32.totalorder %v1190, %v1587
        %vm1749 = vcmp.eq.s32.totalorder %v1194, %v1587
        %vm1750 = vcmp.eq.s32.totalorder %v1198, %v1587
        %vm1751 = vcmp.eq.s32.totalorder %v1202, %v1587
        %vm1752 = vcmp.eq.s32.totalorder %v1206, %v1587
        %vm1753 = vcmp.eq.s32.totalorder %v1210, %v1587
        %vm1754 = vcmp.eq.s32.totalorder %v1214, %v1587
        %vm1755 = vcmp.eq.s32.totalorder %v1218, %v1587
        %vm1756 = vcmp.eq.s32.totalorder %v1222, %v1587
        %vm1757 = vcmp.eq.s32.totalorder %v1226, %v1587
        %vm1758 = vcmp.eq.s32.totalorder %v1230, %v1587
        %vm1759 = vcmp.eq.s32.totalorder %v1234, %v1587
        %vm1760 = vcmp.eq.s32.totalorder %v1238, %v1587
        %vm1761 = vcmp.eq.s32.totalorder %v1242, %v1587
        %vm1762 = vcmp.eq.s32.totalorder %v1246, %v1587
        %vm1763 = vcmp.eq.s32.totalorder %v1250, %v1587
        %vm1764 = vcmp.eq.s32.totalorder %v1257, %v1587
        %vm1765 = vcmp.eq.s32.totalorder %v1261, %v1587
        %vm1766 = vcmp.eq.s32.totalorder %v1265, %v1587
        %vm1767 = vcmp.eq.s32.totalorder %v1269, %v1587
        %vm1768 = vcmp.eq.s32.totalorder %v1273, %v1587
        %vm1769 = vcmp.eq.s32.totalorder %v1277, %v1587
        %vm1770 = vcmp.eq.s32.totalorder %v1281, %v1587
        %vm1771 = vcmp.eq.s32.totalorder %v1285, %v1587
        %vm1772 = vcmp.eq.s32.totalorder %v1289, %v1587
        %vm1773 = vcmp.eq.s32.totalorder %v1293, %v1587
        %vm1774 = vcmp.eq.s32.totalorder %v1297, %v1587
        %vm1775 = vcmp.eq.s32.totalorder %v1301, %v1587
        %vm1776 = vcmp.eq.s32.totalorder %v1305, %v1587
        %vm1777 = vcmp.eq.s32.totalorder %v1309, %v1587
        %vm1778 = vcmp.eq.s32.totalorder %v1313, %v1587
        %vm1779 = vcmp.eq.s32.totalorder %v1317, %v1587
        %vm1780 = vcmp.eq.s32.totalorder %v1324, %v1587
        %vm1781 = vcmp.eq.s32.totalorder %v1328, %v1587
        %vm1782 = vcmp.eq.s32.totalorder %v1332, %v1587
        %vm1783 = vcmp.eq.s32.totalorder %v1336, %v1587
        %vm1784 = vcmp.eq.s32.totalorder %v1340, %v1587
        %vm1785 = vcmp.eq.s32.totalorder %v1344, %v1587
        %vm1786 = vcmp.eq.s32.totalorder %v1348, %v1587
        %vm1787 = vcmp.eq.s32.totalorder %v1352, %v1587
        %vm1788 = vcmp.eq.s32.totalorder %v1356, %v1587
        %vm1789 = vcmp.eq.s32.totalorder %v1360, %v1587
        %vm1790 = vcmp.eq.s32.totalorder %v1364, %v1587
        %vm1791 = vcmp.eq.s32.totalorder %v1368, %v1587
        %vm1792 = vcmp.eq.s32.totalorder %v1372, %v1587
        %vm1793 = vcmp.eq.s32.totalorder %v1376, %v1587
        %vm1794 = vcmp.eq.s32.totalorder %v1380, %v1587
        %vm1795 = vcmp.eq.s32.totalorder %v1384, %v1587
        %vm1796 = vcmp.eq.s32.totalorder %v1391, %v1587
        %vm1797 = vcmp.eq.s32.totalorder %v1395, %v1587
        %vm1798 = vcmp.eq.s32.totalorder %v1399, %v1587
        %vm1799 = vcmp.eq.s32.totalorder %v1403, %v1587
        %vm1800 = vcmp.eq.s32.totalorder %v1407, %v1587
        %vm1801 = vcmp.eq.s32.totalorder %v1411, %v1587
        %vm1802 = vcmp.eq.s32.totalorder %v1415, %v1587
        %vm1803 = vcmp.eq.s32.totalorder %v1419, %v1587
        %vm1804 = vcmp.eq.s32.totalorder %v1423, %v1587
        %vm1805 = vcmp.eq.s32.totalorder %v1427, %v1587
        %vm1806 = vcmp.eq.s32.totalorder %v1431, %v1587
        %vm1807 = vcmp.eq.s32.totalorder %v1435, %v1587
        %vm1808 = vcmp.eq.s32.totalorder %v1439, %v1587
        %vm1809 = vcmp.eq.s32.totalorder %v1443, %v1587
        %vm1810 = vcmp.eq.s32.totalorder %v1447, %v1587
        %vm1811 = vcmp.eq.s32.totalorder %v1451, %v1587
        %vm1812 = vcmp.eq.s32.totalorder %v1458, %v1587
        %vm1813 = vcmp.eq.s32.totalorder %v1462, %v1587
        %vm1814 = vcmp.eq.s32.totalorder %v1466, %v1587
        %vm1815 = vcmp.eq.s32.totalorder %v1470, %v1587
        %vm1816 = vcmp.eq.s32.totalorder %v1474, %v1587
        %vm1817 = vcmp.eq.s32.totalorder %v1478, %v1587
        %vm1818 = vcmp.eq.s32.totalorder %v1482, %v1587
        %vm1819 = vcmp.eq.s32.totalorder %v1486, %v1587
        %vm1820 = vcmp.eq.s32.totalorder %v1490, %v1587
        %vm1821 = vcmp.eq.s32.totalorder %v1494, %v1587
        %vm1822 = vcmp.eq.s32.totalorder %v1498, %v1587
        %vm1823 = vcmp.eq.s32.totalorder %v1502, %v1587
        %vm1824 = vcmp.eq.s32.totalorder %v1506, %v1587
        %vm1825 = vcmp.eq.s32.totalorder %v1510, %v1587
        %vm1826 = vcmp.eq.s32.totalorder %v1514, %v1587
        %vm1827 = vcmp.eq.s32.totalorder %v1518, %v1587
        %vm1828 = vcmp.eq.s32.totalorder %v1525, %v1587
        %vm1829 = vcmp.eq.s32.totalorder %v1529, %v1587
        %vm1830 = vcmp.eq.s32.totalorder %v1533, %v1587
        %vm1831 = vcmp.eq.s32.totalorder %v1537, %v1587
        %vm1832 = vcmp.eq.s32.totalorder %v1541, %v1587
        %vm1833 = vcmp.eq.s32.totalorder %v1545, %v1587
        %vm1834 = vcmp.eq.s32.totalorder %v1549, %v1587
        %vm1835 = vcmp.eq.s32.totalorder %v1553, %v1587
        %vm1836 = vcmp.eq.s32.totalorder %v1557, %v1587
        %vm1837 = vcmp.eq.s32.totalorder %v1561, %v1587
        %vm1838 = vcmp.eq.s32.totalorder %v1565, %v1587
        %vm1839 = vcmp.eq.s32.totalorder %v1569, %v1587
        %vm1840 = vcmp.eq.s32.totalorder %v1573, %v1587
        %vm1841 = vcmp.eq.s32.totalorder %v1577, %v1587
        %vm1842 = vcmp.eq.s32.totalorder %v1581, %v1587
        %vm1843 = vcmp.eq.s32.totalorder %v1585, %v1587
        %v1844 = vsel %vm1588, 1.0, 0.0
        %v1845 = vsel %vm1589, 1.0, 0.0
        %v1846 = vsel %vm1590, 1.0, 0.0
        %v1847 = vsel %vm1591, 1.0, 0.0
        %v1848 = vsel %vm1592, 1.0, 0.0
        %v1849 = vsel %vm1593, 1.0, 0.0
        %v1850 = vsel %vm1594, 1.0, 0.0
        %v1851 = vsel %vm1595, 1.0, 0.0
        %v1852 = vsel %vm1596, 1.0, 0.0
        %v1853 = vsel %vm1597, 1.0, 0.0
        %v1854 = vsel %vm1598, 1.0, 0.0
        %v1855 = vsel %vm1599, 1.0, 0.0
        %v1856 = vsel %vm1600, 1.0, 0.0
        %v1857 = vsel %vm1601, 1.0, 0.0
        %v1858 = vsel %vm1602, 1.0, 0.0
        %v1859 = vsel %vm1603, 1.0, 0.0
        %v1860 = vsel %vm1604, 1.0, 0.0
        %v1861 = vsel %vm1605, 1.0, 0.0
        %v1862 = vsel %vm1606, 1.0, 0.0
        %v1863 = vsel %vm1607, 1.0, 0.0
        %v1864 = vsel %vm1608, 1.0, 0.0
        %v1865 = vsel %vm1609, 1.0, 0.0
        %v1866 = vsel %vm1610, 1.0, 0.0
        %v1867 = vsel %vm1611, 1.0, 0.0
        %v1868 = vsel %vm1612, 1.0, 0.0
        %v1869 = vsel %vm1613, 1.0, 0.0
        %v1870 = vsel %vm1614, 1.0, 0.0
        %v1871 = vsel %vm1615, 1.0, 0.0
        %v1872 = vsel %vm1616, 1.0, 0.0
        %v1873 = vsel %vm1617, 1.0, 0.0
        %v1874 = vsel %vm1618, 1.0, 0.0
        %v1875 = vsel %vm1619, 1.0, 0.0
        %v1876 = vsel %vm1620, 1.0, 0.0
        %v1877 = vsel %vm1621, 1.0, 0.0
        %v1878 = vsel %vm1622, 1.0, 0.0
        %v1879 = vsel %vm1623, 1.0, 0.0
        %v1880 = vsel %vm1624, 1.0, 0.0
        %v1881 = vsel %vm1625, 1.0, 0.0
        %v1882 = vsel %vm1626, 1.0, 0.0
        %v1883 = vsel %vm1627, 1.0, 0.0
        %v1884 = vsel %vm1628, 1.0, 0.0
        %v1885 = vsel %vm1629, 1.0, 0.0
        %v1886 = vsel %vm1630, 1.0, 0.0
        %v1887 = vsel %vm1631, 1.0, 0.0
        %v1888 = vsel %vm1632, 1.0, 0.0
        %v1889 = vsel %vm1633, 1.0, 0.0
        %v1890 = vsel %vm1634, 1.0, 0.0
        %v1891 = vsel %vm1635, 1.0, 0.0
        %v1892 = vsel %vm1636, 1.0, 0.0
        %v1893 = vsel %vm1637, 1.0, 0.0
        %v1894 = vsel %vm1638, 1.0, 0.0
        %v1895 = vsel %vm1639, 1.0, 0.0
        %v1896 = vsel %vm1640, 1.0, 0.0
        %v1897 = vsel %vm1641, 1.0, 0.0
        %v1898 = vsel %vm1642, 1.0, 0.0
        %v1899 = vsel %vm1643, 1.0, 0.0
        %v1900 = vsel %vm1644, 1.0, 0.0
        %v1901 = vsel %vm1645, 1.0, 0.0
        %v1902 = vsel %vm1646, 1.0, 0.0
        %v1903 = vsel %vm1647, 1.0, 0.0
        %v1904 = vsel %vm1648, 1.0, 0.0
        %v1905 = vsel %vm1649, 1.0, 0.0
        %v1906 = vsel %vm1650, 1.0, 0.0
        %v1907 = vsel %vm1651, 1.0, 0.0
        %v1908 = vsel %vm1652, 1.0, 0.0
        %v1909 = vsel %vm1653, 1.0, 0.0
        %v1910 = vsel %vm1654, 1.0, 0.0
        %v1911 = vsel %vm1655, 1.0, 0.0
        %v1912 = vsel %vm1656, 1.0, 0.0
        %v1913 = vsel %vm1657, 1.0, 0.0
        %v1914 = vsel %vm1658, 1.0, 0.0
        %v1915 = vsel %vm1659, 1.0, 0.0
        %v1916 = vsel %vm1660, 1.0, 0.0
        %v1917 = vsel %vm1661, 1.0, 0.0
        %v1918 = vsel %vm1662, 1.0, 0.0
        %v1919 = vsel %vm1663, 1.0, 0.0
        %v1920 = vsel %vm1664, 1.0, 0.0
        %v1921 = vsel %vm1665, 1.0, 0.0
        %v1922 = vsel %vm1666, 1.0, 0.0
        %v1923 = vsel %vm1667, 1.0, 0.0
        %v1924 = vsel %vm1668, 1.0, 0.0
        %v1925 = vsel %vm1669, 1.0, 0.0
        %v1926 = vsel %vm1670, 1.0, 0.0
        %v1927 = vsel %vm1671, 1.0, 0.0
        %v1928 = vsel %vm1672, 1.0, 0.0
        %v1929 = vsel %vm1673, 1.0, 0.0
        %v1930 = vsel %vm1674, 1.0, 0.0
        %v1931 = vsel %vm1675, 1.0, 0.0
        %v1932 = vsel %vm1676, 1.0, 0.0
        %v1933 = vsel %vm1677, 1.0, 0.0
        %v1934 = vsel %vm1678, 1.0, 0.0
        %v1935 = vsel %vm1679, 1.0, 0.0
        %v1936 = vsel %vm1680, 1.0, 0.0
        %v1937 = vsel %vm1681, 1.0, 0.0
        %v1938 = vsel %vm1682, 1.0, 0.0
        %v1939 = vsel %vm1683, 1.0, 0.0
        %v1940 = vsel %vm1684, 1.0, 0.0
        %v1941 = vsel %vm1685, 1.0, 0.0
        %v1942 = vsel %vm1686, 1.0, 0.0
        %v1943 = vsel %vm1687, 1.0, 0.0
        %v1944 = vsel %vm1688, 1.0, 0.0
        %v1945 = vsel %vm1689, 1.0, 0.0
        %v1946 = vsel %vm1690, 1.0, 0.0
        %v1947 = vsel %vm1691, 1.0, 0.0
        %v1948 = vsel %vm1692, 1.0, 0.0
        %v1949 = vsel %vm1693, 1.0, 0.0
        %v1950 = vsel %vm1694, 1.0, 0.0
        %v1951 = vsel %vm1695, 1.0, 0.0
        %v1952 = vsel %vm1696, 1.0, 0.0
        %v1953 = vsel %vm1697, 1.0, 0.0
        %v1954 = vsel %vm1698, 1.0, 0.0
        %v1955 = vsel %vm1699, 1.0, 0.0
        %v1956 = vsel %vm1700, 1.0, 0.0
        %v1957 = vsel %vm1701, 1.0, 0.0
        %v1958 = vsel %vm1702, 1.0, 0.0
        %v1959 = vsel %vm1703, 1.0, 0.0
        %v1960 = vsel %vm1704, 1.0, 0.0
        %v1961 = vsel %vm1705, 1.0, 0.0
        %v1962 = vsel %vm1706, 1.0, 0.0
        %v1963 = vsel %vm1707, 1.0, 0.0
        %v1964 = vsel %vm1708, 1.0, 0.0
        %v1965 = vsel %vm1709, 1.0, 0.0
        %v1966 = vsel %vm1710, 1.0, 0.0
        %v1967 = vsel %vm1711, 1.0, 0.0
        %v1968 = vsel %vm1712, 1.0, 0.0
        %v1969 = vsel %vm1713, 1.0, 0.0
        %v1970 = vsel %vm1714, 1.0, 0.0
        %v1971 = vsel %vm1715, 1.0, 0.0
        %v1972 = vsel %vm1716, 1.0, 0.0
        %v1973 = vsel %vm1717, 1.0, 0.0
        %v1974 = vsel %vm1718, 1.0, 0.0
        %v1975 = vsel %vm1719, 1.0, 0.0
        %v1976 = vsel %vm1720, 1.0, 0.0
        %v1977 = vsel %vm1721, 1.0, 0.0
        %v1978 = vsel %vm1722, 1.0, 0.0
        %v1979 = vsel %vm1723, 1.0, 0.0
        %v1980 = vsel %vm1724, 1.0, 0.0
        %v1981 = vsel %vm1725, 1.0, 0.0
        %v1982 = vsel %vm1726, 1.0, 0.0
        %v1983 = vsel %vm1727, 1.0, 0.0
        %v1984 = vsel %vm1728, 1.0, 0.0
        %v1985 = vsel %vm1729, 1.0, 0.0
        %v1986 = vsel %vm1730, 1.0, 0.0
        %v1987 = vsel %vm1731, 1.0, 0.0
        %v1988 = vsel %vm1732, 1.0, 0.0
        %v1989 = vsel %vm1733, 1.0, 0.0
        %v1990 = vsel %vm1734, 1.0, 0.0
        %v1991 = vsel %vm1735, 1.0, 0.0
        %v1992 = vsel %vm1736, 1.0, 0.0
        %v1993 = vsel %vm1737, 1.0, 0.0
        %v1994 = vsel %vm1738, 1.0, 0.0
        %v1995 = vsel %vm1739, 1.0, 0.0
        %v1996 = vsel %vm1740, 1.0, 0.0
        %v1997 = vsel %vm1741, 1.0, 0.0
        %v1998 = vsel %vm1742, 1.0, 0.0
        %v1999 = vsel %vm1743, 1.0, 0.0
        %v2000 = vsel %vm1744, 1.0, 0.0
        %v2001 = vsel %vm1745, 1.0, 0.0
        %v2002 = vsel %vm1746, 1.0, 0.0
        %v2003 = vsel %vm1747, 1.0, 0.0
        %v2004 = vsel %vm1748, 1.0, 0.0
        %v2005 = vsel %vm1749, 1.0, 0.0
        %v2006 = vsel %vm1750, 1.0, 0.0
        %v2007 = vsel %vm1751, 1.0, 0.0
        %v2008 = vsel %vm1752, 1.0, 0.0
        %v2009 = vsel %vm1753, 1.0, 0.0
        %v2010 = vsel %vm1754, 1.0, 0.0
        %v2011 = vsel %vm1755, 1.0, 0.0
        %v2012 = vsel %vm1756, 1.0, 0.0
        %v2013 = vsel %vm1757, 1.0, 0.0
        %v2014 = vsel %vm1758, 1.0, 0.0
        %v2015 = vsel %vm1759, 1.0, 0.0
        %v2016 = vsel %vm1760, 1.0, 0.0
        %v2017 = vsel %vm1761, 1.0, 0.0
        %v2018 = vsel %vm1762, 1.0, 0.0
        %v2019 = vsel %vm1763, 1.0, 0.0
        %v2020 = vsel %vm1764, 1.0, 0.0
        %v2021 = vsel %vm1765, 1.0, 0.0
        %v2022 = vsel %vm1766, 1.0, 0.0
        %v2023 = vsel %vm1767, 1.0, 0.0
        %v2024 = vsel %vm1768, 1.0, 0.0
        %v2025 = vsel %vm1769, 1.0, 0.0
        %v2026 = vsel %vm1770, 1.0, 0.0
        %v2027 = vsel %vm1771, 1.0, 0.0
        %v2028 = vsel %vm1772, 1.0, 0.0
        %v2029 = vsel %vm1773, 1.0, 0.0
        %v2030 = vsel %vm1774, 1.0, 0.0
        %v2031 = vsel %vm1775, 1.0, 0.0
        %v2032 = vsel %vm1776, 1.0, 0.0
        %v2033 = vsel %vm1777, 1.0, 0.0
        %v2034 = vsel %vm1778, 1.0, 0.0
        %v2035 = vsel %vm1779, 1.0, 0.0
        %v2036 = vsel %vm1780, 1.0, 0.0
        %v2037 = vsel %vm1781, 1.0, 0.0
        %v2038 = vsel %vm1782, 1.0, 0.0
        %v2039 = vsel %vm1783, 1.0, 0.0
        %v2040 = vsel %vm1784, 1.0, 0.0
        %v2041 = vsel %vm1785, 1.0, 0.0
        %v2042 = vsel %vm1786, 1.0, 0.0
        %v2043 = vsel %vm1787, 1.0, 0.0
        %v2044 = vsel %vm1788, 1.0, 0.0
        %v2045 = vsel %vm1789, 1.0, 0.0
        %v2046 = vsel %vm1790, 1.0, 0.0
        %v2047 = vsel %vm1791, 1.0, 0.0
        %v2048 = vsel %vm1792, 1.0, 0.0
        %v2049 = vsel %vm1793, 1.0, 0.0
        %v2050 = vsel %vm1794, 1.0, 0.0
        %v2051 = vsel %vm1795, 1.0, 0.0
        %v2052 = vsel %vm1796, 1.0, 0.0
        %v2053 = vsel %vm1797, 1.0, 0.0
        %v2054 = vsel %vm1798, 1.0, 0.0
        %v2055 = vsel %vm1799, 1.0, 0.0
        %v2056 = vsel %vm1800, 1.0, 0.0
        %v2057 = vsel %vm1801, 1.0, 0.0
        %v2058 = vsel %vm1802, 1.0, 0.0
        %v2059 = vsel %vm1803, 1.0, 0.0
        %v2060 = vsel %vm1804, 1.0, 0.0
        %v2061 = vsel %vm1805, 1.0, 0.0
        %v2062 = vsel %vm1806, 1.0, 0.0
        %v2063 = vsel %vm1807, 1.0, 0.0
        %v2064 = vsel %vm1808, 1.0, 0.0
        %v2065 = vsel %vm1809, 1.0, 0.0
        %v2066 = vsel %vm1810, 1.0, 0.0
        %v2067 = vsel %vm1811, 1.0, 0.0
        %v2068 = vsel %vm1812, 1.0, 0.0
        %v2069 = vsel %vm1813, 1.0, 0.0
        %v2070 = vsel %vm1814, 1.0, 0.0
        %v2071 = vsel %vm1815, 1.0, 0.0
        %v2072 = vsel %vm1816, 1.0, 0.0
        %v2073 = vsel %vm1817, 1.0, 0.0
        %v2074 = vsel %vm1818, 1.0, 0.0
        %v2075 = vsel %vm1819, 1.0, 0.0
        %v2076 = vsel %vm1820, 1.0, 0.0
        %v2077 = vsel %vm1821, 1.0, 0.0
        %v2078 = vsel %vm1822, 1.0, 0.0
        %v2079 = vsel %vm1823, 1.0, 0.0
        %v2080 = vsel %vm1824, 1.0, 0.0
        %v2081 = vsel %vm1825, 1.0, 0.0
        %v2082 = vsel %vm1826, 1.0, 0.0
        %v2083 = vsel %vm1827, 1.0, 0.0
        %v2084 = vsel %vm1828, 1.0, 0.0
        %v2085 = vsel %vm1829, 1.0, 0.0
        %v2086 = vsel %vm1830, 1.0, 0.0
        %v2087 = vsel %vm1831, 1.0, 0.0
        %v2088 = vsel %vm1832, 1.0, 0.0
        %v2089 = vsel %vm1833, 1.0, 0.0
        %v2090 = vsel %vm1834, 1.0, 0.0
        %v2091 = vsel %vm1835, 1.0, 0.0
        %v2092 = vsel %vm1836, 1.0, 0.0
        %v2093 = vsel %vm1837, 1.0, 0.0
        %v2094 = vsel %vm1838, 1.0, 0.0
        %v2095 = vsel %vm1839, 1.0, 0.0
        %v2096 = vsel %vm1840, 1.0, 0.0
        %v2097 = vsel %vm1841, 1.0, 0.0
        %v2098 = vsel %vm1842, 1.0, 0.0
        %v2099 = vsel %vm1843, 1.0, 0.0
        %v2100 = vpack.c.bf16 %v1845, %v1844
        %v2101 = vpack.c.bf16 %v1847, %v1846
        %v2102 = vpack.c.bf16 %v1849, %v1848
        %v2103 = vpack.c.bf16 %v1851, %v1850
        %v2104 = vpack.c.bf16 %v1853, %v1852
        %v2105 = vpack.c.bf16 %v1855, %v1854
        %v2106 = vpack.c.bf16 %v1857, %v1856
        %v2107 = vpack.c.bf16 %v1859, %v1858
        %v2108 = vpack.c.bf16 %v1861, %v1860
        %v2109 = vpack.c.bf16 %v1863, %v1862
        %v2110 = vpack.c.bf16 %v1865, %v1864
        %v2111 = vpack.c.bf16 %v1867, %v1866
        %v2112 = vpack.c.bf16 %v1869, %v1868
        %v2113 = vpack.c.bf16 %v1871, %v1870
        %v2114 = vpack.c.bf16 %v1873, %v1872
        %v2115 = vpack.c.bf16 %v1875, %v1874
        %v2116 = vpack.c.bf16 %v1877, %v1876
        %v2117 = vpack.c.bf16 %v1879, %v1878
        %v2118 = vpack.c.bf16 %v1881, %v1880
        %v2119 = vpack.c.bf16 %v1883, %v1882
        %v2120 = vpack.c.bf16 %v1885, %v1884
        %v2121 = vpack.c.bf16 %v1887, %v1886
        %v2122 = vpack.c.bf16 %v1889, %v1888
        %v2123 = vpack.c.bf16 %v1891, %v1890
        %v2124 = vpack.c.bf16 %v1893, %v1892
        %v2125 = vpack.c.bf16 %v1895, %v1894
        %v2126 = vpack.c.bf16 %v1897, %v1896
        %v2127 = vpack.c.bf16 %v1899, %v1898
        %v2128 = vpack.c.bf16 %v1901, %v1900
        %v2129 = vpack.c.bf16 %v1903, %v1902
        %v2130 = vpack.c.bf16 %v1905, %v1904
        %v2131 = vpack.c.bf16 %v1907, %v1906
        %v2132 = vpack.c.bf16 %v1909, %v1908
        %v2133 = vpack.c.bf16 %v1911, %v1910
        %v2134 = vpack.c.bf16 %v1913, %v1912
        %v2135 = vpack.c.bf16 %v1915, %v1914
        %v2136 = vpack.c.bf16 %v1917, %v1916
        %v2137 = vpack.c.bf16 %v1919, %v1918
        %v2138 = vpack.c.bf16 %v1921, %v1920
        %v2139 = vpack.c.bf16 %v1923, %v1922
        %v2140 = vpack.c.bf16 %v1925, %v1924
        %v2141 = vpack.c.bf16 %v1927, %v1926
        %v2142 = vpack.c.bf16 %v1929, %v1928
        %v2143 = vpack.c.bf16 %v1931, %v1930
        %v2144 = vpack.c.bf16 %v1933, %v1932
        %v2145 = vpack.c.bf16 %v1935, %v1934
        %v2146 = vpack.c.bf16 %v1937, %v1936
        %v2147 = vpack.c.bf16 %v1939, %v1938
        %v2148 = vpack.c.bf16 %v1941, %v1940
        %v2149 = vpack.c.bf16 %v1943, %v1942
        %v2150 = vpack.c.bf16 %v1945, %v1944
        %v2151 = vpack.c.bf16 %v1947, %v1946
        %v2152 = vpack.c.bf16 %v1949, %v1948
        %v2153 = vpack.c.bf16 %v1951, %v1950
        %v2154 = vpack.c.bf16 %v1953, %v1952
        %v2155 = vpack.c.bf16 %v1955, %v1954
        %v2156 = vpack.c.bf16 %v1957, %v1956
        %v2157 = vpack.c.bf16 %v1959, %v1958
        %v2158 = vpack.c.bf16 %v1961, %v1960
        %v2159 = vpack.c.bf16 %v1963, %v1962
        %v2160 = vpack.c.bf16 %v1965, %v1964
        %v2161 = vpack.c.bf16 %v1967, %v1966
        %v2162 = vpack.c.bf16 %v1969, %v1968
        %v2163 = vpack.c.bf16 %v1971, %v1970
        %v2164 = vpack.c.bf16 %v1973, %v1972
        %v2165 = vpack.c.bf16 %v1975, %v1974
        %v2166 = vpack.c.bf16 %v1977, %v1976
        %v2167 = vpack.c.bf16 %v1979, %v1978
        %v2168 = vpack.c.bf16 %v1981, %v1980
        %v2169 = vpack.c.bf16 %v1983, %v1982
        %v2170 = vpack.c.bf16 %v1985, %v1984
        %v2171 = vpack.c.bf16 %v1987, %v1986
        %v2172 = vpack.c.bf16 %v1989, %v1988
        %v2173 = vpack.c.bf16 %v1991, %v1990
        %v2174 = vpack.c.bf16 %v1993, %v1992
        %v2175 = vpack.c.bf16 %v1995, %v1994
        %v2176 = vpack.c.bf16 %v1997, %v1996
        %v2177 = vpack.c.bf16 %v1999, %v1998
        %v2178 = vpack.c.bf16 %v2001, %v2000
        %v2179 = vpack.c.bf16 %v2003, %v2002
        %v2180 = vpack.c.bf16 %v2005, %v2004
        %v2181 = vpack.c.bf16 %v2007, %v2006
        %v2182 = vpack.c.bf16 %v2009, %v2008
        %v2183 = vpack.c.bf16 %v2011, %v2010
        %v2184 = vpack.c.bf16 %v2013, %v2012
        %v2185 = vpack.c.bf16 %v2015, %v2014
        %v2186 = vpack.c.bf16 %v2017, %v2016
        %v2187 = vpack.c.bf16 %v2019, %v2018
        %v2188 = vpack.c.bf16 %v2021, %v2020
        %v2189 = vpack.c.bf16 %v2023, %v2022
        %v2190 = vpack.c.bf16 %v2025, %v2024
        %v2191 = vpack.c.bf16 %v2027, %v2026
        %v2192 = vpack.c.bf16 %v2029, %v2028
        %v2193 = vpack.c.bf16 %v2031, %v2030
        %v2194 = vpack.c.bf16 %v2033, %v2032
        %v2195 = vpack.c.bf16 %v2035, %v2034
        %v2196 = vpack.c.bf16 %v2037, %v2036
        %v2197 = vpack.c.bf16 %v2039, %v2038
        %v2198 = vpack.c.bf16 %v2041, %v2040
        %v2199 = vpack.c.bf16 %v2043, %v2042
        %v2200 = vpack.c.bf16 %v2045, %v2044
        %v2201 = vpack.c.bf16 %v2047, %v2046
        %v2202 = vpack.c.bf16 %v2049, %v2048
        %v2203 = vpack.c.bf16 %v2051, %v2050
        %v2204 = vpack.c.bf16 %v2053, %v2052
        %v2205 = vpack.c.bf16 %v2055, %v2054
        %v2206 = vpack.c.bf16 %v2057, %v2056
        %v2207 = vpack.c.bf16 %v2059, %v2058
        %v2208 = vpack.c.bf16 %v2061, %v2060
        %v2209 = vpack.c.bf16 %v2063, %v2062
        %v2210 = vpack.c.bf16 %v2065, %v2064
        %v2211 = vpack.c.bf16 %v2067, %v2066
        %v2212 = vpack.c.bf16 %v2069, %v2068
        %v2213 = vpack.c.bf16 %v2071, %v2070
        %v2214 = vpack.c.bf16 %v2073, %v2072
        %v2215 = vpack.c.bf16 %v2075, %v2074
        %v2216 = vpack.c.bf16 %v2077, %v2076
        %v2217 = vpack.c.bf16 %v2079, %v2078
        %v2218 = vpack.c.bf16 %v2081, %v2080
        %v2219 = vpack.c.bf16 %v2083, %v2082
        %v2220 = vpack.c.bf16 %v2085, %v2084
        %v2221 = vpack.c.bf16 %v2087, %v2086
        %v2222 = vpack.c.bf16 %v2089, %v2088
        %v2223 = vpack.c.bf16 %v2091, %v2090
        %v2224 = vpack.c.bf16 %v2093, %v2092
        %v2225 = vpack.c.bf16 %v2095, %v2094
        %v2226 = vpack.c.bf16 %v2097, %v2096
        %v2227 = vpack.c.bf16 %v2099, %v2098
        %v2228 = vld [vmem:[%s2] sm:$0xf]
        %v2229 = vld [vmem:[%s2 + $0x4] sm:$0xf]
        %v2230 = vld [vmem:[%s2 + $0x8] sm:$0xf]
        %v2231 = vld [vmem:[%s2 + $0xc] sm:$0xf]
        %v2232 = vld [vmem:[%s2 + $0x10] sm:$0xf]
        %v2233 = vld [vmem:[%s2 + $0x14] sm:$0xf]
        %v2234 = vld [vmem:[%s2 + $0x18] sm:$0xf]
        %v2235 = vld [vmem:[%s2 + $0x1c] sm:$0xf]
        %v2236 = vld [vmem:[%s2 + $0x20] sm:$0xf]
        %v2237 = vld [vmem:[%s2 + $0x24] sm:$0xf]
        %v2238 = vld [vmem:[%s2 + $0x28] sm:$0xf]
        %v2239 = vld [vmem:[%s2 + $0x2c] sm:$0xf]
        %v2240 = vld [vmem:[%s2 + $0x30] sm:$0xf]
        %v2241 = vld [vmem:[%s2 + $0x34] sm:$0xf]
        %v2242 = vld [vmem:[%s2 + $0x38] sm:$0xf]
        %v2243 = vld [vmem:[%s2 + $0x3c] sm:$0xf]
        %v2260 = vunpack.c.l.b16 %v2228
        %v2261 = vunpack.c.l.b16 %v2229
        %v2262 = vunpack.c.l.b16 %v2230
        %v2263 = vunpack.c.l.b16 %v2231
        %v2264 = vunpack.c.l.b16 %v2232
        %v2265 = vunpack.c.l.b16 %v2233
        %v2266 = vunpack.c.l.b16 %v2234
        %v2267 = vunpack.c.l.b16 %v2235
        %v2268 = vunpack.c.l.b16 %v2236
        %v2269 = vunpack.c.l.b16 %v2237
        %v2270 = vunpack.c.l.b16 %v2238
        %v2271 = vunpack.c.l.b16 %v2239
        %v2272 = vunpack.c.l.b16 %v2240
        %v2273 = vunpack.c.l.b16 %v2241
        %v2274 = vunpack.c.l.b16 %v2242
        %v2275 = vunpack.c.l.b16 %v2243
        %v2276 = vpack.c.b16 %v2261, %v2260
        %v2277 = vpack.c.b16 %v2263, %v2262
        %v2278 = vpack.c.b16 %v2265, %v2264
        %v2279 = vpack.c.b16 %v2267, %v2266
        %v2280 = vpack.c.b16 %v2269, %v2268
        %v2281 = vpack.c.b16 %v2271, %v2270
        %v2282 = vpack.c.b16 %v2273, %v2272
        %v2283 = vpack.c.b16 %v2275, %v2274
        %2292 = vmatprep.subr.bf16.mxu0 0
        %2293 = vmatpush1.bf16.msra.mxu0 %v2283
        %2294 = vmatprep.subr.bf16.mxu0 0
        %2295 = vmatpush1.bf16.msra.mxu0 %v2282
        %2296 = vmatprep.subr.bf16.mxu0 0
        %2297 = vmatpush1.bf16.msra.mxu0 %v2281
        %2298 = vmatprep.subr.bf16.mxu0 0
        %2299 = vmatpush1.bf16.msra.mxu0 %v2280
        %2300 = vmatprep.subr.bf16.mxu0 0
        %2301 = vmatpush1.bf16.msra.mxu0 %v2279
        %2302 = vmatprep.subr.bf16.mxu0 0
        %2303 = vmatpush1.bf16.msra.mxu0 %v2278
        %2304 = vmatprep.subr.bf16.mxu0 0
        %2305 = vmatpush1.bf16.msra.mxu0 %v2277
        %2306 = vmatprep.subr.bf16.mxu0 0
        %2307 = vmatpush1.bf16.msra.mxu0 %v2276
        %2308 = vmatprep.subr.bf16.mxu0 0
        %2309 = vmatpush2.bf16.msra.mxu0 0
        %2310 = vmatprep.subr.bf16.mxu0 0
        %2311 = vmatpush2.bf16.msra.mxu0 0
        %2312 = vmatprep.subr.bf16.mxu0 0
        %2313 = vmatpush2.bf16.msra.mxu0 0
        %2314 = vmatprep.subr.bf16.mxu0 0
        %2315 = vmatpush2.bf16.msra.mxu0 0
        %2316 = vmatprep.subr.bf16.mxu0 0
        %2317 = vmatpush2.bf16.msra.mxu0 0
        %2318 = vmatprep.subr.bf16.mxu0 0
        %2319 = vmatpush2.bf16.msra.mxu0 0
        %2320 = vmatprep.subr.bf16.mxu0 0
        %2321 = vmatpush2.bf16.msra.mxu0 0
        %2322 = vmatprep.subr.bf16.mxu0 0
        %2323 = vmatpush2.bf16.msra.mxu0 0
        %2324 = vmatprep.mubr.bf16.mxu0 0
        %2325 = vmatmul.mubr.bf16.gmra.mxu0 %v2100
        %v2326 = vpop.f32.mrf.mxu0
        %v2327 = vadd.f32 0.0, %v2326
        %v2328 = vpop.f32.mrf.mxu0
        %v2329 = vpop.f32.mrf.mxu0
        %v2330 = vadd.f32 0.0, %v2329
        %v2331 = vpop.f32.mrf.mxu0
        %2332 = vmatprep.mubr.bf16.mxu0 0
        %2333 = vmatmul.mubr.bf16.gmra.mxu0 %v2101
        %v2334 = vpop.f32.mrf.mxu0
        %v2335 = vadd.f32 0.0, %v2334
        %v2336 = vpop.f32.mrf.mxu0
        %v2337 = vpop.f32.mrf.mxu0
        %v2338 = vadd.f32 0.0, %v2337
        %v2339 = vpop.f32.mrf.mxu0
        %2340 = vmatprep.mubr.bf16.mxu0 0
        %2341 = vmatmul.mubr.bf16.gmra.mxu0 %v2102
        %v2342 = vpop.f32.mrf.mxu0
        %v2343 = vadd.f32 0.0, %v2342
        %v2344 = vpop.f32.mrf.mxu0
        %v2345 = vpop.f32.mrf.mxu0
        %v2346 = vadd.f32 0.0, %v2345
        %v2347 = vpop.f32.mrf.mxu0
        %2348 = vmatprep.mubr.bf16.mxu0 0
        %2349 = vmatmul.mubr.bf16.gmra.mxu0 %v2103
        %v2350 = vpop.f32.mrf.mxu0
        %v2351 = vadd.f32 0.0, %v2350
        %v2352 = vpop.f32.mrf.mxu0
        %v2353 = vpop.f32.mrf.mxu0
        %v2354 = vadd.f32 0.0, %v2353
        %v2355 = vpop.f32.mrf.mxu0
        %2356 = vmatprep.mubr.bf16.mxu0 0
        %2357 = vmatmul.mubr.bf16.gmra.mxu0 %v2104
        %v2358 = vpop.f32.mrf.mxu0
        %v2359 = vadd.f32 0.0, %v2358
        %v2360 = vpop.f32.mrf.mxu0
        %v2361 = vpop.f32.mrf.mxu0
        %v2362 = vadd.f32 0.0, %v2361
        %v2363 = vpop.f32.mrf.mxu0
        %2364 = vmatprep.mubr.bf16.mxu0 0
        %2365 = vmatmul.mubr.bf16.gmra.mxu0 %v2105
        %v2366 = vpop.f32.mrf.mxu0
        %v2367 = vadd.f32 0.0, %v2366
        %v2368 = vpop.f32.mrf.mxu0
        %v2369 = vpop.f32.mrf.mxu0
        %v2370 = vadd.f32 0.0, %v2369
        %v2371 = vpop.f32.mrf.mxu0
        %2372 = vmatprep.mubr.bf16.mxu0 0
        %2373 = vmatmul.mubr.bf16.gmra.mxu0 %v2106
        %v2374 = vpop.f32.mrf.mxu0
        %v2375 = vadd.f32 0.0, %v2374
        %v2376 = vpop.f32.mrf.mxu0
        %v2377 = vpop.f32.mrf.mxu0
        %v2378 = vadd.f32 0.0, %v2377
        %v2379 = vpop.f32.mrf.mxu0
        %2380 = vmatprep.mubr.bf16.mxu0 0
        %2381 = vmatmul.mubr.bf16.gmra.mxu0 %v2107
        %v2382 = vpop.f32.mrf.mxu0
        %v2383 = vadd.f32 0.0, %v2382
        %v2384 = vpop.f32.mrf.mxu0
        %v2385 = vpop.f32.mrf.mxu0
        %v2386 = vadd.f32 0.0, %v2385
        %v2387 = vpop.f32.mrf.mxu0
        %2388 = vmatprep.mubr.bf16.mxu0 0
        %2389 = vmatmul.mubr.bf16.gmra.mxu0 %v2108
        %v2390 = vpop.f32.mrf.mxu0
        %v2391 = vadd.f32 0.0, %v2390
        %v2392 = vpop.f32.mrf.mxu0
        %v2393 = vpop.f32.mrf.mxu0
        %v2394 = vadd.f32 0.0, %v2393
        %v2395 = vpop.f32.mrf.mxu0
        %2396 = vmatprep.mubr.bf16.mxu0 0
        %2397 = vmatmul.mubr.bf16.gmra.mxu0 %v2109
        %v2398 = vpop.f32.mrf.mxu0
        %v2399 = vadd.f32 0.0, %v2398
        %v2400 = vpop.f32.mrf.mxu0
        %v2401 = vpop.f32.mrf.mxu0
        %v2402 = vadd.f32 0.0, %v2401
        %v2403 = vpop.f32.mrf.mxu0
        %2404 = vmatprep.mubr.bf16.mxu0 0
        %2405 = vmatmul.mubr.bf16.gmra.mxu0 %v2110
        %v2406 = vpop.f32.mrf.mxu0
        %v2407 = vadd.f32 0.0, %v2406
        %v2408 = vpop.f32.mrf.mxu0
        %v2409 = vpop.f32.mrf.mxu0
        %v2410 = vadd.f32 0.0, %v2409
        %v2411 = vpop.f32.mrf.mxu0
        %2412 = vmatprep.mubr.bf16.mxu0 0
        %2413 = vmatmul.mubr.bf16.gmra.mxu0 %v2111
        %v2414 = vpop.f32.mrf.mxu0
        %v2415 = vadd.f32 0.0, %v2414
        %v2416 = vpop.f32.mrf.mxu0
        %v2417 = vpop.f32.mrf.mxu0
        %v2418 = vadd.f32 0.0, %v2417
        %v2419 = vpop.f32.mrf.mxu0
        %2420 = vmatprep.mubr.bf16.mxu0 0
        %2421 = vmatmul.mubr.bf16.gmra.mxu0 %v2112
        %v2422 = vpop.f32.mrf.mxu0
        %v2423 = vadd.f32 0.0, %v2422
        %v2424 = vpop.f32.mrf.mxu0
        %v2425 = vpop.f32.mrf.mxu0
        %v2426 = vadd.f32 0.0, %v2425
        %v2427 = vpop.f32.mrf.mxu0
        %2428 = vmatprep.mubr.bf16.mxu0 0
        %2429 = vmatmul.mubr.bf16.gmra.mxu0 %v2113
        %v2430 = vpop.f32.mrf.mxu0
        %v2431 = vadd.f32 0.0, %v2430
        %v2432 = vpop.f32.mrf.mxu0
        %v2433 = vpop.f32.mrf.mxu0
        %v2434 = vadd.f32 0.0, %v2433
        %v2435 = vpop.f32.mrf.mxu0
        %2436 = vmatprep.mubr.bf16.mxu0 0
        %2437 = vmatmul.mubr.bf16.gmra.mxu0 %v2114
        %v2438 = vpop.f32.mrf.mxu0
        %v2439 = vadd.f32 0.0, %v2438
        %v2440 = vpop.f32.mrf.mxu0
        %v2441 = vpop.f32.mrf.mxu0
        %v2442 = vadd.f32 0.0, %v2441
        %v2443 = vpop.f32.mrf.mxu0
        %2444 = vmatprep.mubr.bf16.mxu0 0
        %2445 = vmatmul.mubr.bf16.gmra.mxu0 %v2115
        %v2446 = vpop.f32.mrf.mxu0
        %v2447 = vadd.f32 0.0, %v2446
        %v2448 = vpop.f32.mrf.mxu0
        %v2449 = vpop.f32.mrf.mxu0
        %v2450 = vadd.f32 0.0, %v2449
        %v2451 = vpop.f32.mrf.mxu0
        %2452 = vmatprep.mubr.bf16.mxu0 0
        %2453 = vmatmul.mubr.bf16.gmra.mxu0 %v2116
        %v2454 = vpop.f32.mrf.mxu0
        %v2455 = vadd.f32 0.0, %v2454
        %v2456 = vpop.f32.mrf.mxu0
        %v2457 = vpop.f32.mrf.mxu0
        %v2458 = vadd.f32 0.0, %v2457
        %v2459 = vpop.f32.mrf.mxu0
        %2460 = vmatprep.mubr.bf16.mxu0 0
        %2461 = vmatmul.mubr.bf16.gmra.mxu0 %v2117
        %v2462 = vpop.f32.mrf.mxu0
        %v2463 = vadd.f32 0.0, %v2462
        %v2464 = vpop.f32.mrf.mxu0
        %v2465 = vpop.f32.mrf.mxu0
        %v2466 = vadd.f32 0.0, %v2465
        %v2467 = vpop.f32.mrf.mxu0
        %2468 = vmatprep.mubr.bf16.mxu0 0
        %2469 = vmatmul.mubr.bf16.gmra.mxu0 %v2118
        %v2470 = vpop.f32.mrf.mxu0
        %v2471 = vadd.f32 0.0, %v2470
        %v2472 = vpop.f32.mrf.mxu0
        %v2473 = vpop.f32.mrf.mxu0
        %v2474 = vadd.f32 0.0, %v2473
        %v2475 = vpop.f32.mrf.mxu0
        %2476 = vmatprep.mubr.bf16.mxu0 0
        %2477 = vmatmul.mubr.bf16.gmra.mxu0 %v2119
        %v2478 = vpop.f32.mrf.mxu0
        %v2479 = vadd.f32 0.0, %v2478
        %v2480 = vpop.f32.mrf.mxu0
        %v2481 = vpop.f32.mrf.mxu0
        %v2482 = vadd.f32 0.0, %v2481
        %v2483 = vpop.f32.mrf.mxu0
        %2484 = vmatprep.mubr.bf16.mxu0 0
        %2485 = vmatmul.mubr.bf16.gmra.mxu0 %v2120
        %v2486 = vpop.f32.mrf.mxu0
        %v2487 = vadd.f32 0.0, %v2486
        %v2488 = vpop.f32.mrf.mxu0
        %v2489 = vpop.f32.mrf.mxu0
        %v2490 = vadd.f32 0.0, %v2489
        %v2491 = vpop.f32.mrf.mxu0
        %2492 = vmatprep.mubr.bf16.mxu0 0
        %2493 = vmatmul.mubr.bf16.gmra.mxu0 %v2121
        %v2494 = vpop.f32.mrf.mxu0
        %v2495 = vadd.f32 0.0, %v2494
        %v2496 = vpop.f32.mrf.mxu0
        %v2497 = vpop.f32.mrf.mxu0
        %v2498 = vadd.f32 0.0, %v2497
        %v2499 = vpop.f32.mrf.mxu0
        %2500 = vmatprep.mubr.bf16.mxu0 0
        %2501 = vmatmul.mubr.bf16.gmra.mxu0 %v2122
        %v2502 = vpop.f32.mrf.mxu0
        %v2503 = vadd.f32 0.0, %v2502
        %v2504 = vpop.f32.mrf.mxu0
        %v2505 = vpop.f32.mrf.mxu0
        %v2506 = vadd.f32 0.0, %v2505
        %v2507 = vpop.f32.mrf.mxu0
        %2508 = vmatprep.mubr.bf16.mxu0 0
        %2509 = vmatmul.mubr.bf16.gmra.mxu0 %v2123
        %v2510 = vpop.f32.mrf.mxu0
        %v2511 = vadd.f32 0.0, %v2510
        %v2512 = vpop.f32.mrf.mxu0
        %v2513 = vpop.f32.mrf.mxu0
        %v2514 = vadd.f32 0.0, %v2513
        %v2515 = vpop.f32.mrf.mxu0
        %2516 = vmatprep.mubr.bf16.mxu0 0
        %2517 = vmatmul.mubr.bf16.gmra.mxu0 %v2124
        %v2518 = vpop.f32.mrf.mxu0
        %v2519 = vadd.f32 0.0, %v2518
        %v2520 = vpop.f32.mrf.mxu0
        %v2521 = vpop.f32.mrf.mxu0
        %v2522 = vadd.f32 0.0, %v2521
        %v2523 = vpop.f32.mrf.mxu0
        %2524 = vmatprep.mubr.bf16.mxu0 0
        %2525 = vmatmul.mubr.bf16.gmra.mxu0 %v2125
        %v2526 = vpop.f32.mrf.mxu0
        %v2527 = vadd.f32 0.0, %v2526
        %v2528 = vpop.f32.mrf.mxu0
        %v2529 = vpop.f32.mrf.mxu0
        %v2530 = vadd.f32 0.0, %v2529
        %v2531 = vpop.f32.mrf.mxu0
        %2532 = vmatprep.mubr.bf16.mxu0 0
        %2533 = vmatmul.mubr.bf16.gmra.mxu0 %v2126
        %v2534 = vpop.f32.mrf.mxu0
        %v2535 = vadd.f32 0.0, %v2534
        %v2536 = vpop.f32.mrf.mxu0
        %v2537 = vpop.f32.mrf.mxu0
        %v2538 = vadd.f32 0.0, %v2537
        %v2539 = vpop.f32.mrf.mxu0
        %2540 = vmatprep.mubr.bf16.mxu0 0
        %2541 = vmatmul.mubr.bf16.gmra.mxu0 %v2127
        %v2542 = vpop.f32.mrf.mxu0
        %v2543 = vadd.f32 0.0, %v2542
        %v2544 = vpop.f32.mrf.mxu0
        %v2545 = vpop.f32.mrf.mxu0
        %v2546 = vadd.f32 0.0, %v2545
        %v2547 = vpop.f32.mrf.mxu0
        %2548 = vmatprep.mubr.bf16.mxu0 0
        %2549 = vmatmul.mubr.bf16.gmra.mxu0 %v2128
        %v2550 = vpop.f32.mrf.mxu0
        %v2551 = vadd.f32 0.0, %v2550
        %v2552 = vpop.f32.mrf.mxu0
        %v2553 = vpop.f32.mrf.mxu0
        %v2554 = vadd.f32 0.0, %v2553
        %v2555 = vpop.f32.mrf.mxu0
        %2556 = vmatprep.mubr.bf16.mxu0 0
        %2557 = vmatmul.mubr.bf16.gmra.mxu0 %v2129
        %v2558 = vpop.f32.mrf.mxu0
        %v2559 = vadd.f32 0.0, %v2558
        %v2560 = vpop.f32.mrf.mxu0
        %v2561 = vpop.f32.mrf.mxu0
        %v2562 = vadd.f32 0.0, %v2561
        %v2563 = vpop.f32.mrf.mxu0
        %2564 = vmatprep.mubr.bf16.mxu0 0
        %2565 = vmatmul.mubr.bf16.gmra.mxu0 %v2130
        %v2566 = vpop.f32.mrf.mxu0
        %v2567 = vadd.f32 0.0, %v2566
        %v2568 = vpop.f32.mrf.mxu0
        %v2569 = vpop.f32.mrf.mxu0
        %v2570 = vadd.f32 0.0, %v2569
        %v2571 = vpop.f32.mrf.mxu0
        %2572 = vmatprep.mubr.bf16.mxu0 0
        %2573 = vmatmul.mubr.bf16.gmra.mxu0 %v2131
        %v2574 = vpop.f32.mrf.mxu0
        %v2575 = vadd.f32 0.0, %v2574
        %v2576 = vpop.f32.mrf.mxu0
        %v2577 = vpop.f32.mrf.mxu0
        %v2578 = vadd.f32 0.0, %v2577
        %v2579 = vpop.f32.mrf.mxu0
        %2580 = vmatprep.mubr.bf16.mxu0 0
        %2581 = vmatmul.mubr.bf16.gmra.mxu0 %v2132
        %v2582 = vpop.f32.mrf.mxu0
        %v2583 = vadd.f32 0.0, %v2582
        %v2584 = vpop.f32.mrf.mxu0
        %v2585 = vpop.f32.mrf.mxu0
        %v2586 = vadd.f32 0.0, %v2585
        %v2587 = vpop.f32.mrf.mxu0
        %2588 = vmatprep.mubr.bf16.mxu0 0
        %2589 = vmatmul.mubr.bf16.gmra.mxu0 %v2133
        %v2590 = vpop.f32.mrf.mxu0
        %v2591 = vadd.f32 0.0, %v2590
        %v2592 = vpop.f32.mrf.mxu0
        %v2593 = vpop.f32.mrf.mxu0
        %v2594 = vadd.f32 0.0, %v2593
        %v2595 = vpop.f32.mrf.mxu0
        %2596 = vmatprep.mubr.bf16.mxu0 0
        %2597 = vmatmul.mubr.bf16.gmra.mxu0 %v2134
        %v2598 = vpop.f32.mrf.mxu0
        %v2599 = vadd.f32 0.0, %v2598
        %v2600 = vpop.f32.mrf.mxu0
        %v2601 = vpop.f32.mrf.mxu0
        %v2602 = vadd.f32 0.0, %v2601
        %v2603 = vpop.f32.mrf.mxu0
        %2604 = vmatprep.mubr.bf16.mxu0 0
        %2605 = vmatmul.mubr.bf16.gmra.mxu0 %v2135
        %v2606 = vpop.f32.mrf.mxu0
        %v2607 = vadd.f32 0.0, %v2606
        %v2608 = vpop.f32.mrf.mxu0
        %v2609 = vpop.f32.mrf.mxu0
        %v2610 = vadd.f32 0.0, %v2609
        %v2611 = vpop.f32.mrf.mxu0
        %2612 = vmatprep.mubr.bf16.mxu0 0
        %2613 = vmatmul.mubr.bf16.gmra.mxu0 %v2136
        %v2614 = vpop.f32.mrf.mxu0
        %v2615 = vadd.f32 0.0, %v2614
        %v2616 = vpop.f32.mrf.mxu0
        %v2617 = vpop.f32.mrf.mxu0
        %v2618 = vadd.f32 0.0, %v2617
        %v2619 = vpop.f32.mrf.mxu0
        %2620 = vmatprep.mubr.bf16.mxu0 0
        %2621 = vmatmul.mubr.bf16.gmra.mxu0 %v2137
        %v2622 = vpop.f32.mrf.mxu0
        %v2623 = vadd.f32 0.0, %v2622
        %v2624 = vpop.f32.mrf.mxu0
        %v2625 = vpop.f32.mrf.mxu0
        %v2626 = vadd.f32 0.0, %v2625
        %v2627 = vpop.f32.mrf.mxu0
        %2628 = vmatprep.mubr.bf16.mxu0 0
        %2629 = vmatmul.mubr.bf16.gmra.mxu0 %v2138
        %v2630 = vpop.f32.mrf.mxu0
        %v2631 = vadd.f32 0.0, %v2630
        %v2632 = vpop.f32.mrf.mxu0
        %v2633 = vpop.f32.mrf.mxu0
        %v2634 = vadd.f32 0.0, %v2633
        %v2635 = vpop.f32.mrf.mxu0
        %2636 = vmatprep.mubr.bf16.mxu0 0
        %2637 = vmatmul.mubr.bf16.gmra.mxu0 %v2139
        %v2638 = vpop.f32.mrf.mxu0
        %v2639 = vadd.f32 0.0, %v2638
        %v2640 = vpop.f32.mrf.mxu0
        %v2641 = vpop.f32.mrf.mxu0
        %v2642 = vadd.f32 0.0, %v2641
        %v2643 = vpop.f32.mrf.mxu0
        %2644 = vmatprep.mubr.bf16.mxu0 0
        %2645 = vmatmul.mubr.bf16.gmra.mxu0 %v2140
        %v2646 = vpop.f32.mrf.mxu0
        %v2647 = vadd.f32 0.0, %v2646
        %v2648 = vpop.f32.mrf.mxu0
        %v2649 = vpop.f32.mrf.mxu0
        %v2650 = vadd.f32 0.0, %v2649
        %v2651 = vpop.f32.mrf.mxu0
        %2652 = vmatprep.mubr.bf16.mxu0 0
        %2653 = vmatmul.mubr.bf16.gmra.mxu0 %v2141
        %v2654 = vpop.f32.mrf.mxu0
        %v2655 = vadd.f32 0.0, %v2654
        %v2656 = vpop.f32.mrf.mxu0
        %v2657 = vpop.f32.mrf.mxu0
        %v2658 = vadd.f32 0.0, %v2657
        %v2659 = vpop.f32.mrf.mxu0
        %2660 = vmatprep.mubr.bf16.mxu0 0
        %2661 = vmatmul.mubr.bf16.gmra.mxu0 %v2142
        %v2662 = vpop.f32.mrf.mxu0
        %v2663 = vadd.f32 0.0, %v2662
        %v2664 = vpop.f32.mrf.mxu0
        %v2665 = vpop.f32.mrf.mxu0
        %v2666 = vadd.f32 0.0, %v2665
        %v2667 = vpop.f32.mrf.mxu0
        %2668 = vmatprep.mubr.bf16.mxu0 0
        %2669 = vmatmul.mubr.bf16.gmra.mxu0 %v2143
        %v2670 = vpop.f32.mrf.mxu0
        %v2671 = vadd.f32 0.0, %v2670
        %v2672 = vpop.f32.mrf.mxu0
        %v2673 = vpop.f32.mrf.mxu0
        %v2674 = vadd.f32 0.0, %v2673
        %v2675 = vpop.f32.mrf.mxu0
        %2676 = vmatprep.mubr.bf16.mxu0 0
        %2677 = vmatmul.mubr.bf16.gmra.mxu0 %v2144
        %v2678 = vpop.f32.mrf.mxu0
        %v2679 = vadd.f32 0.0, %v2678
        %v2680 = vpop.f32.mrf.mxu0
        %v2681 = vpop.f32.mrf.mxu0
        %v2682 = vadd.f32 0.0, %v2681
        %v2683 = vpop.f32.mrf.mxu0
        %2684 = vmatprep.mubr.bf16.mxu0 0
        %2685 = vmatmul.mubr.bf16.gmra.mxu0 %v2145
        %v2686 = vpop.f32.mrf.mxu0
        %v2687 = vadd.f32 0.0, %v2686
        %v2688 = vpop.f32.mrf.mxu0
        %v2689 = vpop.f32.mrf.mxu0
        %v2690 = vadd.f32 0.0, %v2689
        %v2691 = vpop.f32.mrf.mxu0
        %2692 = vmatprep.mubr.bf16.mxu0 0
        %2693 = vmatmul.mubr.bf16.gmra.mxu0 %v2146
        %v2694 = vpop.f32.mrf.mxu0
        %v2695 = vadd.f32 0.0, %v2694
        %v2696 = vpop.f32.mrf.mxu0
        %v2697 = vpop.f32.mrf.mxu0
        %v2698 = vadd.f32 0.0, %v2697
        %v2699 = vpop.f32.mrf.mxu0
        %2700 = vmatprep.mubr.bf16.mxu0 0
        %2701 = vmatmul.mubr.bf16.gmra.mxu0 %v2147
        %v2702 = vpop.f32.mrf.mxu0
        %v2703 = vadd.f32 0.0, %v2702
        %v2704 = vpop.f32.mrf.mxu0
        %v2705 = vpop.f32.mrf.mxu0
        %v2706 = vadd.f32 0.0, %v2705
        %v2707 = vpop.f32.mrf.mxu0
        %2708 = vmatprep.mubr.bf16.mxu0 0
        %2709 = vmatmul.mubr.bf16.gmra.mxu0 %v2148
        %v2710 = vpop.f32.mrf.mxu0
        %v2711 = vadd.f32 0.0, %v2710
        %v2712 = vpop.f32.mrf.mxu0
        %v2713 = vpop.f32.mrf.mxu0
        %v2714 = vadd.f32 0.0, %v2713
        %v2715 = vpop.f32.mrf.mxu0
        %2716 = vmatprep.mubr.bf16.mxu0 0
        %2717 = vmatmul.mubr.bf16.gmra.mxu0 %v2149
        %v2718 = vpop.f32.mrf.mxu0
        %v2719 = vadd.f32 0.0, %v2718
        %v2720 = vpop.f32.mrf.mxu0
        %v2721 = vpop.f32.mrf.mxu0
        %v2722 = vadd.f32 0.0, %v2721
        %v2723 = vpop.f32.mrf.mxu0
        %2724 = vmatprep.mubr.bf16.mxu0 0
        %2725 = vmatmul.mubr.bf16.gmra.mxu0 %v2150
        %v2726 = vpop.f32.mrf.mxu0
        %v2727 = vadd.f32 0.0, %v2726
        %v2728 = vpop.f32.mrf.mxu0
        %v2729 = vpop.f32.mrf.mxu0
        %v2730 = vadd.f32 0.0, %v2729
        %v2731 = vpop.f32.mrf.mxu0
        %2732 = vmatprep.mubr.bf16.mxu0 0
        %2733 = vmatmul.mubr.bf16.gmra.mxu0 %v2151
        %v2734 = vpop.f32.mrf.mxu0
        %v2735 = vadd.f32 0.0, %v2734
        %v2736 = vpop.f32.mrf.mxu0
        %v2737 = vpop.f32.mrf.mxu0
        %v2738 = vadd.f32 0.0, %v2737
        %v2739 = vpop.f32.mrf.mxu0
        %2740 = vmatprep.mubr.bf16.mxu0 0
        %2741 = vmatmul.mubr.bf16.gmra.mxu0 %v2152
        %v2742 = vpop.f32.mrf.mxu0
        %v2743 = vadd.f32 0.0, %v2742
        %v2744 = vpop.f32.mrf.mxu0
        %v2745 = vpop.f32.mrf.mxu0
        %v2746 = vadd.f32 0.0, %v2745
        %v2747 = vpop.f32.mrf.mxu0
        %2748 = vmatprep.mubr.bf16.mxu0 0
        %2749 = vmatmul.mubr.bf16.gmra.mxu0 %v2153
        %v2750 = vpop.f32.mrf.mxu0
        %v2751 = vadd.f32 0.0, %v2750
        %v2752 = vpop.f32.mrf.mxu0
        %v2753 = vpop.f32.mrf.mxu0
        %v2754 = vadd.f32 0.0, %v2753
        %v2755 = vpop.f32.mrf.mxu0
        %2756 = vmatprep.mubr.bf16.mxu0 0
        %2757 = vmatmul.mubr.bf16.gmra.mxu0 %v2154
        %v2758 = vpop.f32.mrf.mxu0
        %v2759 = vadd.f32 0.0, %v2758
        %v2760 = vpop.f32.mrf.mxu0
        %v2761 = vpop.f32.mrf.mxu0
        %v2762 = vadd.f32 0.0, %v2761
        %v2763 = vpop.f32.mrf.mxu0
        %2764 = vmatprep.mubr.bf16.mxu0 0
        %2765 = vmatmul.mubr.bf16.gmra.mxu0 %v2155
        %v2766 = vpop.f32.mrf.mxu0
        %v2767 = vadd.f32 0.0, %v2766
        %v2768 = vpop.f32.mrf.mxu0
        %v2769 = vpop.f32.mrf.mxu0
        %v2770 = vadd.f32 0.0, %v2769
        %v2771 = vpop.f32.mrf.mxu0
        %2772 = vmatprep.mubr.bf16.mxu0 0
        %2773 = vmatmul.mubr.bf16.gmra.mxu0 %v2156
        %v2774 = vpop.f32.mrf.mxu0
        %v2775 = vadd.f32 0.0, %v2774
        %v2776 = vpop.f32.mrf.mxu0
        %v2777 = vpop.f32.mrf.mxu0
        %v2778 = vadd.f32 0.0, %v2777
        %v2779 = vpop.f32.mrf.mxu0
        %2780 = vmatprep.mubr.bf16.mxu0 0
        %2781 = vmatmul.mubr.bf16.gmra.mxu0 %v2157
        %v2782 = vpop.f32.mrf.mxu0
        %v2783 = vadd.f32 0.0, %v2782
        %v2784 = vpop.f32.mrf.mxu0
        %v2785 = vpop.f32.mrf.mxu0
        %v2786 = vadd.f32 0.0, %v2785
        %v2787 = vpop.f32.mrf.mxu0
        %2788 = vmatprep.mubr.bf16.mxu0 0
        %2789 = vmatmul.mubr.bf16.gmra.mxu0 %v2158
        %v2790 = vpop.f32.mrf.mxu0
        %v2791 = vadd.f32 0.0, %v2790
        %v2792 = vpop.f32.mrf.mxu0
        %v2793 = vpop.f32.mrf.mxu0
        %v2794 = vadd.f32 0.0, %v2793
        %v2795 = vpop.f32.mrf.mxu0
        %2796 = vmatprep.mubr.bf16.mxu0 0
        %2797 = vmatmul.mubr.bf16.gmra.mxu0 %v2159
        %v2798 = vpop.f32.mrf.mxu0
        %v2799 = vadd.f32 0.0, %v2798
        %v2800 = vpop.f32.mrf.mxu0
        %v2801 = vpop.f32.mrf.mxu0
        %v2802 = vadd.f32 0.0, %v2801
        %v2803 = vpop.f32.mrf.mxu0
        %2804 = vmatprep.mubr.bf16.mxu0 0
        %2805 = vmatmul.mubr.bf16.gmra.mxu0 %v2160
        %v2806 = vpop.f32.mrf.mxu0
        %v2807 = vadd.f32 0.0, %v2806
        %v2808 = vpop.f32.mrf.mxu0
        %v2809 = vpop.f32.mrf.mxu0
        %v2810 = vadd.f32 0.0, %v2809
        %v2811 = vpop.f32.mrf.mxu0
        %2812 = vmatprep.mubr.bf16.mxu0 0
        %2813 = vmatmul.mubr.bf16.gmra.mxu0 %v2161
        %v2814 = vpop.f32.mrf.mxu0
        %v2815 = vadd.f32 0.0, %v2814
        %v2816 = vpop.f32.mrf.mxu0
        %v2817 = vpop.f32.mrf.mxu0
        %v2818 = vadd.f32 0.0, %v2817
        %v2819 = vpop.f32.mrf.mxu0
        %2820 = vmatprep.mubr.bf16.mxu0 0
        %2821 = vmatmul.mubr.bf16.gmra.mxu0 %v2162
        %v2822 = vpop.f32.mrf.mxu0
        %v2823 = vadd.f32 0.0, %v2822
        %v2824 = vpop.f32.mrf.mxu0
        %v2825 = vpop.f32.mrf.mxu0
        %v2826 = vadd.f32 0.0, %v2825
        %v2827 = vpop.f32.mrf.mxu0
        %2828 = vmatprep.mubr.bf16.mxu0 0
        %2829 = vmatmul.mubr.bf16.gmra.mxu0 %v2163
        %v2830 = vpop.f32.mrf.mxu0
        %v2831 = vadd.f32 0.0, %v2830
        %v2832 = vpop.f32.mrf.mxu0
        %v2833 = vpop.f32.mrf.mxu0
        %v2834 = vadd.f32 0.0, %v2833
        %v2835 = vpop.f32.mrf.mxu0
        %2836 = vmatprep.mubr.bf16.mxu0 0
        %2837 = vmatmul.mubr.bf16.gmra.mxu0 %v2164
        %v2838 = vpop.f32.mrf.mxu0
        %v2839 = vadd.f32 0.0, %v2838
        %v2840 = vpop.f32.mrf.mxu0
        %v2841 = vpop.f32.mrf.mxu0
        %v2842 = vadd.f32 0.0, %v2841
        %v2843 = vpop.f32.mrf.mxu0
        %2844 = vmatprep.mubr.bf16.mxu0 0
        %2845 = vmatmul.mubr.bf16.gmra.mxu0 %v2165
        %v2846 = vpop.f32.mrf.mxu0
        %v2847 = vadd.f32 0.0, %v2846
        %v2848 = vpop.f32.mrf.mxu0
        %v2849 = vpop.f32.mrf.mxu0
        %v2850 = vadd.f32 0.0, %v2849
        %v2851 = vpop.f32.mrf.mxu0
        %2852 = vmatprep.mubr.bf16.mxu0 0
        %2853 = vmatmul.mubr.bf16.gmra.mxu0 %v2166
        %v2854 = vpop.f32.mrf.mxu0
        %v2855 = vadd.f32 0.0, %v2854
        %v2856 = vpop.f32.mrf.mxu0
        %v2857 = vpop.f32.mrf.mxu0
        %v2858 = vadd.f32 0.0, %v2857
        %v2859 = vpop.f32.mrf.mxu0
        %2860 = vmatprep.mubr.bf16.mxu0 0
        %2861 = vmatmul.mubr.bf16.gmra.mxu0 %v2167
        %v2862 = vpop.f32.mrf.mxu0
        %v2863 = vadd.f32 0.0, %v2862
        %v2864 = vpop.f32.mrf.mxu0
        %v2865 = vpop.f32.mrf.mxu0
        %v2866 = vadd.f32 0.0, %v2865
        %v2867 = vpop.f32.mrf.mxu0
        %2868 = vmatprep.mubr.bf16.mxu0 0
        %2869 = vmatmul.mubr.bf16.gmra.mxu0 %v2168
        %v2870 = vpop.f32.mrf.mxu0
        %v2871 = vadd.f32 0.0, %v2870
        %v2872 = vpop.f32.mrf.mxu0
        %v2873 = vpop.f32.mrf.mxu0
        %v2874 = vadd.f32 0.0, %v2873
        %v2875 = vpop.f32.mrf.mxu0
        %2876 = vmatprep.mubr.bf16.mxu0 0
        %2877 = vmatmul.mubr.bf16.gmra.mxu0 %v2169
        %v2878 = vpop.f32.mrf.mxu0
        %v2879 = vadd.f32 0.0, %v2878
        %v2880 = vpop.f32.mrf.mxu0
        %v2881 = vpop.f32.mrf.mxu0
        %v2882 = vadd.f32 0.0, %v2881
        %v2883 = vpop.f32.mrf.mxu0
        %2884 = vmatprep.mubr.bf16.mxu0 0
        %2885 = vmatmul.mubr.bf16.gmra.mxu0 %v2170
        %v2886 = vpop.f32.mrf.mxu0
        %v2887 = vadd.f32 0.0, %v2886
        %v2888 = vpop.f32.mrf.mxu0
        %v2889 = vpop.f32.mrf.mxu0
        %v2890 = vadd.f32 0.0, %v2889
        %v2891 = vpop.f32.mrf.mxu0
        %2892 = vmatprep.mubr.bf16.mxu0 0
        %2893 = vmatmul.mubr.bf16.gmra.mxu0 %v2171
        %v2894 = vpop.f32.mrf.mxu0
        %v2895 = vadd.f32 0.0, %v2894
        %v2896 = vpop.f32.mrf.mxu0
        %v2897 = vpop.f32.mrf.mxu0
        %v2898 = vadd.f32 0.0, %v2897
        %v2899 = vpop.f32.mrf.mxu0
        %2900 = vmatprep.mubr.bf16.mxu0 0
        %2901 = vmatmul.mubr.bf16.gmra.mxu0 %v2172
        %v2902 = vpop.f32.mrf.mxu0
        %v2903 = vadd.f32 0.0, %v2902
        %v2904 = vpop.f32.mrf.mxu0
        %v2905 = vpop.f32.mrf.mxu0
        %v2906 = vadd.f32 0.0, %v2905
        %v2907 = vpop.f32.mrf.mxu0
        %2908 = vmatprep.mubr.bf16.mxu0 0
        %2909 = vmatmul.mubr.bf16.gmra.mxu0 %v2173
        %v2910 = vpop.f32.mrf.mxu0
        %v2911 = vadd.f32 0.0, %v2910
        %v2912 = vpop.f32.mrf.mxu0
        %v2913 = vpop.f32.mrf.mxu0
        %v2914 = vadd.f32 0.0, %v2913
        %v2915 = vpop.f32.mrf.mxu0
        %2916 = vmatprep.mubr.bf16.mxu0 0
        %2917 = vmatmul.mubr.bf16.gmra.mxu0 %v2174
        %v2918 = vpop.f32.mrf.mxu0
        %v2919 = vadd.f32 0.0, %v2918
        %v2920 = vpop.f32.mrf.mxu0
        %v2921 = vpop.f32.mrf.mxu0
        %v2922 = vadd.f32 0.0, %v2921
        %v2923 = vpop.f32.mrf.mxu0
        %2924 = vmatprep.mubr.bf16.mxu0 0
        %2925 = vmatmul.mubr.bf16.gmra.mxu0 %v2175
        %v2926 = vpop.f32.mrf.mxu0
        %v2927 = vadd.f32 0.0, %v2926
        %v2928 = vpop.f32.mrf.mxu0
        %v2929 = vpop.f32.mrf.mxu0
        %v2930 = vadd.f32 0.0, %v2929
        %v2931 = vpop.f32.mrf.mxu0
        %2932 = vmatprep.mubr.bf16.mxu0 0
        %2933 = vmatmul.mubr.bf16.gmra.mxu0 %v2176
        %v2934 = vpop.f32.mrf.mxu0
        %v2935 = vadd.f32 0.0, %v2934
        %v2936 = vpop.f32.mrf.mxu0
        %v2937 = vpop.f32.mrf.mxu0
        %v2938 = vadd.f32 0.0, %v2937
        %v2939 = vpop.f32.mrf.mxu0
        %2940 = vmatprep.mubr.bf16.mxu0 0
        %2941 = vmatmul.mubr.bf16.gmra.mxu0 %v2177
        %v2942 = vpop.f32.mrf.mxu0
        %v2943 = vadd.f32 0.0, %v2942
        %v2944 = vpop.f32.mrf.mxu0
        %v2945 = vpop.f32.mrf.mxu0
        %v2946 = vadd.f32 0.0, %v2945
        %v2947 = vpop.f32.mrf.mxu0
        %2948 = vmatprep.mubr.bf16.mxu0 0
        %2949 = vmatmul.mubr.bf16.gmra.mxu0 %v2178
        %v2950 = vpop.f32.mrf.mxu0
        %v2951 = vadd.f32 0.0, %v2950
        %v2952 = vpop.f32.mrf.mxu0
        %v2953 = vpop.f32.mrf.mxu0
        %v2954 = vadd.f32 0.0, %v2953
        %v2955 = vpop.f32.mrf.mxu0
        %2956 = vmatprep.mubr.bf16.mxu0 0
        %2957 = vmatmul.mubr.bf16.gmra.mxu0 %v2179
        %v2958 = vpop.f32.mrf.mxu0
        %v2959 = vadd.f32 0.0, %v2958
        %v2960 = vpop.f32.mrf.mxu0
        %v2961 = vpop.f32.mrf.mxu0
        %v2962 = vadd.f32 0.0, %v2961
        %v2963 = vpop.f32.mrf.mxu0
        %2964 = vmatprep.mubr.bf16.mxu0 0
        %2965 = vmatmul.mubr.bf16.gmra.mxu0 %v2180
        %v2966 = vpop.f32.mrf.mxu0
        %v2967 = vadd.f32 0.0, %v2966
        %v2968 = vpop.f32.mrf.mxu0
        %v2969 = vpop.f32.mrf.mxu0
        %v2970 = vadd.f32 0.0, %v2969
        %v2971 = vpop.f32.mrf.mxu0
        %2972 = vmatprep.mubr.bf16.mxu0 0
        %2973 = vmatmul.mubr.bf16.gmra.mxu0 %v2181
        %v2974 = vpop.f32.mrf.mxu0
        %v2975 = vadd.f32 0.0, %v2974
        %v2976 = vpop.f32.mrf.mxu0
        %v2977 = vpop.f32.mrf.mxu0
        %v2978 = vadd.f32 0.0, %v2977
        %v2979 = vpop.f32.mrf.mxu0
        %2980 = vmatprep.mubr.bf16.mxu0 0
        %2981 = vmatmul.mubr.bf16.gmra.mxu0 %v2182
        %v2982 = vpop.f32.mrf.mxu0
        %v2983 = vadd.f32 0.0, %v2982
        %v2984 = vpop.f32.mrf.mxu0
        %v2985 = vpop.f32.mrf.mxu0
        %v2986 = vadd.f32 0.0, %v2985
        %v2987 = vpop.f32.mrf.mxu0
        %2988 = vmatprep.mubr.bf16.mxu0 0
        %2989 = vmatmul.mubr.bf16.gmra.mxu0 %v2183
        %v2990 = vpop.f32.mrf.mxu0
        %v2991 = vadd.f32 0.0, %v2990
        %v2992 = vpop.f32.mrf.mxu0
        %v2993 = vpop.f32.mrf.mxu0
        %v2994 = vadd.f32 0.0, %v2993
        %v2995 = vpop.f32.mrf.mxu0
        %2996 = vmatprep.mubr.bf16.mxu0 0
        %2997 = vmatmul.mubr.bf16.gmra.mxu0 %v2184
        %v2998 = vpop.f32.mrf.mxu0
        %v2999 = vadd.f32 0.0, %v2998
        %v3000 = vpop.f32.mrf.mxu0
        %v3001 = vpop.f32.mrf.mxu0
        %v3002 = vadd.f32 0.0, %v3001
        %v3003 = vpop.f32.mrf.mxu0
        %3004 = vmatprep.mubr.bf16.mxu0 0
        %3005 = vmatmul.mubr.bf16.gmra.mxu0 %v2185
        %v3006 = vpop.f32.mrf.mxu0
        %v3007 = vadd.f32 0.0, %v3006
        %v3008 = vpop.f32.mrf.mxu0
        %v3009 = vpop.f32.mrf.mxu0
        %v3010 = vadd.f32 0.0, %v3009
        %v3011 = vpop.f32.mrf.mxu0
        %3012 = vmatprep.mubr.bf16.mxu0 0
        %3013 = vmatmul.mubr.bf16.gmra.mxu0 %v2186
        %v3014 = vpop.f32.mrf.mxu0
        %v3015 = vadd.f32 0.0, %v3014
        %v3016 = vpop.f32.mrf.mxu0
        %v3017 = vpop.f32.mrf.mxu0
        %v3018 = vadd.f32 0.0, %v3017
        %v3019 = vpop.f32.mrf.mxu0
        %3020 = vmatprep.mubr.bf16.mxu0 0
        %3021 = vmatmul.mubr.bf16.gmra.mxu0 %v2187
        %v3022 = vpop.f32.mrf.mxu0
        %v3023 = vadd.f32 0.0, %v3022
        %v3024 = vpop.f32.mrf.mxu0
        %v3025 = vpop.f32.mrf.mxu0
        %v3026 = vadd.f32 0.0, %v3025
        %v3027 = vpop.f32.mrf.mxu0
        %3028 = vmatprep.mubr.bf16.mxu0 0
        %3029 = vmatmul.mubr.bf16.gmra.mxu0 %v2188
        %v3030 = vpop.f32.mrf.mxu0
        %v3031 = vadd.f32 0.0, %v3030
        %v3032 = vpop.f32.mrf.mxu0
        %v3033 = vpop.f32.mrf.mxu0
        %v3034 = vadd.f32 0.0, %v3033
        %v3035 = vpop.f32.mrf.mxu0
        %3036 = vmatprep.mubr.bf16.mxu0 0
        %3037 = vmatmul.mubr.bf16.gmra.mxu0 %v2189
        %v3038 = vpop.f32.mrf.mxu0
        %v3039 = vadd.f32 0.0, %v3038
        %v3040 = vpop.f32.mrf.mxu0
        %v3041 = vpop.f32.mrf.mxu0
        %v3042 = vadd.f32 0.0, %v3041
        %v3043 = vpop.f32.mrf.mxu0
        %3044 = vmatprep.mubr.bf16.mxu0 0
        %3045 = vmatmul.mubr.bf16.gmra.mxu0 %v2190
        %v3046 = vpop.f32.mrf.mxu0
        %v3047 = vadd.f32 0.0, %v3046
        %v3048 = vpop.f32.mrf.mxu0
        %v3049 = vpop.f32.mrf.mxu0
        %v3050 = vadd.f32 0.0, %v3049
        %v3051 = vpop.f32.mrf.mxu0
        %3052 = vmatprep.mubr.bf16.mxu0 0
        %3053 = vmatmul.mubr.bf16.gmra.mxu0 %v2191
        %v3054 = vpop.f32.mrf.mxu0
        %v3055 = vadd.f32 0.0, %v3054
        %v3056 = vpop.f32.mrf.mxu0
        %v3057 = vpop.f32.mrf.mxu0
        %v3058 = vadd.f32 0.0, %v3057
        %v3059 = vpop.f32.mrf.mxu0
        %3060 = vmatprep.mubr.bf16.mxu0 0
        %3061 = vmatmul.mubr.bf16.gmra.mxu0 %v2192
        %v3062 = vpop.f32.mrf.mxu0
        %v3063 = vadd.f32 0.0, %v3062
        %v3064 = vpop.f32.mrf.mxu0
        %v3065 = vpop.f32.mrf.mxu0
        %v3066 = vadd.f32 0.0, %v3065
        %v3067 = vpop.f32.mrf.mxu0
        %3068 = vmatprep.mubr.bf16.mxu0 0
        %3069 = vmatmul.mubr.bf16.gmra.mxu0 %v2193
        %v3070 = vpop.f32.mrf.mxu0
        %v3071 = vadd.f32 0.0, %v3070
        %v3072 = vpop.f32.mrf.mxu0
        %v3073 = vpop.f32.mrf.mxu0
        %v3074 = vadd.f32 0.0, %v3073
        %v3075 = vpop.f32.mrf.mxu0
        %3076 = vmatprep.mubr.bf16.mxu0 0
        %3077 = vmatmul.mubr.bf16.gmra.mxu0 %v2194
        %v3078 = vpop.f32.mrf.mxu0
        %v3079 = vadd.f32 0.0, %v3078
        %v3080 = vpop.f32.mrf.mxu0
        %v3081 = vpop.f32.mrf.mxu0
        %v3082 = vadd.f32 0.0, %v3081
        %v3083 = vpop.f32.mrf.mxu0
        %3084 = vmatprep.mubr.bf16.mxu0 0
        %3085 = vmatmul.mubr.bf16.gmra.mxu0 %v2195
        %v3086 = vpop.f32.mrf.mxu0
        %v3087 = vadd.f32 0.0, %v3086
        %v3088 = vpop.f32.mrf.mxu0
        %v3089 = vpop.f32.mrf.mxu0
        %v3090 = vadd.f32 0.0, %v3089
        %v3091 = vpop.f32.mrf.mxu0
        %3092 = vmatprep.mubr.bf16.mxu0 0
        %3093 = vmatmul.mubr.bf16.gmra.mxu0 %v2196
        %v3094 = vpop.f32.mrf.mxu0
        %v3095 = vadd.f32 0.0, %v3094
        %v3096 = vpop.f32.mrf.mxu0
        %v3097 = vpop.f32.mrf.mxu0
        %v3098 = vadd.f32 0.0, %v3097
        %v3099 = vpop.f32.mrf.mxu0
        %3100 = vmatprep.mubr.bf16.mxu0 0
        %3101 = vmatmul.mubr.bf16.gmra.mxu0 %v2197
        %v3102 = vpop.f32.mrf.mxu0
        %v3103 = vadd.f32 0.0, %v3102
        %v3104 = vpop.f32.mrf.mxu0
        %v3105 = vpop.f32.mrf.mxu0
        %v3106 = vadd.f32 0.0, %v3105
        %v3107 = vpop.f32.mrf.mxu0
        %3108 = vmatprep.mubr.bf16.mxu0 0
        %3109 = vmatmul.mubr.bf16.gmra.mxu0 %v2198
        %v3110 = vpop.f32.mrf.mxu0
        %v3111 = vadd.f32 0.0, %v3110
        %v3112 = vpop.f32.mrf.mxu0
        %v3113 = vpop.f32.mrf.mxu0
        %v3114 = vadd.f32 0.0, %v3113
        %v3115 = vpop.f32.mrf.mxu0
        %3116 = vmatprep.mubr.bf16.mxu0 0
        %3117 = vmatmul.mubr.bf16.gmra.mxu0 %v2199
        %v3118 = vpop.f32.mrf.mxu0
        %v3119 = vadd.f32 0.0, %v3118
        %v3120 = vpop.f32.mrf.mxu0
        %v3121 = vpop.f32.mrf.mxu0
        %v3122 = vadd.f32 0.0, %v3121
        %v3123 = vpop.f32.mrf.mxu0
        %3124 = vmatprep.mubr.bf16.mxu0 0
        %3125 = vmatmul.mubr.bf16.gmra.mxu0 %v2200
        %v3126 = vpop.f32.mrf.mxu0
        %v3127 = vadd.f32 0.0, %v3126
        %v3128 = vpop.f32.mrf.mxu0
        %v3129 = vpop.f32.mrf.mxu0
        %v3130 = vadd.f32 0.0, %v3129
        %v3131 = vpop.f32.mrf.mxu0
        %3132 = vmatprep.mubr.bf16.mxu0 0
        %3133 = vmatmul.mubr.bf16.gmra.mxu0 %v2201
        %v3134 = vpop.f32.mrf.mxu0
        %v3135 = vadd.f32 0.0, %v3134
        %v3136 = vpop.f32.mrf.mxu0
        %v3137 = vpop.f32.mrf.mxu0
        %v3138 = vadd.f32 0.0, %v3137
        %v3139 = vpop.f32.mrf.mxu0
        %3140 = vmatprep.mubr.bf16.mxu0 0
        %3141 = vmatmul.mubr.bf16.gmra.mxu0 %v2202
        %v3142 = vpop.f32.mrf.mxu0
        %v3143 = vadd.f32 0.0, %v3142
        %v3144 = vpop.f32.mrf.mxu0
        %v3145 = vpop.f32.mrf.mxu0
        %v3146 = vadd.f32 0.0, %v3145
        %v3147 = vpop.f32.mrf.mxu0
        %3148 = vmatprep.mubr.bf16.mxu0 0
        %3149 = vmatmul.mubr.bf16.gmra.mxu0 %v2203
        %v3150 = vpop.f32.mrf.mxu0
        %v3151 = vadd.f32 0.0, %v3150
        %v3152 = vpop.f32.mrf.mxu0
        %v3153 = vpop.f32.mrf.mxu0
        %v3154 = vadd.f32 0.0, %v3153
        %v3155 = vpop.f32.mrf.mxu0
        %3156 = vmatprep.mubr.bf16.mxu0 0
        %3157 = vmatmul.mubr.bf16.gmra.mxu0 %v2204
        %v3158 = vpop.f32.mrf.mxu0
        %v3159 = vadd.f32 0.0, %v3158
        %v3160 = vpop.f32.mrf.mxu0
        %v3161 = vpop.f32.mrf.mxu0
        %v3162 = vadd.f32 0.0, %v3161
        %v3163 = vpop.f32.mrf.mxu0
        %3164 = vmatprep.mubr.bf16.mxu0 0
        %3165 = vmatmul.mubr.bf16.gmra.mxu0 %v2205
        %v3166 = vpop.f32.mrf.mxu0
        %v3167 = vadd.f32 0.0, %v3166
        %v3168 = vpop.f32.mrf.mxu0
        %v3169 = vpop.f32.mrf.mxu0
        %v3170 = vadd.f32 0.0, %v3169
        %v3171 = vpop.f32.mrf.mxu0
        %3172 = vmatprep.mubr.bf16.mxu0 0
        %3173 = vmatmul.mubr.bf16.gmra.mxu0 %v2206
        %v3174 = vpop.f32.mrf.mxu0
        %v3175 = vadd.f32 0.0, %v3174
        %v3176 = vpop.f32.mrf.mxu0
        %v3177 = vpop.f32.mrf.mxu0
        %v3178 = vadd.f32 0.0, %v3177
        %v3179 = vpop.f32.mrf.mxu0
        %3180 = vmatprep.mubr.bf16.mxu0 0
        %3181 = vmatmul.mubr.bf16.gmra.mxu0 %v2207
        %v3182 = vpop.f32.mrf.mxu0
        %v3183 = vadd.f32 0.0, %v3182
        %v3184 = vpop.f32.mrf.mxu0
        %v3185 = vpop.f32.mrf.mxu0
        %v3186 = vadd.f32 0.0, %v3185
        %v3187 = vpop.f32.mrf.mxu0
        %3188 = vmatprep.mubr.bf16.mxu0 0
        %3189 = vmatmul.mubr.bf16.gmra.mxu0 %v2208
        %v3190 = vpop.f32.mrf.mxu0
        %v3191 = vadd.f32 0.0, %v3190
        %v3192 = vpop.f32.mrf.mxu0
        %v3193 = vpop.f32.mrf.mxu0
        %v3194 = vadd.f32 0.0, %v3193
        %v3195 = vpop.f32.mrf.mxu0
        %3196 = vmatprep.mubr.bf16.mxu0 0
        %3197 = vmatmul.mubr.bf16.gmra.mxu0 %v2209
        %v3198 = vpop.f32.mrf.mxu0
        %v3199 = vadd.f32 0.0, %v3198
        %v3200 = vpop.f32.mrf.mxu0
        %v3201 = vpop.f32.mrf.mxu0
        %v3202 = vadd.f32 0.0, %v3201
        %v3203 = vpop.f32.mrf.mxu0
        %3204 = vmatprep.mubr.bf16.mxu0 0
        %3205 = vmatmul.mubr.bf16.gmra.mxu0 %v2210
        %v3206 = vpop.f32.mrf.mxu0
        %v3207 = vadd.f32 0.0, %v3206
        %v3208 = vpop.f32.mrf.mxu0
        %v3209 = vpop.f32.mrf.mxu0
        %v3210 = vadd.f32 0.0, %v3209
        %v3211 = vpop.f32.mrf.mxu0
        %3212 = vmatprep.mubr.bf16.mxu0 0
        %3213 = vmatmul.mubr.bf16.gmra.mxu0 %v2211
        %v3214 = vpop.f32.mrf.mxu0
        %v3215 = vadd.f32 0.0, %v3214
        %v3216 = vpop.f32.mrf.mxu0
        %v3217 = vpop.f32.mrf.mxu0
        %v3218 = vadd.f32 0.0, %v3217
        %v3219 = vpop.f32.mrf.mxu0
        %3220 = vmatprep.mubr.bf16.mxu0 0
        %3221 = vmatmul.mubr.bf16.gmra.mxu0 %v2212
        %v3222 = vpop.f32.mrf.mxu0
        %v3223 = vadd.f32 0.0, %v3222
        %v3224 = vpop.f32.mrf.mxu0
        %v3225 = vpop.f32.mrf.mxu0
        %v3226 = vadd.f32 0.0, %v3225
        %v3227 = vpop.f32.mrf.mxu0
        %3228 = vmatprep.mubr.bf16.mxu0 0
        %3229 = vmatmul.mubr.bf16.gmra.mxu0 %v2213
        %v3230 = vpop.f32.mrf.mxu0
        %v3231 = vadd.f32 0.0, %v3230
        %v3232 = vpop.f32.mrf.mxu0
        %v3233 = vpop.f32.mrf.mxu0
        %v3234 = vadd.f32 0.0, %v3233
        %v3235 = vpop.f32.mrf.mxu0
        %3236 = vmatprep.mubr.bf16.mxu0 0
        %3237 = vmatmul.mubr.bf16.gmra.mxu0 %v2214
        %v3238 = vpop.f32.mrf.mxu0
        %v3239 = vadd.f32 0.0, %v3238
        %v3240 = vpop.f32.mrf.mxu0
        %v3241 = vpop.f32.mrf.mxu0
        %v3242 = vadd.f32 0.0, %v3241
        %v3243 = vpop.f32.mrf.mxu0
        %3244 = vmatprep.mubr.bf16.mxu0 0
        %3245 = vmatmul.mubr.bf16.gmra.mxu0 %v2215
        %v3246 = vpop.f32.mrf.mxu0
        %v3247 = vadd.f32 0.0, %v3246
        %v3248 = vpop.f32.mrf.mxu0
        %v3249 = vpop.f32.mrf.mxu0
        %v3250 = vadd.f32 0.0, %v3249
        %v3251 = vpop.f32.mrf.mxu0
        %3252 = vmatprep.mubr.bf16.mxu0 0
        %3253 = vmatmul.mubr.bf16.gmra.mxu0 %v2216
        %v3254 = vpop.f32.mrf.mxu0
        %v3255 = vadd.f32 0.0, %v3254
        %v3256 = vpop.f32.mrf.mxu0
        %v3257 = vpop.f32.mrf.mxu0
        %v3258 = vadd.f32 0.0, %v3257
        %v3259 = vpop.f32.mrf.mxu0
        %3260 = vmatprep.mubr.bf16.mxu0 0
        %3261 = vmatmul.mubr.bf16.gmra.mxu0 %v2217
        %v3262 = vpop.f32.mrf.mxu0
        %v3263 = vadd.f32 0.0, %v3262
        %v3264 = vpop.f32.mrf.mxu0
        %v3265 = vpop.f32.mrf.mxu0
        %v3266 = vadd.f32 0.0, %v3265
        %v3267 = vpop.f32.mrf.mxu0
        %3268 = vmatprep.mubr.bf16.mxu0 0
        %3269 = vmatmul.mubr.bf16.gmra.mxu0 %v2218
        %v3270 = vpop.f32.mrf.mxu0
        %v3271 = vadd.f32 0.0, %v3270
        %v3272 = vpop.f32.mrf.mxu0
        %v3273 = vpop.f32.mrf.mxu0
        %v3274 = vadd.f32 0.0, %v3273
        %v3275 = vpop.f32.mrf.mxu0
        %3276 = vmatprep.mubr.bf16.mxu0 0
        %3277 = vmatmul.mubr.bf16.gmra.mxu0 %v2219
        %v3278 = vpop.f32.mrf.mxu0
        %v3279 = vadd.f32 0.0, %v3278
        %v3280 = vpop.f32.mrf.mxu0
        %v3281 = vpop.f32.mrf.mxu0
        %v3282 = vadd.f32 0.0, %v3281
        %v3283 = vpop.f32.mrf.mxu0
        %3284 = vmatprep.mubr.bf16.mxu0 0
        %3285 = vmatmul.mubr.bf16.gmra.mxu0 %v2220
        %v3286 = vpop.f32.mrf.mxu0
        %v3287 = vadd.f32 0.0, %v3286
        %v3288 = vpop.f32.mrf.mxu0
        %v3289 = vpop.f32.mrf.mxu0
        %v3290 = vadd.f32 0.0, %v3289
        %v3291 = vpop.f32.mrf.mxu0
        %3292 = vmatprep.mubr.bf16.mxu0 0
        %3293 = vmatmul.mubr.bf16.gmra.mxu0 %v2221
        %v3294 = vpop.f32.mrf.mxu0
        %v3295 = vadd.f32 0.0, %v3294
        %v3296 = vpop.f32.mrf.mxu0
        %v3297 = vpop.f32.mrf.mxu0
        %v3298 = vadd.f32 0.0, %v3297
        %v3299 = vpop.f32.mrf.mxu0
        %3300 = vmatprep.mubr.bf16.mxu0 0
        %3301 = vmatmul.mubr.bf16.gmra.mxu0 %v2222
        %v3302 = vpop.f32.mrf.mxu0
        %v3303 = vadd.f32 0.0, %v3302
        %v3304 = vpop.f32.mrf.mxu0
        %v3305 = vpop.f32.mrf.mxu0
        %v3306 = vadd.f32 0.0, %v3305
        %v3307 = vpop.f32.mrf.mxu0
        %3308 = vmatprep.mubr.bf16.mxu0 0
        %3309 = vmatmul.mubr.bf16.gmra.mxu0 %v2223
        %v3310 = vpop.f32.mrf.mxu0
        %v3311 = vadd.f32 0.0, %v3310
        %v3312 = vpop.f32.mrf.mxu0
        %v3313 = vpop.f32.mrf.mxu0
        %v3314 = vadd.f32 0.0, %v3313
        %v3315 = vpop.f32.mrf.mxu0
        %3316 = vmatprep.mubr.bf16.mxu0 0
        %3317 = vmatmul.mubr.bf16.gmra.mxu0 %v2224
        %v3318 = vpop.f32.mrf.mxu0
        %v3319 = vadd.f32 0.0, %v3318
        %v3320 = vpop.f32.mrf.mxu0
        %v3321 = vpop.f32.mrf.mxu0
        %v3322 = vadd.f32 0.0, %v3321
        %v3323 = vpop.f32.mrf.mxu0
        %3324 = vmatprep.mubr.bf16.mxu0 0
        %3325 = vmatmul.mubr.bf16.gmra.mxu0 %v2225
        %v3326 = vpop.f32.mrf.mxu0
        %v3327 = vadd.f32 0.0, %v3326
        %v3328 = vpop.f32.mrf.mxu0
        %v3329 = vpop.f32.mrf.mxu0
        %v3330 = vadd.f32 0.0, %v3329
        %v3331 = vpop.f32.mrf.mxu0
        %3332 = vmatprep.mubr.bf16.mxu0 0
        %3333 = vmatmul.mubr.bf16.gmra.mxu0 %v2226
        %v3334 = vpop.f32.mrf.mxu0
        %v3335 = vadd.f32 0.0, %v3334
        %v3336 = vpop.f32.mrf.mxu0
        %v3337 = vpop.f32.mrf.mxu0
        %v3338 = vadd.f32 0.0, %v3337
        %v3339 = vpop.f32.mrf.mxu0
        %3340 = vmatprep.mubr.bf16.mxu0 0
        %3341 = vmatmul.mubr.bf16.gmra.mxu0 %v2227
        %v3342 = vpop.f32.mrf.mxu0
        %v3343 = vadd.f32 0.0, %v3342
        %v3344 = vpop.f32.mrf.mxu0
        %v3345 = vpop.f32.mrf.mxu0
        %v3346 = vadd.f32 0.0, %v3345
        %v3347 = vpop.f32.mrf.mxu0
        %3348 = vdwg.mxu0
        %v3349 = vpack.c.bf16 %v2330, %v2327
        %v3350 = vpack.c.bf16 %v2338, %v2335
        %v3351 = vpack.c.bf16 %v2346, %v2343
        %v3352 = vpack.c.bf16 %v2354, %v2351
        %v3353 = vpack.c.bf16 %v2362, %v2359
        %v3354 = vpack.c.bf16 %v2370, %v2367
        %v3355 = vpack.c.bf16 %v2378, %v2375
        %v3356 = vpack.c.bf16 %v2386, %v2383
        %v3357 = vpack.c.bf16 %v2394, %v2391
        %v3358 = vpack.c.bf16 %v2402, %v2399
        %v3359 = vpack.c.bf16 %v2410, %v2407
        %v3360 = vpack.c.bf16 %v2418, %v2415
        %v3361 = vpack.c.bf16 %v2426, %v2423
        %v3362 = vpack.c.bf16 %v2434, %v2431
        %v3363 = vpack.c.bf16 %v2442, %v2439
        %v3364 = vpack.c.bf16 %v2450, %v2447
        %v3365 = vpack.c.bf16 %v2458, %v2455
        %v3366 = vpack.c.bf16 %v2466, %v2463
        %v3367 = vpack.c.bf16 %v2474, %v2471
        %v3368 = vpack.c.bf16 %v2482, %v2479
        %v3369 = vpack.c.bf16 %v2490, %v2487
        %v3370 = vpack.c.bf16 %v2498, %v2495
        %v3371 = vpack.c.bf16 %v2506, %v2503
        %v3372 = vpack.c.bf16 %v2514, %v2511
        %v3373 = vpack.c.bf16 %v2522, %v2519
        %v3374 = vpack.c.bf16 %v2530, %v2527
        %v3375 = vpack.c.bf16 %v2538, %v2535
        %v3376 = vpack.c.bf16 %v2546, %v2543
        %v3377 = vpack.c.bf16 %v2554, %v2551
        %v3378 = vpack.c.bf16 %v2562, %v2559
        %v3379 = vpack.c.bf16 %v2570, %v2567
        %v3380 = vpack.c.bf16 %v2578, %v2575
        %v3381 = vpack.c.bf16 %v2586, %v2583
        %v3382 = vpack.c.bf16 %v2594, %v2591
        %v3383 = vpack.c.bf16 %v2602, %v2599
        %v3384 = vpack.c.bf16 %v2610, %v2607
        %v3385 = vpack.c.bf16 %v2618, %v2615
        %v3386 = vpack.c.bf16 %v2626, %v2623
        %v3387 = vpack.c.bf16 %v2634, %v2631
        %v3388 = vpack.c.bf16 %v2642, %v2639
        %v3389 = vpack.c.bf16 %v2650, %v2647
        %v3390 = vpack.c.bf16 %v2658, %v2655
        %v3391 = vpack.c.bf16 %v2666, %v2663
        %v3392 = vpack.c.bf16 %v2674, %v2671
        %v3393 = vpack.c.bf16 %v2682, %v2679
        %v3394 = vpack.c.bf16 %v2690, %v2687
        %v3395 = vpack.c.bf16 %v2698, %v2695
        %v3396 = vpack.c.bf16 %v2706, %v2703
        %v3397 = vpack.c.bf16 %v2714, %v2711
        %v3398 = vpack.c.bf16 %v2722, %v2719
        %v3399 = vpack.c.bf16 %v2730, %v2727
        %v3400 = vpack.c.bf16 %v2738, %v2735
        %v3401 = vpack.c.bf16 %v2746, %v2743
        %v3402 = vpack.c.bf16 %v2754, %v2751
        %v3403 = vpack.c.bf16 %v2762, %v2759
        %v3404 = vpack.c.bf16 %v2770, %v2767
        %v3405 = vpack.c.bf16 %v2778, %v2775
        %v3406 = vpack.c.bf16 %v2786, %v2783
        %v3407 = vpack.c.bf16 %v2794, %v2791
        %v3408 = vpack.c.bf16 %v2802, %v2799
        %v3409 = vpack.c.bf16 %v2810, %v2807
        %v3410 = vpack.c.bf16 %v2818, %v2815
        %v3411 = vpack.c.bf16 %v2826, %v2823
        %v3412 = vpack.c.bf16 %v2834, %v2831
        %v3413 = vpack.c.bf16 %v2842, %v2839
        %v3414 = vpack.c.bf16 %v2850, %v2847
        %v3415 = vpack.c.bf16 %v2858, %v2855
        %v3416 = vpack.c.bf16 %v2866, %v2863
        %v3417 = vpack.c.bf16 %v2874, %v2871
        %v3418 = vpack.c.bf16 %v2882, %v2879
        %v3419 = vpack.c.bf16 %v2890, %v2887
        %v3420 = vpack.c.bf16 %v2898, %v2895
        %v3421 = vpack.c.bf16 %v2906, %v2903
        %v3422 = vpack.c.bf16 %v2914, %v2911
        %v3423 = vpack.c.bf16 %v2922, %v2919
        %v3424 = vpack.c.bf16 %v2930, %v2927
        %v3425 = vpack.c.bf16 %v2938, %v2935
        %v3426 = vpack.c.bf16 %v2946, %v2943
        %v3427 = vpack.c.bf16 %v2954, %v2951
        %v3428 = vpack.c.bf16 %v2962, %v2959
        %v3429 = vpack.c.bf16 %v2970, %v2967
        %v3430 = vpack.c.bf16 %v2978, %v2975
        %v3431 = vpack.c.bf16 %v2986, %v2983
        %v3432 = vpack.c.bf16 %v2994, %v2991
        %v3433 = vpack.c.bf16 %v3002, %v2999
        %v3434 = vpack.c.bf16 %v3010, %v3007
        %v3435 = vpack.c.bf16 %v3018, %v3015
        %v3436 = vpack.c.bf16 %v3026, %v3023
        %v3437 = vpack.c.bf16 %v3034, %v3031
        %v3438 = vpack.c.bf16 %v3042, %v3039
        %v3439 = vpack.c.bf16 %v3050, %v3047
        %v3440 = vpack.c.bf16 %v3058, %v3055
        %v3441 = vpack.c.bf16 %v3066, %v3063
        %v3442 = vpack.c.bf16 %v3074, %v3071
        %v3443 = vpack.c.bf16 %v3082, %v3079
        %v3444 = vpack.c.bf16 %v3090, %v3087
        %v3445 = vpack.c.bf16 %v3098, %v3095
        %v3446 = vpack.c.bf16 %v3106, %v3103
        %v3447 = vpack.c.bf16 %v3114, %v3111
        %v3448 = vpack.c.bf16 %v3122, %v3119
        %v3449 = vpack.c.bf16 %v3130, %v3127
        %v3450 = vpack.c.bf16 %v3138, %v3135
        %v3451 = vpack.c.bf16 %v3146, %v3143
        %v3452 = vpack.c.bf16 %v3154, %v3151
        %v3453 = vpack.c.bf16 %v3162, %v3159
        %v3454 = vpack.c.bf16 %v3170, %v3167
        %v3455 = vpack.c.bf16 %v3178, %v3175
        %v3456 = vpack.c.bf16 %v3186, %v3183
        %v3457 = vpack.c.bf16 %v3194, %v3191
        %v3458 = vpack.c.bf16 %v3202, %v3199
        %v3459 = vpack.c.bf16 %v3210, %v3207
        %v3460 = vpack.c.bf16 %v3218, %v3215
        %v3461 = vpack.c.bf16 %v3226, %v3223
        %v3462 = vpack.c.bf16 %v3234, %v3231
        %v3463 = vpack.c.bf16 %v3242, %v3239
        %v3464 = vpack.c.bf16 %v3250, %v3247
        %v3465 = vpack.c.bf16 %v3258, %v3255
        %v3466 = vpack.c.bf16 %v3266, %v3263
        %v3467 = vpack.c.bf16 %v3274, %v3271
        %v3468 = vpack.c.bf16 %v3282, %v3279
        %v3469 = vpack.c.bf16 %v3290, %v3287
        %v3470 = vpack.c.bf16 %v3298, %v3295
        %v3471 = vpack.c.bf16 %v3306, %v3303
        %v3472 = vpack.c.bf16 %v3314, %v3311
        %v3473 = vpack.c.bf16 %v3322, %v3319
        %v3474 = vpack.c.bf16 %v3330, %v3327
        %v3475 = vpack.c.bf16 %v3338, %v3335
        %v3476 = vpack.c.bf16 %v3346, %v3343
        %v3477 = vld [vmem:[%s469] sm:$0xff]
        %v3478 = vld [vmem:[%s469 + $0x8] sm:$0xf]
        %v3479 = vlaneseq
        %v3480 = vshrl.u32 %v3479, 7
        %v3481 = vsub.s32 0, %v3480
        %v3482 = vrot.slane %v3477, %v3481
        %3484 = vbcast.lane.b32.xlu0 %v3482, 256
        %v3485 = vpop.permute.xlu0 %3484
        %s3487 = sor.u32 256, 8
        %3488 = vbcast.lane.b32.xlu0 %v3482, %s3487
        %v3489 = vpop.permute.xlu0 %3488
        %s3491 = sor.u32 256, 16
        %3492 = vbcast.lane.b32.xlu0 %v3482, %s3491
        %v3493 = vpop.permute.xlu0 %3492
        %s3495 = sor.u32 256, 24
        %3496 = vbcast.lane.b32.xlu0 %v3482, %s3495
        %v3497 = vpop.permute.xlu0 %3496
        %s3499 = sor.u32 256, 32
        %3500 = vbcast.lane.b32.xlu0 %v3482, %s3499
        %v3501 = vpop.permute.xlu0 %3500
        %s3503 = sor.u32 256, 40
        %3504 = vbcast.lane.b32.xlu0 %v3482, %s3503
        %v3505 = vpop.permute.xlu0 %3504
        %s3507 = sor.u32 256, 48
        %3508 = vbcast.lane.b32.xlu0 %v3482, %s3507
        %v3509 = vpop.permute.xlu0 %3508
        %s3511 = sor.u32 256, 56
        %3512 = vbcast.lane.b32.xlu0 %v3482, %s3511
        %v3513 = vpop.permute.xlu0 %3512
        %s3515 = sor.u32 256, 64
        %3516 = vbcast.lane.b32.xlu0 %v3482, %s3515
        %v3517 = vpop.permute.xlu0 %3516
        %s3519 = sor.u32 256, 72
        %3520 = vbcast.lane.b32.xlu0 %v3482, %s3519
        %v3521 = vpop.permute.xlu0 %3520
        %s3523 = sor.u32 256, 80
        %3524 = vbcast.lane.b32.xlu0 %v3482, %s3523
        %v3525 = vpop.permute.xlu0 %3524
        %s3527 = sor.u32 256, 88
        %3528 = vbcast.lane.b32.xlu0 %v3482, %s3527
        %v3529 = vpop.permute.xlu0 %3528
        %s3531 = sor.u32 256, 96
        %3532 = vbcast.lane.b32.xlu0 %v3482, %s3531
        %v3533 = vpop.permute.xlu0 %3532
        %s3535 = sor.u32 256, 104
        %3536 = vbcast.lane.b32.xlu0 %v3482, %s3535
        %v3537 = vpop.permute.xlu0 %3536
        %s3539 = sor.u32 256, 112
        %3540 = vbcast.lane.b32.xlu0 %v3482, %s3539
        %v3541 = vpop.permute.xlu0 %3540
        %s3543 = sor.u32 256, 120
        %3544 = vbcast.lane.b32.xlu0 %v3482, %s3543
        %v3545 = vpop.permute.xlu0 %3544
        %v3546 = vlaneseq
        %v3547 = vshrl.u32 %v3546, 7
        %v3548 = vsub.s32 1, %v3547
        %v3549 = vrot.slane %v3477, %v3548
        %3551 = vbcast.lane.b32.xlu0 %v3549, 256
        %v3552 = vpop.permute.xlu0 %3551
        %s3554 = sor.u32 256, 8
        %3555 = vbcast.lane.b32.xlu0 %v3549, %s3554
        %v3556 = vpop.permute.xlu0 %3555
        %s3558 = sor.u32 256, 16
        %3559 = vbcast.lane.b32.xlu0 %v3549, %s3558
        %v3560 = vpop.permute.xlu0 %3559
        %s3562 = sor.u32 256, 24
        %3563 = vbcast.lane.b32.xlu0 %v3549, %s3562
        %v3564 = vpop.permute.xlu0 %3563
        %s3566 = sor.u32 256, 32
        %3567 = vbcast.lane.b32.xlu0 %v3549, %s3566
        %v3568 = vpop.permute.xlu0 %3567
        %s3570 = sor.u32 256, 40
        %3571 = vbcast.lane.b32.xlu0 %v3549, %s3570
        %v3572 = vpop.permute.xlu0 %3571
        %s3574 = sor.u32 256, 48
        %3575 = vbcast.lane.b32.xlu0 %v3549, %s3574
        %v3576 = vpop.permute.xlu0 %3575
        %s3578 = sor.u32 256, 56
        %3579 = vbcast.lane.b32.xlu0 %v3549, %s3578
        %v3580 = vpop.permute.xlu0 %3579
        %s3582 = sor.u32 256, 64
        %3583 = vbcast.lane.b32.xlu0 %v3549, %s3582
        %v3584 = vpop.permute.xlu0 %3583
        %s3586 = sor.u32 256, 72
        %3587 = vbcast.lane.b32.xlu0 %v3549, %s3586
        %v3588 = vpop.permute.xlu0 %3587
        %s3590 = sor.u32 256, 80
        %3591 = vbcast.lane.b32.xlu0 %v3549, %s3590
        %v3592 = vpop.permute.xlu0 %3591
        %s3594 = sor.u32 256, 88
        %3595 = vbcast.lane.b32.xlu0 %v3549, %s3594
        %v3596 = vpop.permute.xlu0 %3595
        %s3598 = sor.u32 256, 96
        %3599 = vbcast.lane.b32.xlu0 %v3549, %s3598
        %v3600 = vpop.permute.xlu0 %3599
        %s3602 = sor.u32 256, 104
        %3603 = vbcast.lane.b32.xlu0 %v3549, %s3602
        %v3604 = vpop.permute.xlu0 %3603
        %s3606 = sor.u32 256, 112
        %3607 = vbcast.lane.b32.xlu0 %v3549, %s3606
        %v3608 = vpop.permute.xlu0 %3607
        %s3610 = sor.u32 256, 120
        %3611 = vbcast.lane.b32.xlu0 %v3549, %s3610
        %v3612 = vpop.permute.xlu0 %3611
        %v3613 = vlaneseq
        %v3614 = vshrl.u32 %v3613, 7
        %v3615 = vsub.s32 2, %v3614
        %v3616 = vrot.slane %v3477, %v3615
        %3618 = vbcast.lane.b32.xlu0 %v3616, 256
        %v3619 = vpop.permute.xlu0 %3618
        %s3621 = sor.u32 256, 8
        %3622 = vbcast.lane.b32.xlu0 %v3616, %s3621
        %v3623 = vpop.permute.xlu0 %3622
        %s3625 = sor.u32 256, 16
        %3626 = vbcast.lane.b32.xlu0 %v3616, %s3625
        %v3627 = vpop.permute.xlu0 %3626
        %s3629 = sor.u32 256, 24
        %3630 = vbcast.lane.b32.xlu0 %v3616, %s3629
        %v3631 = vpop.permute.xlu0 %3630
        %s3633 = sor.u32 256, 32
        %3634 = vbcast.lane.b32.xlu0 %v3616, %s3633
        %v3635 = vpop.permute.xlu0 %3634
        %s3637 = sor.u32 256, 40
        %3638 = vbcast.lane.b32.xlu0 %v3616, %s3637
        %v3639 = vpop.permute.xlu0 %3638
        %s3641 = sor.u32 256, 48
        %3642 = vbcast.lane.b32.xlu0 %v3616, %s3641
        %v3643 = vpop.permute.xlu0 %3642
        %s3645 = sor.u32 256, 56
        %3646 = vbcast.lane.b32.xlu0 %v3616, %s3645
        %v3647 = vpop.permute.xlu0 %3646
        %s3649 = sor.u32 256, 64
        %3650 = vbcast.lane.b32.xlu0 %v3616, %s3649
        %v3651 = vpop.permute.xlu0 %3650
        %s3653 = sor.u32 256, 72
        %3654 = vbcast.lane.b32.xlu0 %v3616, %s3653
        %v3655 = vpop.permute.xlu0 %3654
        %s3657 = sor.u32 256, 80
        %3658 = vbcast.lane.b32.xlu0 %v3616, %s3657
        %v3659 = vpop.permute.xlu0 %3658
        %s3661 = sor.u32 256, 88
        %3662 = vbcast.lane.b32.xlu0 %v3616, %s3661
        %v3663 = vpop.permute.xlu0 %3662
        %s3665 = sor.u32 256, 96
        %3666 = vbcast.lane.b32.xlu0 %v3616, %s3665
        %v3667 = vpop.permute.xlu0 %3666
        %s3669 = sor.u32 256, 104
        %3670 = vbcast.lane.b32.xlu0 %v3616, %s3669
        %v3671 = vpop.permute.xlu0 %3670
        %s3673 = sor.u32 256, 112
        %3674 = vbcast.lane.b32.xlu0 %v3616, %s3673
        %v3675 = vpop.permute.xlu0 %3674
        %s3677 = sor.u32 256, 120
        %3678 = vbcast.lane.b32.xlu0 %v3616, %s3677
        %v3679 = vpop.permute.xlu0 %3678
        %v3680 = vlaneseq
        %v3681 = vshrl.u32 %v3680, 7
        %v3682 = vsub.s32 3, %v3681
        %v3683 = vrot.slane %v3477, %v3682
        %3685 = vbcast.lane.b32.xlu0 %v3683, 256
        %v3686 = vpop.permute.xlu0 %3685
        %s3688 = sor.u32 256, 8
        %3689 = vbcast.lane.b32.xlu0 %v3683, %s3688
        %v3690 = vpop.permute.xlu0 %3689
        %s3692 = sor.u32 256, 16
        %3693 = vbcast.lane.b32.xlu0 %v3683, %s3692
        %v3694 = vpop.permute.xlu0 %3693
        %s3696 = sor.u32 256, 24
        %3697 = vbcast.lane.b32.xlu0 %v3683, %s3696
        %v3698 = vpop.permute.xlu0 %3697
        %s3700 = sor.u32 256, 32
        %3701 = vbcast.lane.b32.xlu0 %v3683, %s3700
        %v3702 = vpop.permute.xlu0 %3701
        %s3704 = sor.u32 256, 40
        %3705 = vbcast.lane.b32.xlu0 %v3683, %s3704
        %v3706 = vpop.permute.xlu0 %3705
        %s3708 = sor.u32 256, 48
        %3709 = vbcast.lane.b32.xlu0 %v3683, %s3708
        %v3710 = vpop.permute.xlu0 %3709
        %s3712 = sor.u32 256, 56
        %3713 = vbcast.lane.b32.xlu0 %v3683, %s3712
        %v3714 = vpop.permute.xlu0 %3713
        %s3716 = sor.u32 256, 64
        %3717 = vbcast.lane.b32.xlu0 %v3683, %s3716
        %v3718 = vpop.permute.xlu0 %3717
        %s3720 = sor.u32 256, 72
        %3721 = vbcast.lane.b32.xlu0 %v3683, %s3720
        %v3722 = vpop.permute.xlu0 %3721
        %s3724 = sor.u32 256, 80
        %3725 = vbcast.lane.b32.xlu0 %v3683, %s3724
        %v3726 = vpop.permute.xlu0 %3725
        %s3728 = sor.u32 256, 88
        %3729 = vbcast.lane.b32.xlu0 %v3683, %s3728
        %v3730 = vpop.permute.xlu0 %3729
        %s3732 = sor.u32 256, 96
        %3733 = vbcast.lane.b32.xlu0 %v3683, %s3732
        %v3734 = vpop.permute.xlu0 %3733
        %s3736 = sor.u32 256, 104
        %3737 = vbcast.lane.b32.xlu0 %v3683, %s3736
        %v3738 = vpop.permute.xlu0 %3737
        %s3740 = sor.u32 256, 112
        %3741 = vbcast.lane.b32.xlu0 %v3683, %s3740
        %v3742 = vpop.permute.xlu0 %3741
        %s3744 = sor.u32 256, 120
        %3745 = vbcast.lane.b32.xlu0 %v3683, %s3744
        %v3746 = vpop.permute.xlu0 %3745
        %v3747 = vlaneseq
        %v3748 = vshrl.u32 %v3747, 7
        %v3749 = vsub.s32 4, %v3748
        %v3750 = vrot.slane %v3477, %v3749
        %3752 = vbcast.lane.b32.xlu0 %v3750, 256
        %v3753 = vpop.permute.xlu0 %3752
        %s3755 = sor.u32 256, 8
        %3756 = vbcast.lane.b32.xlu0 %v3750, %s3755
        %v3757 = vpop.permute.xlu0 %3756
        %s3759 = sor.u32 256, 16
        %3760 = vbcast.lane.b32.xlu0 %v3750, %s3759
        %v3761 = vpop.permute.xlu0 %3760
        %s3763 = sor.u32 256, 24
        %3764 = vbcast.lane.b32.xlu0 %v3750, %s3763
        %v3765 = vpop.permute.xlu0 %3764
        %s3767 = sor.u32 256, 32
        %3768 = vbcast.lane.b32.xlu0 %v3750, %s3767
        %v3769 = vpop.permute.xlu0 %3768
        %s3771 = sor.u32 256, 40
        %3772 = vbcast.lane.b32.xlu0 %v3750, %s3771
        %v3773 = vpop.permute.xlu0 %3772
        %s3775 = sor.u32 256, 48
        %3776 = vbcast.lane.b32.xlu0 %v3750, %s3775
        %v3777 = vpop.permute.xlu0 %3776
        %s3779 = sor.u32 256, 56
        %3780 = vbcast.lane.b32.xlu0 %v3750, %s3779
        %v3781 = vpop.permute.xlu0 %3780
        %s3783 = sor.u32 256, 64
        %3784 = vbcast.lane.b32.xlu0 %v3750, %s3783
        %v3785 = vpop.permute.xlu0 %3784
        %s3787 = sor.u32 256, 72
        %3788 = vbcast.lane.b32.xlu0 %v3750, %s3787
        %v3789 = vpop.permute.xlu0 %3788
        %s3791 = sor.u32 256, 80
        %3792 = vbcast.lane.b32.xlu0 %v3750, %s3791
        %v3793 = vpop.permute.xlu0 %3792
        %s3795 = sor.u32 256, 88
        %3796 = vbcast.lane.b32.xlu0 %v3750, %s3795
        %v3797 = vpop.permute.xlu0 %3796
        %s3799 = sor.u32 256, 96
        %3800 = vbcast.lane.b32.xlu0 %v3750, %s3799
        %v3801 = vpop.permute.xlu0 %3800
        %s3803 = sor.u32 256, 104
        %3804 = vbcast.lane.b32.xlu0 %v3750, %s3803
        %v3805 = vpop.permute.xlu0 %3804
        %s3807 = sor.u32 256, 112
        %3808 = vbcast.lane.b32.xlu0 %v3750, %s3807
        %v3809 = vpop.permute.xlu0 %3808
        %s3811 = sor.u32 256, 120
        %3812 = vbcast.lane.b32.xlu0 %v3750, %s3811
        %v3813 = vpop.permute.xlu0 %3812
        %v3814 = vlaneseq
        %v3815 = vshrl.u32 %v3814, 7
        %v3816 = vsub.s32 5, %v3815
        %v3817 = vrot.slane %v3477, %v3816
        %3819 = vbcast.lane.b32.xlu0 %v3817, 256
        %v3820 = vpop.permute.xlu0 %3819
        %s3822 = sor.u32 256, 8
        %3823 = vbcast.lane.b32.xlu0 %v3817, %s3822
        %v3824 = vpop.permute.xlu0 %3823
        %s3826 = sor.u32 256, 16
        %3827 = vbcast.lane.b32.xlu0 %v3817, %s3826
        %v3828 = vpop.permute.xlu0 %3827
        %s3830 = sor.u32 256, 24
        %3831 = vbcast.lane.b32.xlu0 %v3817, %s3830
        %v3832 = vpop.permute.xlu0 %3831
        %s3834 = sor.u32 256, 32
        %3835 = vbcast.lane.b32.xlu0 %v3817, %s3834
        %v3836 = vpop.permute.xlu0 %3835
        %s3838 = sor.u32 256, 40
        %3839 = vbcast.lane.b32.xlu0 %v3817, %s3838
        %v3840 = vpop.permute.xlu0 %3839
        %s3842 = sor.u32 256, 48
        %3843 = vbcast.lane.b32.xlu0 %v3817, %s3842
        %v3844 = vpop.permute.xlu0 %3843
        %s3846 = sor.u32 256, 56
        %3847 = vbcast.lane.b32.xlu0 %v3817, %s3846
        %v3848 = vpop.permute.xlu0 %3847
        %s3850 = sor.u32 256, 64
        %3851 = vbcast.lane.b32.xlu0 %v3817, %s3850
        %v3852 = vpop.permute.xlu0 %3851
        %s3854 = sor.u32 256, 72
        %3855 = vbcast.lane.b32.xlu0 %v3817, %s3854
        %v3856 = vpop.permute.xlu0 %3855
        %s3858 = sor.u32 256, 80
        %3859 = vbcast.lane.b32.xlu0 %v3817, %s3858
        %v3860 = vpop.permute.xlu0 %3859
        %s3862 = sor.u32 256, 88
        %3863 = vbcast.lane.b32.xlu0 %v3817, %s3862
        %v3864 = vpop.permute.xlu0 %3863
        %s3866 = sor.u32 256, 96
        %3867 = vbcast.lane.b32.xlu0 %v3817, %s3866
        %v3868 = vpop.permute.xlu0 %3867
        %s3870 = sor.u32 256, 104
        %3871 = vbcast.lane.b32.xlu0 %v3817, %s3870
        %v3872 = vpop.permute.xlu0 %3871
        %s3874 = sor.u32 256, 112
        %3875 = vbcast.lane.b32.xlu0 %v3817, %s3874
        %v3876 = vpop.permute.xlu0 %3875
        %s3878 = sor.u32 256, 120
        %3879 = vbcast.lane.b32.xlu0 %v3817, %s3878
        %v3880 = vpop.permute.xlu0 %3879
        %v3881 = vlaneseq
        %v3882 = vshrl.u32 %v3881, 7
        %v3883 = vsub.s32 6, %v3882
        %v3884 = vrot.slane %v3477, %v3883
        %3886 = vbcast.lane.b32.xlu0 %v3884, 256
        %v3887 = vpop.permute.xlu0 %3886
        %s3889 = sor.u32 256, 8
        %3890 = vbcast.lane.b32.xlu0 %v3884, %s3889
        %v3891 = vpop.permute.xlu0 %3890
        %s3893 = sor.u32 256, 16
        %3894 = vbcast.lane.b32.xlu0 %v3884, %s3893
        %v3895 = vpop.permute.xlu0 %3894
        %s3897 = sor.u32 256, 24
        %3898 = vbcast.lane.b32.xlu0 %v3884, %s3897
        %v3899 = vpop.permute.xlu0 %3898
        %s3901 = sor.u32 256, 32
        %3902 = vbcast.lane.b32.xlu0 %v3884, %s3901
        %v3903 = vpop.permute.xlu0 %3902
        %s3905 = sor.u32 256, 40
        %3906 = vbcast.lane.b32.xlu0 %v3884, %s3905
        %v3907 = vpop.permute.xlu0 %3906
        %s3909 = sor.u32 256, 48
        %3910 = vbcast.lane.b32.xlu0 %v3884, %s3909
        %v3911 = vpop.permute.xlu0 %3910
        %s3913 = sor.u32 256, 56
        %3914 = vbcast.lane.b32.xlu0 %v3884, %s3913
        %v3915 = vpop.permute.xlu0 %3914
        %s3917 = sor.u32 256, 64
        %3918 = vbcast.lane.b32.xlu0 %v3884, %s3917
        %v3919 = vpop.permute.xlu0 %3918
        %s3921 = sor.u32 256, 72
        %3922 = vbcast.lane.b32.xlu0 %v3884, %s3921
        %v3923 = vpop.permute.xlu0 %3922
        %s3925 = sor.u32 256, 80
        %3926 = vbcast.lane.b32.xlu0 %v3884, %s3925
        %v3927 = vpop.permute.xlu0 %3926
        %s3929 = sor.u32 256, 88
        %3930 = vbcast.lane.b32.xlu0 %v3884, %s3929
        %v3931 = vpop.permute.xlu0 %3930
        %s3933 = sor.u32 256, 96
        %3934 = vbcast.lane.b32.xlu0 %v3884, %s3933
        %v3935 = vpop.permute.xlu0 %3934
        %s3937 = sor.u32 256, 104
        %3938 = vbcast.lane.b32.xlu0 %v3884, %s3937
        %v3939 = vpop.permute.xlu0 %3938
        %s3941 = sor.u32 256, 112
        %3942 = vbcast.lane.b32.xlu0 %v3884, %s3941
        %v3943 = vpop.permute.xlu0 %3942
        %s3945 = sor.u32 256, 120
        %3946 = vbcast.lane.b32.xlu0 %v3884, %s3945
        %v3947 = vpop.permute.xlu0 %3946
        %v3948 = vlaneseq
        %v3949 = vshrl.u32 %v3948, 7
        %v3950 = vsub.s32 7, %v3949
        %v3951 = vrot.slane %v3477, %v3950
        %3953 = vbcast.lane.b32.xlu0 %v3951, 256
        %v3954 = vpop.permute.xlu0 %3953
        %s3956 = sor.u32 256, 8
        %3957 = vbcast.lane.b32.xlu0 %v3951, %s3956
        %v3958 = vpop.permute.xlu0 %3957
        %s3960 = sor.u32 256, 16
        %3961 = vbcast.lane.b32.xlu0 %v3951, %s3960
        %v3962 = vpop.permute.xlu0 %3961
        %s3964 = sor.u32 256, 24
        %3965 = vbcast.lane.b32.xlu0 %v3951, %s3964
        %v3966 = vpop.permute.xlu0 %3965
        %s3968 = sor.u32 256, 32
        %3969 = vbcast.lane.b32.xlu0 %v3951, %s3968
        %v3970 = vpop.permute.xlu0 %3969
        %s3972 = sor.u32 256, 40
        %3973 = vbcast.lane.b32.xlu0 %v3951, %s3972
        %v3974 = vpop.permute.xlu0 %3973
        %s3976 = sor.u32 256, 48
        %3977 = vbcast.lane.b32.xlu0 %v3951, %s3976
        %v3978 = vpop.permute.xlu0 %3977
        %s3980 = sor.u32 256, 56
        %3981 = vbcast.lane.b32.xlu0 %v3951, %s3980
        %v3982 = vpop.permute.xlu0 %3981
        %s3984 = sor.u32 256, 64
        %3985 = vbcast.lane.b32.xlu0 %v3951, %s3984
        %v3986 = vpop.permute.xlu0 %3985
        %s3988 = sor.u32 256, 72
        %3989 = vbcast.lane.b32.xlu0 %v3951, %s3988
        %v3990 = vpop.permute.xlu0 %3989
        %s3992 = sor.u32 256, 80
        %3993 = vbcast.lane.b32.xlu0 %v3951, %s3992
        %v3994 = vpop.permute.xlu0 %3993
        %s3996 = sor.u32 256, 88
        %3997 = vbcast.lane.b32.xlu0 %v3951, %s3996
        %v3998 = vpop.permute.xlu0 %3997
        %s4000 = sor.u32 256, 96
        %4001 = vbcast.lane.b32.xlu0 %v3951, %s4000
        %v4002 = vpop.permute.xlu0 %4001
        %s4004 = sor.u32 256, 104
        %4005 = vbcast.lane.b32.xlu0 %v3951, %s4004
        %v4006 = vpop.permute.xlu0 %4005
        %s4008 = sor.u32 256, 112
        %4009 = vbcast.lane.b32.xlu0 %v3951, %s4008
        %v4010 = vpop.permute.xlu0 %4009
        %s4012 = sor.u32 256, 120
        %4013 = vbcast.lane.b32.xlu0 %v3951, %s4012
        %v4014 = vpop.permute.xlu0 %4013
        %v4015 = vlaneseq
        %v4016 = vshrl.u32 %v4015, 7
        %v4017 = vsub.s32 0, %v4016
        %v4018 = vrot.slane %v3478, %v4017
        %4020 = vbcast.lane.b32.xlu0 %v4018, 256
        %v4021 = vpop.permute.xlu0 %4020
        %s4023 = sor.u32 256, 8
        %4024 = vbcast.lane.b32.xlu0 %v4018, %s4023
        %v4025 = vpop.permute.xlu0 %4024
        %s4027 = sor.u32 256, 16
        %4028 = vbcast.lane.b32.xlu0 %v4018, %s4027
        %v4029 = vpop.permute.xlu0 %4028
        %s4031 = sor.u32 256, 24
        %4032 = vbcast.lane.b32.xlu0 %v4018, %s4031
        %v4033 = vpop.permute.xlu0 %4032
        %s4035 = sor.u32 256, 32
        %4036 = vbcast.lane.b32.xlu0 %v4018, %s4035
        %v4037 = vpop.permute.xlu0 %4036
        %s4039 = sor.u32 256, 40
        %4040 = vbcast.lane.b32.xlu0 %v4018, %s4039
        %v4041 = vpop.permute.xlu0 %4040
        %s4043 = sor.u32 256, 48
        %4044 = vbcast.lane.b32.xlu0 %v4018, %s4043
        %v4045 = vpop.permute.xlu0 %4044
        %s4047 = sor.u32 256, 56
        %4048 = vbcast.lane.b32.xlu0 %v4018, %s4047
        %v4049 = vpop.permute.xlu0 %4048
        %s4051 = sor.u32 256, 64
        %4052 = vbcast.lane.b32.xlu0 %v4018, %s4051
        %v4053 = vpop.permute.xlu0 %4052
        %s4055 = sor.u32 256, 72
        %4056 = vbcast.lane.b32.xlu0 %v4018, %s4055
        %v4057 = vpop.permute.xlu0 %4056
        %s4059 = sor.u32 256, 80
        %4060 = vbcast.lane.b32.xlu0 %v4018, %s4059
        %v4061 = vpop.permute.xlu0 %4060
        %s4063 = sor.u32 256, 88
        %4064 = vbcast.lane.b32.xlu0 %v4018, %s4063
        %v4065 = vpop.permute.xlu0 %4064
        %s4067 = sor.u32 256, 96
        %4068 = vbcast.lane.b32.xlu0 %v4018, %s4067
        %v4069 = vpop.permute.xlu0 %4068
        %s4071 = sor.u32 256, 104
        %4072 = vbcast.lane.b32.xlu0 %v4018, %s4071
        %v4073 = vpop.permute.xlu0 %4072
        %s4075 = sor.u32 256, 112
        %4076 = vbcast.lane.b32.xlu0 %v4018, %s4075
        %v4077 = vpop.permute.xlu0 %4076
        %s4079 = sor.u32 256, 120
        %4080 = vbcast.lane.b32.xlu0 %v4018, %s4079
        %v4081 = vpop.permute.xlu0 %4080
        %v4082 = vlaneseq
        %v4083 = vshrl.u32 %v4082, 7
        %v4084 = vsub.s32 1, %v4083
        %v4085 = vrot.slane %v3478, %v4084
        %4087 = vbcast.lane.b32.xlu0 %v4085, 256
        %v4088 = vpop.permute.xlu0 %4087
        %s4090 = sor.u32 256, 8
        %4091 = vbcast.lane.b32.xlu0 %v4085, %s4090
        %v4092 = vpop.permute.xlu0 %4091
        %s4094 = sor.u32 256, 16
        %4095 = vbcast.lane.b32.xlu0 %v4085, %s4094
        %v4096 = vpop.permute.xlu0 %4095
        %s4098 = sor.u32 256, 24
        %4099 = vbcast.lane.b32.xlu0 %v4085, %s4098
        %v4100 = vpop.permute.xlu0 %4099
        %s4102 = sor.u32 256, 32
        %4103 = vbcast.lane.b32.xlu0 %v4085, %s4102
        %v4104 = vpop.permute.xlu0 %4103
        %s4106 = sor.u32 256, 40
        %4107 = vbcast.lane.b32.xlu0 %v4085, %s4106
        %v4108 = vpop.permute.xlu0 %4107
        %s4110 = sor.u32 256, 48
        %4111 = vbcast.lane.b32.xlu0 %v4085, %s4110
        %v4112 = vpop.permute.xlu0 %4111
        %s4114 = sor.u32 256, 56
        %4115 = vbcast.lane.b32.xlu0 %v4085, %s4114
        %v4116 = vpop.permute.xlu0 %4115
        %s4118 = sor.u32 256, 64
        %4119 = vbcast.lane.b32.xlu0 %v4085, %s4118
        %v4120 = vpop.permute.xlu0 %4119
        %s4122 = sor.u32 256, 72
        %4123 = vbcast.lane.b32.xlu0 %v4085, %s4122
        %v4124 = vpop.permute.xlu0 %4123
        %s4126 = sor.u32 256, 80
        %4127 = vbcast.lane.b32.xlu0 %v4085, %s4126
        %v4128 = vpop.permute.xlu0 %4127
        %s4130 = sor.u32 256, 88
        %4131 = vbcast.lane.b32.xlu0 %v4085, %s4130
        %v4132 = vpop.permute.xlu0 %4131
        %s4134 = sor.u32 256, 96
        %4135 = vbcast.lane.b32.xlu0 %v4085, %s4134
        %v4136 = vpop.permute.xlu0 %4135
        %s4138 = sor.u32 256, 104
        %4139 = vbcast.lane.b32.xlu0 %v4085, %s4138
        %v4140 = vpop.permute.xlu0 %4139
        %s4142 = sor.u32 256, 112
        %4143 = vbcast.lane.b32.xlu0 %v4085, %s4142
        %v4144 = vpop.permute.xlu0 %4143
        %s4146 = sor.u32 256, 120
        %4147 = vbcast.lane.b32.xlu0 %v4085, %s4146
        %v4148 = vpop.permute.xlu0 %4147
        %v4149 = vlaneseq
        %v4150 = vshrl.u32 %v4149, 7
        %v4151 = vsub.s32 2, %v4150
        %v4152 = vrot.slane %v3478, %v4151
        %4154 = vbcast.lane.b32.xlu0 %v4152, 256
        %v4155 = vpop.permute.xlu0 %4154
        %s4157 = sor.u32 256, 8
        %4158 = vbcast.lane.b32.xlu0 %v4152, %s4157
        %v4159 = vpop.permute.xlu0 %4158
        %s4161 = sor.u32 256, 16
        %4162 = vbcast.lane.b32.xlu0 %v4152, %s4161
        %v4163 = vpop.permute.xlu0 %4162
        %s4165 = sor.u32 256, 24
        %4166 = vbcast.lane.b32.xlu0 %v4152, %s4165
        %v4167 = vpop.permute.xlu0 %4166
        %s4169 = sor.u32 256, 32
        %4170 = vbcast.lane.b32.xlu0 %v4152, %s4169
        %v4171 = vpop.permute.xlu0 %4170
        %s4173 = sor.u32 256, 40
        %4174 = vbcast.lane.b32.xlu0 %v4152, %s4173
        %v4175 = vpop.permute.xlu0 %4174
        %s4177 = sor.u32 256, 48
        %4178 = vbcast.lane.b32.xlu0 %v4152, %s4177
        %v4179 = vpop.permute.xlu0 %4178
        %s4181 = sor.u32 256, 56
        %4182 = vbcast.lane.b32.xlu0 %v4152, %s4181
        %v4183 = vpop.permute.xlu0 %4182
        %s4185 = sor.u32 256, 64
        %4186 = vbcast.lane.b32.xlu0 %v4152, %s4185
        %v4187 = vpop.permute.xlu0 %4186
        %s4189 = sor.u32 256, 72
        %4190 = vbcast.lane.b32.xlu0 %v4152, %s4189
        %v4191 = vpop.permute.xlu0 %4190
        %s4193 = sor.u32 256, 80
        %4194 = vbcast.lane.b32.xlu0 %v4152, %s4193
        %v4195 = vpop.permute.xlu0 %4194
        %s4197 = sor.u32 256, 88
        %4198 = vbcast.lane.b32.xlu0 %v4152, %s4197
        %v4199 = vpop.permute.xlu0 %4198
        %s4201 = sor.u32 256, 96
        %4202 = vbcast.lane.b32.xlu0 %v4152, %s4201
        %v4203 = vpop.permute.xlu0 %4202
        %s4205 = sor.u32 256, 104
        %4206 = vbcast.lane.b32.xlu0 %v4152, %s4205
        %v4207 = vpop.permute.xlu0 %4206
        %s4209 = sor.u32 256, 112
        %4210 = vbcast.lane.b32.xlu0 %v4152, %s4209
        %v4211 = vpop.permute.xlu0 %4210
        %s4213 = sor.u32 256, 120
        %4214 = vbcast.lane.b32.xlu0 %v4152, %s4213
        %v4215 = vpop.permute.xlu0 %4214
        %v4216 = vlaneseq
        %v4217 = vshrl.u32 %v4216, 7
        %v4218 = vsub.s32 3, %v4217
        %v4219 = vrot.slane %v3478, %v4218
        %4221 = vbcast.lane.b32.xlu0 %v4219, 256
        %v4222 = vpop.permute.xlu0 %4221
        %s4224 = sor.u32 256, 8
        %4225 = vbcast.lane.b32.xlu0 %v4219, %s4224
        %v4226 = vpop.permute.xlu0 %4225
        %s4228 = sor.u32 256, 16
        %4229 = vbcast.lane.b32.xlu0 %v4219, %s4228
        %v4230 = vpop.permute.xlu0 %4229
        %s4232 = sor.u32 256, 24
        %4233 = vbcast.lane.b32.xlu0 %v4219, %s4232
        %v4234 = vpop.permute.xlu0 %4233
        %s4236 = sor.u32 256, 32
        %4237 = vbcast.lane.b32.xlu0 %v4219, %s4236
        %v4238 = vpop.permute.xlu0 %4237
        %s4240 = sor.u32 256, 40
        %4241 = vbcast.lane.b32.xlu0 %v4219, %s4240
        %v4242 = vpop.permute.xlu0 %4241
        %s4244 = sor.u32 256, 48
        %4245 = vbcast.lane.b32.xlu0 %v4219, %s4244
        %v4246 = vpop.permute.xlu0 %4245
        %s4248 = sor.u32 256, 56
        %4249 = vbcast.lane.b32.xlu0 %v4219, %s4248
        %v4250 = vpop.permute.xlu0 %4249
        %s4252 = sor.u32 256, 64
        %4253 = vbcast.lane.b32.xlu0 %v4219, %s4252
        %v4254 = vpop.permute.xlu0 %4253
        %s4256 = sor.u32 256, 72
        %4257 = vbcast.lane.b32.xlu0 %v4219, %s4256
        %v4258 = vpop.permute.xlu0 %4257
        %s4260 = sor.u32 256, 80
        %4261 = vbcast.lane.b32.xlu0 %v4219, %s4260
        %v4262 = vpop.permute.xlu0 %4261
        %s4264 = sor.u32 256, 88
        %4265 = vbcast.lane.b32.xlu0 %v4219, %s4264
        %v4266 = vpop.permute.xlu0 %4265
        %s4268 = sor.u32 256, 96
        %4269 = vbcast.lane.b32.xlu0 %v4219, %s4268
        %v4270 = vpop.permute.xlu0 %4269
        %s4272 = sor.u32 256, 104
        %4273 = vbcast.lane.b32.xlu0 %v4219, %s4272
        %v4274 = vpop.permute.xlu0 %4273
        %s4276 = sor.u32 256, 112
        %4277 = vbcast.lane.b32.xlu0 %v4219, %s4276
        %v4278 = vpop.permute.xlu0 %4277
        %s4280 = sor.u32 256, 120
        %4281 = vbcast.lane.b32.xlu0 %v4219, %s4280
        %v4282 = vpop.permute.xlu0 %4281
        %vm4283 = vcmp.eq.s32.totalorder %v3485, %v1587
        %vm4284 = vcmp.eq.s32.totalorder %v3489, %v1587
        %vm4285 = vcmp.eq.s32.totalorder %v3493, %v1587
        %vm4286 = vcmp.eq.s32.totalorder %v3497, %v1587
        %vm4287 = vcmp.eq.s32.totalorder %v3501, %v1587
        %vm4288 = vcmp.eq.s32.totalorder %v3505, %v1587
        %vm4289 = vcmp.eq.s32.totalorder %v3509, %v1587
        %vm4290 = vcmp.eq.s32.totalorder %v3513, %v1587
        %vm4291 = vcmp.eq.s32.totalorder %v3517, %v1587
        %vm4292 = vcmp.eq.s32.totalorder %v3521, %v1587
        %vm4293 = vcmp.eq.s32.totalorder %v3525, %v1587
        %vm4294 = vcmp.eq.s32.totalorder %v3529, %v1587
        %vm4295 = vcmp.eq.s32.totalorder %v3533, %v1587
        %vm4296 = vcmp.eq.s32.totalorder %v3537, %v1587
        %vm4297 = vcmp.eq.s32.totalorder %v3541, %v1587
        %vm4298 = vcmp.eq.s32.totalorder %v3545, %v1587
        %vm4299 = vcmp.eq.s32.totalorder %v3552, %v1587
        %vm4300 = vcmp.eq.s32.totalorder %v3556, %v1587
        %vm4301 = vcmp.eq.s32.totalorder %v3560, %v1587
        %vm4302 = vcmp.eq.s32.totalorder %v3564, %v1587
        %vm4303 = vcmp.eq.s32.totalorder %v3568, %v1587
        %vm4304 = vcmp.eq.s32.totalorder %v3572, %v1587
        %vm4305 = vcmp.eq.s32.totalorder %v3576, %v1587
        %vm4306 = vcmp.eq.s32.totalorder %v3580, %v1587
        %vm4307 = vcmp.eq.s32.totalorder %v3584, %v1587
        %vm4308 = vcmp.eq.s32.totalorder %v3588, %v1587
        %vm4309 = vcmp.eq.s32.totalorder %v3592, %v1587
        %vm4310 = vcmp.eq.s32.totalorder %v3596, %v1587
        %vm4311 = vcmp.eq.s32.totalorder %v3600, %v1587
        %vm4312 = vcmp.eq.s32.totalorder %v3604, %v1587
        %vm4313 = vcmp.eq.s32.totalorder %v3608, %v1587
        %vm4314 = vcmp.eq.s32.totalorder %v3612, %v1587
        %vm4315 = vcmp.eq.s32.totalorder %v3619, %v1587
        %vm4316 = vcmp.eq.s32.totalorder %v3623, %v1587
        %vm4317 = vcmp.eq.s32.totalorder %v3627, %v1587
        %vm4318 = vcmp.eq.s32.totalorder %v3631, %v1587
        %vm4319 = vcmp.eq.s32.totalorder %v3635, %v1587
        %vm4320 = vcmp.eq.s32.totalorder %v3639, %v1587
        %vm4321 = vcmp.eq.s32.totalorder %v3643, %v1587
        %vm4322 = vcmp.eq.s32.totalorder %v3647, %v1587
        %vm4323 = vcmp.eq.s32.totalorder %v3651, %v1587
        %vm4324 = vcmp.eq.s32.totalorder %v3655, %v1587
        %vm4325 = vcmp.eq.s32.totalorder %v3659, %v1587
        %vm4326 = vcmp.eq.s32.totalorder %v3663, %v1587
        %vm4327 = vcmp.eq.s32.totalorder %v3667, %v1587
        %vm4328 = vcmp.eq.s32.totalorder %v3671, %v1587
        %vm4329 = vcmp.eq.s32.totalorder %v3675, %v1587
        %vm4330 = vcmp.eq.s32.totalorder %v3679, %v1587
        %vm4331 = vcmp.eq.s32.totalorder %v3686, %v1587
        %vm4332 = vcmp.eq.s32.totalorder %v3690, %v1587
        %vm4333 = vcmp.eq.s32.totalorder %v3694, %v1587
        %vm4334 = vcmp.eq.s32.totalorder %v3698, %v1587
        %vm4335 = vcmp.eq.s32.totalorder %v3702, %v1587
        %vm4336 = vcmp.eq.s32.totalorder %v3706, %v1587
        %vm4337 = vcmp.eq.s32.totalorder %v3710, %v1587
        %vm4338 = vcmp.eq.s32.totalorder %v3714, %v1587
        %vm4339 = vcmp.eq.s32.totalorder %v3718, %v1587
        %vm4340 = vcmp.eq.s32.totalorder %v3722, %v1587
        %vm4341 = vcmp.eq.s32.totalorder %v3726, %v1587
        %vm4342 = vcmp.eq.s32.totalorder %v3730, %v1587
        %vm4343 = vcmp.eq.s32.totalorder %v3734, %v1587
        %vm4344 = vcmp.eq.s32.totalorder %v3738, %v1587
        %vm4345 = vcmp.eq.s32.totalorder %v3742, %v1587
        %vm4346 = vcmp.eq.s32.totalorder %v3746, %v1587
        %vm4347 = vcmp.eq.s32.totalorder %v3753, %v1587
        %vm4348 = vcmp.eq.s32.totalorder %v3757, %v1587
        %vm4349 = vcmp.eq.s32.totalorder %v3761, %v1587
        %vm4350 = vcmp.eq.s32.totalorder %v3765, %v1587
        %vm4351 = vcmp.eq.s32.totalorder %v3769, %v1587
        %vm4352 = vcmp.eq.s32.totalorder %v3773, %v1587
        %vm4353 = vcmp.eq.s32.totalorder %v3777, %v1587
        %vm4354 = vcmp.eq.s32.totalorder %v3781, %v1587
        %vm4355 = vcmp.eq.s32.totalorder %v3785, %v1587
        %vm4356 = vcmp.eq.s32.totalorder %v3789, %v1587
        %vm4357 = vcmp.eq.s32.totalorder %v3793, %v1587
        %vm4358 = vcmp.eq.s32.totalorder %v3797, %v1587
        %vm4359 = vcmp.eq.s32.totalorder %v3801, %v1587
        %vm4360 = vcmp.eq.s32.totalorder %v3805, %v1587
        %vm4361 = vcmp.eq.s32.totalorder %v3809, %v1587
        %vm4362 = vcmp.eq.s32.totalorder %v3813, %v1587
        %vm4363 = vcmp.eq.s32.totalorder %v3820, %v1587
        %vm4364 = vcmp.eq.s32.totalorder %v3824, %v1587
        %vm4365 = vcmp.eq.s32.totalorder %v3828, %v1587
        %vm4366 = vcmp.eq.s32.totalorder %v3832, %v1587
        %vm4367 = vcmp.eq.s32.totalorder %v3836, %v1587
        %vm4368 = vcmp.eq.s32.totalorder %v3840, %v1587
        %vm4369 = vcmp.eq.s32.totalorder %v3844, %v1587
        %vm4370 = vcmp.eq.s32.totalorder %v3848, %v1587
        %vm4371 = vcmp.eq.s32.totalorder %v3852, %v1587
        %vm4372 = vcmp.eq.s32.totalorder %v3856, %v1587
        %vm4373 = vcmp.eq.s32.totalorder %v3860, %v1587
        %vm4374 = vcmp.eq.s32.totalorder %v3864, %v1587
        %vm4375 = vcmp.eq.s32.totalorder %v3868, %v1587
        %vm4376 = vcmp.eq.s32.totalorder %v3872, %v1587
        %vm4377 = vcmp.eq.s32.totalorder %v3876, %v1587
        %vm4378 = vcmp.eq.s32.totalorder %v3880, %v1587
        %vm4379 = vcmp.eq.s32.totalorder %v3887, %v1587
        %vm4380 = vcmp.eq.s32.totalorder %v3891, %v1587
        %vm4381 = vcmp.eq.s32.totalorder %v3895, %v1587
        %vm4382 = vcmp.eq.s32.totalorder %v3899, %v1587
        %vm4383 = vcmp.eq.s32.totalorder %v3903, %v1587
        %vm4384 = vcmp.eq.s32.totalorder %v3907, %v1587
        %vm4385 = vcmp.eq.s32.totalorder %v3911, %v1587
        %vm4386 = vcmp.eq.s32.totalorder %v3915, %v1587
        %vm4387 = vcmp.eq.s32.totalorder %v3919, %v1587
        %vm4388 = vcmp.eq.s32.totalorder %v3923, %v1587
        %vm4389 = vcmp.eq.s32.totalorder %v3927, %v1587
        %vm4390 = vcmp.eq.s32.totalorder %v3931, %v1587
        %vm4391 = vcmp.eq.s32.totalorder %v3935, %v1587
        %vm4392 = vcmp.eq.s32.totalorder %v3939, %v1587
        %vm4393 = vcmp.eq.s32.totalorder %v3943, %v1587
        %vm4394 = vcmp.eq.s32.totalorder %v3947, %v1587
        %vm4395 = vcmp.eq.s32.totalorder %v3954, %v1587
        %vm4396 = vcmp.eq.s32.totalorder %v3958, %v1587
        %vm4397 = vcmp.eq.s32.totalorder %v3962, %v1587
        %vm4398 = vcmp.eq.s32.totalorder %v3966, %v1587
        %vm4399 = vcmp.eq.s32.totalorder %v3970, %v1587
        %vm4400 = vcmp.eq.s32.totalorder %v3974, %v1587
        %vm4401 = vcmp.eq.s32.totalorder %v3978, %v1587
        %vm4402 = vcmp.eq.s32.totalorder %v3982, %v1587
        %vm4403 = vcmp.eq.s32.totalorder %v3986, %v1587
        %vm4404 = vcmp.eq.s32.totalorder %v3990, %v1587
        %vm4405 = vcmp.eq.s32.totalorder %v3994, %v1587
        %vm4406 = vcmp.eq.s32.totalorder %v3998, %v1587
        %vm4407 = vcmp.eq.s32.totalorder %v4002, %v1587
        %vm4408 = vcmp.eq.s32.totalorder %v4006, %v1587
        %vm4409 = vcmp.eq.s32.totalorder %v4010, %v1587
        %vm4410 = vcmp.eq.s32.totalorder %v4014, %v1587
        %vm4411 = vcmp.eq.s32.totalorder %v4021, %v1587
        %vm4412 = vcmp.eq.s32.totalorder %v4025, %v1587
        %vm4413 = vcmp.eq.s32.totalorder %v4029, %v1587
        %vm4414 = vcmp.eq.s32.totalorder %v4033, %v1587
        %vm4415 = vcmp.eq.s32.totalorder %v4037, %v1587
        %vm4416 = vcmp.eq.s32.totalorder %v4041, %v1587
        %vm4417 = vcmp.eq.s32.totalorder %v4045, %v1587
        %vm4418 = vcmp.eq.s32.totalorder %v4049, %v1587
        %vm4419 = vcmp.eq.s32.totalorder %v4053, %v1587
        %vm4420 = vcmp.eq.s32.totalorder %v4057, %v1587
        %vm4421 = vcmp.eq.s32.totalorder %v4061, %v1587
        %vm4422 = vcmp.eq.s32.totalorder %v4065, %v1587
        %vm4423 = vcmp.eq.s32.totalorder %v4069, %v1587
        %vm4424 = vcmp.eq.s32.totalorder %v4073, %v1587
        %vm4425 = vcmp.eq.s32.totalorder %v4077, %v1587
        %vm4426 = vcmp.eq.s32.totalorder %v4081, %v1587
        %vm4427 = vcmp.eq.s32.totalorder %v4088, %v1587
        %vm4428 = vcmp.eq.s32.totalorder %v4092, %v1587
        %vm4429 = vcmp.eq.s32.totalorder %v4096, %v1587
        %vm4430 = vcmp.eq.s32.totalorder %v4100, %v1587
        %vm4431 = vcmp.eq.s32.totalorder %v4104, %v1587
        %vm4432 = vcmp.eq.s32.totalorder %v4108, %v1587
        %vm4433 = vcmp.eq.s32.totalorder %v4112, %v1587
        %vm4434 = vcmp.eq.s32.totalorder %v4116, %v1587
        %vm4435 = vcmp.eq.s32.totalorder %v4120, %v1587
        %vm4436 = vcmp.eq.s32.totalorder %v4124, %v1587
        %vm4437 = vcmp.eq.s32.totalorder %v4128, %v1587
        %vm4438 = vcmp.eq.s32.totalorder %v4132, %v1587
        %vm4439 = vcmp.eq.s32.totalorder %v4136, %v1587
        %vm4440 = vcmp.eq.s32.totalorder %v4140, %v1587
        %vm4441 = vcmp.eq.s32.totalorder %v4144, %v1587
        %vm4442 = vcmp.eq.s32.totalorder %v4148, %v1587
        %vm4443 = vcmp.eq.s32.totalorder %v4155, %v1587
        %vm4444 = vcmp.eq.s32.totalorder %v4159, %v1587
        %vm4445 = vcmp.eq.s32.totalorder %v4163, %v1587
        %vm4446 = vcmp.eq.s32.totalorder %v4167, %v1587
        %vm4447 = vcmp.eq.s32.totalorder %v4171, %v1587
        %vm4448 = vcmp.eq.s32.totalorder %v4175, %v1587
        %vm4449 = vcmp.eq.s32.totalorder %v4179, %v1587
        %vm4450 = vcmp.eq.s32.totalorder %v4183, %v1587
        %vm4451 = vcmp.eq.s32.totalorder %v4187, %v1587
        %vm4452 = vcmp.eq.s32.totalorder %v4191, %v1587
        %vm4453 = vcmp.eq.s32.totalorder %v4195, %v1587
        %vm4454 = vcmp.eq.s32.totalorder %v4199, %v1587
        %vm4455 = vcmp.eq.s32.totalorder %v4203, %v1587
        %vm4456 = vcmp.eq.s32.totalorder %v4207, %v1587
        %vm4457 = vcmp.eq.s32.totalorder %v4211, %v1587
        %vm4458 = vcmp.eq.s32.totalorder %v4215, %v1587
        %vm4459 = vcmp.eq.s32.totalorder %v4222, %v1587
        %vm4460 = vcmp.eq.s32.totalorder %v4226, %v1587
        %vm4461 = vcmp.eq.s32.totalorder %v4230, %v1587
        %vm4462 = vcmp.eq.s32.totalorder %v4234, %v1587
        %vm4463 = vcmp.eq.s32.totalorder %v4238, %v1587
        %vm4464 = vcmp.eq.s32.totalorder %v4242, %v1587
        %vm4465 = vcmp.eq.s32.totalorder %v4246, %v1587
        %vm4466 = vcmp.eq.s32.totalorder %v4250, %v1587
        %vm4467 = vcmp.eq.s32.totalorder %v4254, %v1587
        %vm4468 = vcmp.eq.s32.totalorder %v4258, %v1587
        %vm4469 = vcmp.eq.s32.totalorder %v4262, %v1587
        %vm4470 = vcmp.eq.s32.totalorder %v4266, %v1587
        %vm4471 = vcmp.eq.s32.totalorder %v4270, %v1587
        %vm4472 = vcmp.eq.s32.totalorder %v4274, %v1587
        %vm4473 = vcmp.eq.s32.totalorder %v4278, %v1587
        %vm4474 = vcmp.eq.s32.totalorder %v4282, %v1587
        %v4475 = vsel %vm4283, 1.0, 0.0
        %v4476 = vsel %vm4284, 1.0, 0.0
        %v4477 = vsel %vm4285, 1.0, 0.0
        %v4478 = vsel %vm4286, 1.0, 0.0
        %v4479 = vsel %vm4287, 1.0, 0.0
        %v4480 = vsel %vm4288, 1.0, 0.0
        %v4481 = vsel %vm4289, 1.0, 0.0
        %v4482 = vsel %vm4290, 1.0, 0.0
        %v4483 = vsel %vm4291, 1.0, 0.0
        %v4484 = vsel %vm4292, 1.0, 0.0
        %v4485 = vsel %vm4293, 1.0, 0.0
        %v4486 = vsel %vm4294, 1.0, 0.0
        %v4487 = vsel %vm4295, 1.0, 0.0
        %v4488 = vsel %vm4296, 1.0, 0.0
        %v4489 = vsel %vm4297, 1.0, 0.0
        %v4490 = vsel %vm4298, 1.0, 0.0
        %v4491 = vsel %vm4299, 1.0, 0.0
        %v4492 = vsel %vm4300, 1.0, 0.0
        %v4493 = vsel %vm4301, 1.0, 0.0
        %v4494 = vsel %vm4302, 1.0, 0.0
        %v4495 = vsel %vm4303, 1.0, 0.0
        %v4496 = vsel %vm4304, 1.0, 0.0
        %v4497 = vsel %vm4305, 1.0, 0.0
        %v4498 = vsel %vm4306, 1.0, 0.0
        %v4499 = vsel %vm4307, 1.0, 0.0
        %v4500 = vsel %vm4308, 1.0, 0.0
        %v4501 = vsel %vm4309, 1.0, 0.0
        %v4502 = vsel %vm4310, 1.0, 0.0
        %v4503 = vsel %vm4311, 1.0, 0.0
        %v4504 = vsel %vm4312, 1.0, 0.0
        %v4505 = vsel %vm4313, 1.0, 0.0
        %v4506 = vsel %vm4314, 1.0, 0.0
        %v4507 = vsel %vm4315, 1.0, 0.0
        %v4508 = vsel %vm4316, 1.0, 0.0
        %v4509 = vsel %vm4317, 1.0, 0.0
        %v4510 = vsel %vm4318, 1.0, 0.0
        %v4511 = vsel %vm4319, 1.0, 0.0
        %v4512 = vsel %vm4320, 1.0, 0.0
        %v4513 = vsel %vm4321, 1.0, 0.0
        %v4514 = vsel %vm4322, 1.0, 0.0
        %v4515 = vsel %vm4323, 1.0, 0.0
        %v4516 = vsel %vm4324, 1.0, 0.0
        %v4517 = vsel %vm4325, 1.0, 0.0
        %v4518 = vsel %vm4326, 1.0, 0.0
        %v4519 = vsel %vm4327, 1.0, 0.0
        %v4520 = vsel %vm4328, 1.0, 0.0
        %v4521 = vsel %vm4329, 1.0, 0.0
        %v4522 = vsel %vm4330, 1.0, 0.0
        %v4523 = vsel %vm4331, 1.0, 0.0
        %v4524 = vsel %vm4332, 1.0, 0.0
        %v4525 = vsel %vm4333, 1.0, 0.0
        %v4526 = vsel %vm4334, 1.0, 0.0
        %v4527 = vsel %vm4335, 1.0, 0.0
        %v4528 = vsel %vm4336, 1.0, 0.0
        %v4529 = vsel %vm4337, 1.0, 0.0
        %v4530 = vsel %vm4338, 1.0, 0.0
        %v4531 = vsel %vm4339, 1.0, 0.0
        %v4532 = vsel %vm4340, 1.0, 0.0
        %v4533 = vsel %vm4341, 1.0, 0.0
        %v4534 = vsel %vm4342, 1.0, 0.0
        %v4535 = vsel %vm4343, 1.0, 0.0
        %v4536 = vsel %vm4344, 1.0, 0.0
        %v4537 = vsel %vm4345, 1.0, 0.0
        %v4538 = vsel %vm4346, 1.0, 0.0
        %v4539 = vsel %vm4347, 1.0, 0.0
        %v4540 = vsel %vm4348, 1.0, 0.0
        %v4541 = vsel %vm4349, 1.0, 0.0
        %v4542 = vsel %vm4350, 1.0, 0.0
        %v4543 = vsel %vm4351, 1.0, 0.0
        %v4544 = vsel %vm4352, 1.0, 0.0
        %v4545 = vsel %vm4353, 1.0, 0.0
        %v4546 = vsel %vm4354, 1.0, 0.0
        %v4547 = vsel %vm4355, 1.0, 0.0
        %v4548 = vsel %vm4356, 1.0, 0.0
        %v4549 = vsel %vm4357, 1.0, 0.0
        %v4550 = vsel %vm4358, 1.0, 0.0
        %v4551 = vsel %vm4359, 1.0, 0.0
        %v4552 = vsel %vm4360, 1.0, 0.0
        %v4553 = vsel %vm4361, 1.0, 0.0
        %v4554 = vsel %vm4362, 1.0, 0.0
        %v4555 = vsel %vm4363, 1.0, 0.0
        %v4556 = vsel %vm4364, 1.0, 0.0
        %v4557 = vsel %vm4365, 1.0, 0.0
        %v4558 = vsel %vm4366, 1.0, 0.0
        %v4559 = vsel %vm4367, 1.0, 0.0
        %v4560 = vsel %vm4368, 1.0, 0.0
        %v4561 = vsel %vm4369, 1.0, 0.0
        %v4562 = vsel %vm4370, 1.0, 0.0
        %v4563 = vsel %vm4371, 1.0, 0.0
        %v4564 = vsel %vm4372, 1.0, 0.0
        %v4565 = vsel %vm4373, 1.0, 0.0
        %v4566 = vsel %vm4374, 1.0, 0.0
        %v4567 = vsel %vm4375, 1.0, 0.0
        %v4568 = vsel %vm4376, 1.0, 0.0
        %v4569 = vsel %vm4377, 1.0, 0.0
        %v4570 = vsel %vm4378, 1.0, 0.0
        %v4571 = vsel %vm4379, 1.0, 0.0
        %v4572 = vsel %vm4380, 1.0, 0.0
        %v4573 = vsel %vm4381, 1.0, 0.0
        %v4574 = vsel %vm4382, 1.0, 0.0
        %v4575 = vsel %vm4383, 1.0, 0.0
        %v4576 = vsel %vm4384, 1.0, 0.0
        %v4577 = vsel %vm4385, 1.0, 0.0
        %v4578 = vsel %vm4386, 1.0, 0.0
        %v4579 = vsel %vm4387, 1.0, 0.0
        %v4580 = vsel %vm4388, 1.0, 0.0
        %v4581 = vsel %vm4389, 1.0, 0.0
        %v4582 = vsel %vm4390, 1.0, 0.0
        %v4583 = vsel %vm4391, 1.0, 0.0
        %v4584 = vsel %vm4392, 1.0, 0.0
        %v4585 = vsel %vm4393, 1.0, 0.0
        %v4586 = vsel %vm4394, 1.0, 0.0
        %v4587 = vsel %vm4395, 1.0, 0.0
        %v4588 = vsel %vm4396, 1.0, 0.0
        %v4589 = vsel %vm4397, 1.0, 0.0
        %v4590 = vsel %vm4398, 1.0, 0.0
        %v4591 = vsel %vm4399, 1.0, 0.0
        %v4592 = vsel %vm4400, 1.0, 0.0
        %v4593 = vsel %vm4401, 1.0, 0.0
        %v4594 = vsel %vm4402, 1.0, 0.0
        %v4595 = vsel %vm4403, 1.0, 0.0
        %v4596 = vsel %vm4404, 1.0, 0.0
        %v4597 = vsel %vm4405, 1.0, 0.0
        %v4598 = vsel %vm4406, 1.0, 0.0
        %v4599 = vsel %vm4407, 1.0, 0.0
        %v4600 = vsel %vm4408, 1.0, 0.0
        %v4601 = vsel %vm4409, 1.0, 0.0
        %v4602 = vsel %vm4410, 1.0, 0.0
        %v4603 = vsel %vm4411, 1.0, 0.0
        %v4604 = vsel %vm4412, 1.0, 0.0
        %v4605 = vsel %vm4413, 1.0, 0.0
        %v4606 = vsel %vm4414, 1.0, 0.0
        %v4607 = vsel %vm4415, 1.0, 0.0
        %v4608 = vsel %vm4416, 1.0, 0.0
        %v4609 = vsel %vm4417, 1.0, 0.0
        %v4610 = vsel %vm4418, 1.0, 0.0
        %v4611 = vsel %vm4419, 1.0, 0.0
        %v4612 = vsel %vm4420, 1.0, 0.0
        %v4613 = vsel %vm4421, 1.0, 0.0
        %v4614 = vsel %vm4422, 1.0, 0.0
        %v4615 = vsel %vm4423, 1.0, 0.0
        %v4616 = vsel %vm4424, 1.0, 0.0
        %v4617 = vsel %vm4425, 1.0, 0.0
        %v4618 = vsel %vm4426, 1.0, 0.0
        %v4619 = vsel %vm4427, 1.0, 0.0
        %v4620 = vsel %vm4428, 1.0, 0.0
        %v4621 = vsel %vm4429, 1.0, 0.0
        %v4622 = vsel %vm4430, 1.0, 0.0
        %v4623 = vsel %vm4431, 1.0, 0.0
        %v4624 = vsel %vm4432, 1.0, 0.0
        %v4625 = vsel %vm4433, 1.0, 0.0
        %v4626 = vsel %vm4434, 1.0, 0.0
        %v4627 = vsel %vm4435, 1.0, 0.0
        %v4628 = vsel %vm4436, 1.0, 0.0
        %v4629 = vsel %vm4437, 1.0, 0.0
        %v4630 = vsel %vm4438, 1.0, 0.0
        %v4631 = vsel %vm4439, 1.0, 0.0
        %v4632 = vsel %vm4440, 1.0, 0.0
        %v4633 = vsel %vm4441, 1.0, 0.0
        %v4634 = vsel %vm4442, 1.0, 0.0
        %v4635 = vsel %vm4443, 1.0, 0.0
        %v4636 = vsel %vm4444, 1.0, 0.0
        %v4637 = vsel %vm4445, 1.0, 0.0
        %v4638 = vsel %vm4446, 1.0, 0.0
        %v4639 = vsel %vm4447, 1.0, 0.0
        %v4640 = vsel %vm4448, 1.0, 0.0
        %v4641 = vsel %vm4449, 1.0, 0.0
        %v4642 = vsel %vm4450, 1.0, 0.0
        %v4643 = vsel %vm4451, 1.0, 0.0
        %v4644 = vsel %vm4452, 1.0, 0.0
        %v4645 = vsel %vm4453, 1.0, 0.0
        %v4646 = vsel %vm4454, 1.0, 0.0
        %v4647 = vsel %vm4455, 1.0, 0.0
        %v4648 = vsel %vm4456, 1.0, 0.0
        %v4649 = vsel %vm4457, 1.0, 0.0
        %v4650 = vsel %vm4458, 1.0, 0.0
        %v4651 = vsel %vm4459, 1.0, 0.0
        %v4652 = vsel %vm4460, 1.0, 0.0
        %v4653 = vsel %vm4461, 1.0, 0.0
        %v4654 = vsel %vm4462, 1.0, 0.0
        %v4655 = vsel %vm4463, 1.0, 0.0
        %v4656 = vsel %vm4464, 1.0, 0.0
        %v4657 = vsel %vm4465, 1.0, 0.0
        %v4658 = vsel %vm4466, 1.0, 0.0
        %v4659 = vsel %vm4467, 1.0, 0.0
        %v4660 = vsel %vm4468, 1.0, 0.0
        %v4661 = vsel %vm4469, 1.0, 0.0
        %v4662 = vsel %vm4470, 1.0, 0.0
        %v4663 = vsel %vm4471, 1.0, 0.0
        %v4664 = vsel %vm4472, 1.0, 0.0
        %v4665 = vsel %vm4473, 1.0, 0.0
        %v4666 = vsel %vm4474, 1.0, 0.0
        %v4667 = vpack.c.bf16 %v4476, %v4475
        %v4668 = vpack.c.bf16 %v4478, %v4477
        %v4669 = vpack.c.bf16 %v4480, %v4479
        %v4670 = vpack.c.bf16 %v4482, %v4481
        %v4671 = vpack.c.bf16 %v4484, %v4483
        %v4672 = vpack.c.bf16 %v4486, %v4485
        %v4673 = vpack.c.bf16 %v4488, %v4487
        %v4674 = vpack.c.bf16 %v4490, %v4489
        %v4675 = vpack.c.bf16 %v4492, %v4491
        %v4676 = vpack.c.bf16 %v4494, %v4493
        %v4677 = vpack.c.bf16 %v4496, %v4495
        %v4678 = vpack.c.bf16 %v4498, %v4497
        %v4679 = vpack.c.bf16 %v4500, %v4499
        %v4680 = vpack.c.bf16 %v4502, %v4501
        %v4681 = vpack.c.bf16 %v4504, %v4503
        %v4682 = vpack.c.bf16 %v4506, %v4505
        %v4683 = vpack.c.bf16 %v4508, %v4507
        %v4684 = vpack.c.bf16 %v4510, %v4509
        %v4685 = vpack.c.bf16 %v4512, %v4511
        %v4686 = vpack.c.bf16 %v4514, %v4513
        %v4687 = vpack.c.bf16 %v4516, %v4515
        %v4688 = vpack.c.bf16 %v4518, %v4517
        %v4689 = vpack.c.bf16 %v4520, %v4519
        %v4690 = vpack.c.bf16 %v4522, %v4521
        %v4691 = vpack.c.bf16 %v4524, %v4523
        %v4692 = vpack.c.bf16 %v4526, %v4525
        %v4693 = vpack.c.bf16 %v4528, %v4527
        %v4694 = vpack.c.bf16 %v4530, %v4529
        %v4695 = vpack.c.bf16 %v4532, %v4531
        %v4696 = vpack.c.bf16 %v4534, %v4533
        %v4697 = vpack.c.bf16 %v4536, %v4535
        %v4698 = vpack.c.bf16 %v4538, %v4537
        %v4699 = vpack.c.bf16 %v4540, %v4539
        %v4700 = vpack.c.bf16 %v4542, %v4541
        %v4701 = vpack.c.bf16 %v4544, %v4543
        %v4702 = vpack.c.bf16 %v4546, %v4545
        %v4703 = vpack.c.bf16 %v4548, %v4547
        %v4704 = vpack.c.bf16 %v4550, %v4549
        %v4705 = vpack.c.bf16 %v4552, %v4551
        %v4706 = vpack.c.bf16 %v4554, %v4553
        %v4707 = vpack.c.bf16 %v4556, %v4555
        %v4708 = vpack.c.bf16 %v4558, %v4557
        %v4709 = vpack.c.bf16 %v4560, %v4559
        %v4710 = vpack.c.bf16 %v4562, %v4561
        %v4711 = vpack.c.bf16 %v4564, %v4563
        %v4712 = vpack.c.bf16 %v4566, %v4565
        %v4713 = vpack.c.bf16 %v4568, %v4567
        %v4714 = vpack.c.bf16 %v4570, %v4569
        %v4715 = vpack.c.bf16 %v4572, %v4571
        %v4716 = vpack.c.bf16 %v4574, %v4573
        %v4717 = vpack.c.bf16 %v4576, %v4575
        %v4718 = vpack.c.bf16 %v4578, %v4577
        %v4719 = vpack.c.bf16 %v4580, %v4579
        %v4720 = vpack.c.bf16 %v4582, %v4581
        %v4721 = vpack.c.bf16 %v4584, %v4583
        %v4722 = vpack.c.bf16 %v4586, %v4585
        %v4723 = vpack.c.bf16 %v4588, %v4587
        %v4724 = vpack.c.bf16 %v4590, %v4589
        %v4725 = vpack.c.bf16 %v4592, %v4591
        %v4726 = vpack.c.bf16 %v4594, %v4593
        %v4727 = vpack.c.bf16 %v4596, %v4595
        %v4728 = vpack.c.bf16 %v4598, %v4597
        %v4729 = vpack.c.bf16 %v4600, %v4599
        %v4730 = vpack.c.bf16 %v4602, %v4601
        %v4731 = vpack.c.bf16 %v4604, %v4603
        %v4732 = vpack.c.bf16 %v4606, %v4605
        %v4733 = vpack.c.bf16 %v4608, %v4607
        %v4734 = vpack.c.bf16 %v4610, %v4609
        %v4735 = vpack.c.bf16 %v4612, %v4611
        %v4736 = vpack.c.bf16 %v4614, %v4613
        %v4737 = vpack.c.bf16 %v4616, %v4615
        %v4738 = vpack.c.bf16 %v4618, %v4617
        %v4739 = vpack.c.bf16 %v4620, %v4619
        %v4740 = vpack.c.bf16 %v4622, %v4621
        %v4741 = vpack.c.bf16 %v4624, %v4623
        %v4742 = vpack.c.bf16 %v4626, %v4625
        %v4743 = vpack.c.bf16 %v4628, %v4627
        %v4744 = vpack.c.bf16 %v4630, %v4629
        %v4745 = vpack.c.bf16 %v4632, %v4631
        %v4746 = vpack.c.bf16 %v4634, %v4633
        %v4747 = vpack.c.bf16 %v4636, %v4635
        %v4748 = vpack.c.bf16 %v4638, %v4637
        %v4749 = vpack.c.bf16 %v4640, %v4639
        %v4750 = vpack.c.bf16 %v4642, %v4641
        %v4751 = vpack.c.bf16 %v4644, %v4643
        %v4752 = vpack.c.bf16 %v4646, %v4645
        %v4753 = vpack.c.bf16 %v4648, %v4647
        %v4754 = vpack.c.bf16 %v4650, %v4649
        %v4755 = vpack.c.bf16 %v4652, %v4651
        %v4756 = vpack.c.bf16 %v4654, %v4653
        %v4757 = vpack.c.bf16 %v4656, %v4655
        %v4758 = vpack.c.bf16 %v4658, %v4657
        %v4759 = vpack.c.bf16 %v4660, %v4659
        %v4760 = vpack.c.bf16 %v4662, %v4661
        %v4761 = vpack.c.bf16 %v4664, %v4663
        %v4762 = vpack.c.bf16 %v4666, %v4665
        %4763 = vmatprep.subr.bf16.mxu0 0
        %4764 = vmatpush1.bf16.msra.mxu0 %v2283
        %4765 = vmatprep.subr.bf16.mxu0 0
        %4766 = vmatpush1.bf16.msra.mxu0 %v2282
        %4767 = vmatprep.subr.bf16.mxu0 0
        %4768 = vmatpush1.bf16.msra.mxu0 %v2281
        %4769 = vmatprep.subr.bf16.mxu0 0
        %4770 = vmatpush1.bf16.msra.mxu0 %v2280
        %4771 = vmatprep.subr.bf16.mxu0 0
        %4772 = vmatpush1.bf16.msra.mxu0 %v2279
        %4773 = vmatprep.subr.bf16.mxu0 0
        %4774 = vmatpush1.bf16.msra.mxu0 %v2278
        %4775 = vmatprep.subr.bf16.mxu0 0
        %4776 = vmatpush1.bf16.msra.mxu0 %v2277
        %4777 = vmatprep.subr.bf16.mxu0 0
        %4778 = vmatpush1.bf16.msra.mxu0 %v2276
        %4779 = vmatprep.subr.bf16.mxu0 0
        %4780 = vmatpush2.bf16.msra.mxu0 0
        %4781 = vmatprep.subr.bf16.mxu0 0
        %4782 = vmatpush2.bf16.msra.mxu0 0
        %4783 = vmatprep.subr.bf16.mxu0 0
        %4784 = vmatpush2.bf16.msra.mxu0 0
        %4785 = vmatprep.subr.bf16.mxu0 0
        %4786 = vmatpush2.bf16.msra.mxu0 0
        %4787 = vmatprep.subr.bf16.mxu0 0
        %4788 = vmatpush2.bf16.msra.mxu0 0
        %4789 = vmatprep.subr.bf16.mxu0 0
        %4790 = vmatpush2.bf16.msra.mxu0 0
        %4791 = vmatprep.subr.bf16.mxu0 0
        %4792 = vmatpush2.bf16.msra.mxu0 0
        %4793 = vmatprep.subr.bf16.mxu0 0
        %4794 = vmatpush2.bf16.msra.mxu0 0
        %4795 = vmatprep.mubr.bf16.mxu0 0
        %4796 = vmatmul.mubr.bf16.gmra.mxu0 %v4667
        %v4797 = vpop.f32.mrf.mxu0
        %v4798 = vadd.f32 0.0, %v4797
        %v4799 = vpop.f32.mrf.mxu0
        %v4800 = vpop.f32.mrf.mxu0
        %v4801 = vadd.f32 0.0, %v4800
        %v4802 = vpop.f32.mrf.mxu0
        %4803 = vmatprep.mubr.bf16.mxu0 0
        %4804 = vmatmul.mubr.bf16.gmra.mxu0 %v4668
        %v4805 = vpop.f32.mrf.mxu0
        %v4806 = vadd.f32 0.0, %v4805
        %v4807 = vpop.f32.mrf.mxu0
        %v4808 = vpop.f32.mrf.mxu0
        %v4809 = vadd.f32 0.0, %v4808
        %v4810 = vpop.f32.mrf.mxu0
        %4811 = vmatprep.mubr.bf16.mxu0 0
        %4812 = vmatmul.mubr.bf16.gmra.mxu0 %v4669
        %v4813 = vpop.f32.mrf.mxu0
        %v4814 = vadd.f32 0.0, %v4813
        %v4815 = vpop.f32.mrf.mxu0
        %v4816 = vpop.f32.mrf.mxu0
        %v4817 = vadd.f32 0.0, %v4816
        %v4818 = vpop.f32.mrf.mxu0
        %4819 = vmatprep.mubr.bf16.mxu0 0
        %4820 = vmatmul.mubr.bf16.gmra.mxu0 %v4670
        %v4821 = vpop.f32.mrf.mxu0
        %v4822 = vadd.f32 0.0, %v4821
        %v4823 = vpop.f32.mrf.mxu0
        %v4824 = vpop.f32.mrf.mxu0
        %v4825 = vadd.f32 0.0, %v4824
        %v4826 = vpop.f32.mrf.mxu0
        %4827 = vmatprep.mubr.bf16.mxu0 0
        %4828 = vmatmul.mubr.bf16.gmra.mxu0 %v4671
        %v4829 = vpop.f32.mrf.mxu0
        %v4830 = vadd.f32 0.0, %v4829
        %v4831 = vpop.f32.mrf.mxu0
        %v4832 = vpop.f32.mrf.mxu0
        %v4833 = vadd.f32 0.0, %v4832
        %v4834 = vpop.f32.mrf.mxu0
        %4835 = vmatprep.mubr.bf16.mxu0 0
        %4836 = vmatmul.mubr.bf16.gmra.mxu0 %v4672
        %v4837 = vpop.f32.mrf.mxu0
        %v4838 = vadd.f32 0.0, %v4837
        %v4839 = vpop.f32.mrf.mxu0
        %v4840 = vpop.f32.mrf.mxu0
        %v4841 = vadd.f32 0.0, %v4840
        %v4842 = vpop.f32.mrf.mxu0
        %4843 = vmatprep.mubr.bf16.mxu0 0
        %4844 = vmatmul.mubr.bf16.gmra.mxu0 %v4673
        %v4845 = vpop.f32.mrf.mxu0
        %v4846 = vadd.f32 0.0, %v4845
        %v4847 = vpop.f32.mrf.mxu0
        %v4848 = vpop.f32.mrf.mxu0
        %v4849 = vadd.f32 0.0, %v4848
        %v4850 = vpop.f32.mrf.mxu0
        %4851 = vmatprep.mubr.bf16.mxu0 0
        %4852 = vmatmul.mubr.bf16.gmra.mxu0 %v4674
        %v4853 = vpop.f32.mrf.mxu0
        %v4854 = vadd.f32 0.0, %v4853
        %v4855 = vpop.f32.mrf.mxu0
        %v4856 = vpop.f32.mrf.mxu0
        %v4857 = vadd.f32 0.0, %v4856
        %v4858 = vpop.f32.mrf.mxu0
        %4859 = vmatprep.mubr.bf16.mxu0 0
        %4860 = vmatmul.mubr.bf16.gmra.mxu0 %v4675
        %v4861 = vpop.f32.mrf.mxu0
        %v4862 = vadd.f32 0.0, %v4861
        %v4863 = vpop.f32.mrf.mxu0
        %v4864 = vpop.f32.mrf.mxu0
        %v4865 = vadd.f32 0.0, %v4864
        %v4866 = vpop.f32.mrf.mxu0
        %4867 = vmatprep.mubr.bf16.mxu0 0
        %4868 = vmatmul.mubr.bf16.gmra.mxu0 %v4676
        %v4869 = vpop.f32.mrf.mxu0
        %v4870 = vadd.f32 0.0, %v4869
        %v4871 = vpop.f32.mrf.mxu0
        %v4872 = vpop.f32.mrf.mxu0
        %v4873 = vadd.f32 0.0, %v4872
        %v4874 = vpop.f32.mrf.mxu0
        %4875 = vmatprep.mubr.bf16.mxu0 0
        %4876 = vmatmul.mubr.bf16.gmra.mxu0 %v4677
        %v4877 = vpop.f32.mrf.mxu0
        %v4878 = vadd.f32 0.0, %v4877
        %v4879 = vpop.f32.mrf.mxu0
        %v4880 = vpop.f32.mrf.mxu0
        %v4881 = vadd.f32 0.0, %v4880
        %v4882 = vpop.f32.mrf.mxu0
        %4883 = vmatprep.mubr.bf16.mxu0 0
        %4884 = vmatmul.mubr.bf16.gmra.mxu0 %v4678
        %v4885 = vpop.f32.mrf.mxu0
        %v4886 = vadd.f32 0.0, %v4885
        %v4887 = vpop.f32.mrf.mxu0
        %v4888 = vpop.f32.mrf.mxu0
        %v4889 = vadd.f32 0.0, %v4888
        %v4890 = vpop.f32.mrf.mxu0
        %4891 = vmatprep.mubr.bf16.mxu0 0
        %4892 = vmatmul.mubr.bf16.gmra.mxu0 %v4679
        %v4893 = vpop.f32.mrf.mxu0
        %v4894 = vadd.f32 0.0, %v4893
        %v4895 = vpop.f32.mrf.mxu0
        %v4896 = vpop.f32.mrf.mxu0
        %v4897 = vadd.f32 0.0, %v4896
        %v4898 = vpop.f32.mrf.mxu0
        %4899 = vmatprep.mubr.bf16.mxu0 0
        %4900 = vmatmul.mubr.bf16.gmra.mxu0 %v4680
        %v4901 = vpop.f32.mrf.mxu0
        %v4902 = vadd.f32 0.0, %v4901
        %v4903 = vpop.f32.mrf.mxu0
        %v4904 = vpop.f32.mrf.mxu0
        %v4905 = vadd.f32 0.0, %v4904
        %v4906 = vpop.f32.mrf.mxu0
        %4907 = vmatprep.mubr.bf16.mxu0 0
        %4908 = vmatmul.mubr.bf16.gmra.mxu0 %v4681
        %v4909 = vpop.f32.mrf.mxu0
        %v4910 = vadd.f32 0.0, %v4909
        %v4911 = vpop.f32.mrf.mxu0
        %v4912 = vpop.f32.mrf.mxu0
        %v4913 = vadd.f32 0.0, %v4912
        %v4914 = vpop.f32.mrf.mxu0
        %4915 = vmatprep.mubr.bf16.mxu0 0
        %4916 = vmatmul.mubr.bf16.gmra.mxu0 %v4682
        %v4917 = vpop.f32.mrf.mxu0
        %v4918 = vadd.f32 0.0, %v4917
        %v4919 = vpop.f32.mrf.mxu0
        %v4920 = vpop.f32.mrf.mxu0
        %v4921 = vadd.f32 0.0, %v4920
        %v4922 = vpop.f32.mrf.mxu0
        %4923 = vmatprep.mubr.bf16.mxu0 0
        %4924 = vmatmul.mubr.bf16.gmra.mxu0 %v4683
        %v4925 = vpop.f32.mrf.mxu0
        %v4926 = vadd.f32 0.0, %v4925
        %v4927 = vpop.f32.mrf.mxu0
        %v4928 = vpop.f32.mrf.mxu0
        %v4929 = vadd.f32 0.0, %v4928
        %v4930 = vpop.f32.mrf.mxu0
        %4931 = vmatprep.mubr.bf16.mxu0 0
        %4932 = vmatmul.mubr.bf16.gmra.mxu0 %v4684
        %v4933 = vpop.f32.mrf.mxu0
        %v4934 = vadd.f32 0.0, %v4933
        %v4935 = vpop.f32.mrf.mxu0
        %v4936 = vpop.f32.mrf.mxu0
        %v4937 = vadd.f32 0.0, %v4936
        %v4938 = vpop.f32.mrf.mxu0
        %4939 = vmatprep.mubr.bf16.mxu0 0
        %4940 = vmatmul.mubr.bf16.gmra.mxu0 %v4685
        %v4941 = vpop.f32.mrf.mxu0
        %v4942 = vadd.f32 0.0, %v4941
        %v4943 = vpop.f32.mrf.mxu0
        %v4944 = vpop.f32.mrf.mxu0
        %v4945 = vadd.f32 0.0, %v4944
        %v4946 = vpop.f32.mrf.mxu0
        %4947 = vmatprep.mubr.bf16.mxu0 0
        %4948 = vmatmul.mubr.bf16.gmra.mxu0 %v4686
        %v4949 = vpop.f32.mrf.mxu0
        %v4950 = vadd.f32 0.0, %v4949
        %v4951 = vpop.f32.mrf.mxu0
        %v4952 = vpop.f32.mrf.mxu0
        %v4953 = vadd.f32 0.0, %v4952
        %v4954 = vpop.f32.mrf.mxu0
        %4955 = vmatprep.mubr.bf16.mxu0 0
        %4956 = vmatmul.mubr.bf16.gmra.mxu0 %v4687
        %v4957 = vpop.f32.mrf.mxu0
        %v4958 = vadd.f32 0.0, %v4957
        %v4959 = vpop.f32.mrf.mxu0
        %v4960 = vpop.f32.mrf.mxu0
        %v4961 = vadd.f32 0.0, %v4960
        %v4962 = vpop.f32.mrf.mxu0
        %4963 = vmatprep.mubr.bf16.mxu0 0
        %4964 = vmatmul.mubr.bf16.gmra.mxu0 %v4688
        %v4965 = vpop.f32.mrf.mxu0
        %v4966 = vadd.f32 0.0, %v4965
        %v4967 = vpop.f32.mrf.mxu0
        %v4968 = vpop.f32.mrf.mxu0
        %v4969 = vadd.f32 0.0, %v4968
        %v4970 = vpop.f32.mrf.mxu0
        %4971 = vmatprep.mubr.bf16.mxu0 0
        %4972 = vmatmul.mubr.bf16.gmra.mxu0 %v4689
        %v4973 = vpop.f32.mrf.mxu0
        %v4974 = vadd.f32 0.0, %v4973
        %v4975 = vpop.f32.mrf.mxu0
        %v4976 = vpop.f32.mrf.mxu0
        %v4977 = vadd.f32 0.0, %v4976
        %v4978 = vpop.f32.mrf.mxu0
        %4979 = vmatprep.mubr.bf16.mxu0 0
        %4980 = vmatmul.mubr.bf16.gmra.mxu0 %v4690
        %v4981 = vpop.f32.mrf.mxu0
        %v4982 = vadd.f32 0.0, %v4981
        %v4983 = vpop.f32.mrf.mxu0
        %v4984 = vpop.f32.mrf.mxu0
        %v4985 = vadd.f32 0.0, %v4984
        %v4986 = vpop.f32.mrf.mxu0
        %4987 = vmatprep.mubr.bf16.mxu0 0
        %4988 = vmatmul.mubr.bf16.gmra.mxu0 %v4691
        %v4989 = vpop.f32.mrf.mxu0
        %v4990 = vadd.f32 0.0, %v4989
        %v4991 = vpop.f32.mrf.mxu0
        %v4992 = vpop.f32.mrf.mxu0
        %v4993 = vadd.f32 0.0, %v4992
        %v4994 = vpop.f32.mrf.mxu0
        %4995 = vmatprep.mubr.bf16.mxu0 0
        %4996 = vmatmul.mubr.bf16.gmra.mxu0 %v4692
        %v4997 = vpop.f32.mrf.mxu0
        %v4998 = vadd.f32 0.0, %v4997
        %v4999 = vpop.f32.mrf.mxu0
        %v5000 = vpop.f32.mrf.mxu0
        %v5001 = vadd.f32 0.0, %v5000
        %v5002 = vpop.f32.mrf.mxu0
        %5003 = vmatprep.mubr.bf16.mxu0 0
        %5004 = vmatmul.mubr.bf16.gmra.mxu0 %v4693
        %v5005 = vpop.f32.mrf.mxu0
        %v5006 = vadd.f32 0.0, %v5005
        %v5007 = vpop.f32.mrf.mxu0
        %v5008 = vpop.f32.mrf.mxu0
        %v5009 = vadd.f32 0.0, %v5008
        %v5010 = vpop.f32.mrf.mxu0
        %5011 = vmatprep.mubr.bf16.mxu0 0
        %5012 = vmatmul.mubr.bf16.gmra.mxu0 %v4694
        %v5013 = vpop.f32.mrf.mxu0
        %v5014 = vadd.f32 0.0, %v5013
        %v5015 = vpop.f32.mrf.mxu0
        %v5016 = vpop.f32.mrf.mxu0
        %v5017 = vadd.f32 0.0, %v5016
        %v5018 = vpop.f32.mrf.mxu0
        %5019 = vmatprep.mubr.bf16.mxu0 0
        %5020 = vmatmul.mubr.bf16.gmra.mxu0 %v4695
        %v5021 = vpop.f32.mrf.mxu0
        %v5022 = vadd.f32 0.0, %v5021
        %v5023 = vpop.f32.mrf.mxu0
        %v5024 = vpop.f32.mrf.mxu0
        %v5025 = vadd.f32 0.0, %v5024
        %v5026 = vpop.f32.mrf.mxu0
        %5027 = vmatprep.mubr.bf16.mxu0 0
        %5028 = vmatmul.mubr.bf16.gmra.mxu0 %v4696
        %v5029 = vpop.f32.mrf.mxu0
        %v5030 = vadd.f32 0.0, %v5029
        %v5031 = vpop.f32.mrf.mxu0
        %v5032 = vpop.f32.mrf.mxu0
        %v5033 = vadd.f32 0.0, %v5032
        %v5034 = vpop.f32.mrf.mxu0
        %5035 = vmatprep.mubr.bf16.mxu0 0
        %5036 = vmatmul.mubr.bf16.gmra.mxu0 %v4697
        %v5037 = vpop.f32.mrf.mxu0
        %v5038 = vadd.f32 0.0, %v5037
        %v5039 = vpop.f32.mrf.mxu0
        %v5040 = vpop.f32.mrf.mxu0
        %v5041 = vadd.f32 0.0, %v5040
        %v5042 = vpop.f32.mrf.mxu0
        %5043 = vmatprep.mubr.bf16.mxu0 0
        %5044 = vmatmul.mubr.bf16.gmra.mxu0 %v4698
        %v5045 = vpop.f32.mrf.mxu0
        %v5046 = vadd.f32 0.0, %v5045
        %v5047 = vpop.f32.mrf.mxu0
        %v5048 = vpop.f32.mrf.mxu0
        %v5049 = vadd.f32 0.0, %v5048
        %v5050 = vpop.f32.mrf.mxu0
        %5051 = vmatprep.mubr.bf16.mxu0 0
        %5052 = vmatmul.mubr.bf16.gmra.mxu0 %v4699
        %v5053 = vpop.f32.mrf.mxu0
        %v5054 = vadd.f32 0.0, %v5053
        %v5055 = vpop.f32.mrf.mxu0
        %v5056 = vpop.f32.mrf.mxu0
        %v5057 = vadd.f32 0.0, %v5056
        %v5058 = vpop.f32.mrf.mxu0
        %5059 = vmatprep.mubr.bf16.mxu0 0
        %5060 = vmatmul.mubr.bf16.gmra.mxu0 %v4700
        %v5061 = vpop.f32.mrf.mxu0
        %v5062 = vadd.f32 0.0, %v5061
        %v5063 = vpop.f32.mrf.mxu0
        %v5064 = vpop.f32.mrf.mxu0
        %v5065 = vadd.f32 0.0, %v5064
        %v5066 = vpop.f32.mrf.mxu0
        %5067 = vmatprep.mubr.bf16.mxu0 0
        %5068 = vmatmul.mubr.bf16.gmra.mxu0 %v4701
        %v5069 = vpop.f32.mrf.mxu0
        %v5070 = vadd.f32 0.0, %v5069
        %v5071 = vpop.f32.mrf.mxu0
        %v5072 = vpop.f32.mrf.mxu0
        %v5073 = vadd.f32 0.0, %v5072
        %v5074 = vpop.f32.mrf.mxu0
        %5075 = vmatprep.mubr.bf16.mxu0 0
        %5076 = vmatmul.mubr.bf16.gmra.mxu0 %v4702
        %v5077 = vpop.f32.mrf.mxu0
        %v5078 = vadd.f32 0.0, %v5077
        %v5079 = vpop.f32.mrf.mxu0
        %v5080 = vpop.f32.mrf.mxu0
        %v5081 = vadd.f32 0.0, %v5080
        %v5082 = vpop.f32.mrf.mxu0
        %5083 = vmatprep.mubr.bf16.mxu0 0
        %5084 = vmatmul.mubr.bf16.gmra.mxu0 %v4703
        %v5085 = vpop.f32.mrf.mxu0
        %v5086 = vadd.f32 0.0, %v5085
        %v5087 = vpop.f32.mrf.mxu0
        %v5088 = vpop.f32.mrf.mxu0
        %v5089 = vadd.f32 0.0, %v5088
        %v5090 = vpop.f32.mrf.mxu0
        %5091 = vmatprep.mubr.bf16.mxu0 0
        %5092 = vmatmul.mubr.bf16.gmra.mxu0 %v4704
        %v5093 = vpop.f32.mrf.mxu0
        %v5094 = vadd.f32 0.0, %v5093
        %v5095 = vpop.f32.mrf.mxu0
        %v5096 = vpop.f32.mrf.mxu0
        %v5097 = vadd.f32 0.0, %v5096
        %v5098 = vpop.f32.mrf.mxu0
        %5099 = vmatprep.mubr.bf16.mxu0 0
        %5100 = vmatmul.mubr.bf16.gmra.mxu0 %v4705
        %v5101 = vpop.f32.mrf.mxu0
        %v5102 = vadd.f32 0.0, %v5101
        %v5103 = vpop.f32.mrf.mxu0
        %v5104 = vpop.f32.mrf.mxu0
        %v5105 = vadd.f32 0.0, %v5104
        %v5106 = vpop.f32.mrf.mxu0
        %5107 = vmatprep.mubr.bf16.mxu0 0
        %5108 = vmatmul.mubr.bf16.gmra.mxu0 %v4706
        %v5109 = vpop.f32.mrf.mxu0
        %v5110 = vadd.f32 0.0, %v5109
        %v5111 = vpop.f32.mrf.mxu0
        %v5112 = vpop.f32.mrf.mxu0
        %v5113 = vadd.f32 0.0, %v5112
        %v5114 = vpop.f32.mrf.mxu0
        %5115 = vmatprep.mubr.bf16.mxu0 0
        %5116 = vmatmul.mubr.bf16.gmra.mxu0 %v4707
        %v5117 = vpop.f32.mrf.mxu0
        %v5118 = vadd.f32 0.0, %v5117
        %v5119 = vpop.f32.mrf.mxu0
        %v5120 = vpop.f32.mrf.mxu0
        %v5121 = vadd.f32 0.0, %v5120
        %v5122 = vpop.f32.mrf.mxu0
        %5123 = vmatprep.mubr.bf16.mxu0 0
        %5124 = vmatmul.mubr.bf16.gmra.mxu0 %v4708
        %v5125 = vpop.f32.mrf.mxu0
        %v5126 = vadd.f32 0.0, %v5125
        %v5127 = vpop.f32.mrf.mxu0
        %v5128 = vpop.f32.mrf.mxu0
        %v5129 = vadd.f32 0.0, %v5128
        %v5130 = vpop.f32.mrf.mxu0
        %5131 = vmatprep.mubr.bf16.mxu0 0
        %5132 = vmatmul.mubr.bf16.gmra.mxu0 %v4709
        %v5133 = vpop.f32.mrf.mxu0
        %v5134 = vadd.f32 0.0, %v5133
        %v5135 = vpop.f32.mrf.mxu0
        %v5136 = vpop.f32.mrf.mxu0
        %v5137 = vadd.f32 0.0, %v5136
        %v5138 = vpop.f32.mrf.mxu0
        %5139 = vmatprep.mubr.bf16.mxu0 0
        %5140 = vmatmul.mubr.bf16.gmra.mxu0 %v4710
        %v5141 = vpop.f32.mrf.mxu0
        %v5142 = vadd.f32 0.0, %v5141
        %v5143 = vpop.f32.mrf.mxu0
        %v5144 = vpop.f32.mrf.mxu0
        %v5145 = vadd.f32 0.0, %v5144
        %v5146 = vpop.f32.mrf.mxu0
        %5147 = vmatprep.mubr.bf16.mxu0 0
        %5148 = vmatmul.mubr.bf16.gmra.mxu0 %v4711
        %v5149 = vpop.f32.mrf.mxu0
        %v5150 = vadd.f32 0.0, %v5149
        %v5151 = vpop.f32.mrf.mxu0
        %v5152 = vpop.f32.mrf.mxu0
        %v5153 = vadd.f32 0.0, %v5152
        %v5154 = vpop.f32.mrf.mxu0
        %5155 = vmatprep.mubr.bf16.mxu0 0
        %5156 = vmatmul.mubr.bf16.gmra.mxu0 %v4712
        %v5157 = vpop.f32.mrf.mxu0
        %v5158 = vadd.f32 0.0, %v5157
        %v5159 = vpop.f32.mrf.mxu0
        %v5160 = vpop.f32.mrf.mxu0
        %v5161 = vadd.f32 0.0, %v5160
        %v5162 = vpop.f32.mrf.mxu0
        %5163 = vmatprep.mubr.bf16.mxu0 0
        %5164 = vmatmul.mubr.bf16.gmra.mxu0 %v4713
        %v5165 = vpop.f32.mrf.mxu0
        %v5166 = vadd.f32 0.0, %v5165
        %v5167 = vpop.f32.mrf.mxu0
        %v5168 = vpop.f32.mrf.mxu0
        %v5169 = vadd.f32 0.0, %v5168
        %v5170 = vpop.f32.mrf.mxu0
        %5171 = vmatprep.mubr.bf16.mxu0 0
        %5172 = vmatmul.mubr.bf16.gmra.mxu0 %v4714
        %v5173 = vpop.f32.mrf.mxu0
        %v5174 = vadd.f32 0.0, %v5173
        %v5175 = vpop.f32.mrf.mxu0
        %v5176 = vpop.f32.mrf.mxu0
        %v5177 = vadd.f32 0.0, %v5176
        %v5178 = vpop.f32.mrf.mxu0
        %5179 = vmatprep.mubr.bf16.mxu0 0
        %5180 = vmatmul.mubr.bf16.gmra.mxu0 %v4715
        %v5181 = vpop.f32.mrf.mxu0
        %v5182 = vadd.f32 0.0, %v5181
        %v5183 = vpop.f32.mrf.mxu0
        %v5184 = vpop.f32.mrf.mxu0
        %v5185 = vadd.f32 0.0, %v5184
        %v5186 = vpop.f32.mrf.mxu0
        %5187 = vmatprep.mubr.bf16.mxu0 0
        %5188 = vmatmul.mubr.bf16.gmra.mxu0 %v4716
        %v5189 = vpop.f32.mrf.mxu0
        %v5190 = vadd.f32 0.0, %v5189
        %v5191 = vpop.f32.mrf.mxu0
        %v5192 = vpop.f32.mrf.mxu0
        %v5193 = vadd.f32 0.0, %v5192
        %v5194 = vpop.f32.mrf.mxu0
        %5195 = vmatprep.mubr.bf16.mxu0 0
        %5196 = vmatmul.mubr.bf16.gmra.mxu0 %v4717
        %v5197 = vpop.f32.mrf.mxu0
        %v5198 = vadd.f32 0.0, %v5197
        %v5199 = vpop.f32.mrf.mxu0
        %v5200 = vpop.f32.mrf.mxu0
        %v5201 = vadd.f32 0.0, %v5200
        %v5202 = vpop.f32.mrf.mxu0
        %5203 = vmatprep.mubr.bf16.mxu0 0
        %5204 = vmatmul.mubr.bf16.gmra.mxu0 %v4718
        %v5205 = vpop.f32.mrf.mxu0
        %v5206 = vadd.f32 0.0, %v5205
        %v5207 = vpop.f32.mrf.mxu0
        %v5208 = vpop.f32.mrf.mxu0
        %v5209 = vadd.f32 0.0, %v5208
        %v5210 = vpop.f32.mrf.mxu0
        %5211 = vmatprep.mubr.bf16.mxu0 0
        %5212 = vmatmul.mubr.bf16.gmra.mxu0 %v4719
        %v5213 = vpop.f32.mrf.mxu0
        %v5214 = vadd.f32 0.0, %v5213
        %v5215 = vpop.f32.mrf.mxu0
        %v5216 = vpop.f32.mrf.mxu0
        %v5217 = vadd.f32 0.0, %v5216
        %v5218 = vpop.f32.mrf.mxu0
        %5219 = vmatprep.mubr.bf16.mxu0 0
        %5220 = vmatmul.mubr.bf16.gmra.mxu0 %v4720
        %v5221 = vpop.f32.mrf.mxu0
        %v5222 = vadd.f32 0.0, %v5221
        %v5223 = vpop.f32.mrf.mxu0
        %v5224 = vpop.f32.mrf.mxu0
        %v5225 = vadd.f32 0.0, %v5224
        %v5226 = vpop.f32.mrf.mxu0
        %5227 = vmatprep.mubr.bf16.mxu0 0
        %5228 = vmatmul.mubr.bf16.gmra.mxu0 %v4721
        %v5229 = vpop.f32.mrf.mxu0
        %v5230 = vadd.f32 0.0, %v5229
        %v5231 = vpop.f32.mrf.mxu0
        %v5232 = vpop.f32.mrf.mxu0
        %v5233 = vadd.f32 0.0, %v5232
        %v5234 = vpop.f32.mrf.mxu0
        %5235 = vmatprep.mubr.bf16.mxu0 0
        %5236 = vmatmul.mubr.bf16.gmra.mxu0 %v4722
        %v5237 = vpop.f32.mrf.mxu0
        %v5238 = vadd.f32 0.0, %v5237
        %v5239 = vpop.f32.mrf.mxu0
        %v5240 = vpop.f32.mrf.mxu0
        %v5241 = vadd.f32 0.0, %v5240
        %v5242 = vpop.f32.mrf.mxu0
        %5243 = vmatprep.mubr.bf16.mxu0 0
        %5244 = vmatmul.mubr.bf16.gmra.mxu0 %v4723
        %v5245 = vpop.f32.mrf.mxu0
        %v5246 = vadd.f32 0.0, %v5245
        %v5247 = vpop.f32.mrf.mxu0
        %v5248 = vpop.f32.mrf.mxu0
        %v5249 = vadd.f32 0.0, %v5248
        %v5250 = vpop.f32.mrf.mxu0
        %5251 = vmatprep.mubr.bf16.mxu0 0
        %5252 = vmatmul.mubr.bf16.gmra.mxu0 %v4724
        %v5253 = vpop.f32.mrf.mxu0
        %v5254 = vadd.f32 0.0, %v5253
        %v5255 = vpop.f32.mrf.mxu0
        %v5256 = vpop.f32.mrf.mxu0
        %v5257 = vadd.f32 0.0, %v5256
        %v5258 = vpop.f32.mrf.mxu0
        %5259 = vmatprep.mubr.bf16.mxu0 0
        %5260 = vmatmul.mubr.bf16.gmra.mxu0 %v4725
        %v5261 = vpop.f32.mrf.mxu0
        %v5262 = vadd.f32 0.0, %v5261
        %v5263 = vpop.f32.mrf.mxu0
        %v5264 = vpop.f32.mrf.mxu0
        %v5265 = vadd.f32 0.0, %v5264
        %v5266 = vpop.f32.mrf.mxu0
        %5267 = vmatprep.mubr.bf16.mxu0 0
        %5268 = vmatmul.mubr.bf16.gmra.mxu0 %v4726
        %v5269 = vpop.f32.mrf.mxu0
        %v5270 = vadd.f32 0.0, %v5269
        %v5271 = vpop.f32.mrf.mxu0
        %v5272 = vpop.f32.mrf.mxu0
        %v5273 = vadd.f32 0.0, %v5272
        %v5274 = vpop.f32.mrf.mxu0
        %5275 = vmatprep.mubr.bf16.mxu0 0
        %5276 = vmatmul.mubr.bf16.gmra.mxu0 %v4727
        %v5277 = vpop.f32.mrf.mxu0
        %v5278 = vadd.f32 0.0, %v5277
        %v5279 = vpop.f32.mrf.mxu0
        %v5280 = vpop.f32.mrf.mxu0
        %v5281 = vadd.f32 0.0, %v5280
        %v5282 = vpop.f32.mrf.mxu0
        %5283 = vmatprep.mubr.bf16.mxu0 0
        %5284 = vmatmul.mubr.bf16.gmra.mxu0 %v4728
        %v5285 = vpop.f32.mrf.mxu0
        %v5286 = vadd.f32 0.0, %v5285
        %v5287 = vpop.f32.mrf.mxu0
        %v5288 = vpop.f32.mrf.mxu0
        %v5289 = vadd.f32 0.0, %v5288
        %v5290 = vpop.f32.mrf.mxu0
        %5291 = vmatprep.mubr.bf16.mxu0 0
        %5292 = vmatmul.mubr.bf16.gmra.mxu0 %v4729
        %v5293 = vpop.f32.mrf.mxu0
        %v5294 = vadd.f32 0.0, %v5293
        %v5295 = vpop.f32.mrf.mxu0
        %v5296 = vpop.f32.mrf.mxu0
        %v5297 = vadd.f32 0.0, %v5296
        %v5298 = vpop.f32.mrf.mxu0
        %5299 = vmatprep.mubr.bf16.mxu0 0
        %5300 = vmatmul.mubr.bf16.gmra.mxu0 %v4730
        %v5301 = vpop.f32.mrf.mxu0
        %v5302 = vadd.f32 0.0, %v5301
        %v5303 = vpop.f32.mrf.mxu0
        %v5304 = vpop.f32.mrf.mxu0
        %v5305 = vadd.f32 0.0, %v5304
        %v5306 = vpop.f32.mrf.mxu0
        %5307 = vmatprep.mubr.bf16.mxu0 0
        %5308 = vmatmul.mubr.bf16.gmra.mxu0 %v4731
        %v5309 = vpop.f32.mrf.mxu0
        %v5310 = vadd.f32 0.0, %v5309
        %v5311 = vpop.f32.mrf.mxu0
        %v5312 = vpop.f32.mrf.mxu0
        %v5313 = vadd.f32 0.0, %v5312
        %v5314 = vpop.f32.mrf.mxu0
        %5315 = vmatprep.mubr.bf16.mxu0 0
        %5316 = vmatmul.mubr.bf16.gmra.mxu0 %v4732
        %v5317 = vpop.f32.mrf.mxu0
        %v5318 = vadd.f32 0.0, %v5317
        %v5319 = vpop.f32.mrf.mxu0
        %v5320 = vpop.f32.mrf.mxu0
        %v5321 = vadd.f32 0.0, %v5320
        %v5322 = vpop.f32.mrf.mxu0
        %5323 = vmatprep.mubr.bf16.mxu0 0
        %5324 = vmatmul.mubr.bf16.gmra.mxu0 %v4733
        %v5325 = vpop.f32.mrf.mxu0
        %v5326 = vadd.f32 0.0, %v5325
        %v5327 = vpop.f32.mrf.mxu0
        %v5328 = vpop.f32.mrf.mxu0
        %v5329 = vadd.f32 0.0, %v5328
        %v5330 = vpop.f32.mrf.mxu0
        %5331 = vmatprep.mubr.bf16.mxu0 0
        %5332 = vmatmul.mubr.bf16.gmra.mxu0 %v4734
        %v5333 = vpop.f32.mrf.mxu0
        %v5334 = vadd.f32 0.0, %v5333
        %v5335 = vpop.f32.mrf.mxu0
        %v5336 = vpop.f32.mrf.mxu0
        %v5337 = vadd.f32 0.0, %v5336
        %v5338 = vpop.f32.mrf.mxu0
        %5339 = vmatprep.mubr.bf16.mxu0 0
        %5340 = vmatmul.mubr.bf16.gmra.mxu0 %v4735
        %v5341 = vpop.f32.mrf.mxu0
        %v5342 = vadd.f32 0.0, %v5341
        %v5343 = vpop.f32.mrf.mxu0
        %v5344 = vpop.f32.mrf.mxu0
        %v5345 = vadd.f32 0.0, %v5344
        %v5346 = vpop.f32.mrf.mxu0
        %5347 = vmatprep.mubr.bf16.mxu0 0
        %5348 = vmatmul.mubr.bf16.gmra.mxu0 %v4736
        %v5349 = vpop.f32.mrf.mxu0
        %v5350 = vadd.f32 0.0, %v5349
        %v5351 = vpop.f32.mrf.mxu0
        %v5352 = vpop.f32.mrf.mxu0
        %v5353 = vadd.f32 0.0, %v5352
        %v5354 = vpop.f32.mrf.mxu0
        %5355 = vmatprep.mubr.bf16.mxu0 0
        %5356 = vmatmul.mubr.bf16.gmra.mxu0 %v4737
        %v5357 = vpop.f32.mrf.mxu0
        %v5358 = vadd.f32 0.0, %v5357
        %v5359 = vpop.f32.mrf.mxu0
        %v5360 = vpop.f32.mrf.mxu0
        %v5361 = vadd.f32 0.0, %v5360
        %v5362 = vpop.f32.mrf.mxu0
        %5363 = vmatprep.mubr.bf16.mxu0 0
        %5364 = vmatmul.mubr.bf16.gmra.mxu0 %v4738
        %v5365 = vpop.f32.mrf.mxu0
        %v5366 = vadd.f32 0.0, %v5365
        %v5367 = vpop.f32.mrf.mxu0
        %v5368 = vpop.f32.mrf.mxu0
        %v5369 = vadd.f32 0.0, %v5368
        %v5370 = vpop.f32.mrf.mxu0
        %5371 = vmatprep.mubr.bf16.mxu0 0
        %5372 = vmatmul.mubr.bf16.gmra.mxu0 %v4739
        %v5373 = vpop.f32.mrf.mxu0
        %v5374 = vadd.f32 0.0, %v5373
        %v5375 = vpop.f32.mrf.mxu0
        %v5376 = vpop.f32.mrf.mxu0
        %v5377 = vadd.f32 0.0, %v5376
        %v5378 = vpop.f32.mrf.mxu0
        %5379 = vmatprep.mubr.bf16.mxu0 0
        %5380 = vmatmul.mubr.bf16.gmra.mxu0 %v4740
        %v5381 = vpop.f32.mrf.mxu0
        %v5382 = vadd.f32 0.0, %v5381
        %v5383 = vpop.f32.mrf.mxu0
        %v5384 = vpop.f32.mrf.mxu0
        %v5385 = vadd.f32 0.0, %v5384
        %v5386 = vpop.f32.mrf.mxu0
        %5387 = vmatprep.mubr.bf16.mxu0 0
        %5388 = vmatmul.mubr.bf16.gmra.mxu0 %v4741
        %v5389 = vpop.f32.mrf.mxu0
        %v5390 = vadd.f32 0.0, %v5389
        %v5391 = vpop.f32.mrf.mxu0
        %v5392 = vpop.f32.mrf.mxu0
        %v5393 = vadd.f32 0.0, %v5392
        %v5394 = vpop.f32.mrf.mxu0
        %5395 = vmatprep.mubr.bf16.mxu0 0
        %5396 = vmatmul.mubr.bf16.gmra.mxu0 %v4742
        %v5397 = vpop.f32.mrf.mxu0
        %v5398 = vadd.f32 0.0, %v5397
        %v5399 = vpop.f32.mrf.mxu0
        %v5400 = vpop.f32.mrf.mxu0
        %v5401 = vadd.f32 0.0, %v5400
        %v5402 = vpop.f32.mrf.mxu0
        %5403 = vmatprep.mubr.bf16.mxu0 0
        %5404 = vmatmul.mubr.bf16.gmra.mxu0 %v4743
        %v5405 = vpop.f32.mrf.mxu0
        %v5406 = vadd.f32 0.0, %v5405
        %v5407 = vpop.f32.mrf.mxu0
        %v5408 = vpop.f32.mrf.mxu0
        %v5409 = vadd.f32 0.0, %v5408
        %v5410 = vpop.f32.mrf.mxu0
        %5411 = vmatprep.mubr.bf16.mxu0 0
        %5412 = vmatmul.mubr.bf16.gmra.mxu0 %v4744
        %v5413 = vpop.f32.mrf.mxu0
        %v5414 = vadd.f32 0.0, %v5413
        %v5415 = vpop.f32.mrf.mxu0
        %v5416 = vpop.f32.mrf.mxu0
        %v5417 = vadd.f32 0.0, %v5416
        %v5418 = vpop.f32.mrf.mxu0
        %5419 = vmatprep.mubr.bf16.mxu0 0
        %5420 = vmatmul.mubr.bf16.gmra.mxu0 %v4745
        %v5421 = vpop.f32.mrf.mxu0
        %v5422 = vadd.f32 0.0, %v5421
        %v5423 = vpop.f32.mrf.mxu0
        %v5424 = vpop.f32.mrf.mxu0
        %v5425 = vadd.f32 0.0, %v5424
        %v5426 = vpop.f32.mrf.mxu0
        %5427 = vmatprep.mubr.bf16.mxu0 0
        %5428 = vmatmul.mubr.bf16.gmra.mxu0 %v4746
        %v5429 = vpop.f32.mrf.mxu0
        %v5430 = vadd.f32 0.0, %v5429
        %v5431 = vpop.f32.mrf.mxu0
        %v5432 = vpop.f32.mrf.mxu0
        %v5433 = vadd.f32 0.0, %v5432
        %v5434 = vpop.f32.mrf.mxu0
        %5435 = vmatprep.mubr.bf16.mxu0 0
        %5436 = vmatmul.mubr.bf16.gmra.mxu0 %v4747
        %v5437 = vpop.f32.mrf.mxu0
        %v5438 = vadd.f32 0.0, %v5437
        %v5439 = vpop.f32.mrf.mxu0
        %v5440 = vpop.f32.mrf.mxu0
        %v5441 = vadd.f32 0.0, %v5440
        %v5442 = vpop.f32.mrf.mxu0
        %5443 = vmatprep.mubr.bf16.mxu0 0
        %5444 = vmatmul.mubr.bf16.gmra.mxu0 %v4748
        %v5445 = vpop.f32.mrf.mxu0
        %v5446 = vadd.f32 0.0, %v5445
        %v5447 = vpop.f32.mrf.mxu0
        %v5448 = vpop.f32.mrf.mxu0
        %v5449 = vadd.f32 0.0, %v5448
        %v5450 = vpop.f32.mrf.mxu0
        %5451 = vmatprep.mubr.bf16.mxu0 0
        %5452 = vmatmul.mubr.bf16.gmra.mxu0 %v4749
        %v5453 = vpop.f32.mrf.mxu0
        %v5454 = vadd.f32 0.0, %v5453
        %v5455 = vpop.f32.mrf.mxu0
        %v5456 = vpop.f32.mrf.mxu0
        %v5457 = vadd.f32 0.0, %v5456
        %v5458 = vpop.f32.mrf.mxu0
        %5459 = vmatprep.mubr.bf16.mxu0 0
        %5460 = vmatmul.mubr.bf16.gmra.mxu0 %v4750
        %v5461 = vpop.f32.mrf.mxu0
        %v5462 = vadd.f32 0.0, %v5461
        %v5463 = vpop.f32.mrf.mxu0
        %v5464 = vpop.f32.mrf.mxu0
        %v5465 = vadd.f32 0.0, %v5464
        %v5466 = vpop.f32.mrf.mxu0
        %5467 = vmatprep.mubr.bf16.mxu0 0
        %5468 = vmatmul.mubr.bf16.gmra.mxu0 %v4751
        %v5469 = vpop.f32.mrf.mxu0
        %v5470 = vadd.f32 0.0, %v5469
        %v5471 = vpop.f32.mrf.mxu0
        %v5472 = vpop.f32.mrf.mxu0
        %v5473 = vadd.f32 0.0, %v5472
        %v5474 = vpop.f32.mrf.mxu0
        %5475 = vmatprep.mubr.bf16.mxu0 0
        %5476 = vmatmul.mubr.bf16.gmra.mxu0 %v4752
        %v5477 = vpop.f32.mrf.mxu0
        %v5478 = vadd.f32 0.0, %v5477
        %v5479 = vpop.f32.mrf.mxu0
        %v5480 = vpop.f32.mrf.mxu0
        %v5481 = vadd.f32 0.0, %v5480
        %v5482 = vpop.f32.mrf.mxu0
        %5483 = vmatprep.mubr.bf16.mxu0 0
        %5484 = vmatmul.mubr.bf16.gmra.mxu0 %v4753
        %v5485 = vpop.f32.mrf.mxu0
        %v5486 = vadd.f32 0.0, %v5485
        %v5487 = vpop.f32.mrf.mxu0
        %v5488 = vpop.f32.mrf.mxu0
        %v5489 = vadd.f32 0.0, %v5488
        %v5490 = vpop.f32.mrf.mxu0
        %5491 = vmatprep.mubr.bf16.mxu0 0
        %5492 = vmatmul.mubr.bf16.gmra.mxu0 %v4754
        %v5493 = vpop.f32.mrf.mxu0
        %v5494 = vadd.f32 0.0, %v5493
        %v5495 = vpop.f32.mrf.mxu0
        %v5496 = vpop.f32.mrf.mxu0
        %v5497 = vadd.f32 0.0, %v5496
        %v5498 = vpop.f32.mrf.mxu0
        %5499 = vmatprep.mubr.bf16.mxu0 0
        %5500 = vmatmul.mubr.bf16.gmra.mxu0 %v4755
        %v5501 = vpop.f32.mrf.mxu0
        %v5502 = vadd.f32 0.0, %v5501
        %v5503 = vpop.f32.mrf.mxu0
        %v5504 = vpop.f32.mrf.mxu0
        %v5505 = vadd.f32 0.0, %v5504
        %v5506 = vpop.f32.mrf.mxu0
        %5507 = vmatprep.mubr.bf16.mxu0 0
        %5508 = vmatmul.mubr.bf16.gmra.mxu0 %v4756
        %v5509 = vpop.f32.mrf.mxu0
        %v5510 = vadd.f32 0.0, %v5509
        %v5511 = vpop.f32.mrf.mxu0
        %v5512 = vpop.f32.mrf.mxu0
        %v5513 = vadd.f32 0.0, %v5512
        %v5514 = vpop.f32.mrf.mxu0
        %5515 = vmatprep.mubr.bf16.mxu0 0
        %5516 = vmatmul.mubr.bf16.gmra.mxu0 %v4757
        %v5517 = vpop.f32.mrf.mxu0
        %v5518 = vadd.f32 0.0, %v5517
        %v5519 = vpop.f32.mrf.mxu0
        %v5520 = vpop.f32.mrf.mxu0
        %v5521 = vadd.f32 0.0, %v5520
        %v5522 = vpop.f32.mrf.mxu0
        %5523 = vmatprep.mubr.bf16.mxu0 0
        %5524 = vmatmul.mubr.bf16.gmra.mxu0 %v4758
        %v5525 = vpop.f32.mrf.mxu0
        %v5526 = vadd.f32 0.0, %v5525
        %v5527 = vpop.f32.mrf.mxu0
        %v5528 = vpop.f32.mrf.mxu0
        %v5529 = vadd.f32 0.0, %v5528
        %v5530 = vpop.f32.mrf.mxu0
        %5531 = vmatprep.mubr.bf16.mxu0 0
        %5532 = vmatmul.mubr.bf16.gmra.mxu0 %v4759
        %v5533 = vpop.f32.mrf.mxu0
        %v5534 = vadd.f32 0.0, %v5533
        %v5535 = vpop.f32.mrf.mxu0
        %v5536 = vpop.f32.mrf.mxu0
        %v5537 = vadd.f32 0.0, %v5536
        %v5538 = vpop.f32.mrf.mxu0
        %5539 = vmatprep.mubr.bf16.mxu0 0
        %5540 = vmatmul.mubr.bf16.gmra.mxu0 %v4760
        %v5541 = vpop.f32.mrf.mxu0
        %v5542 = vadd.f32 0.0, %v5541
        %v5543 = vpop.f32.mrf.mxu0
        %v5544 = vpop.f32.mrf.mxu0
        %v5545 = vadd.f32 0.0, %v5544
        %v5546 = vpop.f32.mrf.mxu0
        %5547 = vmatprep.mubr.bf16.mxu0 0
        %5548 = vmatmul.mubr.bf16.gmra.mxu0 %v4761
        %v5549 = vpop.f32.mrf.mxu0
        %v5550 = vadd.f32 0.0, %v5549
        %v5551 = vpop.f32.mrf.mxu0
        %v5552 = vpop.f32.mrf.mxu0
        %v5553 = vadd.f32 0.0, %v5552
        %v5554 = vpop.f32.mrf.mxu0
        %5555 = vmatprep.mubr.bf16.mxu0 0
        %5556 = vmatmul.mubr.bf16.gmra.mxu0 %v4762
        %v5557 = vpop.f32.mrf.mxu0
        %v5558 = vadd.f32 0.0, %v5557
        %v5559 = vpop.f32.mrf.mxu0
        %v5560 = vpop.f32.mrf.mxu0
        %v5561 = vadd.f32 0.0, %v5560
        %v5562 = vpop.f32.mrf.mxu0
        %5563 = vdwg.mxu0
        %v5564 = vpack.c.bf16 %v4801, %v4798
        %v5565 = vpack.c.bf16 %v4809, %v4806
        %v5566 = vpack.c.bf16 %v4817, %v4814
        %v5567 = vpack.c.bf16 %v4825, %v4822
        %v5568 = vpack.c.bf16 %v4833, %v4830
        %v5569 = vpack.c.bf16 %v4841, %v4838
        %v5570 = vpack.c.bf16 %v4849, %v4846
        %v5571 = vpack.c.bf16 %v4857, %v4854
        %v5572 = vpack.c.bf16 %v4865, %v4862
        %v5573 = vpack.c.bf16 %v4873, %v4870
        %v5574 = vpack.c.bf16 %v4881, %v4878
        %v5575 = vpack.c.bf16 %v4889, %v4886
        %v5576 = vpack.c.bf16 %v4897, %v4894
        %v5577 = vpack.c.bf16 %v4905, %v4902
        %v5578 = vpack.c.bf16 %v4913, %v4910
        %v5579 = vpack.c.bf16 %v4921, %v4918
        %v5580 = vpack.c.bf16 %v4929, %v4926
        %v5581 = vpack.c.bf16 %v4937, %v4934
        %v5582 = vpack.c.bf16 %v4945, %v4942
        %v5583 = vpack.c.bf16 %v4953, %v4950
        %v5584 = vpack.c.bf16 %v4961, %v4958
        %v5585 = vpack.c.bf16 %v4969, %v4966
        %v5586 = vpack.c.bf16 %v4977, %v4974
        %v5587 = vpack.c.bf16 %v4985, %v4982
        %v5588 = vpack.c.bf16 %v4993, %v4990
        %v5589 = vpack.c.bf16 %v5001, %v4998
        %v5590 = vpack.c.bf16 %v5009, %v5006
        %v5591 = vpack.c.bf16 %v5017, %v5014
        %v5592 = vpack.c.bf16 %v5025, %v5022
        %v5593 = vpack.c.bf16 %v5033, %v5030
        %v5594 = vpack.c.bf16 %v5041, %v5038
        %v5595 = vpack.c.bf16 %v5049, %v5046
        %v5596 = vpack.c.bf16 %v5057, %v5054
        %v5597 = vpack.c.bf16 %v5065, %v5062
        %v5598 = vpack.c.bf16 %v5073, %v5070
        %v5599 = vpack.c.bf16 %v5081, %v5078
        %v5600 = vpack.c.bf16 %v5089, %v5086
        %v5601 = vpack.c.bf16 %v5097, %v5094
        %v5602 = vpack.c.bf16 %v5105, %v5102
        %v5603 = vpack.c.bf16 %v5113, %v5110
        %v5604 = vpack.c.bf16 %v5121, %v5118
        %v5605 = vpack.c.bf16 %v5129, %v5126
        %v5606 = vpack.c.bf16 %v5137, %v5134
        %v5607 = vpack.c.bf16 %v5145, %v5142
        %v5608 = vpack.c.bf16 %v5153, %v5150
        %v5609 = vpack.c.bf16 %v5161, %v5158
        %v5610 = vpack.c.bf16 %v5169, %v5166
        %v5611 = vpack.c.bf16 %v5177, %v5174
        %v5612 = vpack.c.bf16 %v5185, %v5182
        %v5613 = vpack.c.bf16 %v5193, %v5190
        %v5614 = vpack.c.bf16 %v5201, %v5198
        %v5615 = vpack.c.bf16 %v5209, %v5206
        %v5616 = vpack.c.bf16 %v5217, %v5214
        %v5617 = vpack.c.bf16 %v5225, %v5222
        %v5618 = vpack.c.bf16 %v5233, %v5230
        %v5619 = vpack.c.bf16 %v5241, %v5238
        %v5620 = vpack.c.bf16 %v5249, %v5246
        %v5621 = vpack.c.bf16 %v5257, %v5254
        %v5622 = vpack.c.bf16 %v5265, %v5262
        %v5623 = vpack.c.bf16 %v5273, %v5270
        %v5624 = vpack.c.bf16 %v5281, %v5278
        %v5625 = vpack.c.bf16 %v5289, %v5286
        %v5626 = vpack.c.bf16 %v5297, %v5294
        %v5627 = vpack.c.bf16 %v5305, %v5302
        %v5628 = vpack.c.bf16 %v5313, %v5310
        %v5629 = vpack.c.bf16 %v5321, %v5318
        %v5630 = vpack.c.bf16 %v5329, %v5326
        %v5631 = vpack.c.bf16 %v5337, %v5334
        %v5632 = vpack.c.bf16 %v5345, %v5342
        %v5633 = vpack.c.bf16 %v5353, %v5350
        %v5634 = vpack.c.bf16 %v5361, %v5358
        %v5635 = vpack.c.bf16 %v5369, %v5366
        %v5636 = vpack.c.bf16 %v5377, %v5374
        %v5637 = vpack.c.bf16 %v5385, %v5382
        %v5638 = vpack.c.bf16 %v5393, %v5390
        %v5639 = vpack.c.bf16 %v5401, %v5398
        %v5640 = vpack.c.bf16 %v5409, %v5406
        %v5641 = vpack.c.bf16 %v5417, %v5414
        %v5642 = vpack.c.bf16 %v5425, %v5422
        %v5643 = vpack.c.bf16 %v5433, %v5430
        %v5644 = vpack.c.bf16 %v5441, %v5438
        %v5645 = vpack.c.bf16 %v5449, %v5446
        %v5646 = vpack.c.bf16 %v5457, %v5454
        %v5647 = vpack.c.bf16 %v5465, %v5462
        %v5648 = vpack.c.bf16 %v5473, %v5470
        %v5649 = vpack.c.bf16 %v5481, %v5478
        %v5650 = vpack.c.bf16 %v5489, %v5486
        %v5651 = vpack.c.bf16 %v5497, %v5494
        %v5652 = vpack.c.bf16 %v5505, %v5502
        %v5653 = vpack.c.bf16 %v5513, %v5510
        %v5654 = vpack.c.bf16 %v5521, %v5518
        %v5655 = vpack.c.bf16 %v5529, %v5526
        %v5656 = vpack.c.bf16 %v5537, %v5534
        %v5657 = vpack.c.bf16 %v5545, %v5542
        %v5658 = vpack.c.bf16 %v5553, %v5550
        %v5659 = vpack.c.bf16 %v5561, %v5558
        %5756 = vrot.lane.b32.xlu0 %v3357, 32
        %v5757 = vpop.permute.xlu0 %5756
        %5758 = vrot.lane.b32.xlu0 %v3358, 32
        %v5759 = vpop.permute.xlu0 %5758
        %5760 = vrot.lane.b32.xlu0 %v3359, 32
        %v5761 = vpop.permute.xlu0 %5760
        %5762 = vrot.lane.b32.xlu0 %v3360, 32
        %v5763 = vpop.permute.xlu0 %5762
        %5764 = vrot.lane.b32.xlu0 %v3361, 32
        %v5765 = vpop.permute.xlu0 %5764
        %5766 = vrot.lane.b32.xlu0 %v3362, 32
        %v5767 = vpop.permute.xlu0 %5766
        %5768 = vrot.lane.b32.xlu0 %v3363, 32
        %v5769 = vpop.permute.xlu0 %5768
        %5770 = vrot.lane.b32.xlu0 %v3364, 32
        %v5771 = vpop.permute.xlu0 %5770
        %5772 = vrot.lane.b32.xlu0 %v3365, 32
        %v5773 = vpop.permute.xlu0 %5772
        %5774 = vrot.lane.b32.xlu0 %v3366, 32
        %v5775 = vpop.permute.xlu0 %5774
        %5776 = vrot.lane.b32.xlu0 %v3367, 32
        %v5777 = vpop.permute.xlu0 %5776
        %5778 = vrot.lane.b32.xlu0 %v3368, 32
        %v5779 = vpop.permute.xlu0 %5778
        %5780 = vrot.lane.b32.xlu0 %v3369, 32
        %v5781 = vpop.permute.xlu0 %5780
        %5782 = vrot.lane.b32.xlu0 %v3370, 32
        %v5783 = vpop.permute.xlu0 %5782
        %5784 = vrot.lane.b32.xlu0 %v3371, 32
        %v5785 = vpop.permute.xlu0 %5784
        %5786 = vrot.lane.b32.xlu0 %v3372, 32
        %v5787 = vpop.permute.xlu0 %5786
        %5788 = vrot.lane.b32.xlu0 %v3373, 32
        %v5789 = vpop.permute.xlu0 %5788
        %5790 = vrot.lane.b32.xlu0 %v3374, 32
        %v5791 = vpop.permute.xlu0 %5790
        %5792 = vrot.lane.b32.xlu0 %v3375, 32
        %v5793 = vpop.permute.xlu0 %5792
        %5794 = vrot.lane.b32.xlu0 %v3376, 32
        %v5795 = vpop.permute.xlu0 %5794
        %5796 = vrot.lane.b32.xlu0 %v3377, 32
        %v5797 = vpop.permute.xlu0 %5796
        %5798 = vrot.lane.b32.xlu0 %v3378, 32
        %v5799 = vpop.permute.xlu0 %5798
        %5800 = vrot.lane.b32.xlu0 %v3379, 32
        %v5801 = vpop.permute.xlu0 %5800
        %5802 = vrot.lane.b32.xlu0 %v3380, 32
        %v5803 = vpop.permute.xlu0 %5802
        %5804 = vrot.lane.b32.xlu0 %v3381, 32
        %v5805 = vpop.permute.xlu0 %5804
        %5806 = vrot.lane.b32.xlu0 %v3382, 32
        %v5807 = vpop.permute.xlu0 %5806
        %5808 = vrot.lane.b32.xlu0 %v3383, 32
        %v5809 = vpop.permute.xlu0 %5808
        %5810 = vrot.lane.b32.xlu0 %v3384, 32
        %v5811 = vpop.permute.xlu0 %5810
        %5812 = vrot.lane.b32.xlu0 %v3385, 32
        %v5813 = vpop.permute.xlu0 %5812
        %5814 = vrot.lane.b32.xlu0 %v3386, 32
        %v5815 = vpop.permute.xlu0 %5814
        %5816 = vrot.lane.b32.xlu0 %v3387, 32
        %v5817 = vpop.permute.xlu0 %5816
        %5818 = vrot.lane.b32.xlu0 %v3388, 32
        %v5819 = vpop.permute.xlu0 %5818
        %5820 = vrot.lane.b32.xlu0 %v3389, 32
        %v5821 = vpop.permute.xlu0 %5820
        %5822 = vrot.lane.b32.xlu0 %v3390, 32
        %v5823 = vpop.permute.xlu0 %5822
        %5824 = vrot.lane.b32.xlu0 %v3391, 32
        %v5825 = vpop.permute.xlu0 %5824
        %5826 = vrot.lane.b32.xlu0 %v3392, 32
        %v5827 = vpop.permute.xlu0 %5826
        %5828 = vrot.lane.b32.xlu0 %v3393, 32
        %v5829 = vpop.permute.xlu0 %5828
        %5830 = vrot.lane.b32.xlu0 %v3394, 32
        %v5831 = vpop.permute.xlu0 %5830
        %5832 = vrot.lane.b32.xlu0 %v3395, 32
        %v5833 = vpop.permute.xlu0 %5832
        %5834 = vrot.lane.b32.xlu0 %v3396, 32
        %v5835 = vpop.permute.xlu0 %5834
        %5836 = vrot.lane.b32.xlu0 %v3397, 32
        %v5837 = vpop.permute.xlu0 %5836
        %5838 = vrot.lane.b32.xlu0 %v3398, 32
        %v5839 = vpop.permute.xlu0 %5838
        %5840 = vrot.lane.b32.xlu0 %v3399, 32
        %v5841 = vpop.permute.xlu0 %5840
        %5842 = vrot.lane.b32.xlu0 %v3400, 32
        %v5843 = vpop.permute.xlu0 %5842
        %5844 = vrot.lane.b32.xlu0 %v3401, 32
        %v5845 = vpop.permute.xlu0 %5844
        %5846 = vrot.lane.b32.xlu0 %v3402, 32
        %v5847 = vpop.permute.xlu0 %5846
        %5848 = vrot.lane.b32.xlu0 %v3403, 32
        %v5849 = vpop.permute.xlu0 %5848
        %5850 = vrot.lane.b32.xlu0 %v3404, 32
        %v5851 = vpop.permute.xlu0 %5850
        %5852 = vrot.lane.b32.xlu0 %v3405, 32
        %v5853 = vpop.permute.xlu0 %5852
        %5854 = vrot.lane.b32.xlu0 %v3406, 32
        %v5855 = vpop.permute.xlu0 %5854
        %5856 = vrot.lane.b32.xlu0 %v3407, 32
        %v5857 = vpop.permute.xlu0 %5856
        %5858 = vrot.lane.b32.xlu0 %v3408, 32
        %v5859 = vpop.permute.xlu0 %5858
        %5860 = vrot.lane.b32.xlu0 %v3409, 32
        %v5861 = vpop.permute.xlu0 %5860
        %5862 = vrot.lane.b32.xlu0 %v3410, 32
        %v5863 = vpop.permute.xlu0 %5862
        %5864 = vrot.lane.b32.xlu0 %v3411, 32
        %v5865 = vpop.permute.xlu0 %5864
        %5866 = vrot.lane.b32.xlu0 %v3412, 32
        %v5867 = vpop.permute.xlu0 %5866
        %5868 = vrot.lane.b32.xlu0 %v3413, 32
        %v5869 = vpop.permute.xlu0 %5868
        %5870 = vrot.lane.b32.xlu0 %v3414, 32
        %v5871 = vpop.permute.xlu0 %5870
        %5872 = vrot.lane.b32.xlu0 %v3415, 32
        %v5873 = vpop.permute.xlu0 %5872
        %5874 = vrot.lane.b32.xlu0 %v3416, 32
        %v5875 = vpop.permute.xlu0 %5874
        %5876 = vrot.lane.b32.xlu0 %v3417, 32
        %v5877 = vpop.permute.xlu0 %5876
        %5878 = vrot.lane.b32.xlu0 %v3418, 32
        %v5879 = vpop.permute.xlu0 %5878
        %5880 = vrot.lane.b32.xlu0 %v3419, 32
        %v5881 = vpop.permute.xlu0 %5880
        %5882 = vrot.lane.b32.xlu0 %v3420, 32
        %v5883 = vpop.permute.xlu0 %5882
        %5884 = vrot.lane.b32.xlu0 %v3421, 32
        %v5885 = vpop.permute.xlu0 %5884
        %5886 = vrot.lane.b32.xlu0 %v3422, 32
        %v5887 = vpop.permute.xlu0 %5886
        %5888 = vrot.lane.b32.xlu0 %v3423, 32
        %v5889 = vpop.permute.xlu0 %5888
        %5890 = vrot.lane.b32.xlu0 %v3424, 32
        %v5891 = vpop.permute.xlu0 %5890
        %5892 = vrot.lane.b32.xlu0 %v3425, 32
        %v5893 = vpop.permute.xlu0 %5892
        %5894 = vrot.lane.b32.xlu0 %v3426, 32
        %v5895 = vpop.permute.xlu0 %5894
        %5896 = vrot.lane.b32.xlu0 %v3427, 32
        %v5897 = vpop.permute.xlu0 %5896
        %5898 = vrot.lane.b32.xlu0 %v3428, 32
        %v5899 = vpop.permute.xlu0 %5898
        %5900 = vrot.lane.b32.xlu0 %v3429, 32
        %v5901 = vpop.permute.xlu0 %5900
        %5902 = vrot.lane.b32.xlu0 %v3430, 32
        %v5903 = vpop.permute.xlu0 %5902
        %5904 = vrot.lane.b32.xlu0 %v3431, 32
        %v5905 = vpop.permute.xlu0 %5904
        %5906 = vrot.lane.b32.xlu0 %v3432, 32
        %v5907 = vpop.permute.xlu0 %5906
        %5908 = vrot.lane.b32.xlu0 %v3433, 32
        %v5909 = vpop.permute.xlu0 %5908
        %5910 = vrot.lane.b32.xlu0 %v3434, 32
        %v5911 = vpop.permute.xlu0 %5910
        %5912 = vrot.lane.b32.xlu0 %v3435, 32
        %v5913 = vpop.permute.xlu0 %5912
        %5914 = vrot.lane.b32.xlu0 %v3436, 32
        %v5915 = vpop.permute.xlu0 %5914
        %5916 = vrot.lane.b32.xlu0 %v3437, 32
        %v5917 = vpop.permute.xlu0 %5916
        %5918 = vrot.lane.b32.xlu0 %v3438, 32
        %v5919 = vpop.permute.xlu0 %5918
        %5920 = vrot.lane.b32.xlu0 %v3439, 32
        %v5921 = vpop.permute.xlu0 %5920
        %5922 = vrot.lane.b32.xlu0 %v3440, 32
        %v5923 = vpop.permute.xlu0 %5922
        %5924 = vrot.lane.b32.xlu0 %v3441, 32
        %v5925 = vpop.permute.xlu0 %5924
        %5926 = vrot.lane.b32.xlu0 %v3442, 32
        %v5927 = vpop.permute.xlu0 %5926
        %5928 = vrot.lane.b32.xlu0 %v3443, 32
        %v5929 = vpop.permute.xlu0 %5928
        %5930 = vrot.lane.b32.xlu0 %v3444, 32
        %v5931 = vpop.permute.xlu0 %5930
        %5932 = vrot.lane.b32.xlu0 %v3445, 32
        %v5933 = vpop.permute.xlu0 %5932
        %5934 = vrot.lane.b32.xlu0 %v3446, 32
        %v5935 = vpop.permute.xlu0 %5934
        %5936 = vrot.lane.b32.xlu0 %v3447, 32
        %v5937 = vpop.permute.xlu0 %5936
        %5938 = vrot.lane.b32.xlu0 %v3448, 32
        %v5939 = vpop.permute.xlu0 %5938
        %5940 = vrot.lane.b32.xlu0 %v3449, 32
        %v5941 = vpop.permute.xlu0 %5940
        %5942 = vrot.lane.b32.xlu0 %v3450, 32
        %v5943 = vpop.permute.xlu0 %5942
        %5944 = vrot.lane.b32.xlu0 %v3451, 32
        %v5945 = vpop.permute.xlu0 %5944
        %5946 = vrot.lane.b32.xlu0 %v3452, 32
        %v5947 = vpop.permute.xlu0 %5946
        %5956 = vrot.lane.b32.xlu0 %v3365, 64
        %v5957 = vpop.permute.xlu0 %5956
        %5958 = vrot.lane.b32.xlu0 %v3366, 64
        %v5959 = vpop.permute.xlu0 %5958
        %5960 = vrot.lane.b32.xlu0 %v3367, 64
        %v5961 = vpop.permute.xlu0 %5960
        %5962 = vrot.lane.b32.xlu0 %v3368, 64
        %v5963 = vpop.permute.xlu0 %5962
        %5964 = vrot.lane.b32.xlu0 %v3369, 64
        %v5965 = vpop.permute.xlu0 %5964
        %5966 = vrot.lane.b32.xlu0 %v3370, 64
        %v5967 = vpop.permute.xlu0 %5966
        %5968 = vrot.lane.b32.xlu0 %v3371, 64
        %v5969 = vpop.permute.xlu0 %5968
        %5970 = vrot.lane.b32.xlu0 %v3372, 64
        %v5971 = vpop.permute.xlu0 %5970
        %5972 = vrot.lane.b32.xlu0 %v3373, 64
        %v5973 = vpop.permute.xlu0 %5972
        %5974 = vrot.lane.b32.xlu0 %v3374, 64
        %v5975 = vpop.permute.xlu0 %5974
        %5976 = vrot.lane.b32.xlu0 %v3375, 64
        %v5977 = vpop.permute.xlu0 %5976
        %5978 = vrot.lane.b32.xlu0 %v3376, 64
        %v5979 = vpop.permute.xlu0 %5978
        %5980 = vrot.lane.b32.xlu0 %v3377, 64
        %v5981 = vpop.permute.xlu0 %5980
        %5982 = vrot.lane.b32.xlu0 %v3378, 64
        %v5983 = vpop.permute.xlu0 %5982
        %5984 = vrot.lane.b32.xlu0 %v3379, 64
        %v5985 = vpop.permute.xlu0 %5984
        %5986 = vrot.lane.b32.xlu0 %v3380, 64
        %v5987 = vpop.permute.xlu0 %5986
        %5988 = vrot.lane.b32.xlu0 %v3381, 64
        %v5989 = vpop.permute.xlu0 %5988
        %5990 = vrot.lane.b32.xlu0 %v3382, 64
        %v5991 = vpop.permute.xlu0 %5990
        %5992 = vrot.lane.b32.xlu0 %v3383, 64
        %v5993 = vpop.permute.xlu0 %5992
        %5994 = vrot.lane.b32.xlu0 %v3384, 64
        %v5995 = vpop.permute.xlu0 %5994
        %5996 = vrot.lane.b32.xlu0 %v3385, 64
        %v5997 = vpop.permute.xlu0 %5996
        %5998 = vrot.lane.b32.xlu0 %v3386, 64
        %v5999 = vpop.permute.xlu0 %5998
        %6000 = vrot.lane.b32.xlu0 %v3387, 64
        %v6001 = vpop.permute.xlu0 %6000
        %6002 = vrot.lane.b32.xlu0 %v3388, 64
        %v6003 = vpop.permute.xlu0 %6002
        %6004 = vrot.lane.b32.xlu0 %v3389, 64
        %v6005 = vpop.permute.xlu0 %6004
        %6006 = vrot.lane.b32.xlu0 %v3390, 64
        %v6007 = vpop.permute.xlu0 %6006
        %6008 = vrot.lane.b32.xlu0 %v3391, 64
        %v6009 = vpop.permute.xlu0 %6008
        %6010 = vrot.lane.b32.xlu0 %v3392, 64
        %v6011 = vpop.permute.xlu0 %6010
        %6012 = vrot.lane.b32.xlu0 %v3393, 64
        %v6013 = vpop.permute.xlu0 %6012
        %6014 = vrot.lane.b32.xlu0 %v3394, 64
        %v6015 = vpop.permute.xlu0 %6014
        %6016 = vrot.lane.b32.xlu0 %v3395, 64
        %v6017 = vpop.permute.xlu0 %6016
        %6018 = vrot.lane.b32.xlu0 %v3396, 64
        %v6019 = vpop.permute.xlu0 %6018
        %6020 = vrot.lane.b32.xlu0 %v3397, 64
        %v6021 = vpop.permute.xlu0 %6020
        %6022 = vrot.lane.b32.xlu0 %v3398, 64
        %v6023 = vpop.permute.xlu0 %6022
        %6024 = vrot.lane.b32.xlu0 %v3399, 64
        %v6025 = vpop.permute.xlu0 %6024
        %6026 = vrot.lane.b32.xlu0 %v3400, 64
        %v6027 = vpop.permute.xlu0 %6026
        %6028 = vrot.lane.b32.xlu0 %v3401, 64
        %v6029 = vpop.permute.xlu0 %6028
        %6030 = vrot.lane.b32.xlu0 %v3402, 64
        %v6031 = vpop.permute.xlu0 %6030
        %6032 = vrot.lane.b32.xlu0 %v3403, 64
        %v6033 = vpop.permute.xlu0 %6032
        %6034 = vrot.lane.b32.xlu0 %v3404, 64
        %v6035 = vpop.permute.xlu0 %6034
        %6036 = vrot.lane.b32.xlu0 %v3405, 64
        %v6037 = vpop.permute.xlu0 %6036
        %6038 = vrot.lane.b32.xlu0 %v3406, 64
        %v6039 = vpop.permute.xlu0 %6038
        %6040 = vrot.lane.b32.xlu0 %v3407, 64
        %v6041 = vpop.permute.xlu0 %6040
        %6042 = vrot.lane.b32.xlu0 %v3408, 64
        %v6043 = vpop.permute.xlu0 %6042
        %6044 = vrot.lane.b32.xlu0 %v3409, 64
        %v6045 = vpop.permute.xlu0 %6044
        %6046 = vrot.lane.b32.xlu0 %v3410, 64
        %v6047 = vpop.permute.xlu0 %6046
        %6048 = vrot.lane.b32.xlu0 %v3411, 64
        %v6049 = vpop.permute.xlu0 %6048
        %6050 = vrot.lane.b32.xlu0 %v3412, 64
        %v6051 = vpop.permute.xlu0 %6050
        %6052 = vrot.lane.b32.xlu0 %v3413, 64
        %v6053 = vpop.permute.xlu0 %6052
        %6054 = vrot.lane.b32.xlu0 %v3414, 64
        %v6055 = vpop.permute.xlu0 %6054
        %6056 = vrot.lane.b32.xlu0 %v3415, 64
        %v6057 = vpop.permute.xlu0 %6056
        %6058 = vrot.lane.b32.xlu0 %v3416, 64
        %v6059 = vpop.permute.xlu0 %6058
        %6060 = vrot.lane.b32.xlu0 %v3417, 64
        %v6061 = vpop.permute.xlu0 %6060
        %6062 = vrot.lane.b32.xlu0 %v3418, 64
        %v6063 = vpop.permute.xlu0 %6062
        %6064 = vrot.lane.b32.xlu0 %v3419, 64
        %v6065 = vpop.permute.xlu0 %6064
        %6066 = vrot.lane.b32.xlu0 %v3420, 64
        %v6067 = vpop.permute.xlu0 %6066
        %6068 = vrot.lane.b32.xlu0 %v3421, 64
        %v6069 = vpop.permute.xlu0 %6068
        %6070 = vrot.lane.b32.xlu0 %v3422, 64
        %v6071 = vpop.permute.xlu0 %6070
        %6072 = vrot.lane.b32.xlu0 %v3423, 64
        %v6073 = vpop.permute.xlu0 %6072
        %6074 = vrot.lane.b32.xlu0 %v3424, 64
        %v6075 = vpop.permute.xlu0 %6074
        %6076 = vrot.lane.b32.xlu0 %v3425, 64
        %v6077 = vpop.permute.xlu0 %6076
        %6078 = vrot.lane.b32.xlu0 %v3426, 64
        %v6079 = vpop.permute.xlu0 %6078
        %6080 = vrot.lane.b32.xlu0 %v3427, 64
        %v6081 = vpop.permute.xlu0 %6080
        %6082 = vrot.lane.b32.xlu0 %v3428, 64
        %v6083 = vpop.permute.xlu0 %6082
        %6084 = vrot.lane.b32.xlu0 %v3429, 64
        %v6085 = vpop.permute.xlu0 %6084
        %6086 = vrot.lane.b32.xlu0 %v3430, 64
        %v6087 = vpop.permute.xlu0 %6086
        %6088 = vrot.lane.b32.xlu0 %v3431, 64
        %v6089 = vpop.permute.xlu0 %6088
        %6090 = vrot.lane.b32.xlu0 %v3432, 64
        %v6091 = vpop.permute.xlu0 %6090
        %6092 = vrot.lane.b32.xlu0 %v3433, 64
        %v6093 = vpop.permute.xlu0 %6092
        %6094 = vrot.lane.b32.xlu0 %v3434, 64
        %v6095 = vpop.permute.xlu0 %6094
        %6096 = vrot.lane.b32.xlu0 %v3435, 64
        %v6097 = vpop.permute.xlu0 %6096
        %6098 = vrot.lane.b32.xlu0 %v3436, 64
        %v6099 = vpop.permute.xlu0 %6098
        %6100 = vrot.lane.b32.xlu0 %v3437, 64
        %v6101 = vpop.permute.xlu0 %6100
        %6102 = vrot.lane.b32.xlu0 %v3438, 64
        %v6103 = vpop.permute.xlu0 %6102
        %6104 = vrot.lane.b32.xlu0 %v3439, 64
        %v6105 = vpop.permute.xlu0 %6104
        %6106 = vrot.lane.b32.xlu0 %v3440, 64
        %v6107 = vpop.permute.xlu0 %6106
        %6108 = vrot.lane.b32.xlu0 %v3441, 64
        %v6109 = vpop.permute.xlu0 %6108
        %6110 = vrot.lane.b32.xlu0 %v3442, 64
        %v6111 = vpop.permute.xlu0 %6110
        %6112 = vrot.lane.b32.xlu0 %v3443, 64
        %v6113 = vpop.permute.xlu0 %6112
        %6114 = vrot.lane.b32.xlu0 %v3444, 64
        %v6115 = vpop.permute.xlu0 %6114
        %6116 = vrot.lane.b32.xlu0 %v3445, 64
        %v6117 = vpop.permute.xlu0 %6116
        %6118 = vrot.lane.b32.xlu0 %v3446, 64
        %v6119 = vpop.permute.xlu0 %6118
        %6120 = vrot.lane.b32.xlu0 %v3447, 64
        %v6121 = vpop.permute.xlu0 %6120
        %6122 = vrot.lane.b32.xlu0 %v3448, 64
        %v6123 = vpop.permute.xlu0 %6122
        %6124 = vrot.lane.b32.xlu0 %v3449, 64
        %v6125 = vpop.permute.xlu0 %6124
        %6126 = vrot.lane.b32.xlu0 %v3450, 64
        %v6127 = vpop.permute.xlu0 %6126
        %6128 = vrot.lane.b32.xlu0 %v3451, 64
        %v6129 = vpop.permute.xlu0 %6128
        %6130 = vrot.lane.b32.xlu0 %v3452, 64
        %v6131 = vpop.permute.xlu0 %6130
        %6132 = vrot.lane.b32.xlu0 %v3453, 64
        %v6133 = vpop.permute.xlu0 %6132
        %6134 = vrot.lane.b32.xlu0 %v3454, 64
        %v6135 = vpop.permute.xlu0 %6134
        %6136 = vrot.lane.b32.xlu0 %v3455, 64
        %v6137 = vpop.permute.xlu0 %6136
        %6138 = vrot.lane.b32.xlu0 %v3456, 64
        %v6139 = vpop.permute.xlu0 %6138
        %6140 = vrot.lane.b32.xlu0 %v3457, 64
        %v6141 = vpop.permute.xlu0 %6140
        %6142 = vrot.lane.b32.xlu0 %v3458, 64
        %v6143 = vpop.permute.xlu0 %6142
        %6144 = vrot.lane.b32.xlu0 %v3459, 64
        %v6145 = vpop.permute.xlu0 %6144
        %6146 = vrot.lane.b32.xlu0 %v3460, 64
        %v6147 = vpop.permute.xlu0 %6146
        %6156 = vrot.lane.b32.xlu0 %v3373, 96
        %v6157 = vpop.permute.xlu0 %6156
        %6158 = vrot.lane.b32.xlu0 %v3374, 96
        %v6159 = vpop.permute.xlu0 %6158
        %6160 = vrot.lane.b32.xlu0 %v3375, 96
        %v6161 = vpop.permute.xlu0 %6160
        %6162 = vrot.lane.b32.xlu0 %v3376, 96
        %v6163 = vpop.permute.xlu0 %6162
        %6164 = vrot.lane.b32.xlu0 %v3377, 96
        %v6165 = vpop.permute.xlu0 %6164
        %6166 = vrot.lane.b32.xlu0 %v3378, 96
        %v6167 = vpop.permute.xlu0 %6166
        %6168 = vrot.lane.b32.xlu0 %v3379, 96
        %v6169 = vpop.permute.xlu0 %6168
        %6170 = vrot.lane.b32.xlu0 %v3380, 96
        %v6171 = vpop.permute.xlu0 %6170
        %6172 = vrot.lane.b32.xlu0 %v3381, 96
        %v6173 = vpop.permute.xlu0 %6172
        %6174 = vrot.lane.b32.xlu0 %v3382, 96
        %v6175 = vpop.permute.xlu0 %6174
        %6176 = vrot.lane.b32.xlu0 %v3383, 96
        %v6177 = vpop.permute.xlu0 %6176
        %6178 = vrot.lane.b32.xlu0 %v3384, 96
        %v6179 = vpop.permute.xlu0 %6178
        %6180 = vrot.lane.b32.xlu0 %v3385, 96
        %v6181 = vpop.permute.xlu0 %6180
        %6182 = vrot.lane.b32.xlu0 %v3386, 96
        %v6183 = vpop.permute.xlu0 %6182
        %6184 = vrot.lane.b32.xlu0 %v3387, 96
        %v6185 = vpop.permute.xlu0 %6184
        %6186 = vrot.lane.b32.xlu0 %v3388, 96
        %v6187 = vpop.permute.xlu0 %6186
        %6188 = vrot.lane.b32.xlu0 %v3389, 96
        %v6189 = vpop.permute.xlu0 %6188
        %6190 = vrot.lane.b32.xlu0 %v3390, 96
        %v6191 = vpop.permute.xlu0 %6190
        %6192 = vrot.lane.b32.xlu0 %v3391, 96
        %v6193 = vpop.permute.xlu0 %6192
        %6194 = vrot.lane.b32.xlu0 %v3392, 96
        %v6195 = vpop.permute.xlu0 %6194
        %6196 = vrot.lane.b32.xlu0 %v3393, 96
        %v6197 = vpop.permute.xlu0 %6196
        %6198 = vrot.lane.b32.xlu0 %v3394, 96
        %v6199 = vpop.permute.xlu0 %6198
        %6200 = vrot.lane.b32.xlu0 %v3395, 96
        %v6201 = vpop.permute.xlu0 %6200
        %6202 = vrot.lane.b32.xlu0 %v3396, 96
        %v6203 = vpop.permute.xlu0 %6202
        %6204 = vrot.lane.b32.xlu0 %v3397, 96
        %v6205 = vpop.permute.xlu0 %6204
        %6206 = vrot.lane.b32.xlu0 %v3398, 96
        %v6207 = vpop.permute.xlu0 %6206
        %6208 = vrot.lane.b32.xlu0 %v3399, 96
        %v6209 = vpop.permute.xlu0 %6208
        %6210 = vrot.lane.b32.xlu0 %v3400, 96
        %v6211 = vpop.permute.xlu0 %6210
        %6212 = vrot.lane.b32.xlu0 %v3401, 96
        %v6213 = vpop.permute.xlu0 %6212
        %6214 = vrot.lane.b32.xlu0 %v3402, 96
        %v6215 = vpop.permute.xlu0 %6214
        %6216 = vrot.lane.b32.xlu0 %v3403, 96
        %v6217 = vpop.permute.xlu0 %6216
        %6218 = vrot.lane.b32.xlu0 %v3404, 96
        %v6219 = vpop.permute.xlu0 %6218
        %6220 = vrot.lane.b32.xlu0 %v3405, 96
        %v6221 = vpop.permute.xlu0 %6220
        %6222 = vrot.lane.b32.xlu0 %v3406, 96
        %v6223 = vpop.permute.xlu0 %6222
        %6224 = vrot.lane.b32.xlu0 %v3407, 96
        %v6225 = vpop.permute.xlu0 %6224
        %6226 = vrot.lane.b32.xlu0 %v3408, 96
        %v6227 = vpop.permute.xlu0 %6226
        %6228 = vrot.lane.b32.xlu0 %v3409, 96
        %v6229 = vpop.permute.xlu0 %6228
        %6230 = vrot.lane.b32.xlu0 %v3410, 96
        %v6231 = vpop.permute.xlu0 %6230
        %6232 = vrot.lane.b32.xlu0 %v3411, 96
        %v6233 = vpop.permute.xlu0 %6232
        %6234 = vrot.lane.b32.xlu0 %v3412, 96
        %v6235 = vpop.permute.xlu0 %6234
        %6236 = vrot.lane.b32.xlu0 %v3413, 96
        %v6237 = vpop.permute.xlu0 %6236
        %6238 = vrot.lane.b32.xlu0 %v3414, 96
        %v6239 = vpop.permute.xlu0 %6238
        %6240 = vrot.lane.b32.xlu0 %v3415, 96
        %v6241 = vpop.permute.xlu0 %6240
        %6242 = vrot.lane.b32.xlu0 %v3416, 96
        %v6243 = vpop.permute.xlu0 %6242
        %6244 = vrot.lane.b32.xlu0 %v3417, 96
        %v6245 = vpop.permute.xlu0 %6244
        %6246 = vrot.lane.b32.xlu0 %v3418, 96
        %v6247 = vpop.permute.xlu0 %6246
        %6248 = vrot.lane.b32.xlu0 %v3419, 96
        %v6249 = vpop.permute.xlu0 %6248
        %6250 = vrot.lane.b32.xlu0 %v3420, 96
        %v6251 = vpop.permute.xlu0 %6250
        %6252 = vrot.lane.b32.xlu0 %v3421, 96
        %v6253 = vpop.permute.xlu0 %6252
        %6254 = vrot.lane.b32.xlu0 %v3422, 96
        %v6255 = vpop.permute.xlu0 %6254
        %6256 = vrot.lane.b32.xlu0 %v3423, 96
        %v6257 = vpop.permute.xlu0 %6256
        %6258 = vrot.lane.b32.xlu0 %v3424, 96
        %v6259 = vpop.permute.xlu0 %6258
        %6260 = vrot.lane.b32.xlu0 %v3425, 96
        %v6261 = vpop.permute.xlu0 %6260
        %6262 = vrot.lane.b32.xlu0 %v3426, 96
        %v6263 = vpop.permute.xlu0 %6262
        %6264 = vrot.lane.b32.xlu0 %v3427, 96
        %v6265 = vpop.permute.xlu0 %6264
        %6266 = vrot.lane.b32.xlu0 %v3428, 96
        %v6267 = vpop.permute.xlu0 %6266
        %6268 = vrot.lane.b32.xlu0 %v3429, 96
        %v6269 = vpop.permute.xlu0 %6268
        %6270 = vrot.lane.b32.xlu0 %v3430, 96
        %v6271 = vpop.permute.xlu0 %6270
        %6272 = vrot.lane.b32.xlu0 %v3431, 96
        %v6273 = vpop.permute.xlu0 %6272
        %6274 = vrot.lane.b32.xlu0 %v3432, 96
        %v6275 = vpop.permute.xlu0 %6274
        %6276 = vrot.lane.b32.xlu0 %v3433, 96
        %v6277 = vpop.permute.xlu0 %6276
        %6278 = vrot.lane.b32.xlu0 %v3434, 96
        %v6279 = vpop.permute.xlu0 %6278
        %6280 = vrot.lane.b32.xlu0 %v3435, 96
        %v6281 = vpop.permute.xlu0 %6280
        %6282 = vrot.lane.b32.xlu0 %v3436, 96
        %v6283 = vpop.permute.xlu0 %6282
        %6284 = vrot.lane.b32.xlu0 %v3437, 96
        %v6285 = vpop.permute.xlu0 %6284
        %6286 = vrot.lane.b32.xlu0 %v3438, 96
        %v6287 = vpop.permute.xlu0 %6286
        %6288 = vrot.lane.b32.xlu0 %v3439, 96
        %v6289 = vpop.permute.xlu0 %6288
        %6290 = vrot.lane.b32.xlu0 %v3440, 96
        %v6291 = vpop.permute.xlu0 %6290
        %6292 = vrot.lane.b32.xlu0 %v3441, 96
        %v6293 = vpop.permute.xlu0 %6292
        %6294 = vrot.lane.b32.xlu0 %v3442, 96
        %v6295 = vpop.permute.xlu0 %6294
        %6296 = vrot.lane.b32.xlu0 %v3443, 96
        %v6297 = vpop.permute.xlu0 %6296
        %6298 = vrot.lane.b32.xlu0 %v3444, 96
        %v6299 = vpop.permute.xlu0 %6298
        %6300 = vrot.lane.b32.xlu0 %v3445, 96
        %v6301 = vpop.permute.xlu0 %6300
        %6302 = vrot.lane.b32.xlu0 %v3446, 96
        %v6303 = vpop.permute.xlu0 %6302
        %6304 = vrot.lane.b32.xlu0 %v3447, 96
        %v6305 = vpop.permute.xlu0 %6304
        %6306 = vrot.lane.b32.xlu0 %v3448, 96
        %v6307 = vpop.permute.xlu0 %6306
        %6308 = vrot.lane.b32.xlu0 %v3449, 96
        %v6309 = vpop.permute.xlu0 %6308
        %6310 = vrot.lane.b32.xlu0 %v3450, 96
        %v6311 = vpop.permute.xlu0 %6310
        %6312 = vrot.lane.b32.xlu0 %v3451, 96
        %v6313 = vpop.permute.xlu0 %6312
        %6314 = vrot.lane.b32.xlu0 %v3452, 96
        %v6315 = vpop.permute.xlu0 %6314
        %6316 = vrot.lane.b32.xlu0 %v3453, 96
        %v6317 = vpop.permute.xlu0 %6316
        %6318 = vrot.lane.b32.xlu0 %v3454, 96
        %v6319 = vpop.permute.xlu0 %6318
        %6320 = vrot.lane.b32.xlu0 %v3455, 96
        %v6321 = vpop.permute.xlu0 %6320
        %6322 = vrot.lane.b32.xlu0 %v3456, 96
        %v6323 = vpop.permute.xlu0 %6322
        %6324 = vrot.lane.b32.xlu0 %v3457, 96
        %v6325 = vpop.permute.xlu0 %6324
        %6326 = vrot.lane.b32.xlu0 %v3458, 96
        %v6327 = vpop.permute.xlu0 %6326
        %6328 = vrot.lane.b32.xlu0 %v3459, 96
        %v6329 = vpop.permute.xlu0 %6328
        %6330 = vrot.lane.b32.xlu0 %v3460, 96
        %v6331 = vpop.permute.xlu0 %6330
        %6332 = vrot.lane.b32.xlu0 %v3461, 96
        %v6333 = vpop.permute.xlu0 %6332
        %6334 = vrot.lane.b32.xlu0 %v3462, 96
        %v6335 = vpop.permute.xlu0 %6334
        %6336 = vrot.lane.b32.xlu0 %v3463, 96
        %v6337 = vpop.permute.xlu0 %6336
        %6338 = vrot.lane.b32.xlu0 %v3464, 96
        %v6339 = vpop.permute.xlu0 %6338
        %6340 = vrot.lane.b32.xlu0 %v3465, 96
        %v6341 = vpop.permute.xlu0 %6340
        %6342 = vrot.lane.b32.xlu0 %v3466, 96
        %v6343 = vpop.permute.xlu0 %6342
        %6344 = vrot.lane.b32.xlu0 %v3467, 96
        %v6345 = vpop.permute.xlu0 %6344
        %6346 = vrot.lane.b32.xlu0 %v3468, 96
        %v6347 = vpop.permute.xlu0 %6346
        %vm6348 = vcmask 261120
        %v6351 = vsel %vm6348, %v3349, %v5757
        %v6354 = vsel %vm6348, %v3350, %v5759
        %v6357 = vsel %vm6348, %v3351, %v5761
        %v6360 = vsel %vm6348, %v3352, %v5763
        %v6363 = vsel %vm6348, %v3353, %v5765
        %v6366 = vsel %vm6348, %v3354, %v5767
        %v6369 = vsel %vm6348, %v3355, %v5769
        %v6372 = vsel %vm6348, %v3356, %v5771
        %v6375 = vsel %vm6348, %v3357, %v5773
        %v6378 = vsel %vm6348, %v3358, %v5775
        %v6381 = vsel %vm6348, %v3359, %v5777
        %v6384 = vsel %vm6348, %v3360, %v5779
        %v6387 = vsel %vm6348, %v3361, %v5781
        %v6390 = vsel %vm6348, %v3362, %v5783
        %v6393 = vsel %vm6348, %v3363, %v5785
        %v6396 = vsel %vm6348, %v3364, %v5787
        %v6399 = vsel %vm6348, %v3365, %v5789
        %v6402 = vsel %vm6348, %v3366, %v5791
        %v6405 = vsel %vm6348, %v3367, %v5793
        %v6408 = vsel %vm6348, %v3368, %v5795
        %v6411 = vsel %vm6348, %v3369, %v5797
        %v6414 = vsel %vm6348, %v3370, %v5799
        %v6417 = vsel %vm6348, %v3371, %v5801
        %v6420 = vsel %vm6348, %v3372, %v5803
        %v6423 = vsel %vm6348, %v3373, %v5805
        %v6426 = vsel %vm6348, %v3374, %v5807
        %v6429 = vsel %vm6348, %v3375, %v5809
        %v6432 = vsel %vm6348, %v3376, %v5811
        %v6435 = vsel %vm6348, %v3377, %v5813
        %v6438 = vsel %vm6348, %v3378, %v5815
        %v6441 = vsel %vm6348, %v3379, %v5817
        %v6444 = vsel %vm6348, %v3380, %v5819
        %v6447 = vsel %vm6348, %v3381, %v5821
        %v6450 = vsel %vm6348, %v3382, %v5823
        %v6453 = vsel %vm6348, %v3383, %v5825
        %v6456 = vsel %vm6348, %v3384, %v5827
        %v6459 = vsel %vm6348, %v3385, %v5829
        %v6462 = vsel %vm6348, %v3386, %v5831
        %v6465 = vsel %vm6348, %v3387, %v5833
        %v6468 = vsel %vm6348, %v3388, %v5835
        %v6471 = vsel %vm6348, %v3389, %v5837
        %v6474 = vsel %vm6348, %v3390, %v5839
        %v6477 = vsel %vm6348, %v3391, %v5841
        %v6480 = vsel %vm6348, %v3392, %v5843
        %v6483 = vsel %vm6348, %v3393, %v5845
        %v6486 = vsel %vm6348, %v3394, %v5847
        %v6489 = vsel %vm6348, %v3395, %v5849
        %v6492 = vsel %vm6348, %v3396, %v5851
        %v6495 = vsel %vm6348, %v3397, %v5853
        %v6498 = vsel %vm6348, %v3398, %v5855
        %v6501 = vsel %vm6348, %v3399, %v5857
        %v6504 = vsel %vm6348, %v3400, %v5859
        %v6507 = vsel %vm6348, %v3401, %v5861
        %v6510 = vsel %vm6348, %v3402, %v5863
        %v6513 = vsel %vm6348, %v3403, %v5865
        %v6516 = vsel %vm6348, %v3404, %v5867
        %v6519 = vsel %vm6348, %v3405, %v5869
        %v6522 = vsel %vm6348, %v3406, %v5871
        %v6525 = vsel %vm6348, %v3407, %v5873
        %v6528 = vsel %vm6348, %v3408, %v5875
        %v6531 = vsel %vm6348, %v3409, %v5877
        %v6534 = vsel %vm6348, %v3410, %v5879
        %v6537 = vsel %vm6348, %v3411, %v5881
        %v6540 = vsel %vm6348, %v3412, %v5883
        %v6543 = vsel %vm6348, %v3413, %v5885
        %v6546 = vsel %vm6348, %v3414, %v5887
        %v6549 = vsel %vm6348, %v3415, %v5889
        %v6552 = vsel %vm6348, %v3416, %v5891
        %v6555 = vsel %vm6348, %v3417, %v5893
        %v6558 = vsel %vm6348, %v3418, %v5895
        %v6561 = vsel %vm6348, %v3419, %v5897
        %v6564 = vsel %vm6348, %v3420, %v5899
        %v6567 = vsel %vm6348, %v3421, %v5901
        %v6570 = vsel %vm6348, %v3422, %v5903
        %v6573 = vsel %vm6348, %v3423, %v5905
        %v6576 = vsel %vm6348, %v3424, %v5907
        %v6579 = vsel %vm6348, %v3425, %v5909
        %v6582 = vsel %vm6348, %v3426, %v5911
        %v6585 = vsel %vm6348, %v3427, %v5913
        %v6588 = vsel %vm6348, %v3428, %v5915
        %v6591 = vsel %vm6348, %v3429, %v5917
        %v6594 = vsel %vm6348, %v3430, %v5919
        %v6597 = vsel %vm6348, %v3431, %v5921
        %v6600 = vsel %vm6348, %v3432, %v5923
        %v6603 = vsel %vm6348, %v3433, %v5925
        %v6606 = vsel %vm6348, %v3434, %v5927
        %v6609 = vsel %vm6348, %v3435, %v5929
        %v6612 = vsel %vm6348, %v3436, %v5931
        %v6615 = vsel %vm6348, %v3437, %v5933
        %v6618 = vsel %vm6348, %v3438, %v5935
        %v6621 = vsel %vm6348, %v3439, %v5937
        %v6624 = vsel %vm6348, %v3440, %v5939
        %v6627 = vsel %vm6348, %v3441, %v5941
        %v6630 = vsel %vm6348, %v3442, %v5943
        %v6633 = vsel %vm6348, %v3443, %v5945
        %v6636 = vsel %vm6348, %v3444, %v5947
        %vm6637 = vcmask 523264
        %v6639 = vsel %vm6637, %v6351, %v5957
        %v6641 = vsel %vm6637, %v6354, %v5959
        %v6643 = vsel %vm6637, %v6357, %v5961
        %v6645 = vsel %vm6637, %v6360, %v5963
        %v6647 = vsel %vm6637, %v6363, %v5965
        %v6649 = vsel %vm6637, %v6366, %v5967
        %v6651 = vsel %vm6637, %v6369, %v5969
        %v6653 = vsel %vm6637, %v6372, %v5971
        %v6655 = vsel %vm6637, %v6375, %v5973
        %v6657 = vsel %vm6637, %v6378, %v5975
        %v6659 = vsel %vm6637, %v6381, %v5977
        %v6661 = vsel %vm6637, %v6384, %v5979
        %v6663 = vsel %vm6637, %v6387, %v5981
        %v6665 = vsel %vm6637, %v6390, %v5983
        %v6667 = vsel %vm6637, %v6393, %v5985
        %v6669 = vsel %vm6637, %v6396, %v5987
        %v6671 = vsel %vm6637, %v6399, %v5989
        %v6673 = vsel %vm6637, %v6402, %v5991
        %v6675 = vsel %vm6637, %v6405, %v5993
        %v6677 = vsel %vm6637, %v6408, %v5995
        %v6679 = vsel %vm6637, %v6411, %v5997
        %v6681 = vsel %vm6637, %v6414, %v5999
        %v6683 = vsel %vm6637, %v6417, %v6001
        %v6685 = vsel %vm6637, %v6420, %v6003
        %v6687 = vsel %vm6637, %v6423, %v6005
        %v6689 = vsel %vm6637, %v6426, %v6007
        %v6691 = vsel %vm6637, %v6429, %v6009
        %v6693 = vsel %vm6637, %v6432, %v6011
        %v6695 = vsel %vm6637, %v6435, %v6013
        %v6697 = vsel %vm6637, %v6438, %v6015
        %v6699 = vsel %vm6637, %v6441, %v6017
        %v6701 = vsel %vm6637, %v6444, %v6019
        %v6703 = vsel %vm6637, %v6447, %v6021
        %v6705 = vsel %vm6637, %v6450, %v6023
        %v6707 = vsel %vm6637, %v6453, %v6025
        %v6709 = vsel %vm6637, %v6456, %v6027
        %v6711 = vsel %vm6637, %v6459, %v6029
        %v6713 = vsel %vm6637, %v6462, %v6031
        %v6715 = vsel %vm6637, %v6465, %v6033
        %v6717 = vsel %vm6637, %v6468, %v6035
        %v6719 = vsel %vm6637, %v6471, %v6037
        %v6721 = vsel %vm6637, %v6474, %v6039
        %v6723 = vsel %vm6637, %v6477, %v6041
        %v6725 = vsel %vm6637, %v6480, %v6043
        %v6727 = vsel %vm6637, %v6483, %v6045
        %v6729 = vsel %vm6637, %v6486, %v6047
        %v6731 = vsel %vm6637, %v6489, %v6049
        %v6733 = vsel %vm6637, %v6492, %v6051
        %v6735 = vsel %vm6637, %v6495, %v6053
        %v6737 = vsel %vm6637, %v6498, %v6055
        %v6739 = vsel %vm6637, %v6501, %v6057
        %v6741 = vsel %vm6637, %v6504, %v6059
        %v6743 = vsel %vm6637, %v6507, %v6061
        %v6745 = vsel %vm6637, %v6510, %v6063
        %v6747 = vsel %vm6637, %v6513, %v6065
        %v6749 = vsel %vm6637, %v6516, %v6067
        %v6751 = vsel %vm6637, %v6519, %v6069
        %v6753 = vsel %vm6637, %v6522, %v6071
        %v6755 = vsel %vm6637, %v6525, %v6073
        %v6757 = vsel %vm6637, %v6528, %v6075
        %v6759 = vsel %vm6637, %v6531, %v6077
        %v6761 = vsel %vm6637, %v6534, %v6079
        %v6763 = vsel %vm6637, %v6537, %v6081
        %v6765 = vsel %vm6637, %v6540, %v6083
        %v6767 = vsel %vm6637, %v6543, %v6085
        %v6769 = vsel %vm6637, %v6546, %v6087
        %v6771 = vsel %vm6637, %v6549, %v6089
        %v6773 = vsel %vm6637, %v6552, %v6091
        %v6775 = vsel %vm6637, %v6555, %v6093
        %v6777 = vsel %vm6637, %v6558, %v6095
        %v6779 = vsel %vm6637, %v6561, %v6097
        %v6781 = vsel %vm6637, %v6564, %v6099
        %v6783 = vsel %vm6637, %v6567, %v6101
        %v6785 = vsel %vm6637, %v6570, %v6103
        %v6787 = vsel %vm6637, %v6573, %v6105
        %v6789 = vsel %vm6637, %v6576, %v6107
        %v6791 = vsel %vm6637, %v6579, %v6109
        %v6793 = vsel %vm6637, %v6582, %v6111
        %v6795 = vsel %vm6637, %v6585, %v6113
        %v6797 = vsel %vm6637, %v6588, %v6115
        %v6799 = vsel %vm6637, %v6591, %v6117
        %v6801 = vsel %vm6637, %v6594, %v6119
        %v6803 = vsel %vm6637, %v6597, %v6121
        %v6805 = vsel %vm6637, %v6600, %v6123
        %v6807 = vsel %vm6637, %v6603, %v6125
        %v6809 = vsel %vm6637, %v6606, %v6127
        %v6811 = vsel %vm6637, %v6609, %v6129
        %v6813 = vsel %vm6637, %v6612, %v6131
        %v6815 = vsel %vm6637, %v6615, %v6133
        %v6817 = vsel %vm6637, %v6618, %v6135
        %v6819 = vsel %vm6637, %v6621, %v6137
        %v6821 = vsel %vm6637, %v6624, %v6139
        %v6823 = vsel %vm6637, %v6627, %v6141
        %v6825 = vsel %vm6637, %v6630, %v6143
        %v6827 = vsel %vm6637, %v6633, %v6145
        %v6829 = vsel %vm6637, %v6636, %v6147
        %vm6830 = vcmask 785408
        %v6832 = vsel %vm6830, %v6639, %v6157
        %v6835 = vsel %vm6830, %v6641, %v6159
        %v6838 = vsel %vm6830, %v6643, %v6161
        %v6841 = vsel %vm6830, %v6645, %v6163
        %v6844 = vsel %vm6830, %v6647, %v6165
        %v6847 = vsel %vm6830, %v6649, %v6167
        %v6850 = vsel %vm6830, %v6651, %v6169
        %v6853 = vsel %vm6830, %v6653, %v6171
        %v6856 = vsel %vm6830, %v6655, %v6173
        %v6859 = vsel %vm6830, %v6657, %v6175
        %v6862 = vsel %vm6830, %v6659, %v6177
        %v6865 = vsel %vm6830, %v6661, %v6179
        %v6868 = vsel %vm6830, %v6663, %v6181
        %v6871 = vsel %vm6830, %v6665, %v6183
        %v6874 = vsel %vm6830, %v6667, %v6185
        %v6877 = vsel %vm6830, %v6669, %v6187
        %v6880 = vsel %vm6830, %v6671, %v6189
        %v6883 = vsel %vm6830, %v6673, %v6191
        %v6886 = vsel %vm6830, %v6675, %v6193
        %v6889 = vsel %vm6830, %v6677, %v6195
        %v6892 = vsel %vm6830, %v6679, %v6197
        %v6895 = vsel %vm6830, %v6681, %v6199
        %v6898 = vsel %vm6830, %v6683, %v6201
        %v6901 = vsel %vm6830, %v6685, %v6203
        %v6904 = vsel %vm6830, %v6687, %v6205
        %v6907 = vsel %vm6830, %v6689, %v6207
        %v6910 = vsel %vm6830, %v6691, %v6209
        %v6913 = vsel %vm6830, %v6693, %v6211
        %v6916 = vsel %vm6830, %v6695, %v6213
        %v6919 = vsel %vm6830, %v6697, %v6215
        %v6922 = vsel %vm6830, %v6699, %v6217
        %v6925 = vsel %vm6830, %v6701, %v6219
        %v6928 = vsel %vm6830, %v6703, %v6221
        %v6931 = vsel %vm6830, %v6705, %v6223
        %v6934 = vsel %vm6830, %v6707, %v6225
        %v6937 = vsel %vm6830, %v6709, %v6227
        %v6940 = vsel %vm6830, %v6711, %v6229
        %v6943 = vsel %vm6830, %v6713, %v6231
        %v6946 = vsel %vm6830, %v6715, %v6233
        %v6949 = vsel %vm6830, %v6717, %v6235
        %v6952 = vsel %vm6830, %v6719, %v6237
        %v6955 = vsel %vm6830, %v6721, %v6239
        %v6958 = vsel %vm6830, %v6723, %v6241
        %v6961 = vsel %vm6830, %v6725, %v6243
        %v6964 = vsel %vm6830, %v6727, %v6245
        %v6967 = vsel %vm6830, %v6729, %v6247
        %v6970 = vsel %vm6830, %v6731, %v6249
        %v6973 = vsel %vm6830, %v6733, %v6251
        %v6976 = vsel %vm6830, %v6735, %v6253
        %v6979 = vsel %vm6830, %v6737, %v6255
        %v6982 = vsel %vm6830, %v6739, %v6257
        %v6985 = vsel %vm6830, %v6741, %v6259
        %v6988 = vsel %vm6830, %v6743, %v6261
        %v6991 = vsel %vm6830, %v6745, %v6263
        %v6994 = vsel %vm6830, %v6747, %v6265
        %v6997 = vsel %vm6830, %v6749, %v6267
        %v7000 = vsel %vm6830, %v6751, %v6269
        %v7003 = vsel %vm6830, %v6753, %v6271
        %v7006 = vsel %vm6830, %v6755, %v6273
        %v7009 = vsel %vm6830, %v6757, %v6275
        %v7012 = vsel %vm6830, %v6759, %v6277
        %v7015 = vsel %vm6830, %v6761, %v6279
        %v7018 = vsel %vm6830, %v6763, %v6281
        %v7021 = vsel %vm6830, %v6765, %v6283
        %v7024 = vsel %vm6830, %v6767, %v6285
        %v7027 = vsel %vm6830, %v6769, %v6287
        %v7030 = vsel %vm6830, %v6771, %v6289
        %v7033 = vsel %vm6830, %v6773, %v6291
        %v7036 = vsel %vm6830, %v6775, %v6293
        %v7039 = vsel %vm6830, %v6777, %v6295
        %v7042 = vsel %vm6830, %v6779, %v6297
        %v7045 = vsel %vm6830, %v6781, %v6299
        %v7048 = vsel %vm6830, %v6783, %v6301
        %v7051 = vsel %vm6830, %v6785, %v6303
        %v7054 = vsel %vm6830, %v6787, %v6305
        %v7057 = vsel %vm6830, %v6789, %v6307
        %v7060 = vsel %vm6830, %v6791, %v6309
        %v7063 = vsel %vm6830, %v6793, %v6311
        %v7066 = vsel %vm6830, %v6795, %v6313
        %v7069 = vsel %vm6830, %v6797, %v6315
        %v7072 = vsel %vm6830, %v6799, %v6317
        %v7075 = vsel %vm6830, %v6801, %v6319
        %v7078 = vsel %vm6830, %v6803, %v6321
        %v7081 = vsel %vm6830, %v6805, %v6323
        %v7084 = vsel %vm6830, %v6807, %v6325
        %v7087 = vsel %vm6830, %v6809, %v6327
        %v7090 = vsel %vm6830, %v6811, %v6329
        %v7093 = vsel %vm6830, %v6813, %v6331
        %v7096 = vsel %vm6830, %v6815, %v6333
        %v7099 = vsel %vm6830, %v6817, %v6335
        %v7102 = vsel %vm6830, %v6819, %v6337
        %v7105 = vsel %vm6830, %v6821, %v6339
        %v7108 = vsel %vm6830, %v6823, %v6341
        %v7111 = vsel %vm6830, %v6825, %v6343
        %v7114 = vsel %vm6830, %v6827, %v6345
        %v7117 = vsel %vm6830, %v6829, %v6347
        %v7119 = vld [vmem:[%s3] sm:$0xf]
        %v7120 = vld [vmem:[%s3 + $0x4] sm:$0xf]
        %v7121 = vld [vmem:[%s3 + $0x8] sm:$0xf]
        %v7122 = vld [vmem:[%s3 + $0xc] sm:$0xf]
        %v7123 = vld [vmem:[%s3 + $0x10] sm:$0xf]
        %v7124 = vld [vmem:[%s3 + $0x14] sm:$0xf]
        %v7125 = vld [vmem:[%s3 + $0x18] sm:$0xf]
        %v7126 = vld [vmem:[%s3 + $0x1c] sm:$0xf]
        %v7127 = vld [vmem:[%s3 + $0x20] sm:$0xf]
        %v7128 = vld [vmem:[%s3 + $0x24] sm:$0xf]
        %v7129 = vld [vmem:[%s3 + $0x28] sm:$0xf]
        %v7130 = vld [vmem:[%s3 + $0x2c] sm:$0xf]
        %v7131 = vld [vmem:[%s3 + $0x30] sm:$0xf]
        %v7132 = vld [vmem:[%s3 + $0x34] sm:$0xf]
        %v7133 = vld [vmem:[%s3 + $0x38] sm:$0xf]
        %v7134 = vld [vmem:[%s3 + $0x3c] sm:$0xf]
        %v7135 = vld [vmem:[%s3 + $0x40] sm:$0xf]
        %v7136 = vld [vmem:[%s3 + $0x44] sm:$0xf]
        %v7137 = vld [vmem:[%s3 + $0x48] sm:$0xf]
        %v7138 = vld [vmem:[%s3 + $0x4c] sm:$0xf]
        %v7159 = vunpack.c.l.b16 %v7119
        %v7160 = vunpack.c.l.b16 %v7120
        %v7161 = vunpack.c.l.b16 %v7121
        %v7162 = vunpack.c.l.b16 %v7122
        %v7163 = vunpack.c.l.b16 %v7123
        %v7164 = vunpack.c.l.b16 %v7124
        %v7165 = vunpack.c.l.b16 %v7125
        %v7166 = vunpack.c.l.b16 %v7126
        %v7167 = vunpack.c.l.b16 %v7127
        %v7168 = vunpack.c.l.b16 %v7128
        %v7169 = vunpack.c.l.b16 %v7129
        %v7170 = vunpack.c.l.b16 %v7130
        %v7171 = vunpack.c.l.b16 %v7131
        %v7172 = vunpack.c.l.b16 %v7132
        %v7173 = vunpack.c.l.b16 %v7133
        %v7174 = vunpack.c.l.b16 %v7134
        %v7175 = vunpack.c.l.b16 %v7135
        %v7176 = vunpack.c.l.b16 %v7136
        %v7177 = vunpack.c.l.b16 %v7137
        %v7178 = vunpack.c.l.b16 %v7138
        %v7179 = vpack.c.b16 %v7160, %v7159
        %v7180 = vpack.c.b16 %v7162, %v7161
        %v7181 = vpack.c.b16 %v7164, %v7163
        %v7182 = vpack.c.b16 %v7166, %v7165
        %v7183 = vpack.c.b16 %v7168, %v7167
        %v7184 = vpack.c.b16 %v7170, %v7169
        %v7185 = vpack.c.b16 %v7172, %v7171
        %v7186 = vpack.c.b16 %v7174, %v7173
        %v7187 = vpack.c.b16 %v7176, %v7175
        %v7188 = vpack.c.b16 %v7178, %v7177
        %v7199 = vsel %vm6348, %v3381, 0
        %v7201 = vsel %vm6348, %v3382, 0
        %v7203 = vsel %vm6348, %v3383, 0
        %v7205 = vsel %vm6348, %v3384, 0
        %v7207 = vsel %vm6348, %v3385, 0
        %v7209 = vsel %vm6348, %v3386, 0
        %v7211 = vsel %vm6348, %v3387, 0
        %v7213 = vsel %vm6348, %v3388, 0
        %v7215 = vsel %vm6348, %v3389, 0
        %v7217 = vsel %vm6348, %v3390, 0
        %v7219 = vsel %vm6348, %v3391, 0
        %v7221 = vsel %vm6348, %v3392, 0
        %v7223 = vsel %vm6348, %v3393, 0
        %v7225 = vsel %vm6348, %v3394, 0
        %v7227 = vsel %vm6348, %v3395, 0
        %v7229 = vsel %vm6348, %v3396, 0
        %v7231 = vsel %vm6348, %v3397, 0
        %v7233 = vsel %vm6348, %v3398, 0
        %v7235 = vsel %vm6348, %v3399, 0
        %v7237 = vsel %vm6348, %v3400, 0
        %v7239 = vsel %vm6348, %v3401, 0
        %v7241 = vsel %vm6348, %v3402, 0
        %v7243 = vsel %vm6348, %v3403, 0
        %v7245 = vsel %vm6348, %v3404, 0
        %v7247 = vsel %vm6348, %v3405, 0
        %v7249 = vsel %vm6348, %v3406, 0
        %v7251 = vsel %vm6348, %v3407, 0
        %v7253 = vsel %vm6348, %v3408, 0
        %v7255 = vsel %vm6348, %v3409, 0
        %v7257 = vsel %vm6348, %v3410, 0
        %v7259 = vsel %vm6348, %v3411, 0
        %v7261 = vsel %vm6348, %v3412, 0
        %v7263 = vsel %vm6348, %v3413, 0
        %v7265 = vsel %vm6348, %v3414, 0
        %v7267 = vsel %vm6348, %v3415, 0
        %v7269 = vsel %vm6348, %v3416, 0
        %v7271 = vsel %vm6348, %v3417, 0
        %v7273 = vsel %vm6348, %v3418, 0
        %v7275 = vsel %vm6348, %v3419, 0
        %v7277 = vsel %vm6348, %v3420, 0
        %v7279 = vsel %vm6348, %v3421, 0
        %v7281 = vsel %vm6348, %v3422, 0
        %v7283 = vsel %vm6348, %v3423, 0
        %v7285 = vsel %vm6348, %v3424, 0
        %v7287 = vsel %vm6348, %v3425, 0
        %v7289 = vsel %vm6348, %v3426, 0
        %v7291 = vsel %vm6348, %v3427, 0
        %v7293 = vsel %vm6348, %v3428, 0
        %v7295 = vsel %vm6348, %v3429, 0
        %v7297 = vsel %vm6348, %v3430, 0
        %v7299 = vsel %vm6348, %v3431, 0
        %v7301 = vsel %vm6348, %v3432, 0
        %v7303 = vsel %vm6348, %v3433, 0
        %v7305 = vsel %vm6348, %v3434, 0
        %v7307 = vsel %vm6348, %v3435, 0
        %v7309 = vsel %vm6348, %v3436, 0
        %v7311 = vsel %vm6348, %v3437, 0
        %v7313 = vsel %vm6348, %v3438, 0
        %v7315 = vsel %vm6348, %v3439, 0
        %v7317 = vsel %vm6348, %v3440, 0
        %v7319 = vsel %vm6348, %v3441, 0
        %v7321 = vsel %vm6348, %v3442, 0
        %v7323 = vsel %vm6348, %v3443, 0
        %v7325 = vsel %vm6348, %v3444, 0
        %v7328 = vsel %vm6348, %v3445, 0
        %v7331 = vsel %vm6348, %v3446, 0
        %v7334 = vsel %vm6348, %v3447, 0
        %v7337 = vsel %vm6348, %v3448, 0
        %v7340 = vsel %vm6348, %v3449, 0
        %v7343 = vsel %vm6348, %v3450, 0
        %v7346 = vsel %vm6348, %v3451, 0
        %v7349 = vsel %vm6348, %v3452, 0
        %v7352 = vsel %vm6348, %v3453, 0
        %v7355 = vsel %vm6348, %v3454, 0
        %v7358 = vsel %vm6348, %v3455, 0
        %v7361 = vsel %vm6348, %v3456, 0
        %v7364 = vsel %vm6348, %v3457, 0
        %v7367 = vsel %vm6348, %v3458, 0
        %v7370 = vsel %vm6348, %v3459, 0
        %v7373 = vsel %vm6348, %v3460, 0
        %v7376 = vsel %vm6348, %v3461, 0
        %v7379 = vsel %vm6348, %v3462, 0
        %v7382 = vsel %vm6348, %v3463, 0
        %v7385 = vsel %vm6348, %v3464, 0
        %v7388 = vsel %vm6348, %v3465, 0
        %v7391 = vsel %vm6348, %v3466, 0
        %v7394 = vsel %vm6348, %v3467, 0
        %v7397 = vsel %vm6348, %v3468, 0
        %v7400 = vsel %vm6348, %v3469, 0
        %v7403 = vsel %vm6348, %v3470, 0
        %v7406 = vsel %vm6348, %v3471, 0
        %v7409 = vsel %vm6348, %v3472, 0
        %v7412 = vsel %vm6348, %v3473, 0
        %v7415 = vsel %vm6348, %v3474, 0
        %v7418 = vsel %vm6348, %v3475, 0
        %v7421 = vsel %vm6348, %v3476, 0
        %7423 = vmatprep.subr.bf16.mxu0 0
        %7424 = vmatpush1.bf16.msra.mxu0 %v7186
        %7425 = vmatprep.subr.bf16.mxu0 0
        %7426 = vmatpush1.bf16.msra.mxu0 %v7185
        %7427 = vmatprep.subr.bf16.mxu0 0
        %7428 = vmatpush1.bf16.msra.mxu0 %v7184
        %7429 = vmatprep.subr.bf16.mxu0 0
        %7430 = vmatpush1.bf16.msra.mxu0 %v7183
        %7431 = vmatprep.subr.bf16.mxu0 0
        %7432 = vmatpush1.bf16.msra.mxu0 %v7182
        %7433 = vmatprep.subr.bf16.mxu0 0
        %7434 = vmatpush1.bf16.msra.mxu0 %v7181
        %7435 = vmatprep.subr.bf16.mxu0 0
        %7436 = vmatpush1.bf16.msra.mxu0 %v7180
        %7437 = vmatprep.subr.bf16.mxu0 0
        %7438 = vmatpush1.bf16.msra.mxu0 %v7179
        %7439 = vmatprep.subr.bf16.mxu0 0
        %7440 = vmatpush2.bf16.msra.mxu0 0
        %7441 = vmatprep.subr.bf16.mxu0 0
        %7442 = vmatpush2.bf16.msra.mxu0 0
        %7443 = vmatprep.subr.bf16.mxu0 0
        %7444 = vmatpush2.bf16.msra.mxu0 0
        %7445 = vmatprep.subr.bf16.mxu0 0
        %7446 = vmatpush2.bf16.msra.mxu0 0
        %7447 = vmatprep.subr.bf16.mxu0 0
        %7448 = vmatpush2.bf16.msra.mxu0 0
        %7449 = vmatprep.subr.bf16.mxu0 0
        %7450 = vmatpush2.bf16.msra.mxu0 0
        %7451 = vmatprep.subr.bf16.mxu0 0
        %7452 = vmatpush2.bf16.msra.mxu0 %v7188
        %7453 = vmatprep.subr.bf16.mxu0 0
        %7454 = vmatpush2.bf16.msra.mxu0 %v7187
        %7455 = vmatprep.mubr.bf16.mxu0 %v7199
        %7456 = vmatmul.mubr.bf16.gmra.mxu0 %v6832
        %v7457 = vpop.f32.mrf.mxu0
        %v7458 = vadd.f32 0.0, %v7457
        %v7459 = vpop.f32.mrf.mxu0
        %v7460 = vpop.f32.mrf.mxu0
        %v7461 = vadd.f32 0.0, %v7460
        %v7462 = vpop.f32.mrf.mxu0
        %7463 = vmatprep.mubr.bf16.mxu0 %v7201
        %7464 = vmatmul.mubr.bf16.gmra.mxu0 %v6835
        %v7465 = vpop.f32.mrf.mxu0
        %v7466 = vadd.f32 0.0, %v7465
        %v7467 = vpop.f32.mrf.mxu0
        %v7468 = vpop.f32.mrf.mxu0
        %v7469 = vadd.f32 0.0, %v7468
        %v7470 = vpop.f32.mrf.mxu0
        %7471 = vmatprep.mubr.bf16.mxu0 %v7203
        %7472 = vmatmul.mubr.bf16.gmra.mxu0 %v6838
        %v7473 = vpop.f32.mrf.mxu0
        %v7474 = vadd.f32 0.0, %v7473
        %v7475 = vpop.f32.mrf.mxu0
        %v7476 = vpop.f32.mrf.mxu0
        %v7477 = vadd.f32 0.0, %v7476
        %v7478 = vpop.f32.mrf.mxu0
        %7479 = vmatprep.mubr.bf16.mxu0 %v7205
        %7480 = vmatmul.mubr.bf16.gmra.mxu0 %v6841
        %v7481 = vpop.f32.mrf.mxu0
        %v7482 = vadd.f32 0.0, %v7481
        %v7483 = vpop.f32.mrf.mxu0
        %v7484 = vpop.f32.mrf.mxu0
        %v7485 = vadd.f32 0.0, %v7484
        %v7486 = vpop.f32.mrf.mxu0
        %7487 = vmatprep.mubr.bf16.mxu0 %v7207
        %7488 = vmatmul.mubr.bf16.gmra.mxu0 %v6844
        %v7489 = vpop.f32.mrf.mxu0
        %v7490 = vadd.f32 0.0, %v7489
        %v7491 = vpop.f32.mrf.mxu0
        %v7492 = vpop.f32.mrf.mxu0
        %v7493 = vadd.f32 0.0, %v7492
        %v7494 = vpop.f32.mrf.mxu0
        %7495 = vmatprep.mubr.bf16.mxu0 %v7209
        %7496 = vmatmul.mubr.bf16.gmra.mxu0 %v6847
        %v7497 = vpop.f32.mrf.mxu0
        %v7498 = vadd.f32 0.0, %v7497
        %v7499 = vpop.f32.mrf.mxu0
        %v7500 = vpop.f32.mrf.mxu0
        %v7501 = vadd.f32 0.0, %v7500
        %v7502 = vpop.f32.mrf.mxu0
        %7503 = vmatprep.mubr.bf16.mxu0 %v7211
        %7504 = vmatmul.mubr.bf16.gmra.mxu0 %v6850
        %v7505 = vpop.f32.mrf.mxu0
        %v7506 = vadd.f32 0.0, %v7505
        %v7507 = vpop.f32.mrf.mxu0
        %v7508 = vpop.f32.mrf.mxu0
        %v7509 = vadd.f32 0.0, %v7508
        %v7510 = vpop.f32.mrf.mxu0
        %7511 = vmatprep.mubr.bf16.mxu0 %v7213
        %7512 = vmatmul.mubr.bf16.gmra.mxu0 %v6853
        %v7513 = vpop.f32.mrf.mxu0
        %v7514 = vadd.f32 0.0, %v7513
        %v7515 = vpop.f32.mrf.mxu0
        %v7516 = vpop.f32.mrf.mxu0
        %v7517 = vadd.f32 0.0, %v7516
        %v7518 = vpop.f32.mrf.mxu0
        %7519 = vmatprep.mubr.bf16.mxu0 %v7215
        %7520 = vmatmul.mubr.bf16.gmra.mxu0 %v6856
        %v7521 = vpop.f32.mrf.mxu0
        %v7522 = vadd.f32 0.0, %v7521
        %v7523 = vpop.f32.mrf.mxu0
        %v7524 = vpop.f32.mrf.mxu0
        %v7525 = vadd.f32 0.0, %v7524
        %v7526 = vpop.f32.mrf.mxu0
        %7527 = vmatprep.mubr.bf16.mxu0 %v7217
        %7528 = vmatmul.mubr.bf16.gmra.mxu0 %v6859
        %v7529 = vpop.f32.mrf.mxu0
        %v7530 = vadd.f32 0.0, %v7529
        %v7531 = vpop.f32.mrf.mxu0
        %v7532 = vpop.f32.mrf.mxu0
        %v7533 = vadd.f32 0.0, %v7532
        %v7534 = vpop.f32.mrf.mxu0
        %7535 = vmatprep.mubr.bf16.mxu0 %v7219
        %7536 = vmatmul.mubr.bf16.gmra.mxu0 %v6862
        %v7537 = vpop.f32.mrf.mxu0
        %v7538 = vadd.f32 0.0, %v7537
        %v7539 = vpop.f32.mrf.mxu0
        %v7540 = vpop.f32.mrf.mxu0
        %v7541 = vadd.f32 0.0, %v7540
        %v7542 = vpop.f32.mrf.mxu0
        %7543 = vmatprep.mubr.bf16.mxu0 %v7221
        %7544 = vmatmul.mubr.bf16.gmra.mxu0 %v6865
        %v7545 = vpop.f32.mrf.mxu0
        %v7546 = vadd.f32 0.0, %v7545
        %v7547 = vpop.f32.mrf.mxu0
        %v7548 = vpop.f32.mrf.mxu0
        %v7549 = vadd.f32 0.0, %v7548
        %v7550 = vpop.f32.mrf.mxu0
        %7551 = vmatprep.mubr.bf16.mxu0 %v7223
        %7552 = vmatmul.mubr.bf16.gmra.mxu0 %v6868
        %v7553 = vpop.f32.mrf.mxu0
        %v7554 = vadd.f32 0.0, %v7553
        %v7555 = vpop.f32.mrf.mxu0
        %v7556 = vpop.f32.mrf.mxu0
        %v7557 = vadd.f32 0.0, %v7556
        %v7558 = vpop.f32.mrf.mxu0
        %7559 = vmatprep.mubr.bf16.mxu0 %v7225
        %7560 = vmatmul.mubr.bf16.gmra.mxu0 %v6871
        %v7561 = vpop.f32.mrf.mxu0
        %v7562 = vadd.f32 0.0, %v7561
        %v7563 = vpop.f32.mrf.mxu0
        %v7564 = vpop.f32.mrf.mxu0
        %v7565 = vadd.f32 0.0, %v7564
        %v7566 = vpop.f32.mrf.mxu0
        %7567 = vmatprep.mubr.bf16.mxu0 %v7227
        %7568 = vmatmul.mubr.bf16.gmra.mxu0 %v6874
        %v7569 = vpop.f32.mrf.mxu0
        %v7570 = vadd.f32 0.0, %v7569
        %v7571 = vpop.f32.mrf.mxu0
        %v7572 = vpop.f32.mrf.mxu0
        %v7573 = vadd.f32 0.0, %v7572
        %v7574 = vpop.f32.mrf.mxu0
        %7575 = vmatprep.mubr.bf16.mxu0 %v7229
        %7576 = vmatmul.mubr.bf16.gmra.mxu0 %v6877
        %v7577 = vpop.f32.mrf.mxu0
        %v7578 = vadd.f32 0.0, %v7577
        %v7579 = vpop.f32.mrf.mxu0
        %v7580 = vpop.f32.mrf.mxu0
        %v7581 = vadd.f32 0.0, %v7580
        %v7582 = vpop.f32.mrf.mxu0
        %7583 = vmatprep.mubr.bf16.mxu0 %v7231
        %7584 = vmatmul.mubr.bf16.gmra.mxu0 %v6880
        %v7585 = vpop.f32.mrf.mxu0
        %v7586 = vadd.f32 0.0, %v7585
        %v7587 = vpop.f32.mrf.mxu0
        %v7588 = vpop.f32.mrf.mxu0
        %v7589 = vadd.f32 0.0, %v7588
        %v7590 = vpop.f32.mrf.mxu0
        %7591 = vmatprep.mubr.bf16.mxu0 %v7233
        %7592 = vmatmul.mubr.bf16.gmra.mxu0 %v6883
        %v7593 = vpop.f32.mrf.mxu0
        %v7594 = vadd.f32 0.0, %v7593
        %v7595 = vpop.f32.mrf.mxu0
        %v7596 = vpop.f32.mrf.mxu0
        %v7597 = vadd.f32 0.0, %v7596
        %v7598 = vpop.f32.mrf.mxu0
        %7599 = vmatprep.mubr.bf16.mxu0 %v7235
        %7600 = vmatmul.mubr.bf16.gmra.mxu0 %v6886
        %v7601 = vpop.f32.mrf.mxu0
        %v7602 = vadd.f32 0.0, %v7601
        %v7603 = vpop.f32.mrf.mxu0
        %v7604 = vpop.f32.mrf.mxu0
        %v7605 = vadd.f32 0.0, %v7604
        %v7606 = vpop.f32.mrf.mxu0
        %7607 = vmatprep.mubr.bf16.mxu0 %v7237
        %7608 = vmatmul.mubr.bf16.gmra.mxu0 %v6889
        %v7609 = vpop.f32.mrf.mxu0
        %v7610 = vadd.f32 0.0, %v7609
        %v7611 = vpop.f32.mrf.mxu0
        %v7612 = vpop.f32.mrf.mxu0
        %v7613 = vadd.f32 0.0, %v7612
        %v7614 = vpop.f32.mrf.mxu0
        %7615 = vmatprep.mubr.bf16.mxu0 %v7239
        %7616 = vmatmul.mubr.bf16.gmra.mxu0 %v6892
        %v7617 = vpop.f32.mrf.mxu0
        %v7618 = vadd.f32 0.0, %v7617
        %v7619 = vpop.f32.mrf.mxu0
        %v7620 = vpop.f32.mrf.mxu0
        %v7621 = vadd.f32 0.0, %v7620
        %v7622 = vpop.f32.mrf.mxu0
        %7623 = vmatprep.mubr.bf16.mxu0 %v7241
        %7624 = vmatmul.mubr.bf16.gmra.mxu0 %v6895
        %v7625 = vpop.f32.mrf.mxu0
        %v7626 = vadd.f32 0.0, %v7625
        %v7627 = vpop.f32.mrf.mxu0
        %v7628 = vpop.f32.mrf.mxu0
        %v7629 = vadd.f32 0.0, %v7628
        %v7630 = vpop.f32.mrf.mxu0
        %7631 = vmatprep.mubr.bf16.mxu0 %v7243
        %7632 = vmatmul.mubr.bf16.gmra.mxu0 %v6898
        %v7633 = vpop.f32.mrf.mxu0
        %v7634 = vadd.f32 0.0, %v7633
        %v7635 = vpop.f32.mrf.mxu0
        %v7636 = vpop.f32.mrf.mxu0
        %v7637 = vadd.f32 0.0, %v7636
        %v7638 = vpop.f32.mrf.mxu0
        %7639 = vmatprep.mubr.bf16.mxu0 %v7245
        %7640 = vmatmul.mubr.bf16.gmra.mxu0 %v6901
        %v7641 = vpop.f32.mrf.mxu0
        %v7642 = vadd.f32 0.0, %v7641
        %v7643 = vpop.f32.mrf.mxu0
        %v7644 = vpop.f32.mrf.mxu0
        %v7645 = vadd.f32 0.0, %v7644
        %v7646 = vpop.f32.mrf.mxu0
        %7647 = vmatprep.mubr.bf16.mxu0 %v7247
        %7648 = vmatmul.mubr.bf16.gmra.mxu0 %v6904
        %v7649 = vpop.f32.mrf.mxu0
        %v7650 = vadd.f32 0.0, %v7649
        %v7651 = vpop.f32.mrf.mxu0
        %v7652 = vpop.f32.mrf.mxu0
        %v7653 = vadd.f32 0.0, %v7652
        %v7654 = vpop.f32.mrf.mxu0
        %7655 = vmatprep.mubr.bf16.mxu0 %v7249
        %7656 = vmatmul.mubr.bf16.gmra.mxu0 %v6907
        %v7657 = vpop.f32.mrf.mxu0
        %v7658 = vadd.f32 0.0, %v7657
        %v7659 = vpop.f32.mrf.mxu0
        %v7660 = vpop.f32.mrf.mxu0
        %v7661 = vadd.f32 0.0, %v7660
        %v7662 = vpop.f32.mrf.mxu0
        %7663 = vmatprep.mubr.bf16.mxu0 %v7251
        %7664 = vmatmul.mubr.bf16.gmra.mxu0 %v6910
        %v7665 = vpop.f32.mrf.mxu0
        %v7666 = vadd.f32 0.0, %v7665
        %v7667 = vpop.f32.mrf.mxu0
        %v7668 = vpop.f32.mrf.mxu0
        %v7669 = vadd.f32 0.0, %v7668
        %v7670 = vpop.f32.mrf.mxu0
        %7671 = vmatprep.mubr.bf16.mxu0 %v7253
        %7672 = vmatmul.mubr.bf16.gmra.mxu0 %v6913
        %v7673 = vpop.f32.mrf.mxu0
        %v7674 = vadd.f32 0.0, %v7673
        %v7675 = vpop.f32.mrf.mxu0
        %v7676 = vpop.f32.mrf.mxu0
        %v7677 = vadd.f32 0.0, %v7676
        %v7678 = vpop.f32.mrf.mxu0
        %7679 = vmatprep.mubr.bf16.mxu0 %v7255
        %7680 = vmatmul.mubr.bf16.gmra.mxu0 %v6916
        %v7681 = vpop.f32.mrf.mxu0
        %v7682 = vadd.f32 0.0, %v7681
        %v7683 = vpop.f32.mrf.mxu0
        %v7684 = vpop.f32.mrf.mxu0
        %v7685 = vadd.f32 0.0, %v7684
        %v7686 = vpop.f32.mrf.mxu0
        %7687 = vmatprep.mubr.bf16.mxu0 %v7257
        %7688 = vmatmul.mubr.bf16.gmra.mxu0 %v6919
        %v7689 = vpop.f32.mrf.mxu0
        %v7690 = vadd.f32 0.0, %v7689
        %v7691 = vpop.f32.mrf.mxu0
        %v7692 = vpop.f32.mrf.mxu0
        %v7693 = vadd.f32 0.0, %v7692
        %v7694 = vpop.f32.mrf.mxu0
        %7695 = vmatprep.mubr.bf16.mxu0 %v7259
        %7696 = vmatmul.mubr.bf16.gmra.mxu0 %v6922
        %v7697 = vpop.f32.mrf.mxu0
        %v7698 = vadd.f32 0.0, %v7697
        %v7699 = vpop.f32.mrf.mxu0
        %v7700 = vpop.f32.mrf.mxu0
        %v7701 = vadd.f32 0.0, %v7700
        %v7702 = vpop.f32.mrf.mxu0
        %7703 = vmatprep.mubr.bf16.mxu0 %v7261
        %7704 = vmatmul.mubr.bf16.gmra.mxu0 %v6925
        %v7705 = vpop.f32.mrf.mxu0
        %v7706 = vadd.f32 0.0, %v7705
        %v7707 = vpop.f32.mrf.mxu0
        %v7708 = vpop.f32.mrf.mxu0
        %v7709 = vadd.f32 0.0, %v7708
        %v7710 = vpop.f32.mrf.mxu0
        %7711 = vmatprep.mubr.bf16.mxu0 %v7263
        %7712 = vmatmul.mubr.bf16.gmra.mxu0 %v6928
        %v7713 = vpop.f32.mrf.mxu0
        %v7714 = vadd.f32 0.0, %v7713
        %v7715 = vpop.f32.mrf.mxu0
        %v7716 = vpop.f32.mrf.mxu0
        %v7717 = vadd.f32 0.0, %v7716
        %v7718 = vpop.f32.mrf.mxu0
        %7719 = vmatprep.mubr.bf16.mxu0 %v7265
        %7720 = vmatmul.mubr.bf16.gmra.mxu0 %v6931
        %v7721 = vpop.f32.mrf.mxu0
        %v7722 = vadd.f32 0.0, %v7721
        %v7723 = vpop.f32.mrf.mxu0
        %v7724 = vpop.f32.mrf.mxu0
        %v7725 = vadd.f32 0.0, %v7724
        %v7726 = vpop.f32.mrf.mxu0
        %7727 = vmatprep.mubr.bf16.mxu0 %v7267
        %7728 = vmatmul.mubr.bf16.gmra.mxu0 %v6934
        %v7729 = vpop.f32.mrf.mxu0
        %v7730 = vadd.f32 0.0, %v7729
        %v7731 = vpop.f32.mrf.mxu0
        %v7732 = vpop.f32.mrf.mxu0
        %v7733 = vadd.f32 0.0, %v7732
        %v7734 = vpop.f32.mrf.mxu0
        %7735 = vmatprep.mubr.bf16.mxu0 %v7269
        %7736 = vmatmul.mubr.bf16.gmra.mxu0 %v6937
        %v7737 = vpop.f32.mrf.mxu0
        %v7738 = vadd.f32 0.0, %v7737
        %v7739 = vpop.f32.mrf.mxu0
        %v7740 = vpop.f32.mrf.mxu0
        %v7741 = vadd.f32 0.0, %v7740
        %v7742 = vpop.f32.mrf.mxu0
        %7743 = vmatprep.mubr.bf16.mxu0 %v7271
        %7744 = vmatmul.mubr.bf16.gmra.mxu0 %v6940
        %v7745 = vpop.f32.mrf.mxu0
        %v7746 = vadd.f32 0.0, %v7745
        %v7747 = vpop.f32.mrf.mxu0
        %v7748 = vpop.f32.mrf.mxu0
        %v7749 = vadd.f32 0.0, %v7748
        %v7750 = vpop.f32.mrf.mxu0
        %7751 = vmatprep.mubr.bf16.mxu0 %v7273
        %7752 = vmatmul.mubr.bf16.gmra.mxu0 %v6943
        %v7753 = vpop.f32.mrf.mxu0
        %v7754 = vadd.f32 0.0, %v7753
        %v7755 = vpop.f32.mrf.mxu0
        %v7756 = vpop.f32.mrf.mxu0
        %v7757 = vadd.f32 0.0, %v7756
        %v7758 = vpop.f32.mrf.mxu0
        %7759 = vmatprep.mubr.bf16.mxu0 %v7275
        %7760 = vmatmul.mubr.bf16.gmra.mxu0 %v6946
        %v7761 = vpop.f32.mrf.mxu0
        %v7762 = vadd.f32 0.0, %v7761
        %v7763 = vpop.f32.mrf.mxu0
        %v7764 = vpop.f32.mrf.mxu0
        %v7765 = vadd.f32 0.0, %v7764
        %v7766 = vpop.f32.mrf.mxu0
        %7767 = vmatprep.mubr.bf16.mxu0 %v7277
        %7768 = vmatmul.mubr.bf16.gmra.mxu0 %v6949
        %v7769 = vpop.f32.mrf.mxu0
        %v7770 = vadd.f32 0.0, %v7769
        %v7771 = vpop.f32.mrf.mxu0
        %v7772 = vpop.f32.mrf.mxu0
        %v7773 = vadd.f32 0.0, %v7772
        %v7774 = vpop.f32.mrf.mxu0
        %7775 = vmatprep.mubr.bf16.mxu0 %v7279
        %7776 = vmatmul.mubr.bf16.gmra.mxu0 %v6952
        %v7777 = vpop.f32.mrf.mxu0
        %v7778 = vadd.f32 0.0, %v7777
        %v7779 = vpop.f32.mrf.mxu0
        %v7780 = vpop.f32.mrf.mxu0
        %v7781 = vadd.f32 0.0, %v7780
        %v7782 = vpop.f32.mrf.mxu0
        %7783 = vmatprep.mubr.bf16.mxu0 %v7281
        %7784 = vmatmul.mubr.bf16.gmra.mxu0 %v6955
        %v7785 = vpop.f32.mrf.mxu0
        %v7786 = vadd.f32 0.0, %v7785
        %v7787 = vpop.f32.mrf.mxu0
        %v7788 = vpop.f32.mrf.mxu0
        %v7789 = vadd.f32 0.0, %v7788
        %v7790 = vpop.f32.mrf.mxu0
        %7791 = vmatprep.mubr.bf16.mxu0 %v7283
        %7792 = vmatmul.mubr.bf16.gmra.mxu0 %v6958
        %v7793 = vpop.f32.mrf.mxu0
        %v7794 = vadd.f32 0.0, %v7793
        %v7795 = vpop.f32.mrf.mxu0
        %v7796 = vpop.f32.mrf.mxu0
        %v7797 = vadd.f32 0.0, %v7796
        %v7798 = vpop.f32.mrf.mxu0
        %7799 = vmatprep.mubr.bf16.mxu0 %v7285
        %7800 = vmatmul.mubr.bf16.gmra.mxu0 %v6961
        %v7801 = vpop.f32.mrf.mxu0
        %v7802 = vadd.f32 0.0, %v7801
        %v7803 = vpop.f32.mrf.mxu0
        %v7804 = vpop.f32.mrf.mxu0
        %v7805 = vadd.f32 0.0, %v7804
        %v7806 = vpop.f32.mrf.mxu0
        %7807 = vmatprep.mubr.bf16.mxu0 %v7287
        %7808 = vmatmul.mubr.bf16.gmra.mxu0 %v6964
        %v7809 = vpop.f32.mrf.mxu0
        %v7810 = vadd.f32 0.0, %v7809
        %v7811 = vpop.f32.mrf.mxu0
        %v7812 = vpop.f32.mrf.mxu0
        %v7813 = vadd.f32 0.0, %v7812
        %v7814 = vpop.f32.mrf.mxu0
        %7815 = vmatprep.mubr.bf16.mxu0 %v7289
        %7816 = vmatmul.mubr.bf16.gmra.mxu0 %v6967
        %v7817 = vpop.f32.mrf.mxu0
        %v7818 = vadd.f32 0.0, %v7817
        %v7819 = vpop.f32.mrf.mxu0
        %v7820 = vpop.f32.mrf.mxu0
        %v7821 = vadd.f32 0.0, %v7820
        %v7822 = vpop.f32.mrf.mxu0
        %7823 = vmatprep.mubr.bf16.mxu0 %v7291
        %7824 = vmatmul.mubr.bf16.gmra.mxu0 %v6970
        %v7825 = vpop.f32.mrf.mxu0
        %v7826 = vadd.f32 0.0, %v7825
        %v7827 = vpop.f32.mrf.mxu0
        %v7828 = vpop.f32.mrf.mxu0
        %v7829 = vadd.f32 0.0, %v7828
        %v7830 = vpop.f32.mrf.mxu0
        %7831 = vmatprep.mubr.bf16.mxu0 %v7293
        %7832 = vmatmul.mubr.bf16.gmra.mxu0 %v6973
        %v7833 = vpop.f32.mrf.mxu0
        %v7834 = vadd.f32 0.0, %v7833
        %v7835 = vpop.f32.mrf.mxu0
        %v7836 = vpop.f32.mrf.mxu0
        %v7837 = vadd.f32 0.0, %v7836
        %v7838 = vpop.f32.mrf.mxu0
        %7839 = vmatprep.mubr.bf16.mxu0 %v7295
        %7840 = vmatmul.mubr.bf16.gmra.mxu0 %v6976
        %v7841 = vpop.f32.mrf.mxu0
        %v7842 = vadd.f32 0.0, %v7841
        %v7843 = vpop.f32.mrf.mxu0
        %v7844 = vpop.f32.mrf.mxu0
        %v7845 = vadd.f32 0.0, %v7844
        %v7846 = vpop.f32.mrf.mxu0
        %7847 = vmatprep.mubr.bf16.mxu0 %v7297
        %7848 = vmatmul.mubr.bf16.gmra.mxu0 %v6979
        %v7849 = vpop.f32.mrf.mxu0
        %v7850 = vadd.f32 0.0, %v7849
        %v7851 = vpop.f32.mrf.mxu0
        %v7852 = vpop.f32.mrf.mxu0
        %v7853 = vadd.f32 0.0, %v7852
        %v7854 = vpop.f32.mrf.mxu0
        %7855 = vmatprep.mubr.bf16.mxu0 %v7299
        %7856 = vmatmul.mubr.bf16.gmra.mxu0 %v6982
        %v7857 = vpop.f32.mrf.mxu0
        %v7858 = vadd.f32 0.0, %v7857
        %v7859 = vpop.f32.mrf.mxu0
        %v7860 = vpop.f32.mrf.mxu0
        %v7861 = vadd.f32 0.0, %v7860
        %v7862 = vpop.f32.mrf.mxu0
        %7863 = vmatprep.mubr.bf16.mxu0 %v7301
        %7864 = vmatmul.mubr.bf16.gmra.mxu0 %v6985
        %v7865 = vpop.f32.mrf.mxu0
        %v7866 = vadd.f32 0.0, %v7865
        %v7867 = vpop.f32.mrf.mxu0
        %v7868 = vpop.f32.mrf.mxu0
        %v7869 = vadd.f32 0.0, %v7868
        %v7870 = vpop.f32.mrf.mxu0
        %7871 = vmatprep.mubr.bf16.mxu0 %v7303
        %7872 = vmatmul.mubr.bf16.gmra.mxu0 %v6988
        %v7873 = vpop.f32.mrf.mxu0
        %v7874 = vadd.f32 0.0, %v7873
        %v7875 = vpop.f32.mrf.mxu0
        %v7876 = vpop.f32.mrf.mxu0
        %v7877 = vadd.f32 0.0, %v7876
        %v7878 = vpop.f32.mrf.mxu0
        %7879 = vmatprep.mubr.bf16.mxu0 %v7305
        %7880 = vmatmul.mubr.bf16.gmra.mxu0 %v6991
        %v7881 = vpop.f32.mrf.mxu0
        %v7882 = vadd.f32 0.0, %v7881
        %v7883 = vpop.f32.mrf.mxu0
        %v7884 = vpop.f32.mrf.mxu0
        %v7885 = vadd.f32 0.0, %v7884
        %v7886 = vpop.f32.mrf.mxu0
        %7887 = vmatprep.mubr.bf16.mxu0 %v7307
        %7888 = vmatmul.mubr.bf16.gmra.mxu0 %v6994
        %v7889 = vpop.f32.mrf.mxu0
        %v7890 = vadd.f32 0.0, %v7889
        %v7891 = vpop.f32.mrf.mxu0
        %v7892 = vpop.f32.mrf.mxu0
        %v7893 = vadd.f32 0.0, %v7892
        %v7894 = vpop.f32.mrf.mxu0
        %7895 = vmatprep.mubr.bf16.mxu0 %v7309
        %7896 = vmatmul.mubr.bf16.gmra.mxu0 %v6997
        %v7897 = vpop.f32.mrf.mxu0
        %v7898 = vadd.f32 0.0, %v7897
        %v7899 = vpop.f32.mrf.mxu0
        %v7900 = vpop.f32.mrf.mxu0
        %v7901 = vadd.f32 0.0, %v7900
        %v7902 = vpop.f32.mrf.mxu0
        %7903 = vmatprep.mubr.bf16.mxu0 %v7311
        %7904 = vmatmul.mubr.bf16.gmra.mxu0 %v7000
        %v7905 = vpop.f32.mrf.mxu0
        %v7906 = vadd.f32 0.0, %v7905
        %v7907 = vpop.f32.mrf.mxu0
        %v7908 = vpop.f32.mrf.mxu0
        %v7909 = vadd.f32 0.0, %v7908
        %v7910 = vpop.f32.mrf.mxu0
        %7911 = vmatprep.mubr.bf16.mxu0 %v7313
        %7912 = vmatmul.mubr.bf16.gmra.mxu0 %v7003
        %v7913 = vpop.f32.mrf.mxu0
        %v7914 = vadd.f32 0.0, %v7913
        %v7915 = vpop.f32.mrf.mxu0
        %v7916 = vpop.f32.mrf.mxu0
        %v7917 = vadd.f32 0.0, %v7916
        %v7918 = vpop.f32.mrf.mxu0
        %7919 = vmatprep.mubr.bf16.mxu0 %v7315
        %7920 = vmatmul.mubr.bf16.gmra.mxu0 %v7006
        %v7921 = vpop.f32.mrf.mxu0
        %v7922 = vadd.f32 0.0, %v7921
        %v7923 = vpop.f32.mrf.mxu0
        %v7924 = vpop.f32.mrf.mxu0
        %v7925 = vadd.f32 0.0, %v7924
        %v7926 = vpop.f32.mrf.mxu0
        %7927 = vmatprep.mubr.bf16.mxu0 %v7317
        %7928 = vmatmul.mubr.bf16.gmra.mxu0 %v7009
        %v7929 = vpop.f32.mrf.mxu0
        %v7930 = vadd.f32 0.0, %v7929
        %v7931 = vpop.f32.mrf.mxu0
        %v7932 = vpop.f32.mrf.mxu0
        %v7933 = vadd.f32 0.0, %v7932
        %v7934 = vpop.f32.mrf.mxu0
        %7935 = vmatprep.mubr.bf16.mxu0 %v7319
        %7936 = vmatmul.mubr.bf16.gmra.mxu0 %v7012
        %v7937 = vpop.f32.mrf.mxu0
        %v7938 = vadd.f32 0.0, %v7937
        %v7939 = vpop.f32.mrf.mxu0
        %v7940 = vpop.f32.mrf.mxu0
        %v7941 = vadd.f32 0.0, %v7940
        %v7942 = vpop.f32.mrf.mxu0
        %7943 = vmatprep.mubr.bf16.mxu0 %v7321
        %7944 = vmatmul.mubr.bf16.gmra.mxu0 %v7015
        %v7945 = vpop.f32.mrf.mxu0
        %v7946 = vadd.f32 0.0, %v7945
        %v7947 = vpop.f32.mrf.mxu0
        %v7948 = vpop.f32.mrf.mxu0
        %v7949 = vadd.f32 0.0, %v7948
        %v7950 = vpop.f32.mrf.mxu0
        %7951 = vmatprep.mubr.bf16.mxu0 %v7323
        %7952 = vmatmul.mubr.bf16.gmra.mxu0 %v7018
        %v7953 = vpop.f32.mrf.mxu0
        %v7954 = vadd.f32 0.0, %v7953
        %v7955 = vpop.f32.mrf.mxu0
        %v7956 = vpop.f32.mrf.mxu0
        %v7957 = vadd.f32 0.0, %v7956
        %v7958 = vpop.f32.mrf.mxu0
        %7959 = vmatprep.mubr.bf16.mxu0 %v7325
        %7960 = vmatmul.mubr.bf16.gmra.mxu0 %v7021
        %v7961 = vpop.f32.mrf.mxu0
        %v7962 = vadd.f32 0.0, %v7961
        %v7963 = vpop.f32.mrf.mxu0
        %v7964 = vpop.f32.mrf.mxu0
        %v7965 = vadd.f32 0.0, %v7964
        %v7966 = vpop.f32.mrf.mxu0
        %7967 = vmatprep.mubr.bf16.mxu0 %v7328
        %7968 = vmatmul.mubr.bf16.gmra.mxu0 %v7024
        %v7969 = vpop.f32.mrf.mxu0
        %v7970 = vadd.f32 0.0, %v7969
        %v7971 = vpop.f32.mrf.mxu0
        %v7972 = vpop.f32.mrf.mxu0
        %v7973 = vadd.f32 0.0, %v7972
        %v7974 = vpop.f32.mrf.mxu0
        %7975 = vmatprep.mubr.bf16.mxu0 %v7331
        %7976 = vmatmul.mubr.bf16.gmra.mxu0 %v7027
        %v7977 = vpop.f32.mrf.mxu0
        %v7978 = vadd.f32 0.0, %v7977
        %v7979 = vpop.f32.mrf.mxu0
        %v7980 = vpop.f32.mrf.mxu0
        %v7981 = vadd.f32 0.0, %v7980
        %v7982 = vpop.f32.mrf.mxu0
        %7983 = vmatprep.mubr.bf16.mxu0 %v7334
        %7984 = vmatmul.mubr.bf16.gmra.mxu0 %v7030
        %v7985 = vpop.f32.mrf.mxu0
        %v7986 = vadd.f32 0.0, %v7985
        %v7987 = vpop.f32.mrf.mxu0
        %v7988 = vpop.f32.mrf.mxu0
        %v7989 = vadd.f32 0.0, %v7988
        %v7990 = vpop.f32.mrf.mxu0
        %7991 = vmatprep.mubr.bf16.mxu0 %v7337
        %7992 = vmatmul.mubr.bf16.gmra.mxu0 %v7033
        %v7993 = vpop.f32.mrf.mxu0
        %v7994 = vadd.f32 0.0, %v7993
        %v7995 = vpop.f32.mrf.mxu0
        %v7996 = vpop.f32.mrf.mxu0
        %v7997 = vadd.f32 0.0, %v7996
        %v7998 = vpop.f32.mrf.mxu0
        %7999 = vmatprep.mubr.bf16.mxu0 %v7340
        %8000 = vmatmul.mubr.bf16.gmra.mxu0 %v7036
        %v8001 = vpop.f32.mrf.mxu0
        %v8002 = vadd.f32 0.0, %v8001
        %v8003 = vpop.f32.mrf.mxu0
        %v8004 = vpop.f32.mrf.mxu0
        %v8005 = vadd.f32 0.0, %v8004
        %v8006 = vpop.f32.mrf.mxu0
        %8007 = vmatprep.mubr.bf16.mxu0 %v7343
        %8008 = vmatmul.mubr.bf16.gmra.mxu0 %v7039
        %v8009 = vpop.f32.mrf.mxu0
        %v8010 = vadd.f32 0.0, %v8009
        %v8011 = vpop.f32.mrf.mxu0
        %v8012 = vpop.f32.mrf.mxu0
        %v8013 = vadd.f32 0.0, %v8012
        %v8014 = vpop.f32.mrf.mxu0
        %8015 = vmatprep.mubr.bf16.mxu0 %v7346
        %8016 = vmatmul.mubr.bf16.gmra.mxu0 %v7042
        %v8017 = vpop.f32.mrf.mxu0
        %v8018 = vadd.f32 0.0, %v8017
        %v8019 = vpop.f32.mrf.mxu0
        %v8020 = vpop.f32.mrf.mxu0
        %v8021 = vadd.f32 0.0, %v8020
        %v8022 = vpop.f32.mrf.mxu0
        %8023 = vmatprep.mubr.bf16.mxu0 %v7349
        %8024 = vmatmul.mubr.bf16.gmra.mxu0 %v7045
        %v8025 = vpop.f32.mrf.mxu0
        %v8026 = vadd.f32 0.0, %v8025
        %v8027 = vpop.f32.mrf.mxu0
        %v8028 = vpop.f32.mrf.mxu0
        %v8029 = vadd.f32 0.0, %v8028
        %v8030 = vpop.f32.mrf.mxu0
        %8031 = vmatprep.mubr.bf16.mxu0 %v7352
        %8032 = vmatmul.mubr.bf16.gmra.mxu0 %v7048
        %v8033 = vpop.f32.mrf.mxu0
        %v8034 = vadd.f32 0.0, %v8033
        %v8035 = vpop.f32.mrf.mxu0
        %v8036 = vpop.f32.mrf.mxu0
        %v8037 = vadd.f32 0.0, %v8036
        %v8038 = vpop.f32.mrf.mxu0
        %8039 = vmatprep.mubr.bf16.mxu0 %v7355
        %8040 = vmatmul.mubr.bf16.gmra.mxu0 %v7051
        %v8041 = vpop.f32.mrf.mxu0
        %v8042 = vadd.f32 0.0, %v8041
        %v8043 = vpop.f32.mrf.mxu0
        %v8044 = vpop.f32.mrf.mxu0
        %v8045 = vadd.f32 0.0, %v8044
        %v8046 = vpop.f32.mrf.mxu0
        %8047 = vmatprep.mubr.bf16.mxu0 %v7358
        %8048 = vmatmul.mubr.bf16.gmra.mxu0 %v7054
        %v8049 = vpop.f32.mrf.mxu0
        %v8050 = vadd.f32 0.0, %v8049
        %v8051 = vpop.f32.mrf.mxu0
        %v8052 = vpop.f32.mrf.mxu0
        %v8053 = vadd.f32 0.0, %v8052
        %v8054 = vpop.f32.mrf.mxu0
        %8055 = vmatprep.mubr.bf16.mxu0 %v7361
        %8056 = vmatmul.mubr.bf16.gmra.mxu0 %v7057
        %v8057 = vpop.f32.mrf.mxu0
        %v8058 = vadd.f32 0.0, %v8057
        %v8059 = vpop.f32.mrf.mxu0
        %v8060 = vpop.f32.mrf.mxu0
        %v8061 = vadd.f32 0.0, %v8060
        %v8062 = vpop.f32.mrf.mxu0
        %8063 = vmatprep.mubr.bf16.mxu0 %v7364
        %8064 = vmatmul.mubr.bf16.gmra.mxu0 %v7060
        %v8065 = vpop.f32.mrf.mxu0
        %v8066 = vadd.f32 0.0, %v8065
        %v8067 = vpop.f32.mrf.mxu0
        %v8068 = vpop.f32.mrf.mxu0
        %v8069 = vadd.f32 0.0, %v8068
        %v8070 = vpop.f32.mrf.mxu0
        %8071 = vmatprep.mubr.bf16.mxu0 %v7367
        %8072 = vmatmul.mubr.bf16.gmra.mxu0 %v7063
        %v8073 = vpop.f32.mrf.mxu0
        %v8074 = vadd.f32 0.0, %v8073
        %v8075 = vpop.f32.mrf.mxu0
        %v8076 = vpop.f32.mrf.mxu0
        %v8077 = vadd.f32 0.0, %v8076
        %v8078 = vpop.f32.mrf.mxu0
        %8079 = vmatprep.mubr.bf16.mxu0 %v7370
        %8080 = vmatmul.mubr.bf16.gmra.mxu0 %v7066
        %v8081 = vpop.f32.mrf.mxu0
        %v8082 = vadd.f32 0.0, %v8081
        %v8083 = vpop.f32.mrf.mxu0
        %v8084 = vpop.f32.mrf.mxu0
        %v8085 = vadd.f32 0.0, %v8084
        %v8086 = vpop.f32.mrf.mxu0
        %8087 = vmatprep.mubr.bf16.mxu0 %v7373
        %8088 = vmatmul.mubr.bf16.gmra.mxu0 %v7069
        %v8089 = vpop.f32.mrf.mxu0
        %v8090 = vadd.f32 0.0, %v8089
        %v8091 = vpop.f32.mrf.mxu0
        %v8092 = vpop.f32.mrf.mxu0
        %v8093 = vadd.f32 0.0, %v8092
        %v8094 = vpop.f32.mrf.mxu0
        %8095 = vmatprep.mubr.bf16.mxu0 %v7376
        %8096 = vmatmul.mubr.bf16.gmra.mxu0 %v7072
        %v8097 = vpop.f32.mrf.mxu0
        %v8098 = vadd.f32 0.0, %v8097
        %v8099 = vpop.f32.mrf.mxu0
        %v8100 = vpop.f32.mrf.mxu0
        %v8101 = vadd.f32 0.0, %v8100
        %v8102 = vpop.f32.mrf.mxu0
        %8103 = vmatprep.mubr.bf16.mxu0 %v7379
        %8104 = vmatmul.mubr.bf16.gmra.mxu0 %v7075
        %v8105 = vpop.f32.mrf.mxu0
        %v8106 = vadd.f32 0.0, %v8105
        %v8107 = vpop.f32.mrf.mxu0
        %v8108 = vpop.f32.mrf.mxu0
        %v8109 = vadd.f32 0.0, %v8108
        %v8110 = vpop.f32.mrf.mxu0
        %8111 = vmatprep.mubr.bf16.mxu0 %v7382
        %8112 = vmatmul.mubr.bf16.gmra.mxu0 %v7078
        %v8113 = vpop.f32.mrf.mxu0
        %v8114 = vadd.f32 0.0, %v8113
        %v8115 = vpop.f32.mrf.mxu0
        %v8116 = vpop.f32.mrf.mxu0
        %v8117 = vadd.f32 0.0, %v8116
        %v8118 = vpop.f32.mrf.mxu0
        %8119 = vmatprep.mubr.bf16.mxu0 %v7385
        %8120 = vmatmul.mubr.bf16.gmra.mxu0 %v7081
        %v8121 = vpop.f32.mrf.mxu0
        %v8122 = vadd.f32 0.0, %v8121
        %v8123 = vpop.f32.mrf.mxu0
        %v8124 = vpop.f32.mrf.mxu0
        %v8125 = vadd.f32 0.0, %v8124
        %v8126 = vpop.f32.mrf.mxu0
        %8127 = vmatprep.mubr.bf16.mxu0 %v7388
        %8128 = vmatmul.mubr.bf16.gmra.mxu0 %v7084
        %v8129 = vpop.f32.mrf.mxu0
        %v8130 = vadd.f32 0.0, %v8129
        %v8131 = vpop.f32.mrf.mxu0
        %v8132 = vpop.f32.mrf.mxu0
        %v8133 = vadd.f32 0.0, %v8132
        %v8134 = vpop.f32.mrf.mxu0
        %8135 = vmatprep.mubr.bf16.mxu0 %v7391
        %8136 = vmatmul.mubr.bf16.gmra.mxu0 %v7087
        %v8137 = vpop.f32.mrf.mxu0
        %v8138 = vadd.f32 0.0, %v8137
        %v8139 = vpop.f32.mrf.mxu0
        %v8140 = vpop.f32.mrf.mxu0
        %v8141 = vadd.f32 0.0, %v8140
        %v8142 = vpop.f32.mrf.mxu0
        %8143 = vmatprep.mubr.bf16.mxu0 %v7394
        %8144 = vmatmul.mubr.bf16.gmra.mxu0 %v7090
        %v8145 = vpop.f32.mrf.mxu0
        %v8146 = vadd.f32 0.0, %v8145
        %v8147 = vpop.f32.mrf.mxu0
        %v8148 = vpop.f32.mrf.mxu0
        %v8149 = vadd.f32 0.0, %v8148
        %v8150 = vpop.f32.mrf.mxu0
        %8151 = vmatprep.mubr.bf16.mxu0 %v7397
        %8152 = vmatmul.mubr.bf16.gmra.mxu0 %v7093
        %v8153 = vpop.f32.mrf.mxu0
        %v8154 = vadd.f32 0.0, %v8153
        %v8155 = vpop.f32.mrf.mxu0
        %v8156 = vpop.f32.mrf.mxu0
        %v8157 = vadd.f32 0.0, %v8156
        %v8158 = vpop.f32.mrf.mxu0
        %8159 = vmatprep.mubr.bf16.mxu0 %v7400
        %8160 = vmatmul.mubr.bf16.gmra.mxu0 %v7096
        %v8161 = vpop.f32.mrf.mxu0
        %v8162 = vadd.f32 0.0, %v8161
        %v8163 = vpop.f32.mrf.mxu0
        %v8164 = vpop.f32.mrf.mxu0
        %v8165 = vadd.f32 0.0, %v8164
        %v8166 = vpop.f32.mrf.mxu0
        %8167 = vmatprep.mubr.bf16.mxu0 %v7403
        %8168 = vmatmul.mubr.bf16.gmra.mxu0 %v7099
        %v8169 = vpop.f32.mrf.mxu0
        %v8170 = vadd.f32 0.0, %v8169
        %v8171 = vpop.f32.mrf.mxu0
        %v8172 = vpop.f32.mrf.mxu0
        %v8173 = vadd.f32 0.0, %v8172
        %v8174 = vpop.f32.mrf.mxu0
        %8175 = vmatprep.mubr.bf16.mxu0 %v7406
        %8176 = vmatmul.mubr.bf16.gmra.mxu0 %v7102
        %v8177 = vpop.f32.mrf.mxu0
        %v8178 = vadd.f32 0.0, %v8177
        %v8179 = vpop.f32.mrf.mxu0
        %v8180 = vpop.f32.mrf.mxu0
        %v8181 = vadd.f32 0.0, %v8180
        %v8182 = vpop.f32.mrf.mxu0
        %8183 = vmatprep.mubr.bf16.mxu0 %v7409
        %8184 = vmatmul.mubr.bf16.gmra.mxu0 %v7105
        %v8185 = vpop.f32.mrf.mxu0
        %v8186 = vadd.f32 0.0, %v8185
        %v8187 = vpop.f32.mrf.mxu0
        %v8188 = vpop.f32.mrf.mxu0
        %v8189 = vadd.f32 0.0, %v8188
        %v8190 = vpop.f32.mrf.mxu0
        %8191 = vmatprep.mubr.bf16.mxu0 %v7412
        %8192 = vmatmul.mubr.bf16.gmra.mxu0 %v7108
        %v8193 = vpop.f32.mrf.mxu0
        %v8194 = vadd.f32 0.0, %v8193
        %v8195 = vpop.f32.mrf.mxu0
        %v8196 = vpop.f32.mrf.mxu0
        %v8197 = vadd.f32 0.0, %v8196
        %v8198 = vpop.f32.mrf.mxu0
        %8199 = vmatprep.mubr.bf16.mxu0 %v7415
        %8200 = vmatmul.mubr.bf16.gmra.mxu0 %v7111
        %v8201 = vpop.f32.mrf.mxu0
        %v8202 = vadd.f32 0.0, %v8201
        %v8203 = vpop.f32.mrf.mxu0
        %v8204 = vpop.f32.mrf.mxu0
        %v8205 = vadd.f32 0.0, %v8204
        %v8206 = vpop.f32.mrf.mxu0
        %8207 = vmatprep.mubr.bf16.mxu0 %v7418
        %8208 = vmatmul.mubr.bf16.gmra.mxu0 %v7114
        %v8209 = vpop.f32.mrf.mxu0
        %v8210 = vadd.f32 0.0, %v8209
        %v8211 = vpop.f32.mrf.mxu0
        %v8212 = vpop.f32.mrf.mxu0
        %v8213 = vadd.f32 0.0, %v8212
        %v8214 = vpop.f32.mrf.mxu0
        %8215 = vmatprep.mubr.bf16.mxu0 %v7421
        %8216 = vmatmul.mubr.bf16.gmra.mxu0 %v7117
        %v8217 = vpop.f32.mrf.mxu0
        %v8218 = vadd.f32 0.0, %v8217
        %v8219 = vpop.f32.mrf.mxu0
        %v8220 = vpop.f32.mrf.mxu0
        %v8221 = vadd.f32 0.0, %v8220
        %v8222 = vpop.f32.mrf.mxu0
        %8223 = vdwg.mxu0
        %v8224 = vsel %vm6637, %v7458, -inf
        %v8225 = vsel %vm6637, %v7522, -inf
        %v8226 = vmax.f32 %v8224, %v8225
        %v8227 = vsel %vm6637, %v7586, -inf
        %v8228 = vmax.f32 %v8226, %v8227
        %v8229 = vsel %vm6637, %v7650, -inf
        %v8230 = vmax.f32 %v8228, %v8229
        %v8231 = vsel %vm6637, %v7714, -inf
        %v8232 = vmax.f32 %v8230, %v8231
        %v8233 = vsel %vm6637, %v7778, -inf
        %v8234 = vmax.f32 %v8232, %v8233
        %v8235 = vsel %vm6637, %v7842, -inf
        %v8236 = vmax.f32 %v8234, %v8235
        %v8237 = vsel %vm6637, %v7906, -inf
        %v8238 = vmax.f32 %v8236, %v8237
        %v8239 = vsel %vm6637, %v7970, -inf
        %v8240 = vmax.f32 %v8238, %v8239
        %v8241 = vsel %vm6637, %v8034, -inf
        %v8242 = vmax.f32 %v8240, %v8241
        %v8243 = vsel %vm6637, %v8098, -inf
        %v8244 = vmax.f32 %v8242, %v8243
        %v8245 = vsel %vm6637, %v8162, -inf
        %v8246 = vmax.f32 %v8244, %v8245
        %v8247 = vsel %vm6637, %v7461, -inf
        %v8248 = vsel %vm6637, %v7525, -inf
        %v8249 = vmax.f32 %v8247, %v8248
        %v8250 = vsel %vm6637, %v7589, -inf
        %v8251 = vmax.f32 %v8249, %v8250
        %v8252 = vsel %vm6637, %v7653, -inf
        %v8253 = vmax.f32 %v8251, %v8252
        %v8254 = vsel %vm6637, %v7717, -inf
        %v8255 = vmax.f32 %v8253, %v8254
        %v8256 = vsel %vm6637, %v7781, -inf
        %v8257 = vmax.f32 %v8255, %v8256
        %v8258 = vsel %vm6637, %v7845, -inf
        %v8259 = vmax.f32 %v8257, %v8258
        %v8260 = vsel %vm6637, %v7909, -inf
        %v8261 = vmax.f32 %v8259, %v8260
        %v8262 = vsel %vm6637, %v7973, -inf
        %v8263 = vmax.f32 %v8261, %v8262
        %v8264 = vsel %vm6637, %v8037, -inf
        %v8265 = vmax.f32 %v8263, %v8264
        %v8266 = vsel %vm6637, %v8101, -inf
        %v8267 = vmax.f32 %v8265, %v8266
        %v8268 = vsel %vm6637, %v8165, -inf
        %v8269 = vmax.f32 %v8267, %v8268
        %v8270 = vsel %vm6637, %v7466, -inf
        %v8271 = vsel %vm6637, %v7530, -inf
        %v8272 = vmax.f32 %v8270, %v8271
        %v8273 = vsel %vm6637, %v7594, -inf
        %v8274 = vmax.f32 %v8272, %v8273
        %v8275 = vsel %vm6637, %v7658, -inf
        %v8276 = vmax.f32 %v8274, %v8275
        %v8277 = vsel %vm6637, %v7722, -inf
        %v8278 = vmax.f32 %v8276, %v8277
        %v8279 = vsel %vm6637, %v7786, -inf
        %v8280 = vmax.f32 %v8278, %v8279
        %v8281 = vsel %vm6637, %v7850, -inf
        %v8282 = vmax.f32 %v8280, %v8281
        %v8283 = vsel %vm6637, %v7914, -inf
        %v8284 = vmax.f32 %v8282, %v8283
        %v8285 = vsel %vm6637, %v7978, -inf
        %v8286 = vmax.f32 %v8284, %v8285
        %v8287 = vsel %vm6637, %v8042, -inf
        %v8288 = vmax.f32 %v8286, %v8287
        %v8289 = vsel %vm6637, %v8106, -inf
        %v8290 = vmax.f32 %v8288, %v8289
        %v8291 = vsel %vm6637, %v8170, -inf
        %v8292 = vmax.f32 %v8290, %v8291
        %v8293 = vsel %vm6637, %v7469, -inf
        %v8294 = vsel %vm6637, %v7533, -inf
        %v8295 = vmax.f32 %v8293, %v8294
        %v8296 = vsel %vm6637, %v7597, -inf
        %v8297 = vmax.f32 %v8295, %v8296
        %v8298 = vsel %vm6637, %v7661, -inf
        %v8299 = vmax.f32 %v8297, %v8298
        %v8300 = vsel %vm6637, %v7725, -inf
        %v8301 = vmax.f32 %v8299, %v8300
        %v8302 = vsel %vm6637, %v7789, -inf
        %v8303 = vmax.f32 %v8301, %v8302
        %v8304 = vsel %vm6637, %v7853, -inf
        %v8305 = vmax.f32 %v8303, %v8304
        %v8306 = vsel %vm6637, %v7917, -inf
        %v8307 = vmax.f32 %v8305, %v8306
        %v8308 = vsel %vm6637, %v7981, -inf
        %v8309 = vmax.f32 %v8307, %v8308
        %v8310 = vsel %vm6637, %v8045, -inf
        %v8311 = vmax.f32 %v8309, %v8310
        %v8312 = vsel %vm6637, %v8109, -inf
        %v8313 = vmax.f32 %v8311, %v8312
        %v8314 = vsel %vm6637, %v8173, -inf
        %v8315 = vmax.f32 %v8313, %v8314
        %v8316 = vsel %vm6637, %v7474, -inf
        %v8317 = vsel %vm6637, %v7538, -inf
        %v8318 = vmax.f32 %v8316, %v8317
        %v8319 = vsel %vm6637, %v7602, -inf
        %v8320 = vmax.f32 %v8318, %v8319
        %v8321 = vsel %vm6637, %v7666, -inf
        %v8322 = vmax.f32 %v8320, %v8321
        %v8323 = vsel %vm6637, %v7730, -inf
        %v8324 = vmax.f32 %v8322, %v8323
        %v8325 = vsel %vm6637, %v7794, -inf
        %v8326 = vmax.f32 %v8324, %v8325
        %v8327 = vsel %vm6637, %v7858, -inf
        %v8328 = vmax.f32 %v8326, %v8327
        %v8329 = vsel %vm6637, %v7922, -inf
        %v8330 = vmax.f32 %v8328, %v8329
        %v8331 = vsel %vm6637, %v7986, -inf
        %v8332 = vmax.f32 %v8330, %v8331
        %v8333 = vsel %vm6637, %v8050, -inf
        %v8334 = vmax.f32 %v8332, %v8333
        %v8335 = vsel %vm6637, %v8114, -inf
        %v8336 = vmax.f32 %v8334, %v8335
        %v8337 = vsel %vm6637, %v8178, -inf
        %v8338 = vmax.f32 %v8336, %v8337
        %v8339 = vsel %vm6637, %v7477, -inf
        %v8340 = vsel %vm6637, %v7541, -inf
        %v8341 = vmax.f32 %v8339, %v8340
        %v8342 = vsel %vm6637, %v7605, -inf
        %v8343 = vmax.f32 %v8341, %v8342
        %v8344 = vsel %vm6637, %v7669, -inf
        %v8345 = vmax.f32 %v8343, %v8344
        %v8346 = vsel %vm6637, %v7733, -inf
        %v8347 = vmax.f32 %v8345, %v8346
        %v8348 = vsel %vm6637, %v7797, -inf
        %v8349 = vmax.f32 %v8347, %v8348
        %v8350 = vsel %vm6637, %v7861, -inf
        %v8351 = vmax.f32 %v8349, %v8350
        %v8352 = vsel %vm6637, %v7925, -inf
        %v8353 = vmax.f32 %v8351, %v8352
        %v8354 = vsel %vm6637, %v7989, -inf
        %v8355 = vmax.f32 %v8353, %v8354
        %v8356 = vsel %vm6637, %v8053, -inf
        %v8357 = vmax.f32 %v8355, %v8356
        %v8358 = vsel %vm6637, %v8117, -inf
        %v8359 = vmax.f32 %v8357, %v8358
        %v8360 = vsel %vm6637, %v8181, -inf
        %v8361 = vmax.f32 %v8359, %v8360
        %v8362 = vsel %vm6637, %v7482, -inf
        %v8363 = vsel %vm6637, %v7546, -inf
        %v8364 = vmax.f32 %v8362, %v8363
        %v8365 = vsel %vm6637, %v7610, -inf
        %v8366 = vmax.f32 %v8364, %v8365
        %v8367 = vsel %vm6637, %v7674, -inf
        %v8368 = vmax.f32 %v8366, %v8367
        %v8369 = vsel %vm6637, %v7738, -inf
        %v8370 = vmax.f32 %v8368, %v8369
        %v8371 = vsel %vm6637, %v7802, -inf
        %v8372 = vmax.f32 %v8370, %v8371
        %v8373 = vsel %vm6637, %v7866, -inf
        %v8374 = vmax.f32 %v8372, %v8373
        %v8375 = vsel %vm6637, %v7930, -inf
        %v8376 = vmax.f32 %v8374, %v8375
        %v8377 = vsel %vm6637, %v7994, -inf
        %v8378 = vmax.f32 %v8376, %v8377
        %v8379 = vsel %vm6637, %v8058, -inf
        %v8380 = vmax.f32 %v8378, %v8379
        %v8381 = vsel %vm6637, %v8122, -inf
        %v8382 = vmax.f32 %v8380, %v8381
        %v8383 = vsel %vm6637, %v8186, -inf
        %v8384 = vmax.f32 %v8382, %v8383
        %v8385 = vsel %vm6637, %v7485, -inf
        %v8386 = vsel %vm6637, %v7549, -inf
        %v8387 = vmax.f32 %v8385, %v8386
        %v8388 = vsel %vm6637, %v7613, -inf
        %v8389 = vmax.f32 %v8387, %v8388
        %v8390 = vsel %vm6637, %v7677, -inf
        %v8391 = vmax.f32 %v8389, %v8390
        %v8392 = vsel %vm6637, %v7741, -inf
        %v8393 = vmax.f32 %v8391, %v8392
        %v8394 = vsel %vm6637, %v7805, -inf
        %v8395 = vmax.f32 %v8393, %v8394
        %v8396 = vsel %vm6637, %v7869, -inf
        %v8397 = vmax.f32 %v8395, %v8396
        %v8398 = vsel %vm6637, %v7933, -inf
        %v8399 = vmax.f32 %v8397, %v8398
        %v8400 = vsel %vm6637, %v7997, -inf
        %v8401 = vmax.f32 %v8399, %v8400
        %v8402 = vsel %vm6637, %v8061, -inf
        %v8403 = vmax.f32 %v8401, %v8402
        %v8404 = vsel %vm6637, %v8125, -inf
        %v8405 = vmax.f32 %v8403, %v8404
        %v8406 = vsel %vm6637, %v8189, -inf
        %v8407 = vmax.f32 %v8405, %v8406
        %v8408 = vsel %vm6637, %v7490, -inf
        %v8409 = vsel %vm6637, %v7554, -inf
        %v8410 = vmax.f32 %v8408, %v8409
        %v8411 = vsel %vm6637, %v7618, -inf
        %v8412 = vmax.f32 %v8410, %v8411
        %v8413 = vsel %vm6637, %v7682, -inf
        %v8414 = vmax.f32 %v8412, %v8413
        %v8415 = vsel %vm6637, %v7746, -inf
        %v8416 = vmax.f32 %v8414, %v8415
        %v8417 = vsel %vm6637, %v7810, -inf
        %v8418 = vmax.f32 %v8416, %v8417
        %v8419 = vsel %vm6637, %v7874, -inf
        %v8420 = vmax.f32 %v8418, %v8419
        %v8421 = vsel %vm6637, %v7938, -inf
        %v8422 = vmax.f32 %v8420, %v8421
        %v8423 = vsel %vm6637, %v8002, -inf
        %v8424 = vmax.f32 %v8422, %v8423
        %v8425 = vsel %vm6637, %v8066, -inf
        %v8426 = vmax.f32 %v8424, %v8425
        %v8427 = vsel %vm6637, %v8130, -inf
        %v8428 = vmax.f32 %v8426, %v8427
        %v8429 = vsel %vm6637, %v8194, -inf
        %v8430 = vmax.f32 %v8428, %v8429
        %v8431 = vsel %vm6637, %v7493, -inf
        %v8432 = vsel %vm6637, %v7557, -inf
        %v8433 = vmax.f32 %v8431, %v8432
        %v8434 = vsel %vm6637, %v7621, -inf
        %v8435 = vmax.f32 %v8433, %v8434
        %v8436 = vsel %vm6637, %v7685, -inf
        %v8437 = vmax.f32 %v8435, %v8436
        %v8438 = vsel %vm6637, %v7749, -inf
        %v8439 = vmax.f32 %v8437, %v8438
        %v8440 = vsel %vm6637, %v7813, -inf
        %v8441 = vmax.f32 %v8439, %v8440
        %v8442 = vsel %vm6637, %v7877, -inf
        %v8443 = vmax.f32 %v8441, %v8442
        %v8444 = vsel %vm6637, %v7941, -inf
        %v8445 = vmax.f32 %v8443, %v8444
        %v8446 = vsel %vm6637, %v8005, -inf
        %v8447 = vmax.f32 %v8445, %v8446
        %v8448 = vsel %vm6637, %v8069, -inf
        %v8449 = vmax.f32 %v8447, %v8448
        %v8450 = vsel %vm6637, %v8133, -inf
        %v8451 = vmax.f32 %v8449, %v8450
        %v8452 = vsel %vm6637, %v8197, -inf
        %v8453 = vmax.f32 %v8451, %v8452
        %v8454 = vsel %vm6637, %v7498, -inf
        %v8455 = vsel %vm6637, %v7562, -inf
        %v8456 = vmax.f32 %v8454, %v8455
        %v8457 = vsel %vm6637, %v7626, -inf
        %v8458 = vmax.f32 %v8456, %v8457
        %v8459 = vsel %vm6637, %v7690, -inf
        %v8460 = vmax.f32 %v8458, %v8459
        %v8461 = vsel %vm6637, %v7754, -inf
        %v8462 = vmax.f32 %v8460, %v8461
        %v8463 = vsel %vm6637, %v7818, -inf
        %v8464 = vmax.f32 %v8462, %v8463
        %v8465 = vsel %vm6637, %v7882, -inf
        %v8466 = vmax.f32 %v8464, %v8465
        %v8467 = vsel %vm6637, %v7946, -inf
        %v8468 = vmax.f32 %v8466, %v8467
        %v8469 = vsel %vm6637, %v8010, -inf
        %v8470 = vmax.f32 %v8468, %v8469
        %v8471 = vsel %vm6637, %v8074, -inf
        %v8472 = vmax.f32 %v8470, %v8471
        %v8473 = vsel %vm6637, %v8138, -inf
        %v8474 = vmax.f32 %v8472, %v8473
        %v8475 = vsel %vm6637, %v8202, -inf
        %v8476 = vmax.f32 %v8474, %v8475
        %v8477 = vsel %vm6637, %v7501, -inf
        %v8478 = vsel %vm6637, %v7565, -inf
        %v8479 = vmax.f32 %v8477, %v8478
        %v8480 = vsel %vm6637, %v7629, -inf
        %v8481 = vmax.f32 %v8479, %v8480
        %v8482 = vsel %vm6637, %v7693, -inf
        %v8483 = vmax.f32 %v8481, %v8482
        %v8484 = vsel %vm6637, %v7757, -inf
        %v8485 = vmax.f32 %v8483, %v8484
        %v8486 = vsel %vm6637, %v7821, -inf
        %v8487 = vmax.f32 %v8485, %v8486
        %v8488 = vsel %vm6637, %v7885, -inf
        %v8489 = vmax.f32 %v8487, %v8488
        %v8490 = vsel %vm6637, %v7949, -inf
        %v8491 = vmax.f32 %v8489, %v8490
        %v8492 = vsel %vm6637, %v8013, -inf
        %v8493 = vmax.f32 %v8491, %v8492
        %v8494 = vsel %vm6637, %v8077, -inf
        %v8495 = vmax.f32 %v8493, %v8494
        %v8496 = vsel %vm6637, %v8141, -inf
        %v8497 = vmax.f32 %v8495, %v8496
        %v8498 = vsel %vm6637, %v8205, -inf
        %v8499 = vmax.f32 %v8497, %v8498
        %v8500 = vsel %vm6637, %v7506, -inf
        %v8501 = vsel %vm6637, %v7570, -inf
        %v8502 = vmax.f32 %v8500, %v8501
        %v8503 = vsel %vm6637, %v7634, -inf
        %v8504 = vmax.f32 %v8502, %v8503
        %v8505 = vsel %vm6637, %v7698, -inf
        %v8506 = vmax.f32 %v8504, %v8505
        %v8507 = vsel %vm6637, %v7762, -inf
        %v8508 = vmax.f32 %v8506, %v8507
        %v8509 = vsel %vm6637, %v7826, -inf
        %v8510 = vmax.f32 %v8508, %v8509
        %v8511 = vsel %vm6637, %v7890, -inf
        %v8512 = vmax.f32 %v8510, %v8511
        %v8513 = vsel %vm6637, %v7954, -inf
        %v8514 = vmax.f32 %v8512, %v8513
        %v8515 = vsel %vm6637, %v8018, -inf
        %v8516 = vmax.f32 %v8514, %v8515
        %v8517 = vsel %vm6637, %v8082, -inf
        %v8518 = vmax.f32 %v8516, %v8517
        %v8519 = vsel %vm6637, %v8146, -inf
        %v8520 = vmax.f32 %v8518, %v8519
        %v8521 = vsel %vm6637, %v8210, -inf
        %v8522 = vmax.f32 %v8520, %v8521
        %v8523 = vsel %vm6637, %v7509, -inf
        %v8524 = vsel %vm6637, %v7573, -inf
        %v8525 = vmax.f32 %v8523, %v8524
        %v8526 = vsel %vm6637, %v7637, -inf
        %v8527 = vmax.f32 %v8525, %v8526
        %v8528 = vsel %vm6637, %v7701, -inf
        %v8529 = vmax.f32 %v8527, %v8528
        %v8530 = vsel %vm6637, %v7765, -inf
        %v8531 = vmax.f32 %v8529, %v8530
        %v8532 = vsel %vm6637, %v7829, -inf
        %v8533 = vmax.f32 %v8531, %v8532
        %v8534 = vsel %vm6637, %v7893, -inf
        %v8535 = vmax.f32 %v8533, %v8534
        %v8536 = vsel %vm6637, %v7957, -inf
        %v8537 = vmax.f32 %v8535, %v8536
        %v8538 = vsel %vm6637, %v8021, -inf
        %v8539 = vmax.f32 %v8537, %v8538
        %v8540 = vsel %vm6637, %v8085, -inf
        %v8541 = vmax.f32 %v8539, %v8540
        %v8542 = vsel %vm6637, %v8149, -inf
        %v8543 = vmax.f32 %v8541, %v8542
        %v8544 = vsel %vm6637, %v8213, -inf
        %v8545 = vmax.f32 %v8543, %v8544
        %v8546 = vsel %vm6637, %v7514, -inf
        %v8547 = vsel %vm6637, %v7578, -inf
        %v8548 = vmax.f32 %v8546, %v8547
        %v8549 = vsel %vm6637, %v7642, -inf
        %v8550 = vmax.f32 %v8548, %v8549
        %v8551 = vsel %vm6637, %v7706, -inf
        %v8552 = vmax.f32 %v8550, %v8551
        %v8553 = vsel %vm6637, %v7770, -inf
        %v8554 = vmax.f32 %v8552, %v8553
        %v8555 = vsel %vm6637, %v7834, -inf
        %v8556 = vmax.f32 %v8554, %v8555
        %v8557 = vsel %vm6637, %v7898, -inf
        %v8558 = vmax.f32 %v8556, %v8557
        %v8559 = vsel %vm6637, %v7962, -inf
        %v8560 = vmax.f32 %v8558, %v8559
        %v8561 = vsel %vm6637, %v8026, -inf
        %v8562 = vmax.f32 %v8560, %v8561
        %v8563 = vsel %vm6637, %v8090, -inf
        %v8564 = vmax.f32 %v8562, %v8563
        %v8565 = vsel %vm6637, %v8154, -inf
        %v8566 = vmax.f32 %v8564, %v8565
        %v8567 = vsel %vm6637, %v8218, -inf
        %v8568 = vmax.f32 %v8566, %v8567
        %v8569 = vsel %vm6637, %v7517, -inf
        %v8570 = vsel %vm6637, %v7581, -inf
        %v8571 = vmax.f32 %v8569, %v8570
        %v8572 = vsel %vm6637, %v7645, -inf
        %v8573 = vmax.f32 %v8571, %v8572
        %v8574 = vsel %vm6637, %v7709, -inf
        %v8575 = vmax.f32 %v8573, %v8574
        %v8576 = vsel %vm6637, %v7773, -inf
        %v8577 = vmax.f32 %v8575, %v8576
        %v8578 = vsel %vm6637, %v7837, -inf
        %v8579 = vmax.f32 %v8577, %v8578
        %v8580 = vsel %vm6637, %v7901, -inf
        %v8581 = vmax.f32 %v8579, %v8580
        %v8582 = vsel %vm6637, %v7965, -inf
        %v8583 = vmax.f32 %v8581, %v8582
        %v8584 = vsel %vm6637, %v8029, -inf
        %v8585 = vmax.f32 %v8583, %v8584
        %v8586 = vsel %vm6637, %v8093, -inf
        %v8587 = vmax.f32 %v8585, %v8586
        %v8588 = vsel %vm6637, %v8157, -inf
        %v8589 = vmax.f32 %v8587, %v8588
        %v8590 = vsel %vm6637, %v8221, -inf
        %v8591 = vmax.f32 %v8589, %v8590
        %v8592 = vld [vmem:[%s4] sm:$0x1]
        %v8594 = vlaneseq
        %v8595 = vshrl.u32 %v8594, 7
        %v8596 = vsub.s32 0, %v8595
        %v8597 = vrot.slane %v8592, %v8596
        %v8599 = vadd.f32 %v8246, %v8597
        %v8600 = vadd.f32 %v8269, %v8597
        %v8601 = vadd.f32 %v8292, %v8597
        %v8602 = vadd.f32 %v8315, %v8597
        %v8603 = vadd.f32 %v8338, %v8597
        %v8604 = vadd.f32 %v8361, %v8597
        %v8605 = vadd.f32 %v8384, %v8597
        %v8606 = vadd.f32 %v8407, %v8597
        %v8607 = vadd.f32 %v8430, %v8597
        %v8608 = vadd.f32 %v8453, %v8597
        %v8609 = vadd.f32 %v8476, %v8597
        %v8610 = vadd.f32 %v8499, %v8597
        %v8611 = vadd.f32 %v8522, %v8597
        %v8612 = vadd.f32 %v8545, %v8597
        %v8613 = vadd.f32 %v8568, %v8597
        %v8614 = vadd.f32 %v8591, %v8597
        %v8615 = vmax.f32 %v8599, 0.0
        %v8616 = vmax.f32 %v8600, 0.0
        %v8617 = vmax.f32 %v8601, 0.0
        %v8618 = vmax.f32 %v8602, 0.0
        %v8619 = vmax.f32 %v8603, 0.0
        %v8620 = vmax.f32 %v8604, 0.0
        %v8621 = vmax.f32 %v8605, 0.0
        %v8622 = vmax.f32 %v8606, 0.0
        %v8623 = vmax.f32 %v8607, 0.0
        %v8624 = vmax.f32 %v8608, 0.0
        %v8625 = vmax.f32 %v8609, 0.0
        %v8626 = vmax.f32 %v8610, 0.0
        %v8627 = vmax.f32 %v8611, 0.0
        %v8628 = vmax.f32 %v8612, 0.0
        %v8629 = vmax.f32 %v8613, 0.0
        %v8630 = vmax.f32 %v8614, 0.0
        %8695 = vrot.lane.b32.xlu0 %v5572, 32
        %v8696 = vpop.permute.xlu0 %8695
        %8697 = vrot.lane.b32.xlu0 %v5573, 32
        %v8698 = vpop.permute.xlu0 %8697
        %8699 = vrot.lane.b32.xlu0 %v5574, 32
        %v8700 = vpop.permute.xlu0 %8699
        %8701 = vrot.lane.b32.xlu0 %v5575, 32
        %v8702 = vpop.permute.xlu0 %8701
        %8703 = vrot.lane.b32.xlu0 %v5576, 32
        %v8704 = vpop.permute.xlu0 %8703
        %8705 = vrot.lane.b32.xlu0 %v5577, 32
        %v8706 = vpop.permute.xlu0 %8705
        %8707 = vrot.lane.b32.xlu0 %v5578, 32
        %v8708 = vpop.permute.xlu0 %8707
        %8709 = vrot.lane.b32.xlu0 %v5579, 32
        %v8710 = vpop.permute.xlu0 %8709
        %8711 = vrot.lane.b32.xlu0 %v5580, 32
        %v8712 = vpop.permute.xlu0 %8711
        %8713 = vrot.lane.b32.xlu0 %v5581, 32
        %v8714 = vpop.permute.xlu0 %8713
        %8715 = vrot.lane.b32.xlu0 %v5582, 32
        %v8716 = vpop.permute.xlu0 %8715
        %8717 = vrot.lane.b32.xlu0 %v5583, 32
        %v8718 = vpop.permute.xlu0 %8717
        %8719 = vrot.lane.b32.xlu0 %v5584, 32
        %v8720 = vpop.permute.xlu0 %8719
        %8721 = vrot.lane.b32.xlu0 %v5585, 32
        %v8722 = vpop.permute.xlu0 %8721
        %8723 = vrot.lane.b32.xlu0 %v5586, 32
        %v8724 = vpop.permute.xlu0 %8723
        %8725 = vrot.lane.b32.xlu0 %v5587, 32
        %v8726 = vpop.permute.xlu0 %8725
        %8727 = vrot.lane.b32.xlu0 %v5588, 32
        %v8728 = vpop.permute.xlu0 %8727
        %8729 = vrot.lane.b32.xlu0 %v5589, 32
        %v8730 = vpop.permute.xlu0 %8729
        %8731 = vrot.lane.b32.xlu0 %v5590, 32
        %v8732 = vpop.permute.xlu0 %8731
        %8733 = vrot.lane.b32.xlu0 %v5591, 32
        %v8734 = vpop.permute.xlu0 %8733
        %8735 = vrot.lane.b32.xlu0 %v5592, 32
        %v8736 = vpop.permute.xlu0 %8735
        %8737 = vrot.lane.b32.xlu0 %v5593, 32
        %v8738 = vpop.permute.xlu0 %8737
        %8739 = vrot.lane.b32.xlu0 %v5594, 32
        %v8740 = vpop.permute.xlu0 %8739
        %8741 = vrot.lane.b32.xlu0 %v5595, 32
        %v8742 = vpop.permute.xlu0 %8741
        %8743 = vrot.lane.b32.xlu0 %v5596, 32
        %v8744 = vpop.permute.xlu0 %8743
        %8745 = vrot.lane.b32.xlu0 %v5597, 32
        %v8746 = vpop.permute.xlu0 %8745
        %8747 = vrot.lane.b32.xlu0 %v5598, 32
        %v8748 = vpop.permute.xlu0 %8747
        %8749 = vrot.lane.b32.xlu0 %v5599, 32
        %v8750 = vpop.permute.xlu0 %8749
        %8751 = vrot.lane.b32.xlu0 %v5600, 32
        %v8752 = vpop.permute.xlu0 %8751
        %8753 = vrot.lane.b32.xlu0 %v5601, 32
        %v8754 = vpop.permute.xlu0 %8753
        %8755 = vrot.lane.b32.xlu0 %v5602, 32
        %v8756 = vpop.permute.xlu0 %8755
        %8757 = vrot.lane.b32.xlu0 %v5603, 32
        %v8758 = vpop.permute.xlu0 %8757
        %8759 = vrot.lane.b32.xlu0 %v5604, 32
        %v8760 = vpop.permute.xlu0 %8759
        %8761 = vrot.lane.b32.xlu0 %v5605, 32
        %v8762 = vpop.permute.xlu0 %8761
        %8763 = vrot.lane.b32.xlu0 %v5606, 32
        %v8764 = vpop.permute.xlu0 %8763
        %8765 = vrot.lane.b32.xlu0 %v5607, 32
        %v8766 = vpop.permute.xlu0 %8765
        %8767 = vrot.lane.b32.xlu0 %v5608, 32
        %v8768 = vpop.permute.xlu0 %8767
        %8769 = vrot.lane.b32.xlu0 %v5609, 32
        %v8770 = vpop.permute.xlu0 %8769
        %8771 = vrot.lane.b32.xlu0 %v5610, 32
        %v8772 = vpop.permute.xlu0 %8771
        %8773 = vrot.lane.b32.xlu0 %v5611, 32
        %v8774 = vpop.permute.xlu0 %8773
        %8775 = vrot.lane.b32.xlu0 %v5612, 32
        %v8776 = vpop.permute.xlu0 %8775
        %8777 = vrot.lane.b32.xlu0 %v5613, 32
        %v8778 = vpop.permute.xlu0 %8777
        %8779 = vrot.lane.b32.xlu0 %v5614, 32
        %v8780 = vpop.permute.xlu0 %8779
        %8781 = vrot.lane.b32.xlu0 %v5615, 32
        %v8782 = vpop.permute.xlu0 %8781
        %8783 = vrot.lane.b32.xlu0 %v5616, 32
        %v8784 = vpop.permute.xlu0 %8783
        %8785 = vrot.lane.b32.xlu0 %v5617, 32
        %v8786 = vpop.permute.xlu0 %8785
        %8787 = vrot.lane.b32.xlu0 %v5618, 32
        %v8788 = vpop.permute.xlu0 %8787
        %8789 = vrot.lane.b32.xlu0 %v5619, 32
        %v8790 = vpop.permute.xlu0 %8789
        %8791 = vrot.lane.b32.xlu0 %v5620, 32
        %v8792 = vpop.permute.xlu0 %8791
        %8793 = vrot.lane.b32.xlu0 %v5621, 32
        %v8794 = vpop.permute.xlu0 %8793
        %8795 = vrot.lane.b32.xlu0 %v5622, 32
        %v8796 = vpop.permute.xlu0 %8795
        %8797 = vrot.lane.b32.xlu0 %v5623, 32
        %v8798 = vpop.permute.xlu0 %8797
        %8799 = vrot.lane.b32.xlu0 %v5624, 32
        %v8800 = vpop.permute.xlu0 %8799
        %8801 = vrot.lane.b32.xlu0 %v5625, 32
        %v8802 = vpop.permute.xlu0 %8801
        %8803 = vrot.lane.b32.xlu0 %v5626, 32
        %v8804 = vpop.permute.xlu0 %8803
        %8805 = vrot.lane.b32.xlu0 %v5627, 32
        %v8806 = vpop.permute.xlu0 %8805
        %8807 = vrot.lane.b32.xlu0 %v5628, 32
        %v8808 = vpop.permute.xlu0 %8807
        %8809 = vrot.lane.b32.xlu0 %v5629, 32
        %v8810 = vpop.permute.xlu0 %8809
        %8811 = vrot.lane.b32.xlu0 %v5630, 32
        %v8812 = vpop.permute.xlu0 %8811
        %8813 = vrot.lane.b32.xlu0 %v5631, 32
        %v8814 = vpop.permute.xlu0 %8813
        %8815 = vrot.lane.b32.xlu0 %v5632, 32
        %v8816 = vpop.permute.xlu0 %8815
        %8817 = vrot.lane.b32.xlu0 %v5633, 32
        %v8818 = vpop.permute.xlu0 %8817
        %8819 = vrot.lane.b32.xlu0 %v5634, 32
        %v8820 = vpop.permute.xlu0 %8819
        %8821 = vrot.lane.b32.xlu0 %v5635, 32
        %v8822 = vpop.permute.xlu0 %8821
        %8831 = vrot.lane.b32.xlu0 %v5580, 64
        %v8832 = vpop.permute.xlu0 %8831
        %8833 = vrot.lane.b32.xlu0 %v5581, 64
        %v8834 = vpop.permute.xlu0 %8833
        %8835 = vrot.lane.b32.xlu0 %v5582, 64
        %v8836 = vpop.permute.xlu0 %8835
        %8837 = vrot.lane.b32.xlu0 %v5583, 64
        %v8838 = vpop.permute.xlu0 %8837
        %8839 = vrot.lane.b32.xlu0 %v5584, 64
        %v8840 = vpop.permute.xlu0 %8839
        %8841 = vrot.lane.b32.xlu0 %v5585, 64
        %v8842 = vpop.permute.xlu0 %8841
        %8843 = vrot.lane.b32.xlu0 %v5586, 64
        %v8844 = vpop.permute.xlu0 %8843
        %8845 = vrot.lane.b32.xlu0 %v5587, 64
        %v8846 = vpop.permute.xlu0 %8845
        %8847 = vrot.lane.b32.xlu0 %v5588, 64
        %v8848 = vpop.permute.xlu0 %8847
        %8849 = vrot.lane.b32.xlu0 %v5589, 64
        %v8850 = vpop.permute.xlu0 %8849
        %8851 = vrot.lane.b32.xlu0 %v5590, 64
        %v8852 = vpop.permute.xlu0 %8851
        %8853 = vrot.lane.b32.xlu0 %v5591, 64
        %v8854 = vpop.permute.xlu0 %8853
        %8855 = vrot.lane.b32.xlu0 %v5592, 64
        %v8856 = vpop.permute.xlu0 %8855
        %8857 = vrot.lane.b32.xlu0 %v5593, 64
        %v8858 = vpop.permute.xlu0 %8857
        %8859 = vrot.lane.b32.xlu0 %v5594, 64
        %v8860 = vpop.permute.xlu0 %8859
        %8861 = vrot.lane.b32.xlu0 %v5595, 64
        %v8862 = vpop.permute.xlu0 %8861
        %8863 = vrot.lane.b32.xlu0 %v5596, 64
        %v8864 = vpop.permute.xlu0 %8863
        %8865 = vrot.lane.b32.xlu0 %v5597, 64
        %v8866 = vpop.permute.xlu0 %8865
        %8867 = vrot.lane.b32.xlu0 %v5598, 64
        %v8868 = vpop.permute.xlu0 %8867
        %8869 = vrot.lane.b32.xlu0 %v5599, 64
        %v8870 = vpop.permute.xlu0 %8869
        %8871 = vrot.lane.b32.xlu0 %v5600, 64
        %v8872 = vpop.permute.xlu0 %8871
        %8873 = vrot.lane.b32.xlu0 %v5601, 64
        %v8874 = vpop.permute.xlu0 %8873
        %8875 = vrot.lane.b32.xlu0 %v5602, 64
        %v8876 = vpop.permute.xlu0 %8875
        %8877 = vrot.lane.b32.xlu0 %v5603, 64
        %v8878 = vpop.permute.xlu0 %8877
        %8879 = vrot.lane.b32.xlu0 %v5604, 64
        %v8880 = vpop.permute.xlu0 %8879
        %8881 = vrot.lane.b32.xlu0 %v5605, 64
        %v8882 = vpop.permute.xlu0 %8881
        %8883 = vrot.lane.b32.xlu0 %v5606, 64
        %v8884 = vpop.permute.xlu0 %8883
        %8885 = vrot.lane.b32.xlu0 %v5607, 64
        %v8886 = vpop.permute.xlu0 %8885
        %8887 = vrot.lane.b32.xlu0 %v5608, 64
        %v8888 = vpop.permute.xlu0 %8887
        %8889 = vrot.lane.b32.xlu0 %v5609, 64
        %v8890 = vpop.permute.xlu0 %8889
        %8891 = vrot.lane.b32.xlu0 %v5610, 64
        %v8892 = vpop.permute.xlu0 %8891
        %8893 = vrot.lane.b32.xlu0 %v5611, 64
        %v8894 = vpop.permute.xlu0 %8893
        %8895 = vrot.lane.b32.xlu0 %v5612, 64
        %v8896 = vpop.permute.xlu0 %8895
        %8897 = vrot.lane.b32.xlu0 %v5613, 64
        %v8898 = vpop.permute.xlu0 %8897
        %8899 = vrot.lane.b32.xlu0 %v5614, 64
        %v8900 = vpop.permute.xlu0 %8899
        %8901 = vrot.lane.b32.xlu0 %v5615, 64
        %v8902 = vpop.permute.xlu0 %8901
        %8903 = vrot.lane.b32.xlu0 %v5616, 64
        %v8904 = vpop.permute.xlu0 %8903
        %8905 = vrot.lane.b32.xlu0 %v5617, 64
        %v8906 = vpop.permute.xlu0 %8905
        %8907 = vrot.lane.b32.xlu0 %v5618, 64
        %v8908 = vpop.permute.xlu0 %8907
        %8909 = vrot.lane.b32.xlu0 %v5619, 64
        %v8910 = vpop.permute.xlu0 %8909
        %8911 = vrot.lane.b32.xlu0 %v5620, 64
        %v8912 = vpop.permute.xlu0 %8911
        %8913 = vrot.lane.b32.xlu0 %v5621, 64
        %v8914 = vpop.permute.xlu0 %8913
        %8915 = vrot.lane.b32.xlu0 %v5622, 64
        %v8916 = vpop.permute.xlu0 %8915
        %8917 = vrot.lane.b32.xlu0 %v5623, 64
        %v8918 = vpop.permute.xlu0 %8917
        %8919 = vrot.lane.b32.xlu0 %v5624, 64
        %v8920 = vpop.permute.xlu0 %8919
        %8921 = vrot.lane.b32.xlu0 %v5625, 64
        %v8922 = vpop.permute.xlu0 %8921
        %8923 = vrot.lane.b32.xlu0 %v5626, 64
        %v8924 = vpop.permute.xlu0 %8923
        %8925 = vrot.lane.b32.xlu0 %v5627, 64
        %v8926 = vpop.permute.xlu0 %8925
        %8927 = vrot.lane.b32.xlu0 %v5628, 64
        %v8928 = vpop.permute.xlu0 %8927
        %8929 = vrot.lane.b32.xlu0 %v5629, 64
        %v8930 = vpop.permute.xlu0 %8929
        %8931 = vrot.lane.b32.xlu0 %v5630, 64
        %v8932 = vpop.permute.xlu0 %8931
        %8933 = vrot.lane.b32.xlu0 %v5631, 64
        %v8934 = vpop.permute.xlu0 %8933
        %8935 = vrot.lane.b32.xlu0 %v5632, 64
        %v8936 = vpop.permute.xlu0 %8935
        %8937 = vrot.lane.b32.xlu0 %v5633, 64
        %v8938 = vpop.permute.xlu0 %8937
        %8939 = vrot.lane.b32.xlu0 %v5634, 64
        %v8940 = vpop.permute.xlu0 %8939
        %8941 = vrot.lane.b32.xlu0 %v5635, 64
        %v8942 = vpop.permute.xlu0 %8941
        %8943 = vrot.lane.b32.xlu0 %v5636, 64
        %v8944 = vpop.permute.xlu0 %8943
        %8945 = vrot.lane.b32.xlu0 %v5637, 64
        %v8946 = vpop.permute.xlu0 %8945
        %8947 = vrot.lane.b32.xlu0 %v5638, 64
        %v8948 = vpop.permute.xlu0 %8947
        %8949 = vrot.lane.b32.xlu0 %v5639, 64
        %v8950 = vpop.permute.xlu0 %8949
        %8951 = vrot.lane.b32.xlu0 %v5640, 64
        %v8952 = vpop.permute.xlu0 %8951
        %8953 = vrot.lane.b32.xlu0 %v5641, 64
        %v8954 = vpop.permute.xlu0 %8953
        %8955 = vrot.lane.b32.xlu0 %v5642, 64
        %v8956 = vpop.permute.xlu0 %8955
        %8957 = vrot.lane.b32.xlu0 %v5643, 64
        %v8958 = vpop.permute.xlu0 %8957
        %8967 = vrot.lane.b32.xlu0 %v5588, 96
        %v8968 = vpop.permute.xlu0 %8967
        %8969 = vrot.lane.b32.xlu0 %v5589, 96
        %v8970 = vpop.permute.xlu0 %8969
        %8971 = vrot.lane.b32.xlu0 %v5590, 96
        %v8972 = vpop.permute.xlu0 %8971
        %8973 = vrot.lane.b32.xlu0 %v5591, 96
        %v8974 = vpop.permute.xlu0 %8973
        %8975 = vrot.lane.b32.xlu0 %v5592, 96
        %v8976 = vpop.permute.xlu0 %8975
        %8977 = vrot.lane.b32.xlu0 %v5593, 96
        %v8978 = vpop.permute.xlu0 %8977
        %8979 = vrot.lane.b32.xlu0 %v5594, 96
        %v8980 = vpop.permute.xlu0 %8979
        %8981 = vrot.lane.b32.xlu0 %v5595, 96
        %v8982 = vpop.permute.xlu0 %8981
        %8983 = vrot.lane.b32.xlu0 %v5596, 96
        %v8984 = vpop.permute.xlu0 %8983
        %8985 = vrot.lane.b32.xlu0 %v5597, 96
        %v8986 = vpop.permute.xlu0 %8985
        %8987 = vrot.lane.b32.xlu0 %v5598, 96
        %v8988 = vpop.permute.xlu0 %8987
        %8989 = vrot.lane.b32.xlu0 %v5599, 96
        %v8990 = vpop.permute.xlu0 %8989
        %8991 = vrot.lane.b32.xlu0 %v5600, 96
        %v8992 = vpop.permute.xlu0 %8991
        %8993 = vrot.lane.b32.xlu0 %v5601, 96
        %v8994 = vpop.permute.xlu0 %8993
        %8995 = vrot.lane.b32.xlu0 %v5602, 96
        %v8996 = vpop.permute.xlu0 %8995
        %8997 = vrot.lane.b32.xlu0 %v5603, 96
        %v8998 = vpop.permute.xlu0 %8997
        %8999 = vrot.lane.b32.xlu0 %v5604, 96
        %v9000 = vpop.permute.xlu0 %8999
        %9001 = vrot.lane.b32.xlu0 %v5605, 96
        %v9002 = vpop.permute.xlu0 %9001
        %9003 = vrot.lane.b32.xlu0 %v5606, 96
        %v9004 = vpop.permute.xlu0 %9003
        %9005 = vrot.lane.b32.xlu0 %v5607, 96
        %v9006 = vpop.permute.xlu0 %9005
        %9007 = vrot.lane.b32.xlu0 %v5608, 96
        %v9008 = vpop.permute.xlu0 %9007
        %9009 = vrot.lane.b32.xlu0 %v5609, 96
        %v9010 = vpop.permute.xlu0 %9009
        %9011 = vrot.lane.b32.xlu0 %v5610, 96
        %v9012 = vpop.permute.xlu0 %9011
        %9013 = vrot.lane.b32.xlu0 %v5611, 96
        %v9014 = vpop.permute.xlu0 %9013
        %9015 = vrot.lane.b32.xlu0 %v5612, 96
        %v9016 = vpop.permute.xlu0 %9015
        %9017 = vrot.lane.b32.xlu0 %v5613, 96
        %v9018 = vpop.permute.xlu0 %9017
        %9019 = vrot.lane.b32.xlu0 %v5614, 96
        %v9020 = vpop.permute.xlu0 %9019
        %9021 = vrot.lane.b32.xlu0 %v5615, 96
        %v9022 = vpop.permute.xlu0 %9021
        %9023 = vrot.lane.b32.xlu0 %v5616, 96
        %v9024 = vpop.permute.xlu0 %9023
        %9025 = vrot.lane.b32.xlu0 %v5617, 96
        %v9026 = vpop.permute.xlu0 %9025
        %9027 = vrot.lane.b32.xlu0 %v5618, 96
        %v9028 = vpop.permute.xlu0 %9027
        %9029 = vrot.lane.b32.xlu0 %v5619, 96
        %v9030 = vpop.permute.xlu0 %9029
        %9031 = vrot.lane.b32.xlu0 %v5620, 96
        %v9032 = vpop.permute.xlu0 %9031
        %9033 = vrot.lane.b32.xlu0 %v5621, 96
        %v9034 = vpop.permute.xlu0 %9033
        %9035 = vrot.lane.b32.xlu0 %v5622, 96
        %v9036 = vpop.permute.xlu0 %9035
        %9037 = vrot.lane.b32.xlu0 %v5623, 96
        %v9038 = vpop.permute.xlu0 %9037
        %9039 = vrot.lane.b32.xlu0 %v5624, 96
        %v9040 = vpop.permute.xlu0 %9039
        %9041 = vrot.lane.b32.xlu0 %v5625, 96
        %v9042 = vpop.permute.xlu0 %9041
        %9043 = vrot.lane.b32.xlu0 %v5626, 96
        %v9044 = vpop.permute.xlu0 %9043
        %9045 = vrot.lane.b32.xlu0 %v5627, 96
        %v9046 = vpop.permute.xlu0 %9045
        %9047 = vrot.lane.b32.xlu0 %v5628, 96
        %v9048 = vpop.permute.xlu0 %9047
        %9049 = vrot.lane.b32.xlu0 %v5629, 96
        %v9050 = vpop.permute.xlu0 %9049
        %9051 = vrot.lane.b32.xlu0 %v5630, 96
        %v9052 = vpop.permute.xlu0 %9051
        %9053 = vrot.lane.b32.xlu0 %v5631, 96
        %v9054 = vpop.permute.xlu0 %9053
        %9055 = vrot.lane.b32.xlu0 %v5632, 96
        %v9056 = vpop.permute.xlu0 %9055
        %9057 = vrot.lane.b32.xlu0 %v5633, 96
        %v9058 = vpop.permute.xlu0 %9057
        %9059 = vrot.lane.b32.xlu0 %v5634, 96
        %v9060 = vpop.permute.xlu0 %9059
        %9061 = vrot.lane.b32.xlu0 %v5635, 96
        %v9062 = vpop.permute.xlu0 %9061
        %9063 = vrot.lane.b32.xlu0 %v5636, 96
        %v9064 = vpop.permute.xlu0 %9063
        %9065 = vrot.lane.b32.xlu0 %v5637, 96
        %v9066 = vpop.permute.xlu0 %9065
        %9067 = vrot.lane.b32.xlu0 %v5638, 96
        %v9068 = vpop.permute.xlu0 %9067
        %9069 = vrot.lane.b32.xlu0 %v5639, 96
        %v9070 = vpop.permute.xlu0 %9069
        %9071 = vrot.lane.b32.xlu0 %v5640, 96
        %v9072 = vpop.permute.xlu0 %9071
        %9073 = vrot.lane.b32.xlu0 %v5641, 96
        %v9074 = vpop.permute.xlu0 %9073
        %9075 = vrot.lane.b32.xlu0 %v5642, 96
        %v9076 = vpop.permute.xlu0 %9075
        %9077 = vrot.lane.b32.xlu0 %v5643, 96
        %v9078 = vpop.permute.xlu0 %9077
        %9079 = vrot.lane.b32.xlu0 %v5644, 96
        %v9080 = vpop.permute.xlu0 %9079
        %9081 = vrot.lane.b32.xlu0 %v5645, 96
        %v9082 = vpop.permute.xlu0 %9081
        %9083 = vrot.lane.b32.xlu0 %v5646, 96
        %v9084 = vpop.permute.xlu0 %9083
        %9085 = vrot.lane.b32.xlu0 %v5647, 96
        %v9086 = vpop.permute.xlu0 %9085
        %9087 = vrot.lane.b32.xlu0 %v5648, 96
        %v9088 = vpop.permute.xlu0 %9087
        %9089 = vrot.lane.b32.xlu0 %v5649, 96
        %v9090 = vpop.permute.xlu0 %9089
        %9091 = vrot.lane.b32.xlu0 %v5650, 96
        %v9092 = vpop.permute.xlu0 %9091
        %9093 = vrot.lane.b32.xlu0 %v5651, 96
        %v9094 = vpop.permute.xlu0 %9093
        %v9097 = vsel %vm6348, %v5564, %v8696
        %v9100 = vsel %vm6348, %v5565, %v8698
        %v9103 = vsel %vm6348, %v5566, %v8700
        %v9106 = vsel %vm6348, %v5567, %v8702
        %v9109 = vsel %vm6348, %v5568, %v8704
        %v9112 = vsel %vm6348, %v5569, %v8706
        %v9115 = vsel %vm6348, %v5570, %v8708
        %v9118 = vsel %vm6348, %v5571, %v8710
        %v9121 = vsel %vm6348, %v5572, %v8712
        %v9124 = vsel %vm6348, %v5573, %v8714
        %v9127 = vsel %vm6348, %v5574, %v8716
        %v9130 = vsel %vm6348, %v5575, %v8718
        %v9133 = vsel %vm6348, %v5576, %v8720
        %v9136 = vsel %vm6348, %v5577, %v8722
        %v9139 = vsel %vm6348, %v5578, %v8724
        %v9142 = vsel %vm6348, %v5579, %v8726
        %v9145 = vsel %vm6348, %v5580, %v8728
        %v9148 = vsel %vm6348, %v5581, %v8730
        %v9151 = vsel %vm6348, %v5582, %v8732
        %v9154 = vsel %vm6348, %v5583, %v8734
        %v9157 = vsel %vm6348, %v5584, %v8736
        %v9160 = vsel %vm6348, %v5585, %v8738
        %v9163 = vsel %vm6348, %v5586, %v8740
        %v9166 = vsel %vm6348, %v5587, %v8742
        %v9169 = vsel %vm6348, %v5588, %v8744
        %v9172 = vsel %vm6348, %v5589, %v8746
        %v9175 = vsel %vm6348, %v5590, %v8748
        %v9178 = vsel %vm6348, %v5591, %v8750
        %v9181 = vsel %vm6348, %v5592, %v8752
        %v9184 = vsel %vm6348, %v5593, %v8754
        %v9187 = vsel %vm6348, %v5594, %v8756
        %v9190 = vsel %vm6348, %v5595, %v8758
        %v9193 = vsel %vm6348, %v5596, %v8760
        %v9196 = vsel %vm6348, %v5597, %v8762
        %v9199 = vsel %vm6348, %v5598, %v8764
        %v9202 = vsel %vm6348, %v5599, %v8766
        %v9205 = vsel %vm6348, %v5600, %v8768
        %v9208 = vsel %vm6348, %v5601, %v8770
        %v9211 = vsel %vm6348, %v5602, %v8772
        %v9214 = vsel %vm6348, %v5603, %v8774
        %v9217 = vsel %vm6348, %v5604, %v8776
        %v9220 = vsel %vm6348, %v5605, %v8778
        %v9223 = vsel %vm6348, %v5606, %v8780
        %v9226 = vsel %vm6348, %v5607, %v8782
        %v9229 = vsel %vm6348, %v5608, %v8784
        %v9232 = vsel %vm6348, %v5609, %v8786
        %v9235 = vsel %vm6348, %v5610, %v8788
        %v9238 = vsel %vm6348, %v5611, %v8790
        %v9241 = vsel %vm6348, %v5612, %v8792
        %v9244 = vsel %vm6348, %v5613, %v8794
        %v9247 = vsel %vm6348, %v5614, %v8796
        %v9250 = vsel %vm6348, %v5615, %v8798
        %v9253 = vsel %vm6348, %v5616, %v8800
        %v9256 = vsel %vm6348, %v5617, %v8802
        %v9259 = vsel %vm6348, %v5618, %v8804
        %v9262 = vsel %vm6348, %v5619, %v8806
        %v9265 = vsel %vm6348, %v5620, %v8808
        %v9268 = vsel %vm6348, %v5621, %v8810
        %v9271 = vsel %vm6348, %v5622, %v8812
        %v9274 = vsel %vm6348, %v5623, %v8814
        %v9277 = vsel %vm6348, %v5624, %v8816
        %v9280 = vsel %vm6348, %v5625, %v8818
        %v9283 = vsel %vm6348, %v5626, %v8820
        %v9286 = vsel %vm6348, %v5627, %v8822
        %v9288 = vsel %vm6637, %v9097, %v8832
        %v9290 = vsel %vm6637, %v9100, %v8834
        %v9292 = vsel %vm6637, %v9103, %v8836
        %v9294 = vsel %vm6637, %v9106, %v8838
        %v9296 = vsel %vm6637, %v9109, %v8840
        %v9298 = vsel %vm6637, %v9112, %v8842
        %v9300 = vsel %vm6637, %v9115, %v8844
        %v9302 = vsel %vm6637, %v9118, %v8846
        %v9304 = vsel %vm6637, %v9121, %v8848
        %v9306 = vsel %vm6637, %v9124, %v8850
        %v9308 = vsel %vm6637, %v9127, %v8852
        %v9310 = vsel %vm6637, %v9130, %v8854
        %v9312 = vsel %vm6637, %v9133, %v8856
        %v9314 = vsel %vm6637, %v9136, %v8858
        %v9316 = vsel %vm6637, %v9139, %v8860
        %v9318 = vsel %vm6637, %v9142, %v8862
        %v9320 = vsel %vm6637, %v9145, %v8864
        %v9322 = vsel %vm6637, %v9148, %v8866
        %v9324 = vsel %vm6637, %v9151, %v8868
        %v9326 = vsel %vm6637, %v9154, %v8870
        %v9328 = vsel %vm6637, %v9157, %v8872
        %v9330 = vsel %vm6637, %v9160, %v8874
        %v9332 = vsel %vm6637, %v9163, %v8876
        %v9334 = vsel %vm6637, %v9166, %v8878
        %v9336 = vsel %vm6637, %v9169, %v8880
        %v9338 = vsel %vm6637, %v9172, %v8882
        %v9340 = vsel %vm6637, %v9175, %v8884
        %v9342 = vsel %vm6637, %v9178, %v8886
        %v9344 = vsel %vm6637, %v9181, %v8888
        %v9346 = vsel %vm6637, %v9184, %v8890
        %v9348 = vsel %vm6637, %v9187, %v8892
        %v9350 = vsel %vm6637, %v9190, %v8894
        %v9352 = vsel %vm6637, %v9193, %v8896
        %v9354 = vsel %vm6637, %v9196, %v8898
        %v9356 = vsel %vm6637, %v9199, %v8900
        %v9358 = vsel %vm6637, %v9202, %v8902
        %v9360 = vsel %vm6637, %v9205, %v8904
        %v9362 = vsel %vm6637, %v9208, %v8906
        %v9364 = vsel %vm6637, %v9211, %v8908
        %v9366 = vsel %vm6637, %v9214, %v8910
        %v9368 = vsel %vm6637, %v9217, %v8912
        %v9370 = vsel %vm6637, %v9220, %v8914
        %v9372 = vsel %vm6637, %v9223, %v8916
        %v9374 = vsel %vm6637, %v9226, %v8918
        %v9376 = vsel %vm6637, %v9229, %v8920
        %v9378 = vsel %vm6637, %v9232, %v8922
        %v9380 = vsel %vm6637, %v9235, %v8924
        %v9382 = vsel %vm6637, %v9238, %v8926
        %v9384 = vsel %vm6637, %v9241, %v8928
        %v9386 = vsel %vm6637, %v9244, %v8930
        %v9388 = vsel %vm6637, %v9247, %v8932
        %v9390 = vsel %vm6637, %v9250, %v8934
        %v9392 = vsel %vm6637, %v9253, %v8936
        %v9394 = vsel %vm6637, %v9256, %v8938
        %v9396 = vsel %vm6637, %v9259, %v8940
        %v9398 = vsel %vm6637, %v9262, %v8942
        %v9400 = vsel %vm6637, %v9265, %v8944
        %v9402 = vsel %vm6637, %v9268, %v8946
        %v9404 = vsel %vm6637, %v9271, %v8948
        %v9406 = vsel %vm6637, %v9274, %v8950
        %v9408 = vsel %vm6637, %v9277, %v8952
        %v9410 = vsel %vm6637, %v9280, %v8954
        %v9412 = vsel %vm6637, %v9283, %v8956
        %v9414 = vsel %vm6637, %v9286, %v8958
        %v9416 = vsel %vm6830, %v9288, %v8968
        %v9419 = vsel %vm6830, %v9290, %v8970
        %v9422 = vsel %vm6830, %v9292, %v8972
        %v9425 = vsel %vm6830, %v9294, %v8974
        %v9428 = vsel %vm6830, %v9296, %v8976
        %v9431 = vsel %vm6830, %v9298, %v8978
        %v9434 = vsel %vm6830, %v9300, %v8980
        %v9437 = vsel %vm6830, %v9302, %v8982
        %v9440 = vsel %vm6830, %v9304, %v8984
        %v9443 = vsel %vm6830, %v9306, %v8986
        %v9446 = vsel %vm6830, %v9308, %v8988
        %v9449 = vsel %vm6830, %v9310, %v8990
        %v9452 = vsel %vm6830, %v9312, %v8992
        %v9455 = vsel %vm6830, %v9314, %v8994
        %v9458 = vsel %vm6830, %v9316, %v8996
        %v9461 = vsel %vm6830, %v9318, %v8998
        %v9464 = vsel %vm6830, %v9320, %v9000
        %v9467 = vsel %vm6830, %v9322, %v9002
        %v9470 = vsel %vm6830, %v9324, %v9004
        %v9473 = vsel %vm6830, %v9326, %v9006
        %v9476 = vsel %vm6830, %v9328, %v9008
        %v9479 = vsel %vm6830, %v9330, %v9010
        %v9482 = vsel %vm6830, %v9332, %v9012
        %v9485 = vsel %vm6830, %v9334, %v9014
        %v9488 = vsel %vm6830, %v9336, %v9016
        %v9491 = vsel %vm6830, %v9338, %v9018
        %v9494 = vsel %vm6830, %v9340, %v9020
        %v9497 = vsel %vm6830, %v9342, %v9022
        %v9500 = vsel %vm6830, %v9344, %v9024
        %v9503 = vsel %vm6830, %v9346, %v9026
        %v9506 = vsel %vm6830, %v9348, %v9028
        %v9509 = vsel %vm6830, %v9350, %v9030
        %v9512 = vsel %vm6830, %v9352, %v9032
        %v9515 = vsel %vm6830, %v9354, %v9034
        %v9518 = vsel %vm6830, %v9356, %v9036
        %v9521 = vsel %vm6830, %v9358, %v9038
        %v9524 = vsel %vm6830, %v9360, %v9040
        %v9527 = vsel %vm6830, %v9362, %v9042
        %v9530 = vsel %vm6830, %v9364, %v9044
        %v9533 = vsel %vm6830, %v9366, %v9046
        %v9536 = vsel %vm6830, %v9368, %v9048
        %v9539 = vsel %vm6830, %v9370, %v9050
        %v9542 = vsel %vm6830, %v9372, %v9052
        %v9545 = vsel %vm6830, %v9374, %v9054
        %v9548 = vsel %vm6830, %v9376, %v9056
        %v9551 = vsel %vm6830, %v9378, %v9058
        %v9554 = vsel %vm6830, %v9380, %v9060
        %v9557 = vsel %vm6830, %v9382, %v9062
        %v9560 = vsel %vm6830, %v9384, %v9064
        %v9563 = vsel %vm6830, %v9386, %v9066
        %v9566 = vsel %vm6830, %v9388, %v9068
        %v9569 = vsel %vm6830, %v9390, %v9070
        %v9572 = vsel %vm6830, %v9392, %v9072
        %v9575 = vsel %vm6830, %v9394, %v9074
        %v9578 = vsel %vm6830, %v9396, %v9076
        %v9581 = vsel %vm6830, %v9398, %v9078
        %v9584 = vsel %vm6830, %v9400, %v9080
        %v9587 = vsel %vm6830, %v9402, %v9082
        %v9590 = vsel %vm6830, %v9404, %v9084
        %v9593 = vsel %vm6830, %v9406, %v9086
        %v9596 = vsel %vm6830, %v9408, %v9088
        %v9599 = vsel %vm6830, %v9410, %v9090
        %v9602 = vsel %vm6830, %v9412, %v9092
        %v9605 = vsel %vm6830, %v9414, %v9094
        %v9607 = vld [vmem:[%s5] sm:$0xf]
        %v9608 = vld [vmem:[%s5 + $0x4] sm:$0xf]
        %v9609 = vld [vmem:[%s5 + $0x8] sm:$0xf]
        %v9610 = vld [vmem:[%s5 + $0xc] sm:$0xf]
        %v9611 = vld [vmem:[%s5 + $0x10] sm:$0xf]
        %v9612 = vld [vmem:[%s5 + $0x14] sm:$0xf]
        %v9613 = vld [vmem:[%s5 + $0x18] sm:$0xf]
        %v9614 = vld [vmem:[%s5 + $0x1c] sm:$0xf]
        %v9615 = vld [vmem:[%s5 + $0x20] sm:$0xf]
        %v9616 = vld [vmem:[%s5 + $0x24] sm:$0xf]
        %v9617 = vld [vmem:[%s5 + $0x28] sm:$0xf]
        %v9618 = vld [vmem:[%s5 + $0x2c] sm:$0xf]
        %v9619 = vld [vmem:[%s5 + $0x30] sm:$0xf]
        %v9620 = vld [vmem:[%s5 + $0x34] sm:$0xf]
        %v9621 = vld [vmem:[%s5 + $0x38] sm:$0xf]
        %v9622 = vld [vmem:[%s5 + $0x3c] sm:$0xf]
        %v9623 = vld [vmem:[%s5 + $0x40] sm:$0xf]
        %v9624 = vld [vmem:[%s5 + $0x44] sm:$0xf]
        %v9625 = vld [vmem:[%s5 + $0x48] sm:$0xf]
        %v9626 = vld [vmem:[%s5 + $0x4c] sm:$0xf]
        %v9647 = vunpack.c.l.b16 %v9607
        %v9648 = vunpack.c.l.b16 %v9608
        %v9649 = vunpack.c.l.b16 %v9609
        %v9650 = vunpack.c.l.b16 %v9610
        %v9651 = vunpack.c.l.b16 %v9611
        %v9652 = vunpack.c.l.b16 %v9612
        %v9653 = vunpack.c.l.b16 %v9613
        %v9654 = vunpack.c.l.b16 %v9614
        %v9655 = vunpack.c.l.b16 %v9615
        %v9656 = vunpack.c.l.b16 %v9616
        %v9657 = vunpack.c.l.b16 %v9617
        %v9658 = vunpack.c.l.b16 %v9618
        %v9659 = vunpack.c.l.b16 %v9619
        %v9660 = vunpack.c.l.b16 %v9620
        %v9661 = vunpack.c.l.b16 %v9621
        %v9662 = vunpack.c.l.b16 %v9622
        %v9663 = vunpack.c.l.b16 %v9623
        %v9664 = vunpack.c.l.b16 %v9624
        %v9665 = vunpack.c.l.b16 %v9625
        %v9666 = vunpack.c.l.b16 %v9626
        %v9667 = vpack.c.b16 %v9648, %v9647
        %v9668 = vpack.c.b16 %v9650, %v9649
        %v9669 = vpack.c.b16 %v9652, %v9651
        %v9670 = vpack.c.b16 %v9654, %v9653
        %v9671 = vpack.c.b16 %v9656, %v9655
        %v9672 = vpack.c.b16 %v9658, %v9657
        %v9673 = vpack.c.b16 %v9660, %v9659
        %v9674 = vpack.c.b16 %v9662, %v9661
        %v9675 = vpack.c.b16 %v9664, %v9663
        %v9676 = vpack.c.b16 %v9666, %v9665
        %v9687 = vsel %vm6348, %v5596, 0
        %v9689 = vsel %vm6348, %v5597, 0
        %v9691 = vsel %vm6348, %v5598, 0
        %v9693 = vsel %vm6348, %v5599, 0
        %v9695 = vsel %vm6348, %v5600, 0
        %v9697 = vsel %vm6348, %v5601, 0
        %v9699 = vsel %vm6348, %v5602, 0
        %v9701 = vsel %vm6348, %v5603, 0
        %v9703 = vsel %vm6348, %v5604, 0
        %v9705 = vsel %vm6348, %v5605, 0
        %v9707 = vsel %vm6348, %v5606, 0
        %v9709 = vsel %vm6348, %v5607, 0
        %v9711 = vsel %vm6348, %v5608, 0
        %v9713 = vsel %vm6348, %v5609, 0
        %v9715 = vsel %vm6348, %v5610, 0
        %v9717 = vsel %vm6348, %v5611, 0
        %v9719 = vsel %vm6348, %v5612, 0
        %v9721 = vsel %vm6348, %v5613, 0
        %v9723 = vsel %vm6348, %v5614, 0
        %v9725 = vsel %vm6348, %v5615, 0
        %v9727 = vsel %vm6348, %v5616, 0
        %v9729 = vsel %vm6348, %v5617, 0
        %v9731 = vsel %vm6348, %v5618, 0
        %v9733 = vsel %vm6348, %v5619, 0
        %v9735 = vsel %vm6348, %v5620, 0
        %v9737 = vsel %vm6348, %v5621, 0
        %v9739 = vsel %vm6348, %v5622, 0
        %v9741 = vsel %vm6348, %v5623, 0
        %v9743 = vsel %vm6348, %v5624, 0
        %v9745 = vsel %vm6348, %v5625, 0
        %v9747 = vsel %vm6348, %v5626, 0
        %v9749 = vsel %vm6348, %v5627, 0
        %v9752 = vsel %vm6348, %v5628, 0
        %v9755 = vsel %vm6348, %v5629, 0
        %v9758 = vsel %vm6348, %v5630, 0
        %v9761 = vsel %vm6348, %v5631, 0
        %v9764 = vsel %vm6348, %v5632, 0
        %v9767 = vsel %vm6348, %v5633, 0
        %v9770 = vsel %vm6348, %v5634, 0
        %v9773 = vsel %vm6348, %v5635, 0
        %v9776 = vsel %vm6348, %v5636, 0
        %v9779 = vsel %vm6348, %v5637, 0
        %v9782 = vsel %vm6348, %v5638, 0
        %v9785 = vsel %vm6348, %v5639, 0
        %v9788 = vsel %vm6348, %v5640, 0
        %v9791 = vsel %vm6348, %v5641, 0
        %v9794 = vsel %vm6348, %v5642, 0
        %v9797 = vsel %vm6348, %v5643, 0
        %v9800 = vsel %vm6348, %v5644, 0
        %v9803 = vsel %vm6348, %v5645, 0
        %v9806 = vsel %vm6348, %v5646, 0
        %v9809 = vsel %vm6348, %v5647, 0
        %v9812 = vsel %vm6348, %v5648, 0
        %v9815 = vsel %vm6348, %v5649, 0
        %v9818 = vsel %vm6348, %v5650, 0
        %v9821 = vsel %vm6348, %v5651, 0
        %v9824 = vsel %vm6348, %v5652, 0
        %v9827 = vsel %vm6348, %v5653, 0
        %v9830 = vsel %vm6348, %v5654, 0
        %v9833 = vsel %vm6348, %v5655, 0
        %v9836 = vsel %vm6348, %v5656, 0
        %v9839 = vsel %vm6348, %v5657, 0
        %v9842 = vsel %vm6348, %v5658, 0
        %v9845 = vsel %vm6348, %v5659, 0
        %9847 = vmatprep.subr.bf16.mxu0 0
        %9848 = vmatpush1.bf16.msra.mxu0 %v9674
        %9849 = vmatprep.subr.bf16.mxu0 0
        %9850 = vmatpush1.bf16.msra.mxu0 %v9673
        %9851 = vmatprep.subr.bf16.mxu0 0
        %9852 = vmatpush1.bf16.msra.mxu0 %v9672
        %9853 = vmatprep.subr.bf16.mxu0 0
        %9854 = vmatpush1.bf16.msra.mxu0 %v9671
        %9855 = vmatprep.subr.bf16.mxu0 0
        %9856 = vmatpush1.bf16.msra.mxu0 %v9670
        %9857 = vmatprep.subr.bf16.mxu0 0
        %9858 = vmatpush1.bf16.msra.mxu0 %v9669
        %9859 = vmatprep.subr.bf16.mxu0 0
        %9860 = vmatpush1.bf16.msra.mxu0 %v9668
        %9861 = vmatprep.subr.bf16.mxu0 0
        %9862 = vmatpush1.bf16.msra.mxu0 %v9667
        %9863 = vmatprep.subr.bf16.mxu0 0
        %9864 = vmatpush2.bf16.msra.mxu0 0
        %9865 = vmatprep.subr.bf16.mxu0 0
        %9866 = vmatpush2.bf16.msra.mxu0 0
        %9867 = vmatprep.subr.bf16.mxu0 0
        %9868 = vmatpush2.bf16.msra.mxu0 0
        %9869 = vmatprep.subr.bf16.mxu0 0
        %9870 = vmatpush2.bf16.msra.mxu0 0
        %9871 = vmatprep.subr.bf16.mxu0 0
        %9872 = vmatpush2.bf16.msra.mxu0 0
        %9873 = vmatprep.subr.bf16.mxu0 0
        %9874 = vmatpush2.bf16.msra.mxu0 0
        %9875 = vmatprep.subr.bf16.mxu0 0
        %9876 = vmatpush2.bf16.msra.mxu0 %v9676
        %9877 = vmatprep.subr.bf16.mxu0 0
        %9878 = vmatpush2.bf16.msra.mxu0 %v9675
        %9879 = vmatprep.mubr.bf16.mxu0 %v9687
        %9880 = vmatmul.mubr.bf16.gmra.mxu0 %v9416
        %v9881 = vpop.f32.mrf.mxu0
        %v9882 = vadd.f32 0.0, %v9881
        %v9883 = vpop.f32.mrf.mxu0
        %v9884 = vpop.f32.mrf.mxu0
        %v9885 = vadd.f32 0.0, %v9884
        %v9886 = vpop.f32.mrf.mxu0
        %9887 = vmatprep.mubr.bf16.mxu0 %v9689
        %9888 = vmatmul.mubr.bf16.gmra.mxu0 %v9419
        %v9889 = vpop.f32.mrf.mxu0
        %v9890 = vadd.f32 0.0, %v9889
        %v9891 = vpop.f32.mrf.mxu0
        %v9892 = vpop.f32.mrf.mxu0
        %v9893 = vadd.f32 0.0, %v9892
        %v9894 = vpop.f32.mrf.mxu0
        %9895 = vmatprep.mubr.bf16.mxu0 %v9691
        %9896 = vmatmul.mubr.bf16.gmra.mxu0 %v9422
        %v9897 = vpop.f32.mrf.mxu0
        %v9898 = vadd.f32 0.0, %v9897
        %v9899 = vpop.f32.mrf.mxu0
        %v9900 = vpop.f32.mrf.mxu0
        %v9901 = vadd.f32 0.0, %v9900
        %v9902 = vpop.f32.mrf.mxu0
        %9903 = vmatprep.mubr.bf16.mxu0 %v9693
        %9904 = vmatmul.mubr.bf16.gmra.mxu0 %v9425
        %v9905 = vpop.f32.mrf.mxu0
        %v9906 = vadd.f32 0.0, %v9905
        %v9907 = vpop.f32.mrf.mxu0
        %v9908 = vpop.f32.mrf.mxu0
        %v9909 = vadd.f32 0.0, %v9908
        %v9910 = vpop.f32.mrf.mxu0
        %9911 = vmatprep.mubr.bf16.mxu0 %v9695
        %9912 = vmatmul.mubr.bf16.gmra.mxu0 %v9428
        %v9913 = vpop.f32.mrf.mxu0
        %v9914 = vadd.f32 0.0, %v9913
        %v9915 = vpop.f32.mrf.mxu0
        %v9916 = vpop.f32.mrf.mxu0
        %v9917 = vadd.f32 0.0, %v9916
        %v9918 = vpop.f32.mrf.mxu0
        %9919 = vmatprep.mubr.bf16.mxu0 %v9697
        %9920 = vmatmul.mubr.bf16.gmra.mxu0 %v9431
        %v9921 = vpop.f32.mrf.mxu0
        %v9922 = vadd.f32 0.0, %v9921
        %v9923 = vpop.f32.mrf.mxu0
        %v9924 = vpop.f32.mrf.mxu0
        %v9925 = vadd.f32 0.0, %v9924
        %v9926 = vpop.f32.mrf.mxu0
        %9927 = vmatprep.mubr.bf16.mxu0 %v9699
        %9928 = vmatmul.mubr.bf16.gmra.mxu0 %v9434
        %v9929 = vpop.f32.mrf.mxu0
        %v9930 = vadd.f32 0.0, %v9929
        %v9931 = vpop.f32.mrf.mxu0
        %v9932 = vpop.f32.mrf.mxu0
        %v9933 = vadd.f32 0.0, %v9932
        %v9934 = vpop.f32.mrf.mxu0
        %9935 = vmatprep.mubr.bf16.mxu0 %v9701
        %9936 = vmatmul.mubr.bf16.gmra.mxu0 %v9437
        %v9937 = vpop.f32.mrf.mxu0
        %v9938 = vadd.f32 0.0, %v9937
        %v9939 = vpop.f32.mrf.mxu0
        %v9940 = vpop.f32.mrf.mxu0
        %v9941 = vadd.f32 0.0, %v9940
        %v9942 = vpop.f32.mrf.mxu0
        %9943 = vmatprep.mubr.bf16.mxu0 %v9703
        %9944 = vmatmul.mubr.bf16.gmra.mxu0 %v9440
        %v9945 = vpop.f32.mrf.mxu0
        %v9946 = vadd.f32 0.0, %v9945
        %v9947 = vpop.f32.mrf.mxu0
        %v9948 = vpop.f32.mrf.mxu0
        %v9949 = vadd.f32 0.0, %v9948
        %v9950 = vpop.f32.mrf.mxu0
        %9951 = vmatprep.mubr.bf16.mxu0 %v9705
        %9952 = vmatmul.mubr.bf16.gmra.mxu0 %v9443
        %v9953 = vpop.f32.mrf.mxu0
        %v9954 = vadd.f32 0.0, %v9953
        %v9955 = vpop.f32.mrf.mxu0
        %v9956 = vpop.f32.mrf.mxu0
        %v9957 = vadd.f32 0.0, %v9956
        %v9958 = vpop.f32.mrf.mxu0
        %9959 = vmatprep.mubr.bf16.mxu0 %v9707
        %9960 = vmatmul.mubr.bf16.gmra.mxu0 %v9446
        %v9961 = vpop.f32.mrf.mxu0
        %v9962 = vadd.f32 0.0, %v9961
        %v9963 = vpop.f32.mrf.mxu0
        %v9964 = vpop.f32.mrf.mxu0
        %v9965 = vadd.f32 0.0, %v9964
        %v9966 = vpop.f32.mrf.mxu0
        %9967 = vmatprep.mubr.bf16.mxu0 %v9709
        %9968 = vmatmul.mubr.bf16.gmra.mxu0 %v9449
        %v9969 = vpop.f32.mrf.mxu0
        %v9970 = vadd.f32 0.0, %v9969
        %v9971 = vpop.f32.mrf.mxu0
        %v9972 = vpop.f32.mrf.mxu0
        %v9973 = vadd.f32 0.0, %v9972
        %v9974 = vpop.f32.mrf.mxu0
        %9975 = vmatprep.mubr.bf16.mxu0 %v9711
        %9976 = vmatmul.mubr.bf16.gmra.mxu0 %v9452
        %v9977 = vpop.f32.mrf.mxu0
        %v9978 = vadd.f32 0.0, %v9977
        %v9979 = vpop.f32.mrf.mxu0
        %v9980 = vpop.f32.mrf.mxu0
        %v9981 = vadd.f32 0.0, %v9980
        %v9982 = vpop.f32.mrf.mxu0
        %9983 = vmatprep.mubr.bf16.mxu0 %v9713
        %9984 = vmatmul.mubr.bf16.gmra.mxu0 %v9455
        %v9985 = vpop.f32.mrf.mxu0
        %v9986 = vadd.f32 0.0, %v9985
        %v9987 = vpop.f32.mrf.mxu0
        %v9988 = vpop.f32.mrf.mxu0
        %v9989 = vadd.f32 0.0, %v9988
        %v9990 = vpop.f32.mrf.mxu0
        %9991 = vmatprep.mubr.bf16.mxu0 %v9715
        %9992 = vmatmul.mubr.bf16.gmra.mxu0 %v9458
        %v9993 = vpop.f32.mrf.mxu0
        %v9994 = vadd.f32 0.0, %v9993
        %v9995 = vpop.f32.mrf.mxu0
        %v9996 = vpop.f32.mrf.mxu0
        %v9997 = vadd.f32 0.0, %v9996
        %v9998 = vpop.f32.mrf.mxu0
        %9999 = vmatprep.mubr.bf16.mxu0 %v9717
        %10000 = vmatmul.mubr.bf16.gmra.mxu0 %v9461
        %v10001 = vpop.f32.mrf.mxu0
        %v10002 = vadd.f32 0.0, %v10001
        %v10003 = vpop.f32.mrf.mxu0
        %v10004 = vpop.f32.mrf.mxu0
        %v10005 = vadd.f32 0.0, %v10004
        %v10006 = vpop.f32.mrf.mxu0
        %10007 = vmatprep.mubr.bf16.mxu0 %v9719
        %10008 = vmatmul.mubr.bf16.gmra.mxu0 %v9464
        %v10009 = vpop.f32.mrf.mxu0
        %v10010 = vadd.f32 0.0, %v10009
        %v10011 = vpop.f32.mrf.mxu0
        %v10012 = vpop.f32.mrf.mxu0
        %v10013 = vadd.f32 0.0, %v10012
        %v10014 = vpop.f32.mrf.mxu0
        %10015 = vmatprep.mubr.bf16.mxu0 %v9721
        %10016 = vmatmul.mubr.bf16.gmra.mxu0 %v9467
        %v10017 = vpop.f32.mrf.mxu0
        %v10018 = vadd.f32 0.0, %v10017
        %v10019 = vpop.f32.mrf.mxu0
        %v10020 = vpop.f32.mrf.mxu0
        %v10021 = vadd.f32 0.0, %v10020
        %v10022 = vpop.f32.mrf.mxu0
        %10023 = vmatprep.mubr.bf16.mxu0 %v9723
        %10024 = vmatmul.mubr.bf16.gmra.mxu0 %v9470
        %v10025 = vpop.f32.mrf.mxu0
        %v10026 = vadd.f32 0.0, %v10025
        %v10027 = vpop.f32.mrf.mxu0
        %v10028 = vpop.f32.mrf.mxu0
        %v10029 = vadd.f32 0.0, %v10028
        %v10030 = vpop.f32.mrf.mxu0
        %10031 = vmatprep.mubr.bf16.mxu0 %v9725
        %10032 = vmatmul.mubr.bf16.gmra.mxu0 %v9473
        %v10033 = vpop.f32.mrf.mxu0
        %v10034 = vadd.f32 0.0, %v10033
        %v10035 = vpop.f32.mrf.mxu0
        %v10036 = vpop.f32.mrf.mxu0
        %v10037 = vadd.f32 0.0, %v10036
        %v10038 = vpop.f32.mrf.mxu0
        %10039 = vmatprep.mubr.bf16.mxu0 %v9727
        %10040 = vmatmul.mubr.bf16.gmra.mxu0 %v9476
        %v10041 = vpop.f32.mrf.mxu0
        %v10042 = vadd.f32 0.0, %v10041
        %v10043 = vpop.f32.mrf.mxu0
        %v10044 = vpop.f32.mrf.mxu0
        %v10045 = vadd.f32 0.0, %v10044
        %v10046 = vpop.f32.mrf.mxu0
        %10047 = vmatprep.mubr.bf16.mxu0 %v9729
        %10048 = vmatmul.mubr.bf16.gmra.mxu0 %v9479
        %v10049 = vpop.f32.mrf.mxu0
        %v10050 = vadd.f32 0.0, %v10049
        %v10051 = vpop.f32.mrf.mxu0
        %v10052 = vpop.f32.mrf.mxu0
        %v10053 = vadd.f32 0.0, %v10052
        %v10054 = vpop.f32.mrf.mxu0
        %10055 = vmatprep.mubr.bf16.mxu0 %v9731
        %10056 = vmatmul.mubr.bf16.gmra.mxu0 %v9482
        %v10057 = vpop.f32.mrf.mxu0
        %v10058 = vadd.f32 0.0, %v10057
        %v10059 = vpop.f32.mrf.mxu0
        %v10060 = vpop.f32.mrf.mxu0
        %v10061 = vadd.f32 0.0, %v10060
        %v10062 = vpop.f32.mrf.mxu0
        %10063 = vmatprep.mubr.bf16.mxu0 %v9733
        %10064 = vmatmul.mubr.bf16.gmra.mxu0 %v9485
        %v10065 = vpop.f32.mrf.mxu0
        %v10066 = vadd.f32 0.0, %v10065
        %v10067 = vpop.f32.mrf.mxu0
        %v10068 = vpop.f32.mrf.mxu0
        %v10069 = vadd.f32 0.0, %v10068
        %v10070 = vpop.f32.mrf.mxu0
        %10071 = vmatprep.mubr.bf16.mxu0 %v9735
        %10072 = vmatmul.mubr.bf16.gmra.mxu0 %v9488
        %v10073 = vpop.f32.mrf.mxu0
        %v10074 = vadd.f32 0.0, %v10073
        %v10075 = vpop.f32.mrf.mxu0
        %v10076 = vpop.f32.mrf.mxu0
        %v10077 = vadd.f32 0.0, %v10076
        %v10078 = vpop.f32.mrf.mxu0
        %10079 = vmatprep.mubr.bf16.mxu0 %v9737
        %10080 = vmatmul.mubr.bf16.gmra.mxu0 %v9491
        %v10081 = vpop.f32.mrf.mxu0
        %v10082 = vadd.f32 0.0, %v10081
        %v10083 = vpop.f32.mrf.mxu0
        %v10084 = vpop.f32.mrf.mxu0
        %v10085 = vadd.f32 0.0, %v10084
        %v10086 = vpop.f32.mrf.mxu0
        %10087 = vmatprep.mubr.bf16.mxu0 %v9739
        %10088 = vmatmul.mubr.bf16.gmra.mxu0 %v9494
        %v10089 = vpop.f32.mrf.mxu0
        %v10090 = vadd.f32 0.0, %v10089
        %v10091 = vpop.f32.mrf.mxu0
        %v10092 = vpop.f32.mrf.mxu0
        %v10093 = vadd.f32 0.0, %v10092
        %v10094 = vpop.f32.mrf.mxu0
        %10095 = vmatprep.mubr.bf16.mxu0 %v9741
        %10096 = vmatmul.mubr.bf16.gmra.mxu0 %v9497
        %v10097 = vpop.f32.mrf.mxu0
        %v10098 = vadd.f32 0.0, %v10097
        %v10099 = vpop.f32.mrf.mxu0
        %v10100 = vpop.f32.mrf.mxu0
        %v10101 = vadd.f32 0.0, %v10100
        %v10102 = vpop.f32.mrf.mxu0
        %10103 = vmatprep.mubr.bf16.mxu0 %v9743
        %10104 = vmatmul.mubr.bf16.gmra.mxu0 %v9500
        %v10105 = vpop.f32.mrf.mxu0
        %v10106 = vadd.f32 0.0, %v10105
        %v10107 = vpop.f32.mrf.mxu0
        %v10108 = vpop.f32.mrf.mxu0
        %v10109 = vadd.f32 0.0, %v10108
        %v10110 = vpop.f32.mrf.mxu0
        %10111 = vmatprep.mubr.bf16.mxu0 %v9745
        %10112 = vmatmul.mubr.bf16.gmra.mxu0 %v9503
        %v10113 = vpop.f32.mrf.mxu0
        %v10114 = vadd.f32 0.0, %v10113
        %v10115 = vpop.f32.mrf.mxu0
        %v10116 = vpop.f32.mrf.mxu0
        %v10117 = vadd.f32 0.0, %v10116
        %v10118 = vpop.f32.mrf.mxu0
        %10119 = vmatprep.mubr.bf16.mxu0 %v9747
        %10120 = vmatmul.mubr.bf16.gmra.mxu0 %v9506
        %v10121 = vpop.f32.mrf.mxu0
        %v10122 = vadd.f32 0.0, %v10121
        %v10123 = vpop.f32.mrf.mxu0
        %v10124 = vpop.f32.mrf.mxu0
        %v10125 = vadd.f32 0.0, %v10124
        %v10126 = vpop.f32.mrf.mxu0
        %10127 = vmatprep.mubr.bf16.mxu0 %v9749
        %10128 = vmatmul.mubr.bf16.gmra.mxu0 %v9509
        %v10129 = vpop.f32.mrf.mxu0
        %v10130 = vadd.f32 0.0, %v10129
        %v10131 = vpop.f32.mrf.mxu0
        %v10132 = vpop.f32.mrf.mxu0
        %v10133 = vadd.f32 0.0, %v10132
        %v10134 = vpop.f32.mrf.mxu0
        %10135 = vmatprep.mubr.bf16.mxu0 %v9752
        %10136 = vmatmul.mubr.bf16.gmra.mxu0 %v9512
        %v10137 = vpop.f32.mrf.mxu0
        %v10138 = vadd.f32 0.0, %v10137
        %v10139 = vpop.f32.mrf.mxu0
        %v10140 = vpop.f32.mrf.mxu0
        %v10141 = vadd.f32 0.0, %v10140
        %v10142 = vpop.f32.mrf.mxu0
        %10143 = vmatprep.mubr.bf16.mxu0 %v9755
        %10144 = vmatmul.mubr.bf16.gmra.mxu0 %v9515
        %v10145 = vpop.f32.mrf.mxu0
        %v10146 = vadd.f32 0.0, %v10145
        %v10147 = vpop.f32.mrf.mxu0
        %v10148 = vpop.f32.mrf.mxu0
        %v10149 = vadd.f32 0.0, %v10148
        %v10150 = vpop.f32.mrf.mxu0
        %10151 = vmatprep.mubr.bf16.mxu0 %v9758
        %10152 = vmatmul.mubr.bf16.gmra.mxu0 %v9518
        %v10153 = vpop.f32.mrf.mxu0
        %v10154 = vadd.f32 0.0, %v10153
        %v10155 = vpop.f32.mrf.mxu0
        %v10156 = vpop.f32.mrf.mxu0
        %v10157 = vadd.f32 0.0, %v10156
        %v10158 = vpop.f32.mrf.mxu0
        %10159 = vmatprep.mubr.bf16.mxu0 %v9761
        %10160 = vmatmul.mubr.bf16.gmra.mxu0 %v9521
        %v10161 = vpop.f32.mrf.mxu0
        %v10162 = vadd.f32 0.0, %v10161
        %v10163 = vpop.f32.mrf.mxu0
        %v10164 = vpop.f32.mrf.mxu0
        %v10165 = vadd.f32 0.0, %v10164
        %v10166 = vpop.f32.mrf.mxu0
        %10167 = vmatprep.mubr.bf16.mxu0 %v9764
        %10168 = vmatmul.mubr.bf16.gmra.mxu0 %v9524
        %v10169 = vpop.f32.mrf.mxu0
        %v10170 = vadd.f32 0.0, %v10169
        %v10171 = vpop.f32.mrf.mxu0
        %v10172 = vpop.f32.mrf.mxu0
        %v10173 = vadd.f32 0.0, %v10172
        %v10174 = vpop.f32.mrf.mxu0
        %10175 = vmatprep.mubr.bf16.mxu0 %v9767
        %10176 = vmatmul.mubr.bf16.gmra.mxu0 %v9527
        %v10177 = vpop.f32.mrf.mxu0
        %v10178 = vadd.f32 0.0, %v10177
        %v10179 = vpop.f32.mrf.mxu0
        %v10180 = vpop.f32.mrf.mxu0
        %v10181 = vadd.f32 0.0, %v10180
        %v10182 = vpop.f32.mrf.mxu0
        %10183 = vmatprep.mubr.bf16.mxu0 %v9770
        %10184 = vmatmul.mubr.bf16.gmra.mxu0 %v9530
        %v10185 = vpop.f32.mrf.mxu0
        %v10186 = vadd.f32 0.0, %v10185
        %v10187 = vpop.f32.mrf.mxu0
        %v10188 = vpop.f32.mrf.mxu0
        %v10189 = vadd.f32 0.0, %v10188
        %v10190 = vpop.f32.mrf.mxu0
        %10191 = vmatprep.mubr.bf16.mxu0 %v9773
        %10192 = vmatmul.mubr.bf16.gmra.mxu0 %v9533
        %v10193 = vpop.f32.mrf.mxu0
        %v10194 = vadd.f32 0.0, %v10193
        %v10195 = vpop.f32.mrf.mxu0
        %v10196 = vpop.f32.mrf.mxu0
        %v10197 = vadd.f32 0.0, %v10196
        %v10198 = vpop.f32.mrf.mxu0
        %10199 = vmatprep.mubr.bf16.mxu0 %v9776
        %10200 = vmatmul.mubr.bf16.gmra.mxu0 %v9536
        %v10201 = vpop.f32.mrf.mxu0
        %v10202 = vadd.f32 0.0, %v10201
        %v10203 = vpop.f32.mrf.mxu0
        %v10204 = vpop.f32.mrf.mxu0
        %v10205 = vadd.f32 0.0, %v10204
        %v10206 = vpop.f32.mrf.mxu0
        %10207 = vmatprep.mubr.bf16.mxu0 %v9779
        %10208 = vmatmul.mubr.bf16.gmra.mxu0 %v9539
        %v10209 = vpop.f32.mrf.mxu0
        %v10210 = vadd.f32 0.0, %v10209
        %v10211 = vpop.f32.mrf.mxu0
        %v10212 = vpop.f32.mrf.mxu0
        %v10213 = vadd.f32 0.0, %v10212
        %v10214 = vpop.f32.mrf.mxu0
        %10215 = vmatprep.mubr.bf16.mxu0 %v9782
        %10216 = vmatmul.mubr.bf16.gmra.mxu0 %v9542
        %v10217 = vpop.f32.mrf.mxu0
        %v10218 = vadd.f32 0.0, %v10217
        %v10219 = vpop.f32.mrf.mxu0
        %v10220 = vpop.f32.mrf.mxu0
        %v10221 = vadd.f32 0.0, %v10220
        %v10222 = vpop.f32.mrf.mxu0
        %10223 = vmatprep.mubr.bf16.mxu0 %v9785
        %10224 = vmatmul.mubr.bf16.gmra.mxu0 %v9545
        %v10225 = vpop.f32.mrf.mxu0
        %v10226 = vadd.f32 0.0, %v10225
        %v10227 = vpop.f32.mrf.mxu0
        %v10228 = vpop.f32.mrf.mxu0
        %v10229 = vadd.f32 0.0, %v10228
        %v10230 = vpop.f32.mrf.mxu0
        %10231 = vmatprep.mubr.bf16.mxu0 %v9788
        %10232 = vmatmul.mubr.bf16.gmra.mxu0 %v9548
        %v10233 = vpop.f32.mrf.mxu0
        %v10234 = vadd.f32 0.0, %v10233
        %v10235 = vpop.f32.mrf.mxu0
        %v10236 = vpop.f32.mrf.mxu0
        %v10237 = vadd.f32 0.0, %v10236
        %v10238 = vpop.f32.mrf.mxu0
        %10239 = vmatprep.mubr.bf16.mxu0 %v9791
        %10240 = vmatmul.mubr.bf16.gmra.mxu0 %v9551
        %v10241 = vpop.f32.mrf.mxu0
        %v10242 = vadd.f32 0.0, %v10241
        %v10243 = vpop.f32.mrf.mxu0
        %v10244 = vpop.f32.mrf.mxu0
        %v10245 = vadd.f32 0.0, %v10244
        %v10246 = vpop.f32.mrf.mxu0
        %10247 = vmatprep.mubr.bf16.mxu0 %v9794
        %10248 = vmatmul.mubr.bf16.gmra.mxu0 %v9554
        %v10249 = vpop.f32.mrf.mxu0
        %v10250 = vadd.f32 0.0, %v10249
        %v10251 = vpop.f32.mrf.mxu0
        %v10252 = vpop.f32.mrf.mxu0
        %v10253 = vadd.f32 0.0, %v10252
        %v10254 = vpop.f32.mrf.mxu0
        %10255 = vmatprep.mubr.bf16.mxu0 %v9797
        %10256 = vmatmul.mubr.bf16.gmra.mxu0 %v9557
        %v10257 = vpop.f32.mrf.mxu0
        %v10258 = vadd.f32 0.0, %v10257
        %v10259 = vpop.f32.mrf.mxu0
        %v10260 = vpop.f32.mrf.mxu0
        %v10261 = vadd.f32 0.0, %v10260
        %v10262 = vpop.f32.mrf.mxu0
        %10263 = vmatprep.mubr.bf16.mxu0 %v9800
        %10264 = vmatmul.mubr.bf16.gmra.mxu0 %v9560
        %v10265 = vpop.f32.mrf.mxu0
        %v10266 = vadd.f32 0.0, %v10265
        %v10267 = vpop.f32.mrf.mxu0
        %v10268 = vpop.f32.mrf.mxu0
        %v10269 = vadd.f32 0.0, %v10268
        %v10270 = vpop.f32.mrf.mxu0
        %10271 = vmatprep.mubr.bf16.mxu0 %v9803
        %10272 = vmatmul.mubr.bf16.gmra.mxu0 %v9563
        %v10273 = vpop.f32.mrf.mxu0
        %v10274 = vadd.f32 0.0, %v10273
        %v10275 = vpop.f32.mrf.mxu0
        %v10276 = vpop.f32.mrf.mxu0
        %v10277 = vadd.f32 0.0, %v10276
        %v10278 = vpop.f32.mrf.mxu0
        %10279 = vmatprep.mubr.bf16.mxu0 %v9806
        %10280 = vmatmul.mubr.bf16.gmra.mxu0 %v9566
        %v10281 = vpop.f32.mrf.mxu0
        %v10282 = vadd.f32 0.0, %v10281
        %v10283 = vpop.f32.mrf.mxu0
        %v10284 = vpop.f32.mrf.mxu0
        %v10285 = vadd.f32 0.0, %v10284
        %v10286 = vpop.f32.mrf.mxu0
        %10287 = vmatprep.mubr.bf16.mxu0 %v9809
        %10288 = vmatmul.mubr.bf16.gmra.mxu0 %v9569
        %v10289 = vpop.f32.mrf.mxu0
        %v10290 = vadd.f32 0.0, %v10289
        %v10291 = vpop.f32.mrf.mxu0
        %v10292 = vpop.f32.mrf.mxu0
        %v10293 = vadd.f32 0.0, %v10292
        %v10294 = vpop.f32.mrf.mxu0
        %10295 = vmatprep.mubr.bf16.mxu0 %v9812
        %10296 = vmatmul.mubr.bf16.gmra.mxu0 %v9572
        %v10297 = vpop.f32.mrf.mxu0
        %v10298 = vadd.f32 0.0, %v10297
        %v10299 = vpop.f32.mrf.mxu0
        %v10300 = vpop.f32.mrf.mxu0
        %v10301 = vadd.f32 0.0, %v10300
        %v10302 = vpop.f32.mrf.mxu0
        %10303 = vmatprep.mubr.bf16.mxu0 %v9815
        %10304 = vmatmul.mubr.bf16.gmra.mxu0 %v9575
        %v10305 = vpop.f32.mrf.mxu0
        %v10306 = vadd.f32 0.0, %v10305
        %v10307 = vpop.f32.mrf.mxu0
        %v10308 = vpop.f32.mrf.mxu0
        %v10309 = vadd.f32 0.0, %v10308
        %v10310 = vpop.f32.mrf.mxu0
        %10311 = vmatprep.mubr.bf16.mxu0 %v9818
        %10312 = vmatmul.mubr.bf16.gmra.mxu0 %v9578
        %v10313 = vpop.f32.mrf.mxu0
        %v10314 = vadd.f32 0.0, %v10313
        %v10315 = vpop.f32.mrf.mxu0
        %v10316 = vpop.f32.mrf.mxu0
        %v10317 = vadd.f32 0.0, %v10316
        %v10318 = vpop.f32.mrf.mxu0
        %10319 = vmatprep.mubr.bf16.mxu0 %v9821
        %10320 = vmatmul.mubr.bf16.gmra.mxu0 %v9581
        %v10321 = vpop.f32.mrf.mxu0
        %v10322 = vadd.f32 0.0, %v10321
        %v10323 = vpop.f32.mrf.mxu0
        %v10324 = vpop.f32.mrf.mxu0
        %v10325 = vadd.f32 0.0, %v10324
        %v10326 = vpop.f32.mrf.mxu0
        %10327 = vmatprep.mubr.bf16.mxu0 %v9824
        %10328 = vmatmul.mubr.bf16.gmra.mxu0 %v9584
        %v10329 = vpop.f32.mrf.mxu0
        %v10330 = vadd.f32 0.0, %v10329
        %v10331 = vpop.f32.mrf.mxu0
        %v10332 = vpop.f32.mrf.mxu0
        %v10333 = vadd.f32 0.0, %v10332
        %v10334 = vpop.f32.mrf.mxu0
        %10335 = vmatprep.mubr.bf16.mxu0 %v9827
        %10336 = vmatmul.mubr.bf16.gmra.mxu0 %v9587
        %v10337 = vpop.f32.mrf.mxu0
        %v10338 = vadd.f32 0.0, %v10337
        %v10339 = vpop.f32.mrf.mxu0
        %v10340 = vpop.f32.mrf.mxu0
        %v10341 = vadd.f32 0.0, %v10340
        %v10342 = vpop.f32.mrf.mxu0
        %10343 = vmatprep.mubr.bf16.mxu0 %v9830
        %10344 = vmatmul.mubr.bf16.gmra.mxu0 %v9590
        %v10345 = vpop.f32.mrf.mxu0
        %v10346 = vadd.f32 0.0, %v10345
        %v10347 = vpop.f32.mrf.mxu0
        %v10348 = vpop.f32.mrf.mxu0
        %v10349 = vadd.f32 0.0, %v10348
        %v10350 = vpop.f32.mrf.mxu0
        %10351 = vmatprep.mubr.bf16.mxu0 %v9833
        %10352 = vmatmul.mubr.bf16.gmra.mxu0 %v9593
        %v10353 = vpop.f32.mrf.mxu0
        %v10354 = vadd.f32 0.0, %v10353
        %v10355 = vpop.f32.mrf.mxu0
        %v10356 = vpop.f32.mrf.mxu0
        %v10357 = vadd.f32 0.0, %v10356
        %v10358 = vpop.f32.mrf.mxu0
        %10359 = vmatprep.mubr.bf16.mxu0 %v9836
        %10360 = vmatmul.mubr.bf16.gmra.mxu0 %v9596
        %v10361 = vpop.f32.mrf.mxu0
        %v10362 = vadd.f32 0.0, %v10361
        %v10363 = vpop.f32.mrf.mxu0
        %v10364 = vpop.f32.mrf.mxu0
        %v10365 = vadd.f32 0.0, %v10364
        %v10366 = vpop.f32.mrf.mxu0
        %10367 = vmatprep.mubr.bf16.mxu0 %v9839
        %10368 = vmatmul.mubr.bf16.gmra.mxu0 %v9599
        %v10369 = vpop.f32.mrf.mxu0
        %v10370 = vadd.f32 0.0, %v10369
        %v10371 = vpop.f32.mrf.mxu0
        %v10372 = vpop.f32.mrf.mxu0
        %v10373 = vadd.f32 0.0, %v10372
        %v10374 = vpop.f32.mrf.mxu0
        %10375 = vmatprep.mubr.bf16.mxu0 %v9842
        %10376 = vmatmul.mubr.bf16.gmra.mxu0 %v9602
        %v10377 = vpop.f32.mrf.mxu0
        %v10378 = vadd.f32 0.0, %v10377
        %v10379 = vpop.f32.mrf.mxu0
        %v10380 = vpop.f32.mrf.mxu0
        %v10381 = vadd.f32 0.0, %v10380
        %v10382 = vpop.f32.mrf.mxu0
        %10383 = vmatprep.mubr.bf16.mxu0 %v9845
        %10384 = vmatmul.mubr.bf16.gmra.mxu0 %v9605
        %v10385 = vpop.f32.mrf.mxu0
        %v10386 = vadd.f32 0.0, %v10385
        %v10387 = vpop.f32.mrf.mxu0
        %v10388 = vpop.f32.mrf.mxu0
        %v10389 = vadd.f32 0.0, %v10388
        %v10390 = vpop.f32.mrf.mxu0
        %10391 = vdwg.mxu0
        %v10392 = vsel %vm6637, %v9882, -inf
        %v10393 = vsel %vm6637, %v9946, -inf
        %v10394 = vmax.f32 %v10392, %v10393
        %v10395 = vsel %vm6637, %v10010, -inf
        %v10396 = vmax.f32 %v10394, %v10395
        %v10397 = vsel %vm6637, %v10074, -inf
        %v10398 = vmax.f32 %v10396, %v10397
        %v10399 = vsel %vm6637, %v10138, -inf
        %v10400 = vmax.f32 %v10398, %v10399
        %v10401 = vsel %vm6637, %v10202, -inf
        %v10402 = vmax.f32 %v10400, %v10401
        %v10403 = vsel %vm6637, %v10266, -inf
        %v10404 = vmax.f32 %v10402, %v10403
        %v10405 = vsel %vm6637, %v10330, -inf
        %v10406 = vmax.f32 %v10404, %v10405
        %v10407 = vsel %vm6637, %v9885, -inf
        %v10408 = vsel %vm6637, %v9949, -inf
        %v10409 = vmax.f32 %v10407, %v10408
        %v10410 = vsel %vm6637, %v10013, -inf
        %v10411 = vmax.f32 %v10409, %v10410
        %v10412 = vsel %vm6637, %v10077, -inf
        %v10413 = vmax.f32 %v10411, %v10412
        %v10414 = vsel %vm6637, %v10141, -inf
        %v10415 = vmax.f32 %v10413, %v10414
        %v10416 = vsel %vm6637, %v10205, -inf
        %v10417 = vmax.f32 %v10415, %v10416
        %v10418 = vsel %vm6637, %v10269, -inf
        %v10419 = vmax.f32 %v10417, %v10418
        %v10420 = vsel %vm6637, %v10333, -inf
        %v10421 = vmax.f32 %v10419, %v10420
        %v10422 = vsel %vm6637, %v9890, -inf
        %v10423 = vsel %vm6637, %v9954, -inf
        %v10424 = vmax.f32 %v10422, %v10423
        %v10425 = vsel %vm6637, %v10018, -inf
        %v10426 = vmax.f32 %v10424, %v10425
        %v10427 = vsel %vm6637, %v10082, -inf
        %v10428 = vmax.f32 %v10426, %v10427
        %v10429 = vsel %vm6637, %v10146, -inf
        %v10430 = vmax.f32 %v10428, %v10429
        %v10431 = vsel %vm6637, %v10210, -inf
        %v10432 = vmax.f32 %v10430, %v10431
        %v10433 = vsel %vm6637, %v10274, -inf
        %v10434 = vmax.f32 %v10432, %v10433
        %v10435 = vsel %vm6637, %v10338, -inf
        %v10436 = vmax.f32 %v10434, %v10435
        %v10437 = vsel %vm6637, %v9893, -inf
        %v10438 = vsel %vm6637, %v9957, -inf
        %v10439 = vmax.f32 %v10437, %v10438
        %v10440 = vsel %vm6637, %v10021, -inf
        %v10441 = vmax.f32 %v10439, %v10440
        %v10442 = vsel %vm6637, %v10085, -inf
        %v10443 = vmax.f32 %v10441, %v10442
        %v10444 = vsel %vm6637, %v10149, -inf
        %v10445 = vmax.f32 %v10443, %v10444
        %v10446 = vsel %vm6637, %v10213, -inf
        %v10447 = vmax.f32 %v10445, %v10446
        %v10448 = vsel %vm6637, %v10277, -inf
        %v10449 = vmax.f32 %v10447, %v10448
        %v10450 = vsel %vm6637, %v10341, -inf
        %v10451 = vmax.f32 %v10449, %v10450
        %v10452 = vsel %vm6637, %v9898, -inf
        %v10453 = vsel %vm6637, %v9962, -inf
        %v10454 = vmax.f32 %v10452, %v10453
        %v10455 = vsel %vm6637, %v10026, -inf
        %v10456 = vmax.f32 %v10454, %v10455
        %v10457 = vsel %vm6637, %v10090, -inf
        %v10458 = vmax.f32 %v10456, %v10457
        %v10459 = vsel %vm6637, %v10154, -inf
        %v10460 = vmax.f32 %v10458, %v10459
        %v10461 = vsel %vm6637, %v10218, -inf
        %v10462 = vmax.f32 %v10460, %v10461
        %v10463 = vsel %vm6637, %v10282, -inf
        %v10464 = vmax.f32 %v10462, %v10463
        %v10465 = vsel %vm6637, %v10346, -inf
        %v10466 = vmax.f32 %v10464, %v10465
        %v10467 = vsel %vm6637, %v9901, -inf
        %v10468 = vsel %vm6637, %v9965, -inf
        %v10469 = vmax.f32 %v10467, %v10468
        %v10470 = vsel %vm6637, %v10029, -inf
        %v10471 = vmax.f32 %v10469, %v10470
        %v10472 = vsel %vm6637, %v10093, -inf
        %v10473 = vmax.f32 %v10471, %v10472
        %v10474 = vsel %vm6637, %v10157, -inf
        %v10475 = vmax.f32 %v10473, %v10474
        %v10476 = vsel %vm6637, %v10221, -inf
        %v10477 = vmax.f32 %v10475, %v10476
        %v10478 = vsel %vm6637, %v10285, -inf
        %v10479 = vmax.f32 %v10477, %v10478
        %v10480 = vsel %vm6637, %v10349, -inf
        %v10481 = vmax.f32 %v10479, %v10480
        %v10482 = vsel %vm6637, %v9906, -inf
        %v10483 = vsel %vm6637, %v9970, -inf
        %v10484 = vmax.f32 %v10482, %v10483
        %v10485 = vsel %vm6637, %v10034, -inf
        %v10486 = vmax.f32 %v10484, %v10485
        %v10487 = vsel %vm6637, %v10098, -inf
        %v10488 = vmax.f32 %v10486, %v10487
        %v10489 = vsel %vm6637, %v10162, -inf
        %v10490 = vmax.f32 %v10488, %v10489
        %v10491 = vsel %vm6637, %v10226, -inf
        %v10492 = vmax.f32 %v10490, %v10491
        %v10493 = vsel %vm6637, %v10290, -inf
        %v10494 = vmax.f32 %v10492, %v10493
        %v10495 = vsel %vm6637, %v10354, -inf
        %v10496 = vmax.f32 %v10494, %v10495
        %v10497 = vsel %vm6637, %v9909, -inf
        %v10498 = vsel %vm6637, %v9973, -inf
        %v10499 = vmax.f32 %v10497, %v10498
        %v10500 = vsel %vm6637, %v10037, -inf
        %v10501 = vmax.f32 %v10499, %v10500
        %v10502 = vsel %vm6637, %v10101, -inf
        %v10503 = vmax.f32 %v10501, %v10502
        %v10504 = vsel %vm6637, %v10165, -inf
        %v10505 = vmax.f32 %v10503, %v10504
        %v10506 = vsel %vm6637, %v10229, -inf
        %v10507 = vmax.f32 %v10505, %v10506
        %v10508 = vsel %vm6637, %v10293, -inf
        %v10509 = vmax.f32 %v10507, %v10508
        %v10510 = vsel %vm6637, %v10357, -inf
        %v10511 = vmax.f32 %v10509, %v10510
        %v10512 = vsel %vm6637, %v9914, -inf
        %v10513 = vsel %vm6637, %v9978, -inf
        %v10514 = vmax.f32 %v10512, %v10513
        %v10515 = vsel %vm6637, %v10042, -inf
        %v10516 = vmax.f32 %v10514, %v10515
        %v10517 = vsel %vm6637, %v10106, -inf
        %v10518 = vmax.f32 %v10516, %v10517
        %v10519 = vsel %vm6637, %v10170, -inf
        %v10520 = vmax.f32 %v10518, %v10519
        %v10521 = vsel %vm6637, %v10234, -inf
        %v10522 = vmax.f32 %v10520, %v10521
        %v10523 = vsel %vm6637, %v10298, -inf
        %v10524 = vmax.f32 %v10522, %v10523
        %v10525 = vsel %vm6637, %v10362, -inf
        %v10526 = vmax.f32 %v10524, %v10525
        %v10527 = vsel %vm6637, %v9917, -inf
        %v10528 = vsel %vm6637, %v9981, -inf
        %v10529 = vmax.f32 %v10527, %v10528
        %v10530 = vsel %vm6637, %v10045, -inf
        %v10531 = vmax.f32 %v10529, %v10530
        %v10532 = vsel %vm6637, %v10109, -inf
        %v10533 = vmax.f32 %v10531, %v10532
        %v10534 = vsel %vm6637, %v10173, -inf
        %v10535 = vmax.f32 %v10533, %v10534
        %v10536 = vsel %vm6637, %v10237, -inf
        %v10537 = vmax.f32 %v10535, %v10536
        %v10538 = vsel %vm6637, %v10301, -inf
        %v10539 = vmax.f32 %v10537, %v10538
        %v10540 = vsel %vm6637, %v10365, -inf
        %v10541 = vmax.f32 %v10539, %v10540
        %v10542 = vsel %vm6637, %v9922, -inf
        %v10543 = vsel %vm6637, %v9986, -inf
        %v10544 = vmax.f32 %v10542, %v10543
        %v10545 = vsel %vm6637, %v10050, -inf
        %v10546 = vmax.f32 %v10544, %v10545
        %v10547 = vsel %vm6637, %v10114, -inf
        %v10548 = vmax.f32 %v10546, %v10547
        %v10549 = vsel %vm6637, %v10178, -inf
        %v10550 = vmax.f32 %v10548, %v10549
        %v10551 = vsel %vm6637, %v10242, -inf
        %v10552 = vmax.f32 %v10550, %v10551
        %v10553 = vsel %vm6637, %v10306, -inf
        %v10554 = vmax.f32 %v10552, %v10553
        %v10555 = vsel %vm6637, %v10370, -inf
        %v10556 = vmax.f32 %v10554, %v10555
        %v10557 = vsel %vm6637, %v9925, -inf
        %v10558 = vsel %vm6637, %v9989, -inf
        %v10559 = vmax.f32 %v10557, %v10558
        %v10560 = vsel %vm6637, %v10053, -inf
        %v10561 = vmax.f32 %v10559, %v10560
        %v10562 = vsel %vm6637, %v10117, -inf
        %v10563 = vmax.f32 %v10561, %v10562
        %v10564 = vsel %vm6637, %v10181, -inf
        %v10565 = vmax.f32 %v10563, %v10564
        %v10566 = vsel %vm6637, %v10245, -inf
        %v10567 = vmax.f32 %v10565, %v10566
        %v10568 = vsel %vm6637, %v10309, -inf
        %v10569 = vmax.f32 %v10567, %v10568
        %v10570 = vsel %vm6637, %v10373, -inf
        %v10571 = vmax.f32 %v10569, %v10570
        %v10572 = vsel %vm6637, %v9930, -inf
        %v10573 = vsel %vm6637, %v9994, -inf
        %v10574 = vmax.f32 %v10572, %v10573
        %v10575 = vsel %vm6637, %v10058, -inf
        %v10576 = vmax.f32 %v10574, %v10575
        %v10577 = vsel %vm6637, %v10122, -inf
        %v10578 = vmax.f32 %v10576, %v10577
        %v10579 = vsel %vm6637, %v10186, -inf
        %v10580 = vmax.f32 %v10578, %v10579
        %v10581 = vsel %vm6637, %v10250, -inf
        %v10582 = vmax.f32 %v10580, %v10581
        %v10583 = vsel %vm6637, %v10314, -inf
        %v10584 = vmax.f32 %v10582, %v10583
        %v10585 = vsel %vm6637, %v10378, -inf
        %v10586 = vmax.f32 %v10584, %v10585
        %v10587 = vsel %vm6637, %v9933, -inf
        %v10588 = vsel %vm6637, %v9997, -inf
        %v10589 = vmax.f32 %v10587, %v10588
        %v10590 = vsel %vm6637, %v10061, -inf
        %v10591 = vmax.f32 %v10589, %v10590
        %v10592 = vsel %vm6637, %v10125, -inf
        %v10593 = vmax.f32 %v10591, %v10592
        %v10594 = vsel %vm6637, %v10189, -inf
        %v10595 = vmax.f32 %v10593, %v10594
        %v10596 = vsel %vm6637, %v10253, -inf
        %v10597 = vmax.f32 %v10595, %v10596
        %v10598 = vsel %vm6637, %v10317, -inf
        %v10599 = vmax.f32 %v10597, %v10598
        %v10600 = vsel %vm6637, %v10381, -inf
        %v10601 = vmax.f32 %v10599, %v10600
        %v10602 = vsel %vm6637, %v9938, -inf
        %v10603 = vsel %vm6637, %v10002, -inf
        %v10604 = vmax.f32 %v10602, %v10603
        %v10605 = vsel %vm6637, %v10066, -inf
        %v10606 = vmax.f32 %v10604, %v10605
        %v10607 = vsel %vm6637, %v10130, -inf
        %v10608 = vmax.f32 %v10606, %v10607
        %v10609 = vsel %vm6637, %v10194, -inf
        %v10610 = vmax.f32 %v10608, %v10609
        %v10611 = vsel %vm6637, %v10258, -inf
        %v10612 = vmax.f32 %v10610, %v10611
        %v10613 = vsel %vm6637, %v10322, -inf
        %v10614 = vmax.f32 %v10612, %v10613
        %v10615 = vsel %vm6637, %v10386, -inf
        %v10616 = vmax.f32 %v10614, %v10615
        %v10617 = vsel %vm6637, %v9941, -inf
        %v10618 = vsel %vm6637, %v10005, -inf
        %v10619 = vmax.f32 %v10617, %v10618
        %v10620 = vsel %vm6637, %v10069, -inf
        %v10621 = vmax.f32 %v10619, %v10620
        %v10622 = vsel %vm6637, %v10133, -inf
        %v10623 = vmax.f32 %v10621, %v10622
        %v10624 = vsel %vm6637, %v10197, -inf
        %v10625 = vmax.f32 %v10623, %v10624
        %v10626 = vsel %vm6637, %v10261, -inf
        %v10627 = vmax.f32 %v10625, %v10626
        %v10628 = vsel %vm6637, %v10325, -inf
        %v10629 = vmax.f32 %v10627, %v10628
        %v10630 = vsel %vm6637, %v10389, -inf
        %v10631 = vmax.f32 %v10629, %v10630
        %v10632 = vld [vmem:[%s6] sm:$0x1]
        %v10634 = vlaneseq
        %v10635 = vshrl.u32 %v10634, 7
        %v10636 = vsub.s32 0, %v10635
        %v10637 = vrot.slane %v10632, %v10636
        %v10639 = vadd.f32 %v10406, %v10637
        %v10640 = vadd.f32 %v10421, %v10637
        %v10641 = vadd.f32 %v10436, %v10637
        %v10642 = vadd.f32 %v10451, %v10637
        %v10643 = vadd.f32 %v10466, %v10637
        %v10644 = vadd.f32 %v10481, %v10637
        %v10645 = vadd.f32 %v10496, %v10637
        %v10646 = vadd.f32 %v10511, %v10637
        %v10647 = vadd.f32 %v10526, %v10637
        %v10648 = vadd.f32 %v10541, %v10637
        %v10649 = vadd.f32 %v10556, %v10637
        %v10650 = vadd.f32 %v10571, %v10637
        %v10651 = vadd.f32 %v10586, %v10637
        %v10652 = vadd.f32 %v10601, %v10637
        %v10653 = vadd.f32 %v10616, %v10637
        %v10654 = vadd.f32 %v10631, %v10637
        %v10655 = vmax.f32 %v10639, 0.0
        %v10656 = vmax.f32 %v10640, 0.0
        %v10657 = vmax.f32 %v10641, 0.0
        %v10658 = vmax.f32 %v10642, 0.0
        %v10659 = vmax.f32 %v10643, 0.0
        %v10660 = vmax.f32 %v10644, 0.0
        %v10661 = vmax.f32 %v10645, 0.0
        %v10662 = vmax.f32 %v10646, 0.0
        %v10663 = vmax.f32 %v10647, 0.0
        %v10664 = vmax.f32 %v10648, 0.0
        %v10665 = vmax.f32 %v10649, 0.0
        %v10666 = vmax.f32 %v10650, 0.0
        %v10667 = vmax.f32 %v10651, 0.0
        %v10668 = vmax.f32 %v10652, 0.0
        %v10669 = vmax.f32 %v10653, 0.0
        %v10670 = vmax.f32 %v10654, 0.0
        %10687 = vrot.lane.b32.xlu0 %v10655, 64
        %v10688 = vpop.permute.xlu0 %10687
        %10689 = vrot.lane.b32.xlu0 %v10656, 64
        %v10690 = vpop.permute.xlu0 %10689
        %10691 = vrot.lane.b32.xlu0 %v10657, 64
        %v10692 = vpop.permute.xlu0 %10691
        %10693 = vrot.lane.b32.xlu0 %v10658, 64
        %v10694 = vpop.permute.xlu0 %10693
        %10695 = vrot.lane.b32.xlu0 %v10659, 64
        %v10696 = vpop.permute.xlu0 %10695
        %10697 = vrot.lane.b32.xlu0 %v10660, 64
        %v10698 = vpop.permute.xlu0 %10697
        %10699 = vrot.lane.b32.xlu0 %v10661, 64
        %v10700 = vpop.permute.xlu0 %10699
        %10701 = vrot.lane.b32.xlu0 %v10662, 64
        %v10702 = vpop.permute.xlu0 %10701
        %10703 = vrot.lane.b32.xlu0 %v10663, 64
        %v10704 = vpop.permute.xlu0 %10703
        %10705 = vrot.lane.b32.xlu0 %v10664, 64
        %v10706 = vpop.permute.xlu0 %10705
        %10707 = vrot.lane.b32.xlu0 %v10665, 64
        %v10708 = vpop.permute.xlu0 %10707
        %10709 = vrot.lane.b32.xlu0 %v10666, 64
        %v10710 = vpop.permute.xlu0 %10709
        %10711 = vrot.lane.b32.xlu0 %v10667, 64
        %v10712 = vpop.permute.xlu0 %10711
        %10713 = vrot.lane.b32.xlu0 %v10668, 64
        %v10714 = vpop.permute.xlu0 %10713
        %10715 = vrot.lane.b32.xlu0 %v10669, 64
        %v10716 = vpop.permute.xlu0 %10715
        %10717 = vrot.lane.b32.xlu0 %v10670, 64
        %v10718 = vpop.permute.xlu0 %10717
        %v10735 = vsel %vm6637, %v8615, %v10688
        %v10736 = vsel %vm6637, %v8616, %v10690
        %v10737 = vsel %vm6637, %v8617, %v10692
        %v10738 = vsel %vm6637, %v8618, %v10694
        %v10739 = vsel %vm6637, %v8619, %v10696
        %v10740 = vsel %vm6637, %v8620, %v10698
        %v10741 = vsel %vm6637, %v8621, %v10700
        %v10742 = vsel %vm6637, %v8622, %v10702
        %v10743 = vsel %vm6637, %v8623, %v10704
        %v10744 = vsel %vm6637, %v8624, %v10706
        %v10745 = vsel %vm6637, %v8625, %v10708
        %v10746 = vsel %vm6637, %v8626, %v10710
        %v10747 = vsel %vm6637, %v8627, %v10712
        %v10748 = vsel %vm6637, %v8628, %v10714
        %v10749 = vsel %vm6637, %v8629, %v10716
        %v10750 = vsel %vm6637, %v8630, %v10718
        %v10751 = vpack.c.bf16 %v10736, %v10735
        %v10752 = vpack.c.bf16 %v10738, %v10737
        %v10753 = vpack.c.bf16 %v10740, %v10739
        %v10754 = vpack.c.bf16 %v10742, %v10741
        %v10755 = vpack.c.bf16 %v10744, %v10743
        %v10756 = vpack.c.bf16 %v10746, %v10745
        %v10757 = vpack.c.bf16 %v10748, %v10747
        %v10758 = vpack.c.bf16 %v10750, %v10749
        %v10759 = vld [vmem:[%s7] sm:$0xf]
        %v10760 = vld [vmem:[%s7 + $0x4] sm:$0xf]
        %v10761 = vld [vmem:[%s7 + $0x8] sm:$0xf]
        %v10762 = vld [vmem:[%s7 + $0xc] sm:$0xf]
        %v10763 = vld [vmem:[%s7 + $0x10] sm:$0xf]
        %v10764 = vld [vmem:[%s7 + $0x14] sm:$0xf]
        %v10765 = vld [vmem:[%s7 + $0x18] sm:$0xf]
        %v10766 = vld [vmem:[%s7 + $0x1c] sm:$0xf]
        %v10767 = vld [vmem:[%s7 + $0x20] sm:$0xf]
        %v10768 = vld [vmem:[%s7 + $0x24] sm:$0xf]
        %v10769 = vld [vmem:[%s7 + $0x28] sm:$0xf]
        %v10770 = vld [vmem:[%s7 + $0x2c] sm:$0xf]
        %v10771 = vld [vmem:[%s7 + $0x30] sm:$0xf]
        %v10772 = vld [vmem:[%s7 + $0x34] sm:$0xf]
        %v10773 = vld [vmem:[%s7 + $0x38] sm:$0xf]
        %v10774 = vld [vmem:[%s7 + $0x3c] sm:$0xf]
        %v10775 = vld [vmem:[%s8] sm:$0x1]
        %v10777 = vlaneseq
        %v10778 = vshrl.u32 %v10777, 7
        %v10779 = vsub.s32 0, %v10778
        %v10780 = vrot.slane %v10775, %v10779
        %v10798 = vunpack.c.l.b16 %v10759
        %v10799 = vunpack.c.l.b16 %v10760
        %v10800 = vunpack.c.l.b16 %v10761
        %v10801 = vunpack.c.l.b16 %v10762
        %v10802 = vunpack.c.l.b16 %v10763
        %v10803 = vunpack.c.l.b16 %v10764
        %v10804 = vunpack.c.l.b16 %v10765
        %v10805 = vunpack.c.l.b16 %v10766
        %v10806 = vunpack.c.l.b16 %v10767
        %v10807 = vunpack.c.l.b16 %v10768
        %v10808 = vunpack.c.l.b16 %v10769
        %v10809 = vunpack.c.l.b16 %v10770
        %v10810 = vunpack.c.l.b16 %v10771
        %v10811 = vunpack.c.l.b16 %v10772
        %v10812 = vunpack.c.l.b16 %v10773
        %v10813 = vunpack.c.l.b16 %v10774
        %v10814 = vpack.c.b16 %v10799, %v10798
        %v10815 = vpack.c.b16 %v10801, %v10800
        %v10816 = vpack.c.b16 %v10803, %v10802
        %v10817 = vpack.c.b16 %v10805, %v10804
        %v10818 = vpack.c.b16 %v10807, %v10806
        %v10819 = vpack.c.b16 %v10809, %v10808
        %v10820 = vpack.c.b16 %v10811, %v10810
        %v10821 = vpack.c.b16 %v10813, %v10812
        %10830 = vmatprep.subr.bf16.mxu0 0
        %10831 = vmatpush1.bf16.msra.mxu0 %v10821
        %10832 = vmatprep.subr.bf16.mxu0 0
        %10833 = vmatpush1.bf16.msra.mxu0 %v10820
        %10834 = vmatprep.subr.bf16.mxu0 0
        %10835 = vmatpush1.bf16.msra.mxu0 %v10819
        %10836 = vmatprep.subr.bf16.mxu0 0
        %10837 = vmatpush1.bf16.msra.mxu0 %v10818
        %10838 = vmatprep.subr.bf16.mxu0 0
        %10839 = vmatpush1.bf16.msra.mxu0 %v10817
        %10840 = vmatprep.subr.bf16.mxu0 0
        %10841 = vmatpush1.bf16.msra.mxu0 %v10816
        %10842 = vmatprep.subr.bf16.mxu0 0
        %10843 = vmatpush1.bf16.msra.mxu0 %v10815
        %10844 = vmatprep.subr.bf16.mxu0 0
        %10845 = vmatpush1.bf16.msra.mxu0 %v10814
        %10846 = vmatprep.subr.bf16.mxu0 0
        %10847 = vmatpush2.bf16.msra.mxu0 0
        %10848 = vmatprep.subr.bf16.mxu0 0
        %10849 = vmatpush2.bf16.msra.mxu0 0
        %10850 = vmatprep.subr.bf16.mxu0 0
        %10851 = vmatpush2.bf16.msra.mxu0 0
        %10852 = vmatprep.subr.bf16.mxu0 0
        %10853 = vmatpush2.bf16.msra.mxu0 0
        %10854 = vmatprep.subr.bf16.mxu0 0
        %10855 = vmatpush2.bf16.msra.mxu0 0
        %10856 = vmatprep.subr.bf16.mxu0 0
        %10857 = vmatpush2.bf16.msra.mxu0 0
        %10858 = vmatprep.subr.bf16.mxu0 0
        %10859 = vmatpush2.bf16.msra.mxu0 0
        %10860 = vmatprep.subr.bf16.mxu0 0
        %10861 = vmatpush2.bf16.msra.mxu0 0
        %10862 = vmatprep.mubr.bf16.mxu0 0
        %10863 = vmatmul.mubr.bf16.gmra.mxu0 %v10751
        %v10864 = vpop.f32.mrf.mxu0
        %v10865 = vadd.f32 %v10780, %v10864
        %v10866 = vpop.f32.mrf.mxu0
        %v10867 = vpop.f32.mrf.mxu0
        %v10868 = vadd.f32 %v10780, %v10867
        %v10869 = vpop.f32.mrf.mxu0
        %10870 = vmatprep.mubr.bf16.mxu0 0
        %10871 = vmatmul.mubr.bf16.gmra.mxu0 %v10752
        %v10872 = vpop.f32.mrf.mxu0
        %v10873 = vadd.f32 %v10780, %v10872
        %v10874 = vpop.f32.mrf.mxu0
        %v10875 = vpop.f32.mrf.mxu0
        %v10876 = vadd.f32 %v10780, %v10875
        %v10877 = vpop.f32.mrf.mxu0
        %10878 = vmatprep.mubr.bf16.mxu0 0
        %10879 = vmatmul.mubr.bf16.gmra.mxu0 %v10753
        %v10880 = vpop.f32.mrf.mxu0
        %v10881 = vadd.f32 %v10780, %v10880
        %v10882 = vpop.f32.mrf.mxu0
        %v10883 = vpop.f32.mrf.mxu0
        %v10884 = vadd.f32 %v10780, %v10883
        %v10885 = vpop.f32.mrf.mxu0
        %10886 = vmatprep.mubr.bf16.mxu0 0
        %10887 = vmatmul.mubr.bf16.gmra.mxu0 %v10754
        %v10888 = vpop.f32.mrf.mxu0
        %v10889 = vadd.f32 %v10780, %v10888
        %v10890 = vpop.f32.mrf.mxu0
        %v10891 = vpop.f32.mrf.mxu0
        %v10892 = vadd.f32 %v10780, %v10891
        %v10893 = vpop.f32.mrf.mxu0
        %10894 = vmatprep.mubr.bf16.mxu0 0
        %10895 = vmatmul.mubr.bf16.gmra.mxu0 %v10755
        %v10896 = vpop.f32.mrf.mxu0
        %v10897 = vadd.f32 %v10780, %v10896
        %v10898 = vpop.f32.mrf.mxu0
        %v10899 = vpop.f32.mrf.mxu0
        %v10900 = vadd.f32 %v10780, %v10899
        %v10901 = vpop.f32.mrf.mxu0
        %10902 = vmatprep.mubr.bf16.mxu0 0
        %10903 = vmatmul.mubr.bf16.gmra.mxu0 %v10756
        %v10904 = vpop.f32.mrf.mxu0
        %v10905 = vadd.f32 %v10780, %v10904
        %v10906 = vpop.f32.mrf.mxu0
        %v10907 = vpop.f32.mrf.mxu0
        %v10908 = vadd.f32 %v10780, %v10907
        %v10909 = vpop.f32.mrf.mxu0
        %10910 = vmatprep.mubr.bf16.mxu0 0
        %10911 = vmatmul.mubr.bf16.gmra.mxu0 %v10757
        %v10912 = vpop.f32.mrf.mxu0
        %v10913 = vadd.f32 %v10780, %v10912
        %v10914 = vpop.f32.mrf.mxu0
        %v10915 = vpop.f32.mrf.mxu0
        %v10916 = vadd.f32 %v10780, %v10915
        %v10917 = vpop.f32.mrf.mxu0
        %10918 = vmatprep.mubr.bf16.mxu0 0
        %10919 = vmatmul.mubr.bf16.gmra.mxu0 %v10758
        %v10920 = vpop.f32.mrf.mxu0
        %v10921 = vadd.f32 %v10780, %v10920
        %v10922 = vpop.f32.mrf.mxu0
        %v10923 = vpop.f32.mrf.mxu0
        %v10924 = vadd.f32 %v10780, %v10923
        %v10925 = vpop.f32.mrf.mxu0
        %10926 = vdwg.mxu0
        %v10927 = vmax.f32 %v10865, 0.0
        %v10928 = vmax.f32 %v10868, 0.0
        %v10929 = vmax.f32 %v10873, 0.0
        %v10930 = vmax.f32 %v10876, 0.0
        %v10931 = vmax.f32 %v10881, 0.0
        %v10932 = vmax.f32 %v10884, 0.0
        %v10933 = vmax.f32 %v10889, 0.0
        %v10934 = vmax.f32 %v10892, 0.0
        %v10935 = vmax.f32 %v10897, 0.0
        %v10936 = vmax.f32 %v10900, 0.0
        %v10937 = vmax.f32 %v10905, 0.0
        %v10938 = vmax.f32 %v10908, 0.0
        %v10939 = vmax.f32 %v10913, 0.0
        %v10940 = vmax.f32 %v10916, 0.0
        %v10941 = vmax.f32 %v10921, 0.0
        %v10942 = vmax.f32 %v10924, 0.0
        %10943 = vxpose.xlu0.b32.start [1/16] %v10927, 128
        %10944 = vxpose.xlu0.b32.cont [2/16] %v10928, 128
        %10945 = vxpose.xlu0.b32.cont [3/16] %v10929, 128
        %10946 = vxpose.xlu0.b32.cont [4/16] %v10930, 128
        %10947 = vxpose.xlu0.b32.cont [5/16] %v10931, 128
        %10948 = vxpose.xlu0.b32.cont [6/16] %v10932, 128
        %10949 = vxpose.xlu0.b32.cont [7/16] %v10933, 128
        %10950 = vxpose.xlu0.b32.cont [8/16] %v10934, 128
        %10951 = vxpose.xlu0.b32.cont [9/16] %v10935, 128
        %10952 = vxpose.xlu0.b32.cont [10/16] %v10936, 128
        %10953 = vxpose.xlu0.b32.cont [11/16] %v10937, 128
        %10954 = vxpose.xlu0.b32.cont [12/16] %v10938, 128
        %10955 = vxpose.xlu0.b32.cont [13/16] %v10939, 128
        %10956 = vxpose.xlu0.b32.cont [14/16] %v10940, 128
        %10957 = vxpose.xlu0.b32.cont [15/16] %v10941, 128
        %10958 = vxpose.xlu0.b32.end [16/16] %v10942, 128
        %v10959 = vpop.trf.xlu0
        %v10960 = vpop.trf.xlu0
        %v10961 = vpop.trf.xlu0
        %v10962 = vpop.trf.xlu0
        %v10963 = vpop.trf.xlu0
        %v10964 = vpop.trf.xlu0
        %v10965 = vpop.trf.xlu0
        %v10966 = vpop.trf.xlu0
        %v10967 = vpop.trf.xlu0
        %v10968 = vpop.trf.xlu0
        %v10969 = vpop.trf.xlu0
        %v10970 = vpop.trf.xlu0
        %v10971 = vpop.trf.xlu0
        %v10972 = vpop.trf.xlu0
        %v10973 = vpop.trf.xlu0
        %v10974 = vpop.trf.xlu0
        %v10975 = vld [vmem:[%s9] sm:$0xff]
        %v10976 = vld [vmem:[%s9 + $0x8] sm:$0xff]
        %v10977 = vld [vmem:[%s9 + $0x10] sm:$0xff]
        %v10978 = vld [vmem:[%s9 + $0x18] sm:$0xff]
        %v10979 = vld [vmem:[%s9 + $0x20] sm:$0x1]
        %v10981 = vsel %vm6348, %v10975, 0
        %v10984 = vsel %vm6348, %v10976, 0
        %v10987 = vsel %vm6348, %v10977, 0
        %v10990 = vsel %vm6348, %v10978, 0
        %v10993 = vsel %vm6348, %v10979, 0
        %10995 = vmatprep.subr.mxu0 0.0
        %10996 = vmatpush1.msra.mxu0 0.0
        %10997 = vmatprep.subr.mxu0 0.0
        %10998 = vmatpush1.msra.mxu0 0.0
        %10999 = vmatprep.subr.mxu0 0.0
        %11000 = vmatpush1.msra.mxu0 0.0
        %11001 = vmatprep.subr.mxu0 0.0
        %11002 = vmatpush1.msra.mxu0 0.0
        %11003 = vmatprep.subr.mxu0 0.0
        %11004 = vmatpush1.msra.mxu0 0.0
        %11005 = vmatprep.subr.mxu0 0.0
        %11006 = vmatpush1.msra.mxu0 0.0
        %11007 = vmatprep.subr.mxu0 0.0
        %11008 = vmatpush1.msra.mxu0 0.0
        %11009 = vmatprep.subr.mxu0 0.0
        %11010 = vmatpush1.msra.mxu0 0.0
        %11011 = vmatprep.subr.mxu0 0.0
        %11012 = vmatpush1.msra.mxu0 0.0
        %11013 = vmatprep.subr.mxu0 0.0
        %11014 = vmatpush1.msra.mxu0 0.0
        %11015 = vmatprep.subr.mxu0 0.0
        %11016 = vmatpush1.msra.mxu0 0.0
        %11017 = vmatprep.subr.mxu0 0.0
        %11018 = vmatpush1.msra.mxu0 0.0
        %11019 = vmatprep.subr.mxu0 0.0
        %11020 = vmatpush1.msra.mxu0 %v10962
        %11021 = vmatprep.subr.mxu0 0.0
        %11022 = vmatpush1.msra.mxu0 %v10961
        %11023 = vmatprep.subr.mxu0 0.0
        %11024 = vmatpush1.msra.mxu0 %v10960
        %11025 = vmatprep.subr.mxu0 0.0
        %11026 = vmatpush1.msra.mxu0 %v10959
        %11027 = vmatprep.subr.mxu0 0.0
        %11028 = vmatpush2.msra.mxu0 0.0
        %11029 = vmatprep.subr.mxu0 0.0
        %11030 = vmatpush2.msra.mxu0 0.0
        %11031 = vmatprep.subr.mxu0 0.0
        %11032 = vmatpush2.msra.mxu0 0.0
        %11033 = vmatprep.subr.mxu0 0.0
        %11034 = vmatpush2.msra.mxu0 0.0
        %11035 = vmatprep.subr.mxu0 0.0
        %11036 = vmatpush2.msra.mxu0 0.0
        %11037 = vmatprep.subr.mxu0 0.0
        %11038 = vmatpush2.msra.mxu0 0.0
        %11039 = vmatprep.subr.mxu0 0.0
        %11040 = vmatpush2.msra.mxu0 0.0
        %11041 = vmatprep.subr.mxu0 0.0
        %11042 = vmatpush2.msra.mxu0 0.0
        %11043 = vmatprep.subr.mxu0 0.0
        %11044 = vmatpush2.msra.mxu0 0.0
        %11045 = vmatprep.subr.mxu0 0.0
        %11046 = vmatpush2.msra.mxu0 0.0
        %11047 = vmatprep.subr.mxu0 0.0
        %11048 = vmatpush2.msra.mxu0 0.0
        %11049 = vmatprep.subr.mxu0 0.0
        %11050 = vmatpush2.msra.mxu0 0.0
        %11051 = vmatprep.subr.mxu0 0.0
        %11052 = vmatpush2.msra.mxu0 0.0
        %11053 = vmatprep.subr.mxu0 0.0
        %11054 = vmatpush2.msra.mxu0 0.0
        %11055 = vmatprep.subr.mxu0 0.0
        %11056 = vmatpush2.msra.mxu0 0.0
        %11057 = vmatprep.subr.mxu0 0.0
        %11058 = vmatpush2.msra.mxu0 0.0
        %11059 = vmatprep.mubr.f32.mxu0 0.0
        %11060 = vmatmul.mubr.f32.gmra.mxu0 %v10981
        %v11061 = vpop.f32.mrf.mxu0
        %v11062 = vadd.f32 0.0, %v11061
        %v11063 = vpop.f32.mrf.mxu0
        %11064 = vmatprep.mubr.f32.mxu0 0.0
        %11065 = vmatmul.mubr.f32.gmra.mxu0 %v10984
        %v11066 = vpop.f32.mrf.mxu0
        %v11067 = vadd.f32 0.0, %v11066
        %v11068 = vpop.f32.mrf.mxu0
        %11069 = vmatprep.mubr.f32.mxu0 0.0
        %11070 = vmatmul.mubr.f32.gmra.mxu0 %v10987
        %v11071 = vpop.f32.mrf.mxu0
        %v11072 = vadd.f32 0.0, %v11071
        %v11073 = vpop.f32.mrf.mxu0
        %11074 = vmatprep.mubr.f32.mxu0 0.0
        %11075 = vmatmul.mubr.f32.gmra.mxu0 %v10990
        %v11076 = vpop.f32.mrf.mxu0
        %v11077 = vadd.f32 0.0, %v11076
        %v11078 = vpop.f32.mrf.mxu0
        %11079 = vmatprep.mubr.f32.mxu0 0.0
        %11080 = vmatmul.mubr.f32.gmra.mxu0 %v10993
        %v11081 = vpop.f32.mrf.mxu0
        %v11082 = vadd.f32 0.0, %v11081
        %v11083 = vpop.f32.mrf.mxu0
        %11084 = vdwg.mxu0
        %v11085 = vld [vmem:[#allocation2] sm:$0x1]
        %11087 = vset.pattern.permute.xlu0 0
        %11088 = vperm.xlu0 %11087, %v11085
        %v11089 = vpop.permute.xlu0 %11088
        %v11091 = vlaneseq
        %v11092 = vshrl.u32 %v11091, 7
        %v11093 = vsub.s32 0, %v11092
        %v11094 = vrot.slane %v11089, %v11093
        %v11095 = vadd.f32 %v11082, %v11094
        %v11096 = vmul.f32 %v11062, %v11062
        %v11097 = vmul.f32 %v11067, %v11067
        %v11098 = vmul.f32 %v11072, %v11072
        %v11099 = vmul.f32 %v11077, %v11077
        %v11100 = vadd.f32 %v11096, %v11097
        %v11101 = vadd.f32 %v11100, %v11098
        %v11102 = vadd.f32 %v11101, %v11099
        %v11103 = vrot.slane %v11102, 4
        %v11104 = vadd.f32 %v11102, %v11103
        %v11105 = vrot.slane %v11104, 2
        %v11106 = vadd.f32 %v11104, %v11105
        %v11107 = vrot.slane %v11106, 1
        %v11108 = vadd.f32 %v11106, %v11107
        %v11109 = vmul.f32 %v10959, %v10959
        %v11110 = vmul.f32 %v10960, %v10960
        %v11111 = vmul.f32 %v10961, %v10961
        %v11112 = vmul.f32 %v10962, %v10962
        %v11113 = vld [vmem:[%s11] sm:$0xff]
        %v11114 = vld [vmem:[%s11 + $0x8] sm:$0xff]
        %v11115 = vld [vmem:[%s11 + $0x10] sm:$0xff]
        %v11116 = vld [vmem:[%s11 + $0x18] sm:$0xff]
        %11118 = vset.pattern.permute.xlu0 0
        %11119 = vperm.xlu0 %11118, %v11113
        %v11120 = vpop.permute.xlu0 %11119
        %11123 = vset.pattern.permute.xlu0 0
        %11124 = vperm.xlu0 %11123, %v11114
        %v11125 = vpop.permute.xlu0 %11124
        %11128 = vset.pattern.permute.xlu0 0
        %11129 = vperm.xlu0 %11128, %v11115
        %v11130 = vpop.permute.xlu0 %11129
        %11133 = vset.pattern.permute.xlu0 0
        %11134 = vperm.xlu0 %11133, %v11116
        %v11135 = vpop.permute.xlu0 %11134
        %v11137 = vmul.f32 %v11109, %v11120
        %v11138 = vmul.f32 %v11110, %v11125
        %v11139 = vmul.f32 %v11111, %v11130
        %v11140 = vmul.f32 %v11112, %v11135
        %v11141 = vadd.f32 %v11137, %v11138
        %v11142 = vadd.f32 %v11141, %v11139
        %v11143 = vadd.f32 %v11142, %v11140
        %v11144 = vrot.slane %v11143, 4
        %v11145 = vadd.f32 %v11143, %v11144
        %v11146 = vrot.slane %v11145, 2
        %v11147 = vadd.f32 %v11145, %v11146
        %v11148 = vrot.slane %v11147, 1
        %v11149 = vadd.f32 %v11147, %v11148
        %v11150 = vsub.f32 %v11108, %v11149
        %v11151 = vmul.f32 %v11150, 0.5
        %v11152 = vadd.f32 %v11095, %v11151
        %v11153 = vxor.u32 %v11152, 2147483648
        %v11154 = vmul.f32 %v11153, 1.442695
        %v11155 = vpow.pop %v11154
        %v11156 = vadd.f32 %v11155, 1.0
        %v11157 = vrcp.pop %v11156
        %v11158 = vmul.f32 1.0, %v11157
        %11159 = vst [vmem:[%s510] sm:$0x1] %v11158
        %s11160 = sand.u32 %s298, 1
        %s11161 = scalar_lea.sflag [#allocation6], %s11160
        %s11162 = sand.u32 %s298, 1
        %s11163 = scalar_lea.vmem [#allocation5], %s11162
        // Predicated region
        $region145: #{tpu_custom_call.1} parent=135 // pred_check
          %p11164 = pneg %p308
        $region146: #{tpu_custom_call.1} parent=135 // pred_check_branch
          %11166 = sbr.rel (%p11164) target = $region148
        $region147: #{tpu_custom_call.1} parent=135 // pred_region
          %s11168 = ssub.s32 16, 16
          %11169 = vsyncadd %s11161, %s11168
          %s11170 = smul.addr %s28, 16
          %s11171 = scalar_lea.hbm %s12, %s11170
          %s11173 = sshll.u32 %s11163, 4
          %s11174 = int_to_ptr.vmem [resolvable:$true] %s11173
          %11176 = dma.vmem_to_hbm [thread:$0]  %s11174, 16, %s11171, %s11161
        $region148: #{tpu_custom_call.1} parent=135 // pred_fallthru
          _
      $region136: #{tpu_custom_call.1} parent=5 // pred_fallthru
        _
      %p11177 = scmp.le.s32.totalorder 2, %s23
      // Predicated region
      $region149: #{tpu_custom_call.1} parent=5 // pred_check
        %p11178 = pneg %p11177
      $region150: #{tpu_custom_call.1} parent=5 // pred_check_branch
        %11180 = sbr.rel (%p11178) target = $region152
      $region151: #{tpu_custom_call.1} parent=5 // pred_region
        %s11181 = ssub.s32 %s23, 2
        // Predicated region
        $region153: #{tpu_custom_call.1} parent=151 // pred_check
          %p11182 = pneg %p314
        $region154: #{tpu_custom_call.1} parent=151 // pred_check_branch
          %11184 = sbr.rel (%p11182) target = $region156
        $region155: #{tpu_custom_call.1} parent=151 // pred_region
          %s11185 = sand.u32 %s299, 1
          %s11186 = scalar_lea.sflag [#allocation6], %s11185
          %s11187 = sand.u32 %s299, 1
          %s11188 = scalar_lea.vmem [#allocation5], %s11187
          %11189 = dma.done %s11186, 16
        $region156: #{tpu_custom_call.1} parent=151 // pred_fallthru
          _
      $region152: #{tpu_custom_call.1} parent=5 // pred_fallthru
        _
    $region6: #{tpu_custom_call.1} parent=1 // loop_footer
      %s27 = sadd.s32 1, %s23
    $region7: #{tpu_custom_call.1} parent=1 // loop_footer_branch
      %22 = sbr.rel target = $region3
    $region8: #{tpu_custom_call.1} parent=1 // loop_exit
      _
    %11190 = vsyncpa [#allocation6], 1
    %s11191 = scalar_lea.sflag [#allocation6], 1
    %11192 = vsyncpa %s11191, 1

</llo_original>
